<compile_context>
chip_gen: v5e
topology: v5e:2x2
jax: 0.10.0
libtpu: 0.0.40
codegen_flags: <defaults>
</compile_context>

<pallas_src>
import numpy as np
import jax
import jax.numpy as jnp
from jax import lax
from jax.experimental import pallas as pl
from jax.experimental.pallas import tpu as pltpu


def _build_tap_mask():
    """M[kh, kw, p_in, p_out] = 1 where input pixel p_in=(hi,wi) feeds output pixel
    p_out=(h,w) through tap (kh, kw) of a 3x3 / pad=1 conv on an 8x8 image."""
    M = np.zeros((3, 3, 64, 64), np.float32)
    for kh in range(3):
        for kw in range(3):
            for h in range(8):
                for w in range(8):
                    hi, wi = h + kh - 1, w + kw - 1
                    if 0 <= hi < 8 and 0 <= wi < 8:
                        M[kh, kw, hi * 8 + wi, h * 8 + w] = 1.0
    return M


_TAP_MASK = _build_tap_mask()   # numpy constant, built once at import time


def _fused_kernel(wd_ref, b1_ref, w2_ref, x_ref, out_ref):
    # wd_ref: (1024, 448) bf16  folded conv weight (rows: oc*64+hw_out, cols: c*64+hw_in)
    # b1_ref: (1024, 1)   f32   conv bias repeated per spatial position
    # w2_ref: (1024, 1)   f32   linear weight (PyTorch (oc, h, w) flatten order)
    # x_ref:  (448, TB)   bf16  raw input activations, batch on lanes
    # out_ref:(1, TB)     f32   lane-dense per-example output (bias added in wrapper)
    z = jnp.dot(wd_ref[...], x_ref[...],
                preferred_element_type=jnp.float32)          # (1024, TB) MXU, f32 acc
    act = jnp.tanh(z + b1_ref[...])                          # bias bcast over lanes + tanh
    out_ref[...] = jnp.sum(act * w2_ref[...], axis=0, keepdims=True)  # VPU mul + sublane sum


def net1_v3_forward(x, conv_w, conv_b, lin_w, lin_b, *, batch_tile=512):
    """x: [B, 7, 8, 8] float32 (NCHW, like PyTorch). Returns [B, 1] float32."""
    B, C, H, W = x.shape
    assert (C, H, W) == (7, 8, 8)
    HW = H * W                      # 64
    IF = C * HW                     # 448 input features per example (c, h, w) order
    OC = conv_w.shape[0]            # 16
    OF = OC * HW                    # 1024 conv-output features (oc, h, w) order

    TB = batch_tile                 # multiple of 128 -> lane-dense blocks & stores
    G = (B + TB - 1) // TB
    Bp = G * TB

    # ---- fold the conv into one dense (OF, IF) matrix (padding lives in the weight) ----
    wd = jnp.einsum("ocde,depq->oqcp", conv_w, jnp.asarray(_TAP_MASK))
    wd = wd.reshape(OF, IF).astype(jnp.bfloat16)               # bf16 for the MXU
    b1 = jnp.repeat(conv_b.astype(jnp.float32), HW).reshape(OF, 1)
    w2 = lin_w.reshape(OF, 1).astype(jnp.float32)              # matches (oc, h, w) rows

    # ---- raw input stream: bf16, batch on lanes, padded to a whole number of tiles ----
    xT = x.reshape(B, IF).astype(jnp.bfloat16)
    if Bp != B:
        xT = jnp.pad(xT, ((0, Bp - B), (0, 0)))
    xT = xT.T                                                  # (IF, Bp)

    out = pl.pallas_call(
        _fused_kernel,
        out_shape=jax.ShapeDtypeStruct((1, Bp), jnp.float32),
        grid_spec=pltpu.PrefetchScalarGridSpec(
            num_scalar_prefetch=0,
            grid=(G,),
            in_specs=[
                pl.BlockSpec((OF, IF), lambda i: (0, 0)),      # folded conv weight (constant)
                pl.BlockSpec((OF, 1), lambda i: (0, 0)),       # conv bias
                pl.BlockSpec((OF, 1), lambda i: (0, 0)),       # linear weight
                pl.BlockSpec((IF, TB), lambda i: (0, i)),      # raw activations, batch tile
            ],
            out_specs=pl.BlockSpec((1, TB), lambda i: (0, i)),
        ),
        compiler_params=pltpu.CompilerParams(
            dimension_semantics=("parallel",),                 # v7x megacore splits batch tiles
            vmem_limit_bytes=48 * 1024 * 1024,                 # safe on v5e/v6e/v7x
        ),
    )(wd, b1, w2, xT)

    out = out[0, :B].reshape(B, 1)
    # Fold the scalar linear bias here instead of shipping a (1,1) VMEM block.
    return out + lin_b.reshape(1, 1).astype(jnp.float32)


def _reference_forward(x, conv_w, conv_b, lin_w, lin_b):
    """Pure-JAX f32 reference mirroring PyTorch semantics (NCHW conv + flatten C,H,W)."""
    y = lax.conv_general_dilated(
        x, conv_w, window_strides=(1, 1), padding=((1, 1), (1, 1)),
        dimension_numbers=("NCHW", "OIHW", "NCHW"),
    ) + conv_b.reshape(1, -1, 1, 1)
    y = jnp.tanh(y)
    y = y.reshape(y.shape[0], -1)               # (B, OC*H*W) in (oc, h, w) order
    return y @ lin_w.T + lin_b


if __name__ == "__main__":
    key = jax.random.PRNGKey(0)
    k_x, k_cw, k_cb, k_lw, k_lb = jax.random.split(key, 5)

    B = 2
    x = jax.random.normal(k_x, (B, 7, 8, 8), dtype=jnp.float32)

    # Deterministic synthetic parameters (shapes from the module's __init__).
    conv_w = 0.1 * jax.random.normal(k_cw, (16, 7, 3, 3), dtype=jnp.float32)
    conv_b = 0.1 * jax.random.normal(k_cb, (16,), dtype=jnp.float32)
    lin_w = 0.05 * jax.random.normal(k_lw, (1, 16 * 8 * 8), dtype=jnp.float32)
    lin_b = 0.05 * jax.random.normal(k_lb, (1,), dtype=jnp.float32)

    fwd = jax.jit(net1_v3_forward)
    out = fwd(x, conv_w, conv_b, lin_w, lin_b)
    out = jax.block_until_ready(out)

    ref = _reference_forward(x, conv_w, conv_b, lin_w, lin_b)
    assert out.shape == (B, 1)
    # bf16 input / folded-conv-weight storage bounds the deviation from the f32 reference.
    assert jnp.allclose(out, ref, atol=2e-2, rtol=2e-2), (out, ref)

    print("KERNEL_OK")
</pallas_src>

<mosaic_0001>
module attributes {stable_mosaic.version = 11 : i64} {
  func.func @_fused_kernel(%arg0: i32, %arg1: memref<1024x448xbf16, #tpu.memory_space<vmem>>, %arg2: memref<1024x1xf32, #tpu.memory_space<vmem>>, %arg3: memref<1024x1xf32, #tpu.memory_space<vmem>>, %arg4: memref<448x512xbf16, #tpu.memory_space<vmem>>, %arg5: memref<1x512xf32, #tpu.memory_space<vmem>>) attributes {dimension_semantics = [#tpu.dimension_semantics<parallel>], iteration_bounds = array<i64: 1>, scalar_prefetch = 0 : i64, scratch_operands = 0 : i64, tpu.core_type = #tpu.core_type<tc>, window_params = [{pipeline_mode = #tpu.pipeline_mode<synchronous>, transform_indices = @transform_0, window_bounds = array<i64: 1024, 448>}, {pipeline_mode = #tpu.pipeline_mode<synchronous>, transform_indices = @transform_1, window_bounds = array<i64: 1024, 1>}, {pipeline_mode = #tpu.pipeline_mode<synchronous>, transform_indices = @transform_2, window_bounds = array<i64: 1024, 1>}, {transform_indices = @transform_3, window_bounds = array<i64: 448, 512>}, {transform_indices = @transform_4, window_bounds = array<i64: 1, 512>}]} {
    %c0 = arith.constant 0 : index
    %c0_0 = arith.constant 0 : index
    %0 = vector.load %arg1[%c0, %c0_0] : memref<1024x448xbf16, #tpu.memory_space<vmem>>, vector<1024x448xbf16>
    %c0_1 = arith.constant 0 : index
    %c0_2 = arith.constant 0 : index
    %1 = vector.load %arg4[%c0_1, %c0_2] : memref<448x512xbf16, #tpu.memory_space<vmem>>, vector<448x512xbf16>
    %cst = arith.constant dense<0.000000e+00> : vector<1024x512xf32>
    %2 = tpu.matmul %0, %1, %cst {dimension_numbers = #tpu.dot_dimension_numbers<[1], [0], [0], [1], [0, 0, 1, 1], [], []>} : vector<1024x448xbf16>, vector<448x512xbf16>, vector<1024x512xf32> -> vector<1024x512xf32>
    %c0_3 = arith.constant 0 : index
    %c0_4 = arith.constant 0 : index
    %3 = vector.load %arg2[%c0_3, %c0_4] : memref<1024x1xf32, #tpu.memory_space<vmem>>, vector<1024x1xf32>
    %4 = vector.broadcast %3 : vector<1024x1xf32> to vector<1024x512xf32>
    %5 = arith.addf %2, %4 : vector<1024x512xf32>
    %6 = math.tanh %5 : vector<1024x512xf32>
    %c0_5 = arith.constant 0 : index
    %c0_6 = arith.constant 0 : index
    %7 = vector.load %arg3[%c0_5, %c0_6] : memref<1024x1xf32, #tpu.memory_space<vmem>>, vector<1024x1xf32>
    %8 = vector.broadcast %7 : vector<1024x1xf32> to vector<1024x512xf32>
    %9 = arith.mulf %6, %8 : vector<1024x512xf32>
    %cst_7 = arith.constant dense<0.000000e+00> : vector<512xf32>
    %10 = vector.multi_reduction <add>, %9, %cst_7 [0] : vector<1024x512xf32> to vector<512xf32>
    %11 = vector.shape_cast %10 : vector<512xf32> to vector<1x512xf32>
    %c0_8 = arith.constant 0 : index
    %c0_9 = arith.constant 0 : index
    %12 = vector.load %arg5[%c0_8, %c0_9] : memref<1x512xf32, #tpu.memory_space<vmem>>, vector<1x512xf32>
    tpu.vector_store %arg5[%c0_8, %c0_9], %11 {strides = array<i32>} : memref<1x512xf32, #tpu.memory_space<vmem>>, vector<1x512xf32>,
    return
  }
  func.func @transform_0(%arg0: i32) -> (i32, i32) {
    %c0_i32 = arith.constant 0 : i32
    %c0_i32_0 = arith.constant 0 : i32
    %c0_i32_1 = arith.constant 0 : i32
    return %c0_i32, %c0_i32_0 : i32, i32
  }
  func.func @transform_1(%arg0: i32) -> (i32, i32) {
    %c0_i32 = arith.constant 0 : i32
    %c0_i32_0 = arith.constant 0 : i32
    %c0_i32_1 = arith.constant 0 : i32
    return %c0_i32, %c0_i32_0 : i32, i32
  }
  func.func @transform_2(%arg0: i32) -> (i32, i32) {
    %c0_i32 = arith.constant 0 : i32
    %c0_i32_0 = arith.constant 0 : i32
    %c0_i32_1 = arith.constant 0 : i32
    return %c0_i32, %c0_i32_0 : i32, i32
  }
  func.func @transform_3(%arg0: i32) -> (i32, i32) {
    %c0_i32 = arith.constant 0 : i32
    %c0_i32_0 = arith.constant 0 : i32
    return %c0_i32, %arg0 : i32, i32
  }
  func.func @transform_4(%arg0: i32) -> (i32, i32) {
    %c0_i32 = arith.constant 0 : i32
    %c0_i32_0 = arith.constant 0 : i32
    return %c0_i32, %arg0 : i32, i32
  }
}

</mosaic_0001>

<llo_original>
// kernel: net1_v3_forward.1
$region0: #{net1_v3_forward.1}
  #allocation0 [shape = 'u32[]', space=smem, size = 0x4, offset = 0x4, fixed_abs, tag = 'smem constant byte address 0x4 - core index']
  #allocation1 [shape = 'u32[72,128]{1,0:T(1,128)}', space=vmem, size = 0x9000, scoped, tag = 'internal scratch']
  %s0 = inlined_call_operand.vmem [shape: bf16[1024,448], index: 0, kind: input, shape index: {}]
  %s1 = inlined_call_operand.vmem [shape: f32[1024,1], index: 1, kind: input, shape index: {}]
  %s2 = inlined_call_operand.vmem [shape: f32[1024,1], index: 2, kind: input, shape index: {}]
  %s3 = inlined_call_operand.vmem [shape: bf16[448,512], index: 3, kind: input, shape index: {}]
  %s4 = inlined_call_operand.vmem [shape: f32[1,512], index: 4, kind: output, shape index: {}]
  %s5 = sld [smem:[#allocation0]]
  $region26: #{net1_v3_forward.1} parent=0
    _
  %s7 = ssub.s32 1, %s5
  %s8 = scalar_select 0, %s7, %s5
  // Predicated region
  $region2: #{net1_v3_forward.1} parent=0 // pred_check
    _
  $region3: #{net1_v3_forward.1} parent=0 // pred_check_branch
    %10 = sbr.rel (0) target = $region5
  $region4: #{net1_v3_forward.1} parent=0 // pred_region
    _
  $region5: #{net1_v3_forward.1} parent=0 // pred_fallthru
    _
  // Predicated region
  $region6: #{net1_v3_forward.1} parent=0 // pred_check
    _
  $region7: #{net1_v3_forward.1} parent=0 // pred_check_branch
    %12 = sbr.rel (0) target = $region9
  $region8: #{net1_v3_forward.1} parent=0 // pred_region
    _
  $region9: #{net1_v3_forward.1} parent=0 // pred_fallthru
    _
  // Predicated region
  $region10: #{net1_v3_forward.1} parent=0 // pred_check
    _
  $region11: #{net1_v3_forward.1} parent=0 // pred_check_branch
    %14 = sbr.rel (0) target = $region13
  $region12: #{net1_v3_forward.1} parent=0 // pred_region
    _
  $region13: #{net1_v3_forward.1} parent=0 // pred_fallthru
    _
  // Predicated region
  $region14: #{net1_v3_forward.1} parent=0 // pred_check
    _
  $region15: #{net1_v3_forward.1} parent=0 // pred_check_branch
    %16 = sbr.rel (0) target = $region17
  $region16: #{net1_v3_forward.1} parent=0 // pred_region
    _
  $region17: #{net1_v3_forward.1} parent=0 // pred_fallthru
    _
  %v18 = vld [vmem:[%s0] sm:$0xff]
  %v19 = vld [vmem:[%s0 + $0x8] sm:$0xff]
  %v20 = vld [vmem:[%s0 + $0x10] sm:$0xff]
  %v21 = vld [vmem:[%s0 + $0x18] sm:$0xff]
  %v22 = vld [vmem:[%s0 + $0x20] sm:$0xff]
  %v23 = vld [vmem:[%s0 + $0x28] sm:$0xff]
  %v24 = vld [vmem:[%s0 + $0x30] sm:$0xff]
  %v25 = vld [vmem:[%s0 + $0x38] sm:$0xff]
  %v26 = vld [vmem:[%s0 + $0x40] sm:$0xff]
  %v27 = vld [vmem:[%s0 + $0x48] sm:$0xff]
  %v28 = vld [vmem:[%s0 + $0x50] sm:$0xff]
  %v29 = vld [vmem:[%s0 + $0x58] sm:$0xff]
  %v30 = vld [vmem:[%s0 + $0x60] sm:$0xff]
  %v31 = vld [vmem:[%s0 + $0x68] sm:$0xff]
  %v32 = vld [vmem:[%s0 + $0x70] sm:$0xff]
  %v33 = vld [vmem:[%s0 + $0x78] sm:$0xff]
  %v34 = vld [vmem:[%s0 + $0x80] sm:$0xff]
  %v35 = vld [vmem:[%s0 + $0x88] sm:$0xff]
  %v36 = vld [vmem:[%s0 + $0x90] sm:$0xff]
  %v37 = vld [vmem:[%s0 + $0x98] sm:$0xff]
  %v38 = vld [vmem:[%s0 + $0xa0] sm:$0xff]
  %v39 = vld [vmem:[%s0 + $0xa8] sm:$0xff]
  %v40 = vld [vmem:[%s0 + $0xb0] sm:$0xff]
  %v41 = vld [vmem:[%s0 + $0xb8] sm:$0xff]
  %v42 = vld [vmem:[%s0 + $0xc0] sm:$0xff]
  %v43 = vld [vmem:[%s0 + $0xc8] sm:$0xff]
  %v44 = vld [vmem:[%s0 + $0xd0] sm:$0xff]
  %v45 = vld [vmem:[%s0 + $0xd8] sm:$0xff]
  %v46 = vld [vmem:[%s0 + $0xe0] sm:$0xff]
  %v47 = vld [vmem:[%s0 + $0xe8] sm:$0xff]
  %v48 = vld [vmem:[%s0 + $0xf0] sm:$0xff]
  %v49 = vld [vmem:[%s0 + $0xf8] sm:$0xff]
  %v50 = vld [vmem:[%s0 + $0x100] sm:$0xff]
  %v51 = vld [vmem:[%s0 + $0x108] sm:$0xff]
  %v52 = vld [vmem:[%s0 + $0x110] sm:$0xff]
  %v53 = vld [vmem:[%s0 + $0x118] sm:$0xff]
  %v54 = vld [vmem:[%s0 + $0x120] sm:$0xff]
  %v55 = vld [vmem:[%s0 + $0x128] sm:$0xff]
  %v56 = vld [vmem:[%s0 + $0x130] sm:$0xff]
  %v57 = vld [vmem:[%s0 + $0x138] sm:$0xff]
  %v58 = vld [vmem:[%s0 + $0x140] sm:$0xff]
  %v59 = vld [vmem:[%s0 + $0x148] sm:$0xff]
  %v60 = vld [vmem:[%s0 + $0x150] sm:$0xff]
  %v61 = vld [vmem:[%s0 + $0x158] sm:$0xff]
  %v62 = vld [vmem:[%s0 + $0x160] sm:$0xff]
  %v63 = vld [vmem:[%s0 + $0x168] sm:$0xff]
  %v64 = vld [vmem:[%s0 + $0x170] sm:$0xff]
  %v65 = vld [vmem:[%s0 + $0x178] sm:$0xff]
  %v66 = vld [vmem:[%s0 + $0x180] sm:$0xff]
  %v67 = vld [vmem:[%s0 + $0x188] sm:$0xff]
  %v68 = vld [vmem:[%s0 + $0x190] sm:$0xff]
  %v69 = vld [vmem:[%s0 + $0x198] sm:$0xff]
  %v70 = vld [vmem:[%s0 + $0x1a0] sm:$0xff]
  %v71 = vld [vmem:[%s0 + $0x1a8] sm:$0xff]
  %v72 = vld [vmem:[%s0 + $0x1b0] sm:$0xff]
  %v73 = vld [vmem:[%s0 + $0x1b8] sm:$0xff]
  %v74 = vld [vmem:[%s0 + $0x1c0] sm:$0xff]
  %v75 = vld [vmem:[%s0 + $0x1c8] sm:$0xff]
  %v76 = vld [vmem:[%s0 + $0x1d0] sm:$0xff]
  %v77 = vld [vmem:[%s0 + $0x1d8] sm:$0xff]
  %v78 = vld [vmem:[%s0 + $0x1e0] sm:$0xff]
  %v79 = vld [vmem:[%s0 + $0x1e8] sm:$0xff]
  %v80 = vld [vmem:[%s0 + $0x1f0] sm:$0xff]
  %v81 = vld [vmem:[%s0 + $0x1f8] sm:$0xff]
  %v82 = vld [vmem:[%s0 + $0x200] sm:$0xff]
  %v83 = vld [vmem:[%s0 + $0x208] sm:$0xff]
  %v84 = vld [vmem:[%s0 + $0x210] sm:$0xff]
  %v85 = vld [vmem:[%s0 + $0x218] sm:$0xff]
  %v86 = vld [vmem:[%s0 + $0x220] sm:$0xff]
  %v87 = vld [vmem:[%s0 + $0x228] sm:$0xff]
  %v88 = vld [vmem:[%s0 + $0x230] sm:$0xff]
  %v89 = vld [vmem:[%s0 + $0x238] sm:$0xff]
  %v90 = vld [vmem:[%s0 + $0x240] sm:$0xff]
  %v91 = vld [vmem:[%s0 + $0x248] sm:$0xff]
  %v92 = vld [vmem:[%s0 + $0x250] sm:$0xff]
  %v93 = vld [vmem:[%s0 + $0x258] sm:$0xff]
  %v94 = vld [vmem:[%s0 + $0x260] sm:$0xff]
  %v95 = vld [vmem:[%s0 + $0x268] sm:$0xff]
  %v96 = vld [vmem:[%s0 + $0x270] sm:$0xff]
  %v97 = vld [vmem:[%s0 + $0x278] sm:$0xff]
  %v98 = vld [vmem:[%s0 + $0x280] sm:$0xff]
  %v99 = vld [vmem:[%s0 + $0x288] sm:$0xff]
  %v100 = vld [vmem:[%s0 + $0x290] sm:$0xff]
  %v101 = vld [vmem:[%s0 + $0x298] sm:$0xff]
  %v102 = vld [vmem:[%s0 + $0x2a0] sm:$0xff]
  %v103 = vld [vmem:[%s0 + $0x2a8] sm:$0xff]
  %v104 = vld [vmem:[%s0 + $0x2b0] sm:$0xff]
  %v105 = vld [vmem:[%s0 + $0x2b8] sm:$0xff]
  %v106 = vld [vmem:[%s0 + $0x2c0] sm:$0xff]
  %v107 = vld [vmem:[%s0 + $0x2c8] sm:$0xff]
  %v108 = vld [vmem:[%s0 + $0x2d0] sm:$0xff]
  %v109 = vld [vmem:[%s0 + $0x2d8] sm:$0xff]
  %v110 = vld [vmem:[%s0 + $0x2e0] sm:$0xff]
  %v111 = vld [vmem:[%s0 + $0x2e8] sm:$0xff]
  %v112 = vld [vmem:[%s0 + $0x2f0] sm:$0xff]
  %v113 = vld [vmem:[%s0 + $0x2f8] sm:$0xff]
  %v114 = vld [vmem:[%s0 + $0x300] sm:$0xff]
  %v115 = vld [vmem:[%s0 + $0x308] sm:$0xff]
  %v116 = vld [vmem:[%s0 + $0x310] sm:$0xff]
  %v117 = vld [vmem:[%s0 + $0x318] sm:$0xff]
  %v118 = vld [vmem:[%s0 + $0x320] sm:$0xff]
  %v119 = vld [vmem:[%s0 + $0x328] sm:$0xff]
  %v120 = vld [vmem:[%s0 + $0x330] sm:$0xff]
  %v121 = vld [vmem:[%s0 + $0x338] sm:$0xff]
  %v122 = vld [vmem:[%s0 + $0x340] sm:$0xff]
  %v123 = vld [vmem:[%s0 + $0x348] sm:$0xff]
  %v124 = vld [vmem:[%s0 + $0x350] sm:$0xff]
  %v125 = vld [vmem:[%s0 + $0x358] sm:$0xff]
  %v126 = vld [vmem:[%s0 + $0x360] sm:$0xff]
  %v127 = vld [vmem:[%s0 + $0x368] sm:$0xff]
  %v128 = vld [vmem:[%s0 + $0x370] sm:$0xff]
  %v129 = vld [vmem:[%s0 + $0x378] sm:$0xff]
  %v130 = vld [vmem:[%s0 + $0x380] sm:$0xff]
  %v131 = vld [vmem:[%s0 + $0x388] sm:$0xff]
  %v132 = vld [vmem:[%s0 + $0x390] sm:$0xff]
  %v133 = vld [vmem:[%s0 + $0x398] sm:$0xff]
  %v134 = vld [vmem:[%s0 + $0x3a0] sm:$0xff]
  %v135 = vld [vmem:[%s0 + $0x3a8] sm:$0xff]
  %v136 = vld [vmem:[%s0 + $0x3b0] sm:$0xff]
  %v137 = vld [vmem:[%s0 + $0x3b8] sm:$0xff]
  %v138 = vld [vmem:[%s0 + $0x3c0] sm:$0xff]
  %v139 = vld [vmem:[%s0 + $0x3c8] sm:$0xff]
  %v140 = vld [vmem:[%s0 + $0x3d0] sm:$0xff]
  %v141 = vld [vmem:[%s0 + $0x3d8] sm:$0xff]
  %v142 = vld [vmem:[%s0 + $0x3e0] sm:$0xff]
  %v143 = vld [vmem:[%s0 + $0x3e8] sm:$0xff]
  %v144 = vld [vmem:[%s0 + $0x3f0] sm:$0xff]
  %v145 = vld [vmem:[%s0 + $0x3f8] sm:$0xff]
  %v146 = vld [vmem:[%s0 + $0x400] sm:$0xff]
  %v147 = vld [vmem:[%s0 + $0x408] sm:$0xff]
  %v148 = vld [vmem:[%s0 + $0x410] sm:$0xff]
  %v149 = vld [vmem:[%s0 + $0x418] sm:$0xff]
  %v150 = vld [vmem:[%s0 + $0x420] sm:$0xff]
  %v151 = vld [vmem:[%s0 + $0x428] sm:$0xff]
  %v152 = vld [vmem:[%s0 + $0x430] sm:$0xff]
  %v153 = vld [vmem:[%s0 + $0x438] sm:$0xff]
  %v154 = vld [vmem:[%s0 + $0x440] sm:$0xff]
  %v155 = vld [vmem:[%s0 + $0x448] sm:$0xff]
  %v156 = vld [vmem:[%s0 + $0x450] sm:$0xff]
  %v157 = vld [vmem:[%s0 + $0x458] sm:$0xff]
  %v158 = vld [vmem:[%s0 + $0x460] sm:$0xff]
  %v159 = vld [vmem:[%s0 + $0x468] sm:$0xff]
  %v160 = vld [vmem:[%s0 + $0x470] sm:$0xff]
  %v161 = vld [vmem:[%s0 + $0x478] sm:$0xff]
  %v162 = vld [vmem:[%s0 + $0x480] sm:$0xff]
  %v163 = vld [vmem:[%s0 + $0x488] sm:$0xff]
  %v164 = vld [vmem:[%s0 + $0x490] sm:$0xff]
  %v165 = vld [vmem:[%s0 + $0x498] sm:$0xff]
  %v166 = vld [vmem:[%s0 + $0x4a0] sm:$0xff]
  %v167 = vld [vmem:[%s0 + $0x4a8] sm:$0xff]
  %v168 = vld [vmem:[%s0 + $0x4b0] sm:$0xff]
  %v169 = vld [vmem:[%s0 + $0x4b8] sm:$0xff]
  %v170 = vld [vmem:[%s0 + $0x4c0] sm:$0xff]
  %v171 = vld [vmem:[%s0 + $0x4c8] sm:$0xff]
  %v172 = vld [vmem:[%s0 + $0x4d0] sm:$0xff]
  %v173 = vld [vmem:[%s0 + $0x4d8] sm:$0xff]
  %v174 = vld [vmem:[%s0 + $0x4e0] sm:$0xff]
  %v175 = vld [vmem:[%s0 + $0x4e8] sm:$0xff]
  %v176 = vld [vmem:[%s0 + $0x4f0] sm:$0xff]
  %v177 = vld [vmem:[%s0 + $0x4f8] sm:$0xff]
  %v178 = vld [vmem:[%s0 + $0x500] sm:$0xff]
  %v179 = vld [vmem:[%s0 + $0x508] sm:$0xff]
  %v180 = vld [vmem:[%s0 + $0x510] sm:$0xff]
  %v181 = vld [vmem:[%s0 + $0x518] sm:$0xff]
  %v182 = vld [vmem:[%s0 + $0x520] sm:$0xff]
  %v183 = vld [vmem:[%s0 + $0x528] sm:$0xff]
  %v184 = vld [vmem:[%s0 + $0x530] sm:$0xff]
  %v185 = vld [vmem:[%s0 + $0x538] sm:$0xff]
  %v186 = vld [vmem:[%s0 + $0x540] sm:$0xff]
  %v187 = vld [vmem:[%s0 + $0x548] sm:$0xff]
  %v188 = vld [vmem:[%s0 + $0x550] sm:$0xff]
  %v189 = vld [vmem:[%s0 + $0x558] sm:$0xff]
  %v190 = vld [vmem:[%s0 + $0x560] sm:$0xff]
  %v191 = vld [vmem:[%s0 + $0x568] sm:$0xff]
  %v192 = vld [vmem:[%s0 + $0x570] sm:$0xff]
  %v193 = vld [vmem:[%s0 + $0x578] sm:$0xff]
  %v194 = vld [vmem:[%s0 + $0x580] sm:$0xff]
  %v195 = vld [vmem:[%s0 + $0x588] sm:$0xff]
  %v196 = vld [vmem:[%s0 + $0x590] sm:$0xff]
  %v197 = vld [vmem:[%s0 + $0x598] sm:$0xff]
  %v198 = vld [vmem:[%s0 + $0x5a0] sm:$0xff]
  %v199 = vld [vmem:[%s0 + $0x5a8] sm:$0xff]
  %v200 = vld [vmem:[%s0 + $0x5b0] sm:$0xff]
  %v201 = vld [vmem:[%s0 + $0x5b8] sm:$0xff]
  %v202 = vld [vmem:[%s0 + $0x5c0] sm:$0xff]
  %v203 = vld [vmem:[%s0 + $0x5c8] sm:$0xff]
  %v204 = vld [vmem:[%s0 + $0x5d0] sm:$0xff]
  %v205 = vld [vmem:[%s0 + $0x5d8] sm:$0xff]
  %v206 = vld [vmem:[%s0 + $0x5e0] sm:$0xff]
  %v207 = vld [vmem:[%s0 + $0x5e8] sm:$0xff]
  %v208 = vld [vmem:[%s0 + $0x5f0] sm:$0xff]
  %v209 = vld [vmem:[%s0 + $0x5f8] sm:$0xff]
  %v210 = vld [vmem:[%s0 + $0x600] sm:$0xff]
  %v211 = vld [vmem:[%s0 + $0x608] sm:$0xff]
  %v212 = vld [vmem:[%s0 + $0x610] sm:$0xff]
  %v213 = vld [vmem:[%s0 + $0x618] sm:$0xff]
  %v214 = vld [vmem:[%s0 + $0x620] sm:$0xff]
  %v215 = vld [vmem:[%s0 + $0x628] sm:$0xff]
  %v216 = vld [vmem:[%s0 + $0x630] sm:$0xff]
  %v217 = vld [vmem:[%s0 + $0x638] sm:$0xff]
  %v218 = vld [vmem:[%s0 + $0x640] sm:$0xff]
  %v219 = vld [vmem:[%s0 + $0x648] sm:$0xff]
  %v220 = vld [vmem:[%s0 + $0x650] sm:$0xff]
  %v221 = vld [vmem:[%s0 + $0x658] sm:$0xff]
  %v222 = vld [vmem:[%s0 + $0x660] sm:$0xff]
  %v223 = vld [vmem:[%s0 + $0x668] sm:$0xff]
  %v224 = vld [vmem:[%s0 + $0x670] sm:$0xff]
  %v225 = vld [vmem:[%s0 + $0x678] sm:$0xff]
  %v226 = vld [vmem:[%s0 + $0x680] sm:$0xff]
  %v227 = vld [vmem:[%s0 + $0x688] sm:$0xff]
  %v228 = vld [vmem:[%s0 + $0x690] sm:$0xff]
  %v229 = vld [vmem:[%s0 + $0x698] sm:$0xff]
  %v230 = vld [vmem:[%s0 + $0x6a0] sm:$0xff]
  %v231 = vld [vmem:[%s0 + $0x6a8] sm:$0xff]
  %v232 = vld [vmem:[%s0 + $0x6b0] sm:$0xff]
  %v233 = vld [vmem:[%s0 + $0x6b8] sm:$0xff]
  %v234 = vld [vmem:[%s0 + $0x6c0] sm:$0xff]
  %v235 = vld [vmem:[%s0 + $0x6c8] sm:$0xff]
  %v236 = vld [vmem:[%s0 + $0x6d0] sm:$0xff]
  %v237 = vld [vmem:[%s0 + $0x6d8] sm:$0xff]
  %v238 = vld [vmem:[%s0 + $0x6e0] sm:$0xff]
  %v239 = vld [vmem:[%s0 + $0x6e8] sm:$0xff]
  %v240 = vld [vmem:[%s0 + $0x6f0] sm:$0xff]
  %v241 = vld [vmem:[%s0 + $0x6f8] sm:$0xff]
  %v242 = vld [vmem:[%s0 + $0x700] sm:$0xff]
  %v243 = vld [vmem:[%s0 + $0x708] sm:$0xff]
  %v244 = vld [vmem:[%s0 + $0x710] sm:$0xff]
  %v245 = vld [vmem:[%s0 + $0x718] sm:$0xff]
  %v246 = vld [vmem:[%s0 + $0x720] sm:$0xff]
  %v247 = vld [vmem:[%s0 + $0x728] sm:$0xff]
  %v248 = vld [vmem:[%s0 + $0x730] sm:$0xff]
  %v249 = vld [vmem:[%s0 + $0x738] sm:$0xff]
  %v250 = vld [vmem:[%s0 + $0x740] sm:$0xff]
  %v251 = vld [vmem:[%s0 + $0x748] sm:$0xff]
  %v252 = vld [vmem:[%s0 + $0x750] sm:$0xff]
  %v253 = vld [vmem:[%s0 + $0x758] sm:$0xff]
  %v254 = vld [vmem:[%s0 + $0x760] sm:$0xff]
  %v255 = vld [vmem:[%s0 + $0x768] sm:$0xff]
  %v256 = vld [vmem:[%s0 + $0x770] sm:$0xff]
  %v257 = vld [vmem:[%s0 + $0x778] sm:$0xff]
  %v258 = vld [vmem:[%s0 + $0x780] sm:$0xff]
  %v259 = vld [vmem:[%s0 + $0x788] sm:$0xff]
  %v260 = vld [vmem:[%s0 + $0x790] sm:$0xff]
  %v261 = vld [vmem:[%s0 + $0x798] sm:$0xff]
  %v262 = vld [vmem:[%s0 + $0x7a0] sm:$0xff]
  %v263 = vld [vmem:[%s0 + $0x7a8] sm:$0xff]
  %v264 = vld [vmem:[%s0 + $0x7b0] sm:$0xff]
  %v265 = vld [vmem:[%s0 + $0x7b8] sm:$0xff]
  %v266 = vld [vmem:[%s0 + $0x7c0] sm:$0xff]
  %v267 = vld [vmem:[%s0 + $0x7c8] sm:$0xff]
  %v268 = vld [vmem:[%s0 + $0x7d0] sm:$0xff]
  %v269 = vld [vmem:[%s0 + $0x7d8] sm:$0xff]
  %v270 = vld [vmem:[%s0 + $0x7e0] sm:$0xff]
  %v271 = vld [vmem:[%s0 + $0x7e8] sm:$0xff]
  %v272 = vld [vmem:[%s0 + $0x7f0] sm:$0xff]
  %v273 = vld [vmem:[%s0 + $0x7f8] sm:$0xff]
  %v274 = vld [vmem:[%s3] sm:$0xff]
  %v275 = vld [vmem:[%s3 + $0x8] sm:$0xff]
  %v276 = vld [vmem:[%s3 + $0x10] sm:$0xff]
  %v277 = vld [vmem:[%s3 + $0x18] sm:$0xff]
  %v278 = vld [vmem:[%s3 + $0x20] sm:$0xff]
  %v279 = vld [vmem:[%s3 + $0x28] sm:$0xff]
  %v280 = vld [vmem:[%s3 + $0x30] sm:$0xff]
  %v281 = vld [vmem:[%s3 + $0x38] sm:$0xff]
  %v282 = vld [vmem:[%s3 + $0x40] sm:$0xff]
  %v283 = vld [vmem:[%s3 + $0x48] sm:$0xff]
  %v284 = vld [vmem:[%s3 + $0x50] sm:$0xff]
  %v285 = vld [vmem:[%s3 + $0x58] sm:$0xff]
  %v286 = vld [vmem:[%s3 + $0x60] sm:$0xff]
  %v287 = vld [vmem:[%s3 + $0x68] sm:$0xff]
  %v288 = vld [vmem:[%s3 + $0x70] sm:$0xff]
  %v289 = vld [vmem:[%s3 + $0x78] sm:$0xff]
  %v290 = vld [vmem:[%s3 + $0x80] sm:$0xff]
  %v291 = vld [vmem:[%s3 + $0x88] sm:$0xff]
  %v292 = vld [vmem:[%s3 + $0x90] sm:$0xff]
  %v293 = vld [vmem:[%s3 + $0x98] sm:$0xff]
  %v294 = vld [vmem:[%s3 + $0xa0] sm:$0xff]
  %v295 = vld [vmem:[%s3 + $0xa8] sm:$0xff]
  %v296 = vld [vmem:[%s3 + $0xb0] sm:$0xff]
  %v297 = vld [vmem:[%s3 + $0xb8] sm:$0xff]
  %v298 = vld [vmem:[%s3 + $0xc0] sm:$0xff]
  %v299 = vld [vmem:[%s3 + $0xc8] sm:$0xff]
  %v300 = vld [vmem:[%s3 + $0xd0] sm:$0xff]
  %v301 = vld [vmem:[%s3 + $0xd8] sm:$0xff]
  %v302 = vld [vmem:[%s3 + $0xe0] sm:$0xff]
  %v303 = vld [vmem:[%s3 + $0xe8] sm:$0xff]
  %v304 = vld [vmem:[%s3 + $0xf0] sm:$0xff]
  %v305 = vld [vmem:[%s3 + $0xf8] sm:$0xff]
  %v306 = vld [vmem:[%s3 + $0x100] sm:$0xff]
  %v307 = vld [vmem:[%s3 + $0x108] sm:$0xff]
  %v308 = vld [vmem:[%s3 + $0x110] sm:$0xff]
  %v309 = vld [vmem:[%s3 + $0x118] sm:$0xff]
  %v310 = vld [vmem:[%s3 + $0x120] sm:$0xff]
  %v311 = vld [vmem:[%s3 + $0x128] sm:$0xff]
  %v312 = vld [vmem:[%s3 + $0x130] sm:$0xff]
  %v313 = vld [vmem:[%s3 + $0x138] sm:$0xff]
  %v314 = vld [vmem:[%s3 + $0x140] sm:$0xff]
  %v315 = vld [vmem:[%s3 + $0x148] sm:$0xff]
  %v316 = vld [vmem:[%s3 + $0x150] sm:$0xff]
  %v317 = vld [vmem:[%s3 + $0x158] sm:$0xff]
  %v318 = vld [vmem:[%s3 + $0x160] sm:$0xff]
  %v319 = vld [vmem:[%s3 + $0x168] sm:$0xff]
  %v320 = vld [vmem:[%s3 + $0x170] sm:$0xff]
  %v321 = vld [vmem:[%s3 + $0x178] sm:$0xff]
  %v322 = vld [vmem:[%s3 + $0x180] sm:$0xff]
  %v323 = vld [vmem:[%s3 + $0x188] sm:$0xff]
  %v324 = vld [vmem:[%s3 + $0x190] sm:$0xff]
  %v325 = vld [vmem:[%s3 + $0x198] sm:$0xff]
  %v326 = vld [vmem:[%s3 + $0x1a0] sm:$0xff]
  %v327 = vld [vmem:[%s3 + $0x1a8] sm:$0xff]
  %v328 = vld [vmem:[%s3 + $0x1b0] sm:$0xff]
  %v329 = vld [vmem:[%s3 + $0x1b8] sm:$0xff]
  %v330 = vld [vmem:[%s3 + $0x1c0] sm:$0xff]
  %v331 = vld [vmem:[%s3 + $0x1c8] sm:$0xff]
  %v332 = vld [vmem:[%s3 + $0x1d0] sm:$0xff]
  %v333 = vld [vmem:[%s3 + $0x1d8] sm:$0xff]
  %v334 = vld [vmem:[%s3 + $0x1e0] sm:$0xff]
  %v335 = vld [vmem:[%s3 + $0x1e8] sm:$0xff]
  %v336 = vld [vmem:[%s3 + $0x1f0] sm:$0xff]
  %v337 = vld [vmem:[%s3 + $0x1f8] sm:$0xff]
  %v338 = vld [vmem:[%s3 + $0x200] sm:$0xff]
  %v339 = vld [vmem:[%s3 + $0x208] sm:$0xff]
  %v340 = vld [vmem:[%s3 + $0x210] sm:$0xff]
  %v341 = vld [vmem:[%s3 + $0x218] sm:$0xff]
  %v342 = vld [vmem:[%s3 + $0x220] sm:$0xff]
  %v343 = vld [vmem:[%s3 + $0x228] sm:$0xff]
  %v344 = vld [vmem:[%s3 + $0x230] sm:$0xff]
  %v345 = vld [vmem:[%s3 + $0x238] sm:$0xff]
  %v346 = vld [vmem:[%s3 + $0x240] sm:$0xff]
  %v347 = vld [vmem:[%s3 + $0x248] sm:$0xff]
  %v348 = vld [vmem:[%s3 + $0x250] sm:$0xff]
  %v349 = vld [vmem:[%s3 + $0x258] sm:$0xff]
  %v350 = vld [vmem:[%s3 + $0x260] sm:$0xff]
  %v351 = vld [vmem:[%s3 + $0x268] sm:$0xff]
  %v352 = vld [vmem:[%s3 + $0x270] sm:$0xff]
  %v353 = vld [vmem:[%s3 + $0x278] sm:$0xff]
  %v354 = vld [vmem:[%s3 + $0x280] sm:$0xff]
  %v355 = vld [vmem:[%s3 + $0x288] sm:$0xff]
  %v356 = vld [vmem:[%s3 + $0x290] sm:$0xff]
  %v357 = vld [vmem:[%s3 + $0x298] sm:$0xff]
  %v358 = vld [vmem:[%s3 + $0x2a0] sm:$0xff]
  %v359 = vld [vmem:[%s3 + $0x2a8] sm:$0xff]
  %v360 = vld [vmem:[%s3 + $0x2b0] sm:$0xff]
  %v361 = vld [vmem:[%s3 + $0x2b8] sm:$0xff]
  %v362 = vld [vmem:[%s3 + $0x2c0] sm:$0xff]
  %v363 = vld [vmem:[%s3 + $0x2c8] sm:$0xff]
  %v364 = vld [vmem:[%s3 + $0x2d0] sm:$0xff]
  %v365 = vld [vmem:[%s3 + $0x2d8] sm:$0xff]
  %v366 = vld [vmem:[%s3 + $0x2e0] sm:$0xff]
  %v367 = vld [vmem:[%s3 + $0x2e8] sm:$0xff]
  %v368 = vld [vmem:[%s3 + $0x2f0] sm:$0xff]
  %v369 = vld [vmem:[%s3 + $0x2f8] sm:$0xff]
  %v370 = vld [vmem:[%s3 + $0x300] sm:$0xff]
  %v371 = vld [vmem:[%s3 + $0x308] sm:$0xff]
  %v372 = vld [vmem:[%s3 + $0x310] sm:$0xff]
  %v373 = vld [vmem:[%s3 + $0x318] sm:$0xff]
  %v374 = vld [vmem:[%s3 + $0x320] sm:$0xff]
  %v375 = vld [vmem:[%s3 + $0x328] sm:$0xff]
  %v376 = vld [vmem:[%s3 + $0x330] sm:$0xff]
  %v377 = vld [vmem:[%s3 + $0x338] sm:$0xff]
  %v378 = vld [vmem:[%s3 + $0x340] sm:$0xff]
  %v379 = vld [vmem:[%s3 + $0x348] sm:$0xff]
  %v380 = vld [vmem:[%s3 + $0x350] sm:$0xff]
  %v381 = vld [vmem:[%s3 + $0x358] sm:$0xff]
  %v382 = vld [vmem:[%s3 + $0x360] sm:$0xff]
  %v383 = vld [vmem:[%s3 + $0x368] sm:$0xff]
  %v384 = vld [vmem:[%s3 + $0x370] sm:$0xff]
  %v385 = vld [vmem:[%s3 + $0x378] sm:$0xff]
  %v386 = vld [vmem:[%s1] sm:$0xff]
  %v387 = vld [vmem:[%s1 + $0x8] sm:$0xff]
  %v388 = vld [vmem:[%s1 + $0x10] sm:$0xff]
  %v389 = vld [vmem:[%s1 + $0x18] sm:$0xff]
  %v390 = vld [vmem:[%s1 + $0x20] sm:$0xff]
  %v391 = vld [vmem:[%s1 + $0x28] sm:$0xff]
  %v392 = vld [vmem:[%s1 + $0x30] sm:$0xff]
  %v393 = vld [vmem:[%s1 + $0x38] sm:$0xff]
  %v394 = vld [vmem:[%s1 + $0x40] sm:$0xff]
  %v395 = vld [vmem:[%s1 + $0x48] sm:$0xff]
  %v396 = vld [vmem:[%s1 + $0x50] sm:$0xff]
  %v397 = vld [vmem:[%s1 + $0x58] sm:$0xff]
  %v398 = vld [vmem:[%s1 + $0x60] sm:$0xff]
  %v399 = vld [vmem:[%s1 + $0x68] sm:$0xff]
  %v400 = vld [vmem:[%s1 + $0x70] sm:$0xff]
  %v401 = vld [vmem:[%s1 + $0x78] sm:$0xff]
  %v402 = vld [vmem:[%s1 + $0x80] sm:$0xff]
  %v403 = vld [vmem:[%s1 + $0x88] sm:$0xff]
  %v404 = vld [vmem:[%s1 + $0x90] sm:$0xff]
  %v405 = vld [vmem:[%s1 + $0x98] sm:$0xff]
  %v406 = vld [vmem:[%s1 + $0xa0] sm:$0xff]
  %v407 = vld [vmem:[%s1 + $0xa8] sm:$0xff]
  %v408 = vld [vmem:[%s1 + $0xb0] sm:$0xff]
  %v409 = vld [vmem:[%s1 + $0xb8] sm:$0xff]
  %v410 = vld [vmem:[%s1 + $0xc0] sm:$0xff]
  %v411 = vld [vmem:[%s1 + $0xc8] sm:$0xff]
  %v412 = vld [vmem:[%s1 + $0xd0] sm:$0xff]
  %v413 = vld [vmem:[%s1 + $0xd8] sm:$0xff]
  %v414 = vld [vmem:[%s1 + $0xe0] sm:$0xff]
  %v415 = vld [vmem:[%s1 + $0xe8] sm:$0xff]
  %v416 = vld [vmem:[%s1 + $0xf0] sm:$0xff]
  %v417 = vld [vmem:[%s1 + $0xf8] sm:$0xff]
  %v418 = vld [vmem:[%s1 + $0x100] sm:$0xff]
  %v419 = vld [vmem:[%s1 + $0x108] sm:$0xff]
  %v420 = vld [vmem:[%s1 + $0x110] sm:$0xff]
  %v421 = vld [vmem:[%s1 + $0x118] sm:$0xff]
  %v422 = vld [vmem:[%s1 + $0x120] sm:$0xff]
  %v423 = vld [vmem:[%s1 + $0x128] sm:$0xff]
  %v424 = vld [vmem:[%s1 + $0x130] sm:$0xff]
  %v425 = vld [vmem:[%s1 + $0x138] sm:$0xff]
  %v426 = vld [vmem:[%s1 + $0x140] sm:$0xff]
  %v427 = vld [vmem:[%s1 + $0x148] sm:$0xff]
  %v428 = vld [vmem:[%s1 + $0x150] sm:$0xff]
  %v429 = vld [vmem:[%s1 + $0x158] sm:$0xff]
  %v430 = vld [vmem:[%s1 + $0x160] sm:$0xff]
  %v431 = vld [vmem:[%s1 + $0x168] sm:$0xff]
  %v432 = vld [vmem:[%s1 + $0x170] sm:$0xff]
  %v433 = vld [vmem:[%s1 + $0x178] sm:$0xff]
  %v434 = vld [vmem:[%s1 + $0x180] sm:$0xff]
  %v435 = vld [vmem:[%s1 + $0x188] sm:$0xff]
  %v436 = vld [vmem:[%s1 + $0x190] sm:$0xff]
  %v437 = vld [vmem:[%s1 + $0x198] sm:$0xff]
  %v438 = vld [vmem:[%s1 + $0x1a0] sm:$0xff]
  %v439 = vld [vmem:[%s1 + $0x1a8] sm:$0xff]
  %v440 = vld [vmem:[%s1 + $0x1b0] sm:$0xff]
  %v441 = vld [vmem:[%s1 + $0x1b8] sm:$0xff]
  %v442 = vld [vmem:[%s1 + $0x1c0] sm:$0xff]
  %v443 = vld [vmem:[%s1 + $0x1c8] sm:$0xff]
  %v444 = vld [vmem:[%s1 + $0x1d0] sm:$0xff]
  %v445 = vld [vmem:[%s1 + $0x1d8] sm:$0xff]
  %v446 = vld [vmem:[%s1 + $0x1e0] sm:$0xff]
  %v447 = vld [vmem:[%s1 + $0x1e8] sm:$0xff]
  %v448 = vld [vmem:[%s1 + $0x1f0] sm:$0xff]
  %v449 = vld [vmem:[%s1 + $0x1f8] sm:$0xff]
  %v450 = vld [vmem:[%s1 + $0x200] sm:$0xff]
  %v451 = vld [vmem:[%s1 + $0x208] sm:$0xff]
  %v452 = vld [vmem:[%s1 + $0x210] sm:$0xff]
  %v453 = vld [vmem:[%s1 + $0x218] sm:$0xff]
  %v454 = vld [vmem:[%s1 + $0x220] sm:$0xff]
  %v455 = vld [vmem:[%s1 + $0x228] sm:$0xff]
  %v456 = vld [vmem:[%s1 + $0x230] sm:$0xff]
  %v457 = vld [vmem:[%s1 + $0x238] sm:$0xff]
  %v458 = vld [vmem:[%s1 + $0x240] sm:$0xff]
  %v459 = vld [vmem:[%s1 + $0x248] sm:$0xff]
  %v460 = vld [vmem:[%s1 + $0x250] sm:$0xff]
  %v461 = vld [vmem:[%s1 + $0x258] sm:$0xff]
  %v462 = vld [vmem:[%s1 + $0x260] sm:$0xff]
  %v463 = vld [vmem:[%s1 + $0x268] sm:$0xff]
  %v464 = vld [vmem:[%s1 + $0x270] sm:$0xff]
  %v465 = vld [vmem:[%s1 + $0x278] sm:$0xff]
  %v466 = vld [vmem:[%s1 + $0x280] sm:$0xff]
  %v467 = vld [vmem:[%s1 + $0x288] sm:$0xff]
  %v468 = vld [vmem:[%s1 + $0x290] sm:$0xff]
  %v469 = vld [vmem:[%s1 + $0x298] sm:$0xff]
  %v470 = vld [vmem:[%s1 + $0x2a0] sm:$0xff]
  %v471 = vld [vmem:[%s1 + $0x2a8] sm:$0xff]
  %v472 = vld [vmem:[%s1 + $0x2b0] sm:$0xff]
  %v473 = vld [vmem:[%s1 + $0x2b8] sm:$0xff]
  %v474 = vld [vmem:[%s1 + $0x2c0] sm:$0xff]
  %v475 = vld [vmem:[%s1 + $0x2c8] sm:$0xff]
  %v476 = vld [vmem:[%s1 + $0x2d0] sm:$0xff]
  %v477 = vld [vmem:[%s1 + $0x2d8] sm:$0xff]
  %v478 = vld [vmem:[%s1 + $0x2e0] sm:$0xff]
  %v479 = vld [vmem:[%s1 + $0x2e8] sm:$0xff]
  %v480 = vld [vmem:[%s1 + $0x2f0] sm:$0xff]
  %v481 = vld [vmem:[%s1 + $0x2f8] sm:$0xff]
  %v482 = vld [vmem:[%s1 + $0x300] sm:$0xff]
  %v483 = vld [vmem:[%s1 + $0x308] sm:$0xff]
  %v484 = vld [vmem:[%s1 + $0x310] sm:$0xff]
  %v485 = vld [vmem:[%s1 + $0x318] sm:$0xff]
  %v486 = vld [vmem:[%s1 + $0x320] sm:$0xff]
  %v487 = vld [vmem:[%s1 + $0x328] sm:$0xff]
  %v488 = vld [vmem:[%s1 + $0x330] sm:$0xff]
  %v489 = vld [vmem:[%s1 + $0x338] sm:$0xff]
  %v490 = vld [vmem:[%s1 + $0x340] sm:$0xff]
  %v491 = vld [vmem:[%s1 + $0x348] sm:$0xff]
  %v492 = vld [vmem:[%s1 + $0x350] sm:$0xff]
  %v493 = vld [vmem:[%s1 + $0x358] sm:$0xff]
  %v494 = vld [vmem:[%s1 + $0x360] sm:$0xff]
  %v495 = vld [vmem:[%s1 + $0x368] sm:$0xff]
  %v496 = vld [vmem:[%s1 + $0x370] sm:$0xff]
  %v497 = vld [vmem:[%s1 + $0x378] sm:$0xff]
  %v498 = vld [vmem:[%s1 + $0x380] sm:$0xff]
  %v499 = vld [vmem:[%s1 + $0x388] sm:$0xff]
  %v500 = vld [vmem:[%s1 + $0x390] sm:$0xff]
  %v501 = vld [vmem:[%s1 + $0x398] sm:$0xff]
  %v502 = vld [vmem:[%s1 + $0x3a0] sm:$0xff]
  %v503 = vld [vmem:[%s1 + $0x3a8] sm:$0xff]
  %v504 = vld [vmem:[%s1 + $0x3b0] sm:$0xff]
  %v505 = vld [vmem:[%s1 + $0x3b8] sm:$0xff]
  %v506 = vld [vmem:[%s1 + $0x3c0] sm:$0xff]
  %v507 = vld [vmem:[%s1 + $0x3c8] sm:$0xff]
  %v508 = vld [vmem:[%s1 + $0x3d0] sm:$0xff]
  %v509 = vld [vmem:[%s1 + $0x3d8] sm:$0xff]
  %v510 = vld [vmem:[%s1 + $0x3e0] sm:$0xff]
  %v511 = vld [vmem:[%s1 + $0x3e8] sm:$0xff]
  %v512 = vld [vmem:[%s1 + $0x3f0] sm:$0xff]
  %v513 = vld [vmem:[%s1 + $0x3f8] sm:$0xff]
  %515 = vset.pattern.permute.xlu0 0
  %516 = vperm.xlu0 %515, %v386
  %v517 = vpop.permute.xlu0 %516
  %520 = vset.pattern.permute.xlu0 0
  %521 = vperm.xlu0 %520, %v387
  %v522 = vpop.permute.xlu0 %521
  %525 = vset.pattern.permute.xlu0 0
  %526 = vperm.xlu0 %525, %v388
  %v527 = vpop.permute.xlu0 %526
  %530 = vset.pattern.permute.xlu0 0
  %531 = vperm.xlu0 %530, %v389
  %v532 = vpop.permute.xlu0 %531
  %535 = vset.pattern.permute.xlu0 0
  %536 = vperm.xlu0 %535, %v390
  %v537 = vpop.permute.xlu0 %536
  %540 = vset.pattern.permute.xlu0 0
  %541 = vperm.xlu0 %540, %v391
  %v542 = vpop.permute.xlu0 %541
  %545 = vset.pattern.permute.xlu0 0
  %546 = vperm.xlu0 %545, %v392
  %v547 = vpop.permute.xlu0 %546
  %550 = vset.pattern.permute.xlu0 0
  %551 = vperm.xlu0 %550, %v393
  %v552 = vpop.permute.xlu0 %551
  %555 = vset.pattern.permute.xlu0 0
  %556 = vperm.xlu0 %555, %v394
  %v557 = vpop.permute.xlu0 %556
  %560 = vset.pattern.permute.xlu0 0
  %561 = vperm.xlu0 %560, %v395
  %v562 = vpop.permute.xlu0 %561
  %565 = vset.pattern.permute.xlu0 0
  %566 = vperm.xlu0 %565, %v396
  %v567 = vpop.permute.xlu0 %566
  %570 = vset.pattern.permute.xlu0 0
  %571 = vperm.xlu0 %570, %v397
  %v572 = vpop.permute.xlu0 %571
  %575 = vset.pattern.permute.xlu0 0
  %576 = vperm.xlu0 %575, %v398
  %v577 = vpop.permute.xlu0 %576
  %580 = vset.pattern.permute.xlu0 0
  %581 = vperm.xlu0 %580, %v399
  %v582 = vpop.permute.xlu0 %581
  %585 = vset.pattern.permute.xlu0 0
  %586 = vperm.xlu0 %585, %v400
  %v587 = vpop.permute.xlu0 %586
  %590 = vset.pattern.permute.xlu0 0
  %591 = vperm.xlu0 %590, %v401
  %v592 = vpop.permute.xlu0 %591
  %595 = vset.pattern.permute.xlu0 0
  %596 = vperm.xlu0 %595, %v402
  %v597 = vpop.permute.xlu0 %596
  %600 = vset.pattern.permute.xlu0 0
  %601 = vperm.xlu0 %600, %v403
  %v602 = vpop.permute.xlu0 %601
  %605 = vset.pattern.permute.xlu0 0
  %606 = vperm.xlu0 %605, %v404
  %v607 = vpop.permute.xlu0 %606
  %610 = vset.pattern.permute.xlu0 0
  %611 = vperm.xlu0 %610, %v405
  %v612 = vpop.permute.xlu0 %611
  %615 = vset.pattern.permute.xlu0 0
  %616 = vperm.xlu0 %615, %v406
  %v617 = vpop.permute.xlu0 %616
  %620 = vset.pattern.permute.xlu0 0
  %621 = vperm.xlu0 %620, %v407
  %v622 = vpop.permute.xlu0 %621
  %625 = vset.pattern.permute.xlu0 0
  %626 = vperm.xlu0 %625, %v408
  %v627 = vpop.permute.xlu0 %626
  %630 = vset.pattern.permute.xlu0 0
  %631 = vperm.xlu0 %630, %v409
  %v632 = vpop.permute.xlu0 %631
  %635 = vset.pattern.permute.xlu0 0
  %636 = vperm.xlu0 %635, %v410
  %v637 = vpop.permute.xlu0 %636
  %640 = vset.pattern.permute.xlu0 0
  %641 = vperm.xlu0 %640, %v411
  %v642 = vpop.permute.xlu0 %641
  %645 = vset.pattern.permute.xlu0 0
  %646 = vperm.xlu0 %645, %v412
  %v647 = vpop.permute.xlu0 %646
  %650 = vset.pattern.permute.xlu0 0
  %651 = vperm.xlu0 %650, %v413
  %v652 = vpop.permute.xlu0 %651
  %655 = vset.pattern.permute.xlu0 0
  %656 = vperm.xlu0 %655, %v414
  %v657 = vpop.permute.xlu0 %656
  %660 = vset.pattern.permute.xlu0 0
  %661 = vperm.xlu0 %660, %v415
  %v662 = vpop.permute.xlu0 %661
  %665 = vset.pattern.permute.xlu0 0
  %666 = vperm.xlu0 %665, %v416
  %v667 = vpop.permute.xlu0 %666
  %670 = vset.pattern.permute.xlu0 0
  %671 = vperm.xlu0 %670, %v417
  %v672 = vpop.permute.xlu0 %671
  %675 = vset.pattern.permute.xlu0 0
  %676 = vperm.xlu0 %675, %v418
  %v677 = vpop.permute.xlu0 %676
  %680 = vset.pattern.permute.xlu0 0
  %681 = vperm.xlu0 %680, %v419
  %v682 = vpop.permute.xlu0 %681
  %685 = vset.pattern.permute.xlu0 0
  %686 = vperm.xlu0 %685, %v420
  %v687 = vpop.permute.xlu0 %686
  %690 = vset.pattern.permute.xlu0 0
  %691 = vperm.xlu0 %690, %v421
  %v692 = vpop.permute.xlu0 %691
  %695 = vset.pattern.permute.xlu0 0
  %696 = vperm.xlu0 %695, %v422
  %v697 = vpop.permute.xlu0 %696
  %700 = vset.pattern.permute.xlu0 0
  %701 = vperm.xlu0 %700, %v423
  %v702 = vpop.permute.xlu0 %701
  %705 = vset.pattern.permute.xlu0 0
  %706 = vperm.xlu0 %705, %v424
  %v707 = vpop.permute.xlu0 %706
  %710 = vset.pattern.permute.xlu0 0
  %711 = vperm.xlu0 %710, %v425
  %v712 = vpop.permute.xlu0 %711
  %715 = vset.pattern.permute.xlu0 0
  %716 = vperm.xlu0 %715, %v426
  %v717 = vpop.permute.xlu0 %716
  %720 = vset.pattern.permute.xlu0 0
  %721 = vperm.xlu0 %720, %v427
  %v722 = vpop.permute.xlu0 %721
  %725 = vset.pattern.permute.xlu0 0
  %726 = vperm.xlu0 %725, %v428
  %v727 = vpop.permute.xlu0 %726
  %730 = vset.pattern.permute.xlu0 0
  %731 = vperm.xlu0 %730, %v429
  %v732 = vpop.permute.xlu0 %731
  %735 = vset.pattern.permute.xlu0 0
  %736 = vperm.xlu0 %735, %v430
  %v737 = vpop.permute.xlu0 %736
  %740 = vset.pattern.permute.xlu0 0
  %741 = vperm.xlu0 %740, %v431
  %v742 = vpop.permute.xlu0 %741
  %745 = vset.pattern.permute.xlu0 0
  %746 = vperm.xlu0 %745, %v432
  %v747 = vpop.permute.xlu0 %746
  %750 = vset.pattern.permute.xlu0 0
  %751 = vperm.xlu0 %750, %v433
  %v752 = vpop.permute.xlu0 %751
  %755 = vset.pattern.permute.xlu0 0
  %756 = vperm.xlu0 %755, %v434
  %v757 = vpop.permute.xlu0 %756
  %760 = vset.pattern.permute.xlu0 0
  %761 = vperm.xlu0 %760, %v435
  %v762 = vpop.permute.xlu0 %761
  %765 = vset.pattern.permute.xlu0 0
  %766 = vperm.xlu0 %765, %v436
  %v767 = vpop.permute.xlu0 %766
  %770 = vset.pattern.permute.xlu0 0
  %771 = vperm.xlu0 %770, %v437
  %v772 = vpop.permute.xlu0 %771
  %775 = vset.pattern.permute.xlu0 0
  %776 = vperm.xlu0 %775, %v438
  %v777 = vpop.permute.xlu0 %776
  %780 = vset.pattern.permute.xlu0 0
  %781 = vperm.xlu0 %780, %v439
  %v782 = vpop.permute.xlu0 %781
  %785 = vset.pattern.permute.xlu0 0
  %786 = vperm.xlu0 %785, %v440
  %v787 = vpop.permute.xlu0 %786
  %790 = vset.pattern.permute.xlu0 0
  %791 = vperm.xlu0 %790, %v441
  %v792 = vpop.permute.xlu0 %791
  %795 = vset.pattern.permute.xlu0 0
  %796 = vperm.xlu0 %795, %v442
  %v797 = vpop.permute.xlu0 %796
  %800 = vset.pattern.permute.xlu0 0
  %801 = vperm.xlu0 %800, %v443
  %v802 = vpop.permute.xlu0 %801
  %805 = vset.pattern.permute.xlu0 0
  %806 = vperm.xlu0 %805, %v444
  %v807 = vpop.permute.xlu0 %806
  %810 = vset.pattern.permute.xlu0 0
  %811 = vperm.xlu0 %810, %v445
  %v812 = vpop.permute.xlu0 %811
  %815 = vset.pattern.permute.xlu0 0
  %816 = vperm.xlu0 %815, %v446
  %v817 = vpop.permute.xlu0 %816
  %820 = vset.pattern.permute.xlu0 0
  %821 = vperm.xlu0 %820, %v447
  %v822 = vpop.permute.xlu0 %821
  %825 = vset.pattern.permute.xlu0 0
  %826 = vperm.xlu0 %825, %v448
  %v827 = vpop.permute.xlu0 %826
  %830 = vset.pattern.permute.xlu0 0
  %831 = vperm.xlu0 %830, %v449
  %v832 = vpop.permute.xlu0 %831
  %835 = vset.pattern.permute.xlu0 0
  %836 = vperm.xlu0 %835, %v450
  %v837 = vpop.permute.xlu0 %836
  %840 = vset.pattern.permute.xlu0 0
  %841 = vperm.xlu0 %840, %v451
  %v842 = vpop.permute.xlu0 %841
  %845 = vset.pattern.permute.xlu0 0
  %846 = vperm.xlu0 %845, %v452
  %v847 = vpop.permute.xlu0 %846
  %850 = vset.pattern.permute.xlu0 0
  %851 = vperm.xlu0 %850, %v453
  %v852 = vpop.permute.xlu0 %851
  %855 = vset.pattern.permute.xlu0 0
  %856 = vperm.xlu0 %855, %v454
  %v857 = vpop.permute.xlu0 %856
  %860 = vset.pattern.permute.xlu0 0
  %861 = vperm.xlu0 %860, %v455
  %v862 = vpop.permute.xlu0 %861
  %865 = vset.pattern.permute.xlu0 0
  %866 = vperm.xlu0 %865, %v456
  %v867 = vpop.permute.xlu0 %866
  %870 = vset.pattern.permute.xlu0 0
  %871 = vperm.xlu0 %870, %v457
  %v872 = vpop.permute.xlu0 %871
  %875 = vset.pattern.permute.xlu0 0
  %876 = vperm.xlu0 %875, %v458
  %v877 = vpop.permute.xlu0 %876
  %880 = vset.pattern.permute.xlu0 0
  %881 = vperm.xlu0 %880, %v459
  %v882 = vpop.permute.xlu0 %881
  %885 = vset.pattern.permute.xlu0 0
  %886 = vperm.xlu0 %885, %v460
  %v887 = vpop.permute.xlu0 %886
  %890 = vset.pattern.permute.xlu0 0
  %891 = vperm.xlu0 %890, %v461
  %v892 = vpop.permute.xlu0 %891
  %895 = vset.pattern.permute.xlu0 0
  %896 = vperm.xlu0 %895, %v462
  %v897 = vpop.permute.xlu0 %896
  %900 = vset.pattern.permute.xlu0 0
  %901 = vperm.xlu0 %900, %v463
  %v902 = vpop.permute.xlu0 %901
  %905 = vset.pattern.permute.xlu0 0
  %906 = vperm.xlu0 %905, %v464
  %v907 = vpop.permute.xlu0 %906
  %910 = vset.pattern.permute.xlu0 0
  %911 = vperm.xlu0 %910, %v465
  %v912 = vpop.permute.xlu0 %911
  %915 = vset.pattern.permute.xlu0 0
  %916 = vperm.xlu0 %915, %v466
  %v917 = vpop.permute.xlu0 %916
  %920 = vset.pattern.permute.xlu0 0
  %921 = vperm.xlu0 %920, %v467
  %v922 = vpop.permute.xlu0 %921
  %925 = vset.pattern.permute.xlu0 0
  %926 = vperm.xlu0 %925, %v468
  %v927 = vpop.permute.xlu0 %926
  %930 = vset.pattern.permute.xlu0 0
  %931 = vperm.xlu0 %930, %v469
  %v932 = vpop.permute.xlu0 %931
  %935 = vset.pattern.permute.xlu0 0
  %936 = vperm.xlu0 %935, %v470
  %v937 = vpop.permute.xlu0 %936
  %940 = vset.pattern.permute.xlu0 0
  %941 = vperm.xlu0 %940, %v471
  %v942 = vpop.permute.xlu0 %941
  %945 = vset.pattern.permute.xlu0 0
  %946 = vperm.xlu0 %945, %v472
  %v947 = vpop.permute.xlu0 %946
  %950 = vset.pattern.permute.xlu0 0
  %951 = vperm.xlu0 %950, %v473
  %v952 = vpop.permute.xlu0 %951
  %955 = vset.pattern.permute.xlu0 0
  %956 = vperm.xlu0 %955, %v474
  %v957 = vpop.permute.xlu0 %956
  %960 = vset.pattern.permute.xlu0 0
  %961 = vperm.xlu0 %960, %v475
  %v962 = vpop.permute.xlu0 %961
  %965 = vset.pattern.permute.xlu0 0
  %966 = vperm.xlu0 %965, %v476
  %v967 = vpop.permute.xlu0 %966
  %970 = vset.pattern.permute.xlu0 0
  %971 = vperm.xlu0 %970, %v477
  %v972 = vpop.permute.xlu0 %971
  %975 = vset.pattern.permute.xlu0 0
  %976 = vperm.xlu0 %975, %v478
  %v977 = vpop.permute.xlu0 %976
  %980 = vset.pattern.permute.xlu0 0
  %981 = vperm.xlu0 %980, %v479
  %v982 = vpop.permute.xlu0 %981
  %985 = vset.pattern.permute.xlu0 0
  %986 = vperm.xlu0 %985, %v480
  %v987 = vpop.permute.xlu0 %986
  %990 = vset.pattern.permute.xlu0 0
  %991 = vperm.xlu0 %990, %v481
  %v992 = vpop.permute.xlu0 %991
  %995 = vset.pattern.permute.xlu0 0
  %996 = vperm.xlu0 %995, %v482
  %v997 = vpop.permute.xlu0 %996
  %1000 = vset.pattern.permute.xlu0 0
  %1001 = vperm.xlu0 %1000, %v483
  %v1002 = vpop.permute.xlu0 %1001
  %1005 = vset.pattern.permute.xlu0 0
  %1006 = vperm.xlu0 %1005, %v484
  %v1007 = vpop.permute.xlu0 %1006
  %1010 = vset.pattern.permute.xlu0 0
  %1011 = vperm.xlu0 %1010, %v485
  %v1012 = vpop.permute.xlu0 %1011
  %1015 = vset.pattern.permute.xlu0 0
  %1016 = vperm.xlu0 %1015, %v486
  %v1017 = vpop.permute.xlu0 %1016
  %1020 = vset.pattern.permute.xlu0 0
  %1021 = vperm.xlu0 %1020, %v487
  %v1022 = vpop.permute.xlu0 %1021
  %1025 = vset.pattern.permute.xlu0 0
  %1026 = vperm.xlu0 %1025, %v488
  %v1027 = vpop.permute.xlu0 %1026
  %1030 = vset.pattern.permute.xlu0 0
  %1031 = vperm.xlu0 %1030, %v489
  %v1032 = vpop.permute.xlu0 %1031
  %1035 = vset.pattern.permute.xlu0 0
  %1036 = vperm.xlu0 %1035, %v490
  %v1037 = vpop.permute.xlu0 %1036
  %1040 = vset.pattern.permute.xlu0 0
  %1041 = vperm.xlu0 %1040, %v491
  %v1042 = vpop.permute.xlu0 %1041
  %1045 = vset.pattern.permute.xlu0 0
  %1046 = vperm.xlu0 %1045, %v492
  %v1047 = vpop.permute.xlu0 %1046
  %1050 = vset.pattern.permute.xlu0 0
  %1051 = vperm.xlu0 %1050, %v493
  %v1052 = vpop.permute.xlu0 %1051
  %1055 = vset.pattern.permute.xlu0 0
  %1056 = vperm.xlu0 %1055, %v494
  %v1057 = vpop.permute.xlu0 %1056
  %1060 = vset.pattern.permute.xlu0 0
  %1061 = vperm.xlu0 %1060, %v495
  %v1062 = vpop.permute.xlu0 %1061
  %1065 = vset.pattern.permute.xlu0 0
  %1066 = vperm.xlu0 %1065, %v496
  %v1067 = vpop.permute.xlu0 %1066
  %1070 = vset.pattern.permute.xlu0 0
  %1071 = vperm.xlu0 %1070, %v497
  %v1072 = vpop.permute.xlu0 %1071
  %1075 = vset.pattern.permute.xlu0 0
  %1076 = vperm.xlu0 %1075, %v498
  %v1077 = vpop.permute.xlu0 %1076
  %1080 = vset.pattern.permute.xlu0 0
  %1081 = vperm.xlu0 %1080, %v499
  %v1082 = vpop.permute.xlu0 %1081
  %1085 = vset.pattern.permute.xlu0 0
  %1086 = vperm.xlu0 %1085, %v500
  %v1087 = vpop.permute.xlu0 %1086
  %1090 = vset.pattern.permute.xlu0 0
  %1091 = vperm.xlu0 %1090, %v501
  %v1092 = vpop.permute.xlu0 %1091
  %1095 = vset.pattern.permute.xlu0 0
  %1096 = vperm.xlu0 %1095, %v502
  %v1097 = vpop.permute.xlu0 %1096
  %1100 = vset.pattern.permute.xlu0 0
  %1101 = vperm.xlu0 %1100, %v503
  %v1102 = vpop.permute.xlu0 %1101
  %1105 = vset.pattern.permute.xlu0 0
  %1106 = vperm.xlu0 %1105, %v504
  %v1107 = vpop.permute.xlu0 %1106
  %1110 = vset.pattern.permute.xlu0 0
  %1111 = vperm.xlu0 %1110, %v505
  %v1112 = vpop.permute.xlu0 %1111
  %1115 = vset.pattern.permute.xlu0 0
  %1116 = vperm.xlu0 %1115, %v506
  %v1117 = vpop.permute.xlu0 %1116
  %1120 = vset.pattern.permute.xlu0 0
  %1121 = vperm.xlu0 %1120, %v507
  %v1122 = vpop.permute.xlu0 %1121
  %1125 = vset.pattern.permute.xlu0 0
  %1126 = vperm.xlu0 %1125, %v508
  %v1127 = vpop.permute.xlu0 %1126
  %1130 = vset.pattern.permute.xlu0 0
  %1131 = vperm.xlu0 %1130, %v509
  %v1132 = vpop.permute.xlu0 %1131
  %1135 = vset.pattern.permute.xlu0 0
  %1136 = vperm.xlu0 %1135, %v510
  %v1137 = vpop.permute.xlu0 %1136
  %1140 = vset.pattern.permute.xlu0 0
  %1141 = vperm.xlu0 %1140, %v511
  %v1142 = vpop.permute.xlu0 %1141
  %1145 = vset.pattern.permute.xlu0 0
  %1146 = vperm.xlu0 %1145, %v512
  %v1147 = vpop.permute.xlu0 %1146
  %1150 = vset.pattern.permute.xlu0 0
  %1151 = vperm.xlu0 %1150, %v513
  %v1152 = vpop.permute.xlu0 %1151
  %v1410 = vunpack.c.l.b16 %v18
  %v1411 = vunpack.c.h.b16 %v18
  %v1412 = vunpack.c.l.b16 %v19
  %v1413 = vunpack.c.h.b16 %v19
  %v1414 = vunpack.c.l.b16 %v20
  %v1415 = vunpack.c.h.b16 %v20
  %v1416 = vunpack.c.l.b16 %v21
  %v1417 = vunpack.c.h.b16 %v21
  %v1418 = vunpack.c.l.b16 %v22
  %v1419 = vunpack.c.h.b16 %v22
  %v1420 = vunpack.c.l.b16 %v23
  %v1421 = vunpack.c.h.b16 %v23
  %v1422 = vunpack.c.l.b16 %v24
  %v1423 = vunpack.c.h.b16 %v24
  %v1424 = vunpack.c.l.b16 %v25
  %v1425 = vunpack.c.h.b16 %v25
  %v1426 = vunpack.c.l.b16 %v26
  %v1427 = vunpack.c.h.b16 %v26
  %v1428 = vunpack.c.l.b16 %v27
  %v1429 = vunpack.c.h.b16 %v27
  %v1430 = vunpack.c.l.b16 %v28
  %v1431 = vunpack.c.h.b16 %v28
  %v1432 = vunpack.c.l.b16 %v29
  %v1433 = vunpack.c.h.b16 %v29
  %v1434 = vunpack.c.l.b16 %v30
  %v1435 = vunpack.c.h.b16 %v30
  %v1436 = vunpack.c.l.b16 %v31
  %v1437 = vunpack.c.h.b16 %v31
  %v1438 = vunpack.c.l.b16 %v32
  %v1439 = vunpack.c.h.b16 %v32
  %v1440 = vunpack.c.l.b16 %v33
  %v1441 = vunpack.c.h.b16 %v33
  %v1442 = vunpack.c.l.b16 %v34
  %v1443 = vunpack.c.h.b16 %v34
  %v1444 = vunpack.c.l.b16 %v35
  %v1445 = vunpack.c.h.b16 %v35
  %v1446 = vunpack.c.l.b16 %v36
  %v1447 = vunpack.c.h.b16 %v36
  %v1448 = vunpack.c.l.b16 %v37
  %v1449 = vunpack.c.h.b16 %v37
  %v1450 = vunpack.c.l.b16 %v38
  %v1451 = vunpack.c.h.b16 %v38
  %v1452 = vunpack.c.l.b16 %v39
  %v1453 = vunpack.c.h.b16 %v39
  %v1454 = vunpack.c.l.b16 %v40
  %v1455 = vunpack.c.h.b16 %v40
  %v1456 = vunpack.c.l.b16 %v41
  %v1457 = vunpack.c.h.b16 %v41
  %v1458 = vunpack.c.l.b16 %v42
  %v1459 = vunpack.c.h.b16 %v42
  %v1460 = vunpack.c.l.b16 %v43
  %v1461 = vunpack.c.h.b16 %v43
  %v1462 = vunpack.c.l.b16 %v44
  %v1463 = vunpack.c.h.b16 %v44
  %v1464 = vunpack.c.l.b16 %v45
  %v1465 = vunpack.c.h.b16 %v45
  %v1466 = vunpack.c.l.b16 %v46
  %v1467 = vunpack.c.h.b16 %v46
  %v1468 = vunpack.c.l.b16 %v47
  %v1469 = vunpack.c.h.b16 %v47
  %v1470 = vunpack.c.l.b16 %v48
  %v1471 = vunpack.c.h.b16 %v48
  %v1472 = vunpack.c.l.b16 %v49
  %v1473 = vunpack.c.h.b16 %v49
  %v1474 = vunpack.c.l.b16 %v50
  %v1475 = vunpack.c.h.b16 %v50
  %v1476 = vunpack.c.l.b16 %v51
  %v1477 = vunpack.c.h.b16 %v51
  %v1478 = vunpack.c.l.b16 %v52
  %v1479 = vunpack.c.h.b16 %v52
  %v1480 = vunpack.c.l.b16 %v53
  %v1481 = vunpack.c.h.b16 %v53
  %v1482 = vunpack.c.l.b16 %v54
  %v1483 = vunpack.c.h.b16 %v54
  %v1484 = vunpack.c.l.b16 %v55
  %v1485 = vunpack.c.h.b16 %v55
  %v1486 = vunpack.c.l.b16 %v56
  %v1487 = vunpack.c.h.b16 %v56
  %v1488 = vunpack.c.l.b16 %v57
  %v1489 = vunpack.c.h.b16 %v57
  %v1490 = vunpack.c.l.b16 %v58
  %v1491 = vunpack.c.h.b16 %v58
  %v1492 = vunpack.c.l.b16 %v59
  %v1493 = vunpack.c.h.b16 %v59
  %v1494 = vunpack.c.l.b16 %v60
  %v1495 = vunpack.c.h.b16 %v60
  %v1496 = vunpack.c.l.b16 %v61
  %v1497 = vunpack.c.h.b16 %v61
  %v1498 = vunpack.c.l.b16 %v62
  %v1499 = vunpack.c.h.b16 %v62
  %v1500 = vunpack.c.l.b16 %v63
  %v1501 = vunpack.c.h.b16 %v63
  %v1502 = vunpack.c.l.b16 %v64
  %v1503 = vunpack.c.h.b16 %v64
  %v1504 = vunpack.c.l.b16 %v65
  %v1505 = vunpack.c.h.b16 %v65
  %v1506 = vunpack.c.l.b16 %v66
  %v1507 = vunpack.c.h.b16 %v66
  %v1508 = vunpack.c.l.b16 %v67
  %v1509 = vunpack.c.h.b16 %v67
  %v1510 = vunpack.c.l.b16 %v68
  %v1511 = vunpack.c.h.b16 %v68
  %v1512 = vunpack.c.l.b16 %v69
  %v1513 = vunpack.c.h.b16 %v69
  %v1514 = vunpack.c.l.b16 %v70
  %v1515 = vunpack.c.h.b16 %v70
  %v1516 = vunpack.c.l.b16 %v71
  %v1517 = vunpack.c.h.b16 %v71
  %v1518 = vunpack.c.l.b16 %v72
  %v1519 = vunpack.c.h.b16 %v72
  %v1520 = vunpack.c.l.b16 %v73
  %v1521 = vunpack.c.h.b16 %v73
  %v1522 = vunpack.c.l.b16 %v74
  %v1523 = vunpack.c.h.b16 %v74
  %v1524 = vunpack.c.l.b16 %v75
  %v1525 = vunpack.c.h.b16 %v75
  %v1526 = vunpack.c.l.b16 %v76
  %v1527 = vunpack.c.h.b16 %v76
  %v1528 = vunpack.c.l.b16 %v77
  %v1529 = vunpack.c.h.b16 %v77
  %v1530 = vunpack.c.l.b16 %v78
  %v1531 = vunpack.c.h.b16 %v78
  %v1532 = vunpack.c.l.b16 %v79
  %v1533 = vunpack.c.h.b16 %v79
  %v1534 = vunpack.c.l.b16 %v80
  %v1535 = vunpack.c.h.b16 %v80
  %v1536 = vunpack.c.l.b16 %v81
  %v1537 = vunpack.c.h.b16 %v81
  %v1538 = vunpack.c.l.b16 %v82
  %v1539 = vunpack.c.h.b16 %v82
  %v1540 = vunpack.c.l.b16 %v83
  %v1541 = vunpack.c.h.b16 %v83
  %v1542 = vunpack.c.l.b16 %v84
  %v1543 = vunpack.c.h.b16 %v84
  %v1544 = vunpack.c.l.b16 %v85
  %v1545 = vunpack.c.h.b16 %v85
  %v1546 = vunpack.c.l.b16 %v86
  %v1547 = vunpack.c.h.b16 %v86
  %v1548 = vunpack.c.l.b16 %v87
  %v1549 = vunpack.c.h.b16 %v87
  %v1550 = vunpack.c.l.b16 %v88
  %v1551 = vunpack.c.h.b16 %v88
  %v1552 = vunpack.c.l.b16 %v89
  %v1553 = vunpack.c.h.b16 %v89
  %v1554 = vunpack.c.l.b16 %v90
  %v1555 = vunpack.c.h.b16 %v90
  %v1556 = vunpack.c.l.b16 %v91
  %v1557 = vunpack.c.h.b16 %v91
  %v1558 = vunpack.c.l.b16 %v92
  %v1559 = vunpack.c.h.b16 %v92
  %v1560 = vunpack.c.l.b16 %v93
  %v1561 = vunpack.c.h.b16 %v93
  %v1562 = vunpack.c.l.b16 %v94
  %v1563 = vunpack.c.h.b16 %v94
  %v1564 = vunpack.c.l.b16 %v95
  %v1565 = vunpack.c.h.b16 %v95
  %v1566 = vunpack.c.l.b16 %v96
  %v1567 = vunpack.c.h.b16 %v96
  %v1568 = vunpack.c.l.b16 %v97
  %v1569 = vunpack.c.h.b16 %v97
  %v1570 = vunpack.c.l.b16 %v98
  %v1571 = vunpack.c.h.b16 %v98
  %v1572 = vunpack.c.l.b16 %v99
  %v1573 = vunpack.c.h.b16 %v99
  %v1574 = vunpack.c.l.b16 %v100
  %v1575 = vunpack.c.h.b16 %v100
  %v1576 = vunpack.c.l.b16 %v101
  %v1577 = vunpack.c.h.b16 %v101
  %v1578 = vunpack.c.l.b16 %v102
  %v1579 = vunpack.c.h.b16 %v102
  %v1580 = vunpack.c.l.b16 %v103
  %v1581 = vunpack.c.h.b16 %v103
  %v1582 = vunpack.c.l.b16 %v104
  %v1583 = vunpack.c.h.b16 %v104
  %v1584 = vunpack.c.l.b16 %v105
  %v1585 = vunpack.c.h.b16 %v105
  %v1586 = vunpack.c.l.b16 %v106
  %v1587 = vunpack.c.h.b16 %v106
  %v1588 = vunpack.c.l.b16 %v107
  %v1589 = vunpack.c.h.b16 %v107
  %v1590 = vunpack.c.l.b16 %v108
  %v1591 = vunpack.c.h.b16 %v108
  %v1592 = vunpack.c.l.b16 %v109
  %v1593 = vunpack.c.h.b16 %v109
  %v1594 = vunpack.c.l.b16 %v110
  %v1595 = vunpack.c.h.b16 %v110
  %v1596 = vunpack.c.l.b16 %v111
  %v1597 = vunpack.c.h.b16 %v111
  %v1598 = vunpack.c.l.b16 %v112
  %v1599 = vunpack.c.h.b16 %v112
  %v1600 = vunpack.c.l.b16 %v113
  %v1601 = vunpack.c.h.b16 %v113
  %v1602 = vunpack.c.l.b16 %v114
  %v1603 = vunpack.c.h.b16 %v114
  %v1604 = vunpack.c.l.b16 %v115
  %v1605 = vunpack.c.h.b16 %v115
  %v1606 = vunpack.c.l.b16 %v116
  %v1607 = vunpack.c.h.b16 %v116
  %v1608 = vunpack.c.l.b16 %v117
  %v1609 = vunpack.c.h.b16 %v117
  %v1610 = vunpack.c.l.b16 %v118
  %v1611 = vunpack.c.h.b16 %v118
  %v1612 = vunpack.c.l.b16 %v119
  %v1613 = vunpack.c.h.b16 %v119
  %v1614 = vunpack.c.l.b16 %v120
  %v1615 = vunpack.c.h.b16 %v120
  %v1616 = vunpack.c.l.b16 %v121
  %v1617 = vunpack.c.h.b16 %v121
  %v1618 = vunpack.c.l.b16 %v122
  %v1619 = vunpack.c.h.b16 %v122
  %v1620 = vunpack.c.l.b16 %v123
  %v1621 = vunpack.c.h.b16 %v123
  %v1622 = vunpack.c.l.b16 %v124
  %v1623 = vunpack.c.h.b16 %v124
  %v1624 = vunpack.c.l.b16 %v125
  %v1625 = vunpack.c.h.b16 %v125
  %v1626 = vunpack.c.l.b16 %v126
  %v1627 = vunpack.c.h.b16 %v126
  %v1628 = vunpack.c.l.b16 %v127
  %v1629 = vunpack.c.h.b16 %v127
  %v1630 = vunpack.c.l.b16 %v128
  %v1631 = vunpack.c.h.b16 %v128
  %v1632 = vunpack.c.l.b16 %v129
  %v1633 = vunpack.c.h.b16 %v129
  %v1634 = vunpack.c.l.b16 %v130
  %v1635 = vunpack.c.h.b16 %v130
  %v1636 = vunpack.c.l.b16 %v131
  %v1637 = vunpack.c.h.b16 %v131
  %v1638 = vunpack.c.l.b16 %v132
  %v1639 = vunpack.c.h.b16 %v132
  %v1640 = vunpack.c.l.b16 %v133
  %v1641 = vunpack.c.h.b16 %v133
  %v1642 = vunpack.c.l.b16 %v134
  %v1643 = vunpack.c.h.b16 %v134
  %v1644 = vunpack.c.l.b16 %v135
  %v1645 = vunpack.c.h.b16 %v135
  %v1646 = vunpack.c.l.b16 %v136
  %v1647 = vunpack.c.h.b16 %v136
  %v1648 = vunpack.c.l.b16 %v137
  %v1649 = vunpack.c.h.b16 %v137
  %v1650 = vunpack.c.l.b16 %v138
  %v1651 = vunpack.c.h.b16 %v138
  %v1652 = vunpack.c.l.b16 %v139
  %v1653 = vunpack.c.h.b16 %v139
  %v1654 = vunpack.c.l.b16 %v140
  %v1655 = vunpack.c.h.b16 %v140
  %v1656 = vunpack.c.l.b16 %v141
  %v1657 = vunpack.c.h.b16 %v141
  %v1658 = vunpack.c.l.b16 %v142
  %v1659 = vunpack.c.h.b16 %v142
  %v1660 = vunpack.c.l.b16 %v143
  %v1661 = vunpack.c.h.b16 %v143
  %v1662 = vunpack.c.l.b16 %v144
  %v1663 = vunpack.c.h.b16 %v144
  %v1664 = vunpack.c.l.b16 %v145
  %v1665 = vunpack.c.h.b16 %v145
  %v1666 = vunpack.c.l.b16 %v146
  %v1667 = vunpack.c.h.b16 %v146
  %v1668 = vunpack.c.l.b16 %v147
  %v1669 = vunpack.c.h.b16 %v147
  %v1670 = vunpack.c.l.b16 %v148
  %v1671 = vunpack.c.h.b16 %v148
  %v1672 = vunpack.c.l.b16 %v149
  %v1673 = vunpack.c.h.b16 %v149
  %v1674 = vunpack.c.l.b16 %v150
  %v1675 = vunpack.c.h.b16 %v150
  %v1676 = vunpack.c.l.b16 %v151
  %v1677 = vunpack.c.h.b16 %v151
  %v1678 = vunpack.c.l.b16 %v152
  %v1679 = vunpack.c.h.b16 %v152
  %v1680 = vunpack.c.l.b16 %v153
  %v1681 = vunpack.c.h.b16 %v153
  %v1682 = vunpack.c.l.b16 %v154
  %v1683 = vunpack.c.h.b16 %v154
  %v1684 = vunpack.c.l.b16 %v155
  %v1685 = vunpack.c.h.b16 %v155
  %v1686 = vunpack.c.l.b16 %v156
  %v1687 = vunpack.c.h.b16 %v156
  %v1688 = vunpack.c.l.b16 %v157
  %v1689 = vunpack.c.h.b16 %v157
  %v1690 = vunpack.c.l.b16 %v158
  %v1691 = vunpack.c.h.b16 %v158
  %v1692 = vunpack.c.l.b16 %v159
  %v1693 = vunpack.c.h.b16 %v159
  %v1694 = vunpack.c.l.b16 %v160
  %v1695 = vunpack.c.h.b16 %v160
  %v1696 = vunpack.c.l.b16 %v161
  %v1697 = vunpack.c.h.b16 %v161
  %v1698 = vunpack.c.l.b16 %v162
  %v1699 = vunpack.c.h.b16 %v162
  %v1700 = vunpack.c.l.b16 %v163
  %v1701 = vunpack.c.h.b16 %v163
  %v1702 = vunpack.c.l.b16 %v164
  %v1703 = vunpack.c.h.b16 %v164
  %v1704 = vunpack.c.l.b16 %v165
  %v1705 = vunpack.c.h.b16 %v165
  %v1706 = vunpack.c.l.b16 %v166
  %v1707 = vunpack.c.h.b16 %v166
  %v1708 = vunpack.c.l.b16 %v167
  %v1709 = vunpack.c.h.b16 %v167
  %v1710 = vunpack.c.l.b16 %v168
  %v1711 = vunpack.c.h.b16 %v168
  %v1712 = vunpack.c.l.b16 %v169
  %v1713 = vunpack.c.h.b16 %v169
  %v1714 = vunpack.c.l.b16 %v170
  %v1715 = vunpack.c.h.b16 %v170
  %v1716 = vunpack.c.l.b16 %v171
  %v1717 = vunpack.c.h.b16 %v171
  %v1718 = vunpack.c.l.b16 %v172
  %v1719 = vunpack.c.h.b16 %v172
  %v1720 = vunpack.c.l.b16 %v173
  %v1721 = vunpack.c.h.b16 %v173
  %v1722 = vunpack.c.l.b16 %v174
  %v1723 = vunpack.c.h.b16 %v174
  %v1724 = vunpack.c.l.b16 %v175
  %v1725 = vunpack.c.h.b16 %v175
  %v1726 = vunpack.c.l.b16 %v176
  %v1727 = vunpack.c.h.b16 %v176
  %v1728 = vunpack.c.l.b16 %v177
  %v1729 = vunpack.c.h.b16 %v177
  %v1730 = vunpack.c.l.b16 %v178
  %v1731 = vunpack.c.h.b16 %v178
  %v1732 = vunpack.c.l.b16 %v179
  %v1733 = vunpack.c.h.b16 %v179
  %v1734 = vunpack.c.l.b16 %v180
  %v1735 = vunpack.c.h.b16 %v180
  %v1736 = vunpack.c.l.b16 %v181
  %v1737 = vunpack.c.h.b16 %v181
  %v1738 = vunpack.c.l.b16 %v182
  %v1739 = vunpack.c.h.b16 %v182
  %v1740 = vunpack.c.l.b16 %v183
  %v1741 = vunpack.c.h.b16 %v183
  %v1742 = vunpack.c.l.b16 %v184
  %v1743 = vunpack.c.h.b16 %v184
  %v1744 = vunpack.c.l.b16 %v185
  %v1745 = vunpack.c.h.b16 %v185
  %v1746 = vunpack.c.l.b16 %v186
  %v1747 = vunpack.c.h.b16 %v186
  %v1748 = vunpack.c.l.b16 %v187
  %v1749 = vunpack.c.h.b16 %v187
  %v1750 = vunpack.c.l.b16 %v188
  %v1751 = vunpack.c.h.b16 %v188
  %v1752 = vunpack.c.l.b16 %v189
  %v1753 = vunpack.c.h.b16 %v189
  %v1754 = vunpack.c.l.b16 %v190
  %v1755 = vunpack.c.h.b16 %v190
  %v1756 = vunpack.c.l.b16 %v191
  %v1757 = vunpack.c.h.b16 %v191
  %v1758 = vunpack.c.l.b16 %v192
  %v1759 = vunpack.c.h.b16 %v192
  %v1760 = vunpack.c.l.b16 %v193
  %v1761 = vunpack.c.h.b16 %v193
  %v1762 = vunpack.c.l.b16 %v194
  %v1763 = vunpack.c.h.b16 %v194
  %v1764 = vunpack.c.l.b16 %v195
  %v1765 = vunpack.c.h.b16 %v195
  %v1766 = vunpack.c.l.b16 %v196
  %v1767 = vunpack.c.h.b16 %v196
  %v1768 = vunpack.c.l.b16 %v197
  %v1769 = vunpack.c.h.b16 %v197
  %v1770 = vunpack.c.l.b16 %v198
  %v1771 = vunpack.c.h.b16 %v198
  %v1772 = vunpack.c.l.b16 %v199
  %v1773 = vunpack.c.h.b16 %v199
  %v1774 = vunpack.c.l.b16 %v200
  %v1775 = vunpack.c.h.b16 %v200
  %v1776 = vunpack.c.l.b16 %v201
  %v1777 = vunpack.c.h.b16 %v201
  %v1778 = vunpack.c.l.b16 %v202
  %v1779 = vunpack.c.h.b16 %v202
  %v1780 = vunpack.c.l.b16 %v203
  %v1781 = vunpack.c.h.b16 %v203
  %v1782 = vunpack.c.l.b16 %v204
  %v1783 = vunpack.c.h.b16 %v204
  %v1784 = vunpack.c.l.b16 %v205
  %v1785 = vunpack.c.h.b16 %v205
  %v1786 = vunpack.c.l.b16 %v206
  %v1787 = vunpack.c.h.b16 %v206
  %v1788 = vunpack.c.l.b16 %v207
  %v1789 = vunpack.c.h.b16 %v207
  %v1790 = vunpack.c.l.b16 %v208
  %v1791 = vunpack.c.h.b16 %v208
  %v1792 = vunpack.c.l.b16 %v209
  %v1793 = vunpack.c.h.b16 %v209
  %v1794 = vunpack.c.l.b16 %v210
  %v1795 = vunpack.c.h.b16 %v210
  %v1796 = vunpack.c.l.b16 %v211
  %v1797 = vunpack.c.h.b16 %v211
  %v1798 = vunpack.c.l.b16 %v212
  %v1799 = vunpack.c.h.b16 %v212
  %v1800 = vunpack.c.l.b16 %v213
  %v1801 = vunpack.c.h.b16 %v213
  %v1802 = vunpack.c.l.b16 %v214
  %v1803 = vunpack.c.h.b16 %v214
  %v1804 = vunpack.c.l.b16 %v215
  %v1805 = vunpack.c.h.b16 %v215
  %v1806 = vunpack.c.l.b16 %v216
  %v1807 = vunpack.c.h.b16 %v216
  %v1808 = vunpack.c.l.b16 %v217
  %v1809 = vunpack.c.h.b16 %v217
  %v1810 = vunpack.c.l.b16 %v218
  %v1811 = vunpack.c.h.b16 %v218
  %v1812 = vunpack.c.l.b16 %v219
  %v1813 = vunpack.c.h.b16 %v219
  %v1814 = vunpack.c.l.b16 %v220
  %v1815 = vunpack.c.h.b16 %v220
  %v1816 = vunpack.c.l.b16 %v221
  %v1817 = vunpack.c.h.b16 %v221
  %v1818 = vunpack.c.l.b16 %v222
  %v1819 = vunpack.c.h.b16 %v222
  %v1820 = vunpack.c.l.b16 %v223
  %v1821 = vunpack.c.h.b16 %v223
  %v1822 = vunpack.c.l.b16 %v224
  %v1823 = vunpack.c.h.b16 %v224
  %v1824 = vunpack.c.l.b16 %v225
  %v1825 = vunpack.c.h.b16 %v225
  %v1826 = vunpack.c.l.b16 %v226
  %v1827 = vunpack.c.h.b16 %v226
  %v1828 = vunpack.c.l.b16 %v227
  %v1829 = vunpack.c.h.b16 %v227
  %v1830 = vunpack.c.l.b16 %v228
  %v1831 = vunpack.c.h.b16 %v228
  %v1832 = vunpack.c.l.b16 %v229
  %v1833 = vunpack.c.h.b16 %v229
  %v1834 = vunpack.c.l.b16 %v230
  %v1835 = vunpack.c.h.b16 %v230
  %v1836 = vunpack.c.l.b16 %v231
  %v1837 = vunpack.c.h.b16 %v231
  %v1838 = vunpack.c.l.b16 %v232
  %v1839 = vunpack.c.h.b16 %v232
  %v1840 = vunpack.c.l.b16 %v233
  %v1841 = vunpack.c.h.b16 %v233
  %v1842 = vunpack.c.l.b16 %v234
  %v1843 = vunpack.c.h.b16 %v234
  %v1844 = vunpack.c.l.b16 %v235
  %v1845 = vunpack.c.h.b16 %v235
  %v1846 = vunpack.c.l.b16 %v236
  %v1847 = vunpack.c.h.b16 %v236
  %v1848 = vunpack.c.l.b16 %v237
  %v1849 = vunpack.c.h.b16 %v237
  %v1850 = vunpack.c.l.b16 %v238
  %v1851 = vunpack.c.h.b16 %v238
  %v1852 = vunpack.c.l.b16 %v239
  %v1853 = vunpack.c.h.b16 %v239
  %v1854 = vunpack.c.l.b16 %v240
  %v1855 = vunpack.c.h.b16 %v240
  %v1856 = vunpack.c.l.b16 %v241
  %v1857 = vunpack.c.h.b16 %v241
  %v1858 = vunpack.c.l.b16 %v242
  %v1859 = vunpack.c.h.b16 %v242
  %v1860 = vunpack.c.l.b16 %v243
  %v1861 = vunpack.c.h.b16 %v243
  %v1862 = vunpack.c.l.b16 %v244
  %v1863 = vunpack.c.h.b16 %v244
  %v1864 = vunpack.c.l.b16 %v245
  %v1865 = vunpack.c.h.b16 %v245
  %v1866 = vunpack.c.l.b16 %v246
  %v1867 = vunpack.c.h.b16 %v246
  %v1868 = vunpack.c.l.b16 %v247
  %v1869 = vunpack.c.h.b16 %v247
  %v1870 = vunpack.c.l.b16 %v248
  %v1871 = vunpack.c.h.b16 %v248
  %v1872 = vunpack.c.l.b16 %v249
  %v1873 = vunpack.c.h.b16 %v249
  %v1874 = vunpack.c.l.b16 %v250
  %v1875 = vunpack.c.h.b16 %v250
  %v1876 = vunpack.c.l.b16 %v251
  %v1877 = vunpack.c.h.b16 %v251
  %v1878 = vunpack.c.l.b16 %v252
  %v1879 = vunpack.c.h.b16 %v252
  %v1880 = vunpack.c.l.b16 %v253
  %v1881 = vunpack.c.h.b16 %v253
  %v1882 = vunpack.c.l.b16 %v254
  %v1883 = vunpack.c.h.b16 %v254
  %v1884 = vunpack.c.l.b16 %v255
  %v1885 = vunpack.c.h.b16 %v255
  %v1886 = vunpack.c.l.b16 %v256
  %v1887 = vunpack.c.h.b16 %v256
  %v1888 = vunpack.c.l.b16 %v257
  %v1889 = vunpack.c.h.b16 %v257
  %v1890 = vunpack.c.l.b16 %v258
  %v1891 = vunpack.c.h.b16 %v258
  %v1892 = vunpack.c.l.b16 %v259
  %v1893 = vunpack.c.h.b16 %v259
  %v1894 = vunpack.c.l.b16 %v260
  %v1895 = vunpack.c.h.b16 %v260
  %v1896 = vunpack.c.l.b16 %v261
  %v1897 = vunpack.c.h.b16 %v261
  %v1898 = vunpack.c.l.b16 %v262
  %v1899 = vunpack.c.h.b16 %v262
  %v1900 = vunpack.c.l.b16 %v263
  %v1901 = vunpack.c.h.b16 %v263
  %v1902 = vunpack.c.l.b16 %v264
  %v1903 = vunpack.c.h.b16 %v264
  %v1904 = vunpack.c.l.b16 %v265
  %v1905 = vunpack.c.h.b16 %v265
  %v1906 = vunpack.c.l.b16 %v266
  %v1907 = vunpack.c.h.b16 %v266
  %v1908 = vunpack.c.l.b16 %v267
  %v1909 = vunpack.c.h.b16 %v267
  %v1910 = vunpack.c.l.b16 %v268
  %v1911 = vunpack.c.h.b16 %v268
  %v1912 = vunpack.c.l.b16 %v269
  %v1913 = vunpack.c.h.b16 %v269
  %v1914 = vunpack.c.l.b16 %v270
  %v1915 = vunpack.c.h.b16 %v270
  %v1916 = vunpack.c.l.b16 %v271
  %v1917 = vunpack.c.h.b16 %v271
  %v1918 = vunpack.c.l.b16 %v272
  %v1919 = vunpack.c.h.b16 %v272
  %v1920 = vunpack.c.l.b16 %v273
  %v1921 = vunpack.c.h.b16 %v273
  %v1922 = vpack.c.b16 %v1414, %v1410
  %v1923 = vpack.c.b16 %v1415, %v1411
  %v1924 = vpack.c.b16 %v1416, %v1412
  %v1925 = vpack.c.b16 %v1417, %v1413
  %v1926 = vpack.c.b16 %v1422, %v1418
  %v1927 = vpack.c.b16 %v1423, %v1419
  %v1928 = vpack.c.b16 %v1424, %v1420
  %v1929 = vpack.c.b16 %v1425, %v1421
  %v1930 = vpack.c.b16 %v1430, %v1426
  %v1931 = vpack.c.b16 %v1431, %v1427
  %v1932 = vpack.c.b16 %v1432, %v1428
  %v1933 = vpack.c.b16 %v1433, %v1429
  %v1934 = vpack.c.b16 %v1438, %v1434
  %v1935 = vpack.c.b16 %v1439, %v1435
  %v1936 = vpack.c.b16 %v1440, %v1436
  %v1937 = vpack.c.b16 %v1441, %v1437
  %v1938 = vpack.c.b16 %v1446, %v1442
  %v1939 = vpack.c.b16 %v1447, %v1443
  %v1940 = vpack.c.b16 %v1448, %v1444
  %v1941 = vpack.c.b16 %v1449, %v1445
  %v1942 = vpack.c.b16 %v1454, %v1450
  %v1943 = vpack.c.b16 %v1455, %v1451
  %v1944 = vpack.c.b16 %v1456, %v1452
  %v1945 = vpack.c.b16 %v1457, %v1453
  %v1946 = vpack.c.b16 %v1462, %v1458
  %v1947 = vpack.c.b16 %v1463, %v1459
  %v1948 = vpack.c.b16 %v1464, %v1460
  %v1949 = vpack.c.b16 %v1465, %v1461
  %v1950 = vpack.c.b16 %v1470, %v1466
  %v1951 = vpack.c.b16 %v1471, %v1467
  %v1952 = vpack.c.b16 %v1472, %v1468
  %v1953 = vpack.c.b16 %v1473, %v1469
  %v1954 = vpack.c.b16 %v1478, %v1474
  %v1955 = vpack.c.b16 %v1479, %v1475
  %v1956 = vpack.c.b16 %v1480, %v1476
  %v1957 = vpack.c.b16 %v1481, %v1477
  %v1958 = vpack.c.b16 %v1486, %v1482
  %v1959 = vpack.c.b16 %v1487, %v1483
  %v1960 = vpack.c.b16 %v1488, %v1484
  %v1961 = vpack.c.b16 %v1489, %v1485
  %v1962 = vpack.c.b16 %v1494, %v1490
  %v1963 = vpack.c.b16 %v1495, %v1491
  %v1964 = vpack.c.b16 %v1496, %v1492
  %v1965 = vpack.c.b16 %v1497, %v1493
  %v1966 = vpack.c.b16 %v1502, %v1498
  %v1967 = vpack.c.b16 %v1503, %v1499
  %v1968 = vpack.c.b16 %v1504, %v1500
  %v1969 = vpack.c.b16 %v1505, %v1501
  %v1970 = vpack.c.b16 %v1510, %v1506
  %v1971 = vpack.c.b16 %v1511, %v1507
  %v1972 = vpack.c.b16 %v1512, %v1508
  %v1973 = vpack.c.b16 %v1513, %v1509
  %v1974 = vpack.c.b16 %v1518, %v1514
  %v1975 = vpack.c.b16 %v1519, %v1515
  %v1976 = vpack.c.b16 %v1520, %v1516
  %v1977 = vpack.c.b16 %v1521, %v1517
  %v1978 = vpack.c.b16 %v1526, %v1522
  %v1979 = vpack.c.b16 %v1527, %v1523
  %v1980 = vpack.c.b16 %v1528, %v1524
  %v1981 = vpack.c.b16 %v1529, %v1525
  %v1982 = vpack.c.b16 %v1534, %v1530
  %v1983 = vpack.c.b16 %v1535, %v1531
  %v1984 = vpack.c.b16 %v1536, %v1532
  %v1985 = vpack.c.b16 %v1537, %v1533
  %v1986 = vpack.c.b16 %v1542, %v1538
  %v1987 = vpack.c.b16 %v1543, %v1539
  %v1988 = vpack.c.b16 %v1544, %v1540
  %v1989 = vpack.c.b16 %v1545, %v1541
  %v1990 = vpack.c.b16 %v1550, %v1546
  %v1991 = vpack.c.b16 %v1551, %v1547
  %v1992 = vpack.c.b16 %v1552, %v1548
  %v1993 = vpack.c.b16 %v1553, %v1549
  %v1994 = vpack.c.b16 %v1558, %v1554
  %v1995 = vpack.c.b16 %v1559, %v1555
  %v1996 = vpack.c.b16 %v1560, %v1556
  %v1997 = vpack.c.b16 %v1561, %v1557
  %v1998 = vpack.c.b16 %v1566, %v1562
  %v1999 = vpack.c.b16 %v1567, %v1563
  %v2000 = vpack.c.b16 %v1568, %v1564
  %v2001 = vpack.c.b16 %v1569, %v1565
  %v2002 = vpack.c.b16 %v1574, %v1570
  %v2003 = vpack.c.b16 %v1575, %v1571
  %v2004 = vpack.c.b16 %v1576, %v1572
  %v2005 = vpack.c.b16 %v1577, %v1573
  %v2006 = vpack.c.b16 %v1582, %v1578
  %v2007 = vpack.c.b16 %v1583, %v1579
  %v2008 = vpack.c.b16 %v1584, %v1580
  %v2009 = vpack.c.b16 %v1585, %v1581
  %v2010 = vpack.c.b16 %v1590, %v1586
  %v2011 = vpack.c.b16 %v1591, %v1587
  %v2012 = vpack.c.b16 %v1592, %v1588
  %v2013 = vpack.c.b16 %v1593, %v1589
  %v2014 = vpack.c.b16 %v1598, %v1594
  %v2015 = vpack.c.b16 %v1599, %v1595
  %v2016 = vpack.c.b16 %v1600, %v1596
  %v2017 = vpack.c.b16 %v1601, %v1597
  %v2018 = vpack.c.b16 %v1606, %v1602
  %v2019 = vpack.c.b16 %v1607, %v1603
  %v2020 = vpack.c.b16 %v1608, %v1604
  %v2021 = vpack.c.b16 %v1609, %v1605
  %v2022 = vpack.c.b16 %v1614, %v1610
  %v2023 = vpack.c.b16 %v1615, %v1611
  %v2024 = vpack.c.b16 %v1616, %v1612
  %v2025 = vpack.c.b16 %v1617, %v1613
  %v2026 = vpack.c.b16 %v1622, %v1618
  %v2027 = vpack.c.b16 %v1623, %v1619
  %v2028 = vpack.c.b16 %v1624, %v1620
  %v2029 = vpack.c.b16 %v1625, %v1621
  %v2030 = vpack.c.b16 %v1630, %v1626
  %v2031 = vpack.c.b16 %v1631, %v1627
  %v2032 = vpack.c.b16 %v1632, %v1628
  %v2033 = vpack.c.b16 %v1633, %v1629
  %v2034 = vpack.c.b16 %v1638, %v1634
  %v2035 = vpack.c.b16 %v1639, %v1635
  %v2036 = vpack.c.b16 %v1640, %v1636
  %v2037 = vpack.c.b16 %v1641, %v1637
  %v2038 = vpack.c.b16 %v1646, %v1642
  %v2039 = vpack.c.b16 %v1647, %v1643
  %v2040 = vpack.c.b16 %v1648, %v1644
  %v2041 = vpack.c.b16 %v1649, %v1645
  %v2042 = vpack.c.b16 %v1654, %v1650
  %v2043 = vpack.c.b16 %v1655, %v1651
  %v2044 = vpack.c.b16 %v1656, %v1652
  %v2045 = vpack.c.b16 %v1657, %v1653
  %v2046 = vpack.c.b16 %v1662, %v1658
  %v2047 = vpack.c.b16 %v1663, %v1659
  %v2048 = vpack.c.b16 %v1664, %v1660
  %v2049 = vpack.c.b16 %v1665, %v1661
  %v2050 = vpack.c.b16 %v1670, %v1666
  %v2051 = vpack.c.b16 %v1671, %v1667
  %v2052 = vpack.c.b16 %v1672, %v1668
  %v2053 = vpack.c.b16 %v1673, %v1669
  %v2054 = vpack.c.b16 %v1678, %v1674
  %v2055 = vpack.c.b16 %v1679, %v1675
  %v2056 = vpack.c.b16 %v1680, %v1676
  %v2057 = vpack.c.b16 %v1681, %v1677
  %v2058 = vpack.c.b16 %v1686, %v1682
  %v2059 = vpack.c.b16 %v1687, %v1683
  %v2060 = vpack.c.b16 %v1688, %v1684
  %v2061 = vpack.c.b16 %v1689, %v1685
  %v2062 = vpack.c.b16 %v1694, %v1690
  %v2063 = vpack.c.b16 %v1695, %v1691
  %v2064 = vpack.c.b16 %v1696, %v1692
  %v2065 = vpack.c.b16 %v1697, %v1693
  %v2066 = vpack.c.b16 %v1702, %v1698
  %v2067 = vpack.c.b16 %v1703, %v1699
  %v2068 = vpack.c.b16 %v1704, %v1700
  %v2069 = vpack.c.b16 %v1705, %v1701
  %v2070 = vpack.c.b16 %v1710, %v1706
  %v2071 = vpack.c.b16 %v1711, %v1707
  %v2072 = vpack.c.b16 %v1712, %v1708
  %v2073 = vpack.c.b16 %v1713, %v1709
  %v2074 = vpack.c.b16 %v1718, %v1714
  %v2075 = vpack.c.b16 %v1719, %v1715
  %v2076 = vpack.c.b16 %v1720, %v1716
  %v2077 = vpack.c.b16 %v1721, %v1717
  %v2078 = vpack.c.b16 %v1726, %v1722
  %v2079 = vpack.c.b16 %v1727, %v1723
  %v2080 = vpack.c.b16 %v1728, %v1724
  %v2081 = vpack.c.b16 %v1729, %v1725
  %v2082 = vpack.c.b16 %v1734, %v1730
  %v2083 = vpack.c.b16 %v1735, %v1731
  %v2084 = vpack.c.b16 %v1736, %v1732
  %v2085 = vpack.c.b16 %v1737, %v1733
  %v2086 = vpack.c.b16 %v1742, %v1738
  %v2087 = vpack.c.b16 %v1743, %v1739
  %v2088 = vpack.c.b16 %v1744, %v1740
  %v2089 = vpack.c.b16 %v1745, %v1741
  %v2090 = vpack.c.b16 %v1750, %v1746
  %v2091 = vpack.c.b16 %v1751, %v1747
  %v2092 = vpack.c.b16 %v1752, %v1748
  %v2093 = vpack.c.b16 %v1753, %v1749
  %v2094 = vpack.c.b16 %v1758, %v1754
  %v2095 = vpack.c.b16 %v1759, %v1755
  %v2096 = vpack.c.b16 %v1760, %v1756
  %v2097 = vpack.c.b16 %v1761, %v1757
  %v2098 = vpack.c.b16 %v1766, %v1762
  %v2099 = vpack.c.b16 %v1767, %v1763
  %v2100 = vpack.c.b16 %v1768, %v1764
  %v2101 = vpack.c.b16 %v1769, %v1765
  %v2102 = vpack.c.b16 %v1774, %v1770
  %v2103 = vpack.c.b16 %v1775, %v1771
  %v2104 = vpack.c.b16 %v1776, %v1772
  %v2105 = vpack.c.b16 %v1777, %v1773
  %v2106 = vpack.c.b16 %v1782, %v1778
  %v2107 = vpack.c.b16 %v1783, %v1779
  %v2108 = vpack.c.b16 %v1784, %v1780
  %v2109 = vpack.c.b16 %v1785, %v1781
  %v2110 = vpack.c.b16 %v1790, %v1786
  %v2111 = vpack.c.b16 %v1791, %v1787
  %v2112 = vpack.c.b16 %v1792, %v1788
  %v2113 = vpack.c.b16 %v1793, %v1789
  %v2114 = vpack.c.b16 %v1798, %v1794
  %v2115 = vpack.c.b16 %v1799, %v1795
  %v2116 = vpack.c.b16 %v1800, %v1796
  %v2117 = vpack.c.b16 %v1801, %v1797
  %v2118 = vpack.c.b16 %v1806, %v1802
  %v2119 = vpack.c.b16 %v1807, %v1803
  %v2120 = vpack.c.b16 %v1808, %v1804
  %v2121 = vpack.c.b16 %v1809, %v1805
  %v2122 = vpack.c.b16 %v1814, %v1810
  %v2123 = vpack.c.b16 %v1815, %v1811
  %v2124 = vpack.c.b16 %v1816, %v1812
  %v2125 = vpack.c.b16 %v1817, %v1813
  %v2126 = vpack.c.b16 %v1822, %v1818
  %v2127 = vpack.c.b16 %v1823, %v1819
  %v2128 = vpack.c.b16 %v1824, %v1820
  %v2129 = vpack.c.b16 %v1825, %v1821
  %v2130 = vpack.c.b16 %v1830, %v1826
  %v2131 = vpack.c.b16 %v1831, %v1827
  %v2132 = vpack.c.b16 %v1832, %v1828
  %v2133 = vpack.c.b16 %v1833, %v1829
  %v2134 = vpack.c.b16 %v1838, %v1834
  %v2135 = vpack.c.b16 %v1839, %v1835
  %v2136 = vpack.c.b16 %v1840, %v1836
  %v2137 = vpack.c.b16 %v1841, %v1837
  %v2138 = vpack.c.b16 %v1846, %v1842
  %v2139 = vpack.c.b16 %v1847, %v1843
  %v2140 = vpack.c.b16 %v1848, %v1844
  %v2141 = vpack.c.b16 %v1849, %v1845
  %v2142 = vpack.c.b16 %v1854, %v1850
  %v2143 = vpack.c.b16 %v1855, %v1851
  %v2144 = vpack.c.b16 %v1856, %v1852
  %v2145 = vpack.c.b16 %v1857, %v1853
  %v2146 = vpack.c.b16 %v1862, %v1858
  %v2147 = vpack.c.b16 %v1863, %v1859
  %v2148 = vpack.c.b16 %v1864, %v1860
  %v2149 = vpack.c.b16 %v1865, %v1861
  %v2150 = vpack.c.b16 %v1870, %v1866
  %v2151 = vpack.c.b16 %v1871, %v1867
  %v2152 = vpack.c.b16 %v1872, %v1868
  %v2153 = vpack.c.b16 %v1873, %v1869
  %v2154 = vpack.c.b16 %v1878, %v1874
  %v2155 = vpack.c.b16 %v1879, %v1875
  %v2156 = vpack.c.b16 %v1880, %v1876
  %v2157 = vpack.c.b16 %v1881, %v1877
  %v2158 = vpack.c.b16 %v1886, %v1882
  %v2159 = vpack.c.b16 %v1887, %v1883
  %v2160 = vpack.c.b16 %v1888, %v1884
  %v2161 = vpack.c.b16 %v1889, %v1885
  %v2162 = vpack.c.b16 %v1894, %v1890
  %v2163 = vpack.c.b16 %v1895, %v1891
  %v2164 = vpack.c.b16 %v1896, %v1892
  %v2165 = vpack.c.b16 %v1897, %v1893
  %v2166 = vpack.c.b16 %v1902, %v1898
  %v2167 = vpack.c.b16 %v1903, %v1899
  %v2168 = vpack.c.b16 %v1904, %v1900
  %v2169 = vpack.c.b16 %v1905, %v1901
  %v2170 = vpack.c.b16 %v1910, %v1906
  %v2171 = vpack.c.b16 %v1911, %v1907
  %v2172 = vpack.c.b16 %v1912, %v1908
  %v2173 = vpack.c.b16 %v1913, %v1909
  %v2174 = vpack.c.b16 %v1918, %v1914
  %v2175 = vpack.c.b16 %v1919, %v1915
  %v2176 = vpack.c.b16 %v1920, %v1916
  %v2177 = vpack.c.b16 %v1921, %v1917
  %v2482 = vunpack.c.l.b16 %v274
  %v2483 = vunpack.c.h.b16 %v274
  %v2484 = vunpack.c.l.b16 %v275
  %v2485 = vunpack.c.h.b16 %v275
  %v2486 = vunpack.c.l.b16 %v276
  %v2487 = vunpack.c.h.b16 %v276
  %v2488 = vunpack.c.l.b16 %v277
  %v2489 = vunpack.c.h.b16 %v277
  %v2490 = vunpack.c.l.b16 %v278
  %v2491 = vunpack.c.h.b16 %v278
  %v2492 = vunpack.c.l.b16 %v279
  %v2493 = vunpack.c.h.b16 %v279
  %v2494 = vunpack.c.l.b16 %v280
  %v2495 = vunpack.c.h.b16 %v280
  %v2496 = vunpack.c.l.b16 %v281
  %v2497 = vunpack.c.h.b16 %v281
  %v2498 = vunpack.c.l.b16 %v282
  %v2499 = vunpack.c.h.b16 %v282
  %v2500 = vunpack.c.l.b16 %v283
  %v2501 = vunpack.c.h.b16 %v283
  %v2502 = vunpack.c.l.b16 %v284
  %v2503 = vunpack.c.h.b16 %v284
  %v2504 = vunpack.c.l.b16 %v285
  %v2505 = vunpack.c.h.b16 %v285
  %v2506 = vunpack.c.l.b16 %v286
  %v2507 = vunpack.c.h.b16 %v286
  %v2508 = vunpack.c.l.b16 %v287
  %v2509 = vunpack.c.h.b16 %v287
  %v2510 = vunpack.c.l.b16 %v288
  %v2511 = vunpack.c.h.b16 %v288
  %v2512 = vunpack.c.l.b16 %v289
  %v2513 = vunpack.c.h.b16 %v289
  %v2514 = vunpack.c.l.b16 %v290
  %v2515 = vunpack.c.h.b16 %v290
  %v2516 = vunpack.c.l.b16 %v291
  %v2517 = vunpack.c.h.b16 %v291
  %v2518 = vunpack.c.l.b16 %v292
  %v2519 = vunpack.c.h.b16 %v292
  %v2520 = vunpack.c.l.b16 %v293
  %v2521 = vunpack.c.h.b16 %v293
  %v2522 = vunpack.c.l.b16 %v294
  %v2523 = vunpack.c.h.b16 %v294
  %v2524 = vunpack.c.l.b16 %v295
  %v2525 = vunpack.c.h.b16 %v295
  %v2526 = vunpack.c.l.b16 %v296
  %v2527 = vunpack.c.h.b16 %v296
  %v2528 = vunpack.c.l.b16 %v297
  %v2529 = vunpack.c.h.b16 %v297
  %v2530 = vunpack.c.l.b16 %v298
  %v2531 = vunpack.c.h.b16 %v298
  %v2532 = vunpack.c.l.b16 %v299
  %v2533 = vunpack.c.h.b16 %v299
  %v2534 = vunpack.c.l.b16 %v300
  %v2535 = vunpack.c.h.b16 %v300
  %v2536 = vunpack.c.l.b16 %v301
  %v2537 = vunpack.c.h.b16 %v301
  %v2538 = vunpack.c.l.b16 %v302
  %v2539 = vunpack.c.h.b16 %v302
  %v2540 = vunpack.c.l.b16 %v303
  %v2541 = vunpack.c.h.b16 %v303
  %v2542 = vunpack.c.l.b16 %v304
  %v2543 = vunpack.c.h.b16 %v304
  %v2544 = vunpack.c.l.b16 %v305
  %v2545 = vunpack.c.h.b16 %v305
  %v2546 = vunpack.c.l.b16 %v306
  %v2547 = vunpack.c.h.b16 %v306
  %v2548 = vunpack.c.l.b16 %v307
  %v2549 = vunpack.c.h.b16 %v307
  %v2550 = vunpack.c.l.b16 %v308
  %v2551 = vunpack.c.h.b16 %v308
  %v2552 = vunpack.c.l.b16 %v309
  %v2553 = vunpack.c.h.b16 %v309
  %v2554 = vunpack.c.l.b16 %v310
  %v2555 = vunpack.c.h.b16 %v310
  %v2556 = vunpack.c.l.b16 %v311
  %v2557 = vunpack.c.h.b16 %v311
  %v2558 = vunpack.c.l.b16 %v312
  %v2559 = vunpack.c.h.b16 %v312
  %v2560 = vunpack.c.l.b16 %v313
  %v2561 = vunpack.c.h.b16 %v313
  %v2562 = vunpack.c.l.b16 %v314
  %v2563 = vunpack.c.h.b16 %v314
  %v2564 = vunpack.c.l.b16 %v315
  %v2565 = vunpack.c.h.b16 %v315
  %v2566 = vunpack.c.l.b16 %v316
  %v2567 = vunpack.c.h.b16 %v316
  %v2568 = vunpack.c.l.b16 %v317
  %v2569 = vunpack.c.h.b16 %v317
  %v2570 = vunpack.c.l.b16 %v318
  %v2571 = vunpack.c.h.b16 %v318
  %v2572 = vunpack.c.l.b16 %v319
  %v2573 = vunpack.c.h.b16 %v319
  %v2574 = vunpack.c.l.b16 %v320
  %v2575 = vunpack.c.h.b16 %v320
  %v2576 = vunpack.c.l.b16 %v321
  %v2577 = vunpack.c.h.b16 %v321
  %v2578 = vunpack.c.l.b16 %v322
  %v2579 = vunpack.c.h.b16 %v322
  %v2580 = vunpack.c.l.b16 %v323
  %v2581 = vunpack.c.h.b16 %v323
  %v2582 = vunpack.c.l.b16 %v324
  %v2583 = vunpack.c.h.b16 %v324
  %v2584 = vunpack.c.l.b16 %v325
  %v2585 = vunpack.c.h.b16 %v325
  %v2586 = vunpack.c.l.b16 %v326
  %v2587 = vunpack.c.h.b16 %v326
  %v2588 = vunpack.c.l.b16 %v327
  %v2589 = vunpack.c.h.b16 %v327
  %v2590 = vunpack.c.l.b16 %v328
  %v2591 = vunpack.c.h.b16 %v328
  %v2592 = vunpack.c.l.b16 %v329
  %v2593 = vunpack.c.h.b16 %v329
  %v2594 = vunpack.c.l.b16 %v330
  %v2595 = vunpack.c.h.b16 %v330
  %v2596 = vunpack.c.l.b16 %v331
  %v2597 = vunpack.c.h.b16 %v331
  %v2598 = vunpack.c.l.b16 %v332
  %v2599 = vunpack.c.h.b16 %v332
  %v2600 = vunpack.c.l.b16 %v333
  %v2601 = vunpack.c.h.b16 %v333
  %v2602 = vunpack.c.l.b16 %v334
  %v2603 = vunpack.c.h.b16 %v334
  %v2604 = vunpack.c.l.b16 %v335
  %v2605 = vunpack.c.h.b16 %v335
  %v2606 = vunpack.c.l.b16 %v336
  %v2607 = vunpack.c.h.b16 %v336
  %v2608 = vunpack.c.l.b16 %v337
  %v2609 = vunpack.c.h.b16 %v337
  %v2610 = vunpack.c.l.b16 %v338
  %v2611 = vunpack.c.h.b16 %v338
  %v2612 = vunpack.c.l.b16 %v339
  %v2613 = vunpack.c.h.b16 %v339
  %v2614 = vunpack.c.l.b16 %v340
  %v2615 = vunpack.c.h.b16 %v340
  %v2616 = vunpack.c.l.b16 %v341
  %v2617 = vunpack.c.h.b16 %v341
  %v2618 = vunpack.c.l.b16 %v342
  %v2619 = vunpack.c.h.b16 %v342
  %v2620 = vunpack.c.l.b16 %v343
  %v2621 = vunpack.c.h.b16 %v343
  %v2622 = vunpack.c.l.b16 %v344
  %v2623 = vunpack.c.h.b16 %v344
  %v2624 = vunpack.c.l.b16 %v345
  %v2625 = vunpack.c.h.b16 %v345
  %v2626 = vunpack.c.l.b16 %v346
  %v2627 = vunpack.c.h.b16 %v346
  %v2628 = vunpack.c.l.b16 %v347
  %v2629 = vunpack.c.h.b16 %v347
  %v2630 = vunpack.c.l.b16 %v348
  %v2631 = vunpack.c.h.b16 %v348
  %v2632 = vunpack.c.l.b16 %v349
  %v2633 = vunpack.c.h.b16 %v349
  %v2634 = vunpack.c.l.b16 %v350
  %v2635 = vunpack.c.h.b16 %v350
  %v2636 = vunpack.c.l.b16 %v351
  %v2637 = vunpack.c.h.b16 %v351
  %v2638 = vunpack.c.l.b16 %v352
  %v2639 = vunpack.c.h.b16 %v352
  %v2640 = vunpack.c.l.b16 %v353
  %v2641 = vunpack.c.h.b16 %v353
  %v2642 = vunpack.c.l.b16 %v354
  %v2643 = vunpack.c.h.b16 %v354
  %v2644 = vunpack.c.l.b16 %v355
  %v2645 = vunpack.c.h.b16 %v355
  %v2646 = vunpack.c.l.b16 %v356
  %v2647 = vunpack.c.h.b16 %v356
  %v2648 = vunpack.c.l.b16 %v357
  %v2649 = vunpack.c.h.b16 %v357
  %v2650 = vunpack.c.l.b16 %v358
  %v2651 = vunpack.c.h.b16 %v358
  %v2652 = vunpack.c.l.b16 %v359
  %v2653 = vunpack.c.h.b16 %v359
  %v2654 = vunpack.c.l.b16 %v360
  %v2655 = vunpack.c.h.b16 %v360
  %v2656 = vunpack.c.l.b16 %v361
  %v2657 = vunpack.c.h.b16 %v361
  %v2658 = vunpack.c.l.b16 %v362
  %v2659 = vunpack.c.h.b16 %v362
  %v2660 = vunpack.c.l.b16 %v363
  %v2661 = vunpack.c.h.b16 %v363
  %v2662 = vunpack.c.l.b16 %v364
  %v2663 = vunpack.c.h.b16 %v364
  %v2664 = vunpack.c.l.b16 %v365
  %v2665 = vunpack.c.h.b16 %v365
  %v2666 = vunpack.c.l.b16 %v366
  %v2667 = vunpack.c.h.b16 %v366
  %v2668 = vunpack.c.l.b16 %v367
  %v2669 = vunpack.c.h.b16 %v367
  %v2670 = vunpack.c.l.b16 %v368
  %v2671 = vunpack.c.h.b16 %v368
  %v2672 = vunpack.c.l.b16 %v369
  %v2673 = vunpack.c.h.b16 %v369
  %v2674 = vunpack.c.l.b16 %v370
  %v2675 = vunpack.c.h.b16 %v370
  %v2676 = vunpack.c.l.b16 %v371
  %v2677 = vunpack.c.h.b16 %v371
  %v2678 = vunpack.c.l.b16 %v372
  %v2679 = vunpack.c.h.b16 %v372
  %v2680 = vunpack.c.l.b16 %v373
  %v2681 = vunpack.c.h.b16 %v373
  %v2682 = vunpack.c.l.b16 %v374
  %v2683 = vunpack.c.h.b16 %v374
  %v2684 = vunpack.c.l.b16 %v375
  %v2685 = vunpack.c.h.b16 %v375
  %v2686 = vunpack.c.l.b16 %v376
  %v2687 = vunpack.c.h.b16 %v376
  %v2688 = vunpack.c.l.b16 %v377
  %v2689 = vunpack.c.h.b16 %v377
  %v2690 = vunpack.c.l.b16 %v378
  %v2691 = vunpack.c.h.b16 %v378
  %v2692 = vunpack.c.l.b16 %v379
  %v2693 = vunpack.c.h.b16 %v379
  %v2694 = vunpack.c.l.b16 %v380
  %v2695 = vunpack.c.h.b16 %v380
  %v2696 = vunpack.c.l.b16 %v381
  %v2697 = vunpack.c.h.b16 %v381
  %v2698 = vunpack.c.l.b16 %v382
  %v2699 = vunpack.c.h.b16 %v382
  %v2700 = vunpack.c.l.b16 %v383
  %v2701 = vunpack.c.h.b16 %v383
  %v2702 = vunpack.c.l.b16 %v384
  %v2703 = vunpack.c.h.b16 %v384
  %v2704 = vunpack.c.l.b16 %v385
  %v2705 = vunpack.c.h.b16 %v385
  %v2706 = vpack.c.b16 %v2486, %v2482
  %v2707 = vpack.c.b16 %v2487, %v2483
  %v2708 = vpack.c.b16 %v2488, %v2484
  %v2709 = vpack.c.b16 %v2489, %v2485
  %v2710 = vpack.c.b16 %v2494, %v2490
  %v2711 = vpack.c.b16 %v2495, %v2491
  %v2712 = vpack.c.b16 %v2496, %v2492
  %v2713 = vpack.c.b16 %v2497, %v2493
  %v2714 = vpack.c.b16 %v2502, %v2498
  %v2715 = vpack.c.b16 %v2503, %v2499
  %v2716 = vpack.c.b16 %v2504, %v2500
  %v2717 = vpack.c.b16 %v2505, %v2501
  %v2718 = vpack.c.b16 %v2510, %v2506
  %v2719 = vpack.c.b16 %v2511, %v2507
  %v2720 = vpack.c.b16 %v2512, %v2508
  %v2721 = vpack.c.b16 %v2513, %v2509
  %v2722 = vpack.c.b16 %v2518, %v2514
  %v2723 = vpack.c.b16 %v2519, %v2515
  %v2724 = vpack.c.b16 %v2520, %v2516
  %v2725 = vpack.c.b16 %v2521, %v2517
  %v2726 = vpack.c.b16 %v2526, %v2522
  %v2727 = vpack.c.b16 %v2527, %v2523
  %v2728 = vpack.c.b16 %v2528, %v2524
  %v2729 = vpack.c.b16 %v2529, %v2525
  %v2730 = vpack.c.b16 %v2534, %v2530
  %v2731 = vpack.c.b16 %v2535, %v2531
  %v2732 = vpack.c.b16 %v2536, %v2532
  %v2733 = vpack.c.b16 %v2537, %v2533
  %v2734 = vpack.c.b16 %v2542, %v2538
  %v2735 = vpack.c.b16 %v2543, %v2539
  %v2736 = vpack.c.b16 %v2544, %v2540
  %v2737 = vpack.c.b16 %v2545, %v2541
  %v2738 = vpack.c.b16 %v2550, %v2546
  %v2739 = vpack.c.b16 %v2551, %v2547
  %v2740 = vpack.c.b16 %v2552, %v2548
  %v2741 = vpack.c.b16 %v2553, %v2549
  %v2742 = vpack.c.b16 %v2558, %v2554
  %v2743 = vpack.c.b16 %v2559, %v2555
  %v2744 = vpack.c.b16 %v2560, %v2556
  %v2745 = vpack.c.b16 %v2561, %v2557
  %v2746 = vpack.c.b16 %v2566, %v2562
  %v2747 = vpack.c.b16 %v2567, %v2563
  %v2748 = vpack.c.b16 %v2568, %v2564
  %v2749 = vpack.c.b16 %v2569, %v2565
  %v2750 = vpack.c.b16 %v2574, %v2570
  %v2751 = vpack.c.b16 %v2575, %v2571
  %v2752 = vpack.c.b16 %v2576, %v2572
  %v2753 = vpack.c.b16 %v2577, %v2573
  %v2754 = vpack.c.b16 %v2582, %v2578
  %v2755 = vpack.c.b16 %v2583, %v2579
  %v2756 = vpack.c.b16 %v2584, %v2580
  %v2757 = vpack.c.b16 %v2585, %v2581
  %v2758 = vpack.c.b16 %v2590, %v2586
  %v2759 = vpack.c.b16 %v2591, %v2587
  %v2760 = vpack.c.b16 %v2592, %v2588
  %v2761 = vpack.c.b16 %v2593, %v2589
  %v2762 = vpack.c.b16 %v2598, %v2594
  %v2763 = vpack.c.b16 %v2599, %v2595
  %v2764 = vpack.c.b16 %v2600, %v2596
  %v2765 = vpack.c.b16 %v2601, %v2597
  %v2766 = vpack.c.b16 %v2606, %v2602
  %v2767 = vpack.c.b16 %v2607, %v2603
  %v2768 = vpack.c.b16 %v2608, %v2604
  %v2769 = vpack.c.b16 %v2609, %v2605
  %v2770 = vpack.c.b16 %v2614, %v2610
  %v2771 = vpack.c.b16 %v2615, %v2611
  %v2772 = vpack.c.b16 %v2616, %v2612
  %v2773 = vpack.c.b16 %v2617, %v2613
  %v2774 = vpack.c.b16 %v2622, %v2618
  %v2775 = vpack.c.b16 %v2623, %v2619
  %v2776 = vpack.c.b16 %v2624, %v2620
  %v2777 = vpack.c.b16 %v2625, %v2621
  %v2778 = vpack.c.b16 %v2630, %v2626
  %v2779 = vpack.c.b16 %v2631, %v2627
  %v2780 = vpack.c.b16 %v2632, %v2628
  %v2781 = vpack.c.b16 %v2633, %v2629
  %v2782 = vpack.c.b16 %v2638, %v2634
  %v2783 = vpack.c.b16 %v2639, %v2635
  %v2784 = vpack.c.b16 %v2640, %v2636
  %v2785 = vpack.c.b16 %v2641, %v2637
  %v2786 = vpack.c.b16 %v2646, %v2642
  %v2787 = vpack.c.b16 %v2647, %v2643
  %v2788 = vpack.c.b16 %v2648, %v2644
  %v2789 = vpack.c.b16 %v2649, %v2645
  %v2790 = vpack.c.b16 %v2654, %v2650
  %v2791 = vpack.c.b16 %v2655, %v2651
  %v2792 = vpack.c.b16 %v2656, %v2652
  %v2793 = vpack.c.b16 %v2657, %v2653
  %v2794 = vpack.c.b16 %v2662, %v2658
  %v2795 = vpack.c.b16 %v2663, %v2659
  %v2796 = vpack.c.b16 %v2664, %v2660
  %v2797 = vpack.c.b16 %v2665, %v2661
  %v2798 = vpack.c.b16 %v2670, %v2666
  %v2799 = vpack.c.b16 %v2671, %v2667
  %v2800 = vpack.c.b16 %v2672, %v2668
  %v2801 = vpack.c.b16 %v2673, %v2669
  %v2802 = vpack.c.b16 %v2678, %v2674
  %v2803 = vpack.c.b16 %v2679, %v2675
  %v2804 = vpack.c.b16 %v2680, %v2676
  %v2805 = vpack.c.b16 %v2681, %v2677
  %v2806 = vpack.c.b16 %v2686, %v2682
  %v2807 = vpack.c.b16 %v2687, %v2683
  %v2808 = vpack.c.b16 %v2688, %v2684
  %v2809 = vpack.c.b16 %v2689, %v2685
  %v2810 = vpack.c.b16 %v2694, %v2690
  %v2811 = vpack.c.b16 %v2695, %v2691
  %v2812 = vpack.c.b16 %v2696, %v2692
  %v2813 = vpack.c.b16 %v2697, %v2693
  %v2814 = vpack.c.b16 %v2702, %v2698
  %v2815 = vpack.c.b16 %v2703, %v2699
  %v2816 = vpack.c.b16 %v2704, %v2700
  %v2817 = vpack.c.b16 %v2705, %v2701
  %vm2930 = vcmask 523264
  %v2932 = vsel %vm2930, %v1925, 0
  %v2935 = vsel %vm2930, %v1929, 0
  %v2938 = vsel %vm2930, %v1933, 0
  %v2941 = vsel %vm2930, %v1937, 0
  %v2944 = vsel %vm2930, %v1941, 0
  %v2947 = vsel %vm2930, %v1945, 0
  %v2950 = vsel %vm2930, %v1949, 0
  %v2953 = vsel %vm2930, %v1953, 0
  %v2956 = vsel %vm2930, %v1957, 0
  %v2959 = vsel %vm2930, %v1961, 0
  %v2962 = vsel %vm2930, %v1965, 0
  %v2965 = vsel %vm2930, %v1969, 0
  %v2968 = vsel %vm2930, %v1973, 0
  %v2971 = vsel %vm2930, %v1977, 0
  %v2974 = vsel %vm2930, %v1981, 0
  %v2977 = vsel %vm2930, %v1985, 0
  %v2980 = vsel %vm2930, %v1989, 0
  %v2983 = vsel %vm2930, %v1993, 0
  %v2986 = vsel %vm2930, %v1997, 0
  %v2989 = vsel %vm2930, %v2001, 0
  %v2992 = vsel %vm2930, %v2005, 0
  %v2995 = vsel %vm2930, %v2009, 0
  %v2998 = vsel %vm2930, %v2013, 0
  %v3001 = vsel %vm2930, %v2017, 0
  %v3004 = vsel %vm2930, %v2021, 0
  %v3007 = vsel %vm2930, %v2025, 0
  %v3010 = vsel %vm2930, %v2029, 0
  %v3013 = vsel %vm2930, %v2033, 0
  %v3016 = vsel %vm2930, %v2037, 0
  %v3019 = vsel %vm2930, %v2041, 0
  %v3022 = vsel %vm2930, %v2045, 0
  %v3025 = vsel %vm2930, %v2049, 0
  %v3028 = vsel %vm2930, %v2053, 0
  %v3031 = vsel %vm2930, %v2057, 0
  %v3034 = vsel %vm2930, %v2061, 0
  %v3037 = vsel %vm2930, %v2065, 0
  %v3040 = vsel %vm2930, %v2069, 0
  %v3043 = vsel %vm2930, %v2073, 0
  %v3046 = vsel %vm2930, %v2077, 0
  %v3049 = vsel %vm2930, %v2081, 0
  %v3052 = vsel %vm2930, %v2085, 0
  %v3055 = vsel %vm2930, %v2089, 0
  %v3058 = vsel %vm2930, %v2093, 0
  %v3061 = vsel %vm2930, %v2097, 0
  %v3064 = vsel %vm2930, %v2101, 0
  %v3067 = vsel %vm2930, %v2105, 0
  %v3070 = vsel %vm2930, %v2109, 0
  %v3073 = vsel %vm2930, %v2113, 0
  %v3076 = vsel %vm2930, %v2117, 0
  %v3079 = vsel %vm2930, %v2121, 0
  %v3082 = vsel %vm2930, %v2125, 0
  %v3085 = vsel %vm2930, %v2129, 0
  %v3088 = vsel %vm2930, %v2133, 0
  %v3091 = vsel %vm2930, %v2137, 0
  %v3094 = vsel %vm2930, %v2141, 0
  %v3097 = vsel %vm2930, %v2145, 0
  %v3100 = vsel %vm2930, %v2149, 0
  %v3103 = vsel %vm2930, %v2153, 0
  %v3106 = vsel %vm2930, %v2157, 0
  %v3109 = vsel %vm2930, %v2161, 0
  %v3112 = vsel %vm2930, %v2165, 0
  %v3115 = vsel %vm2930, %v2169, 0
  %v3118 = vsel %vm2930, %v2173, 0
  %v3121 = vsel %vm2930, %v2177, 0
  %3123 = vmatpush.bf16.msra.mxu0 %v2734
  %3124 = vmatpush.bf16.msra.mxu0 %v2730
  %3125 = vmatpush.bf16.msra.mxu0 %v2726
  %3126 = vmatpush.bf16.msra.mxu0 %v2722
  %3127 = vmatpush.bf16.msra.mxu0 %v2718
  %3128 = vmatpush.bf16.msra.mxu0 %v2714
  %3129 = vmatpush.bf16.msra.mxu0 %v2710
  %3130 = vmatpush.bf16.msra.mxu0 %v2706
  %3131 = vmatmul.bf16.gmra.mxu0 %v1922
  %v3132 = vpop.f32.mrf.mxu0
  %v3133 = vadd.f32 %v517, %v3132
  %v3134 = vpop.f32.mrf.mxu0
  %v3135 = vadd.f32 %v522, %v3134
  %3136 = vmatmul.bf16.gmra.mxu0 %v1926
  %v3137 = vpop.f32.mrf.mxu0
  %v3138 = vadd.f32 %v527, %v3137
  %v3139 = vpop.f32.mrf.mxu0
  %v3140 = vadd.f32 %v532, %v3139
  %3141 = vmatmul.bf16.gmra.mxu0 %v1930
  %v3142 = vpop.f32.mrf.mxu0
  %v3143 = vadd.f32 %v537, %v3142
  %v3144 = vpop.f32.mrf.mxu0
  %v3145 = vadd.f32 %v542, %v3144
  %3146 = vmatmul.bf16.gmra.mxu0 %v1934
  %v3147 = vpop.f32.mrf.mxu0
  %v3148 = vadd.f32 %v547, %v3147
  %v3149 = vpop.f32.mrf.mxu0
  %v3150 = vadd.f32 %v552, %v3149
  %3151 = vmatmul.bf16.gmra.mxu0 %v1938
  %v3152 = vpop.f32.mrf.mxu0
  %v3153 = vadd.f32 %v557, %v3152
  %v3154 = vpop.f32.mrf.mxu0
  %v3155 = vadd.f32 %v562, %v3154
  %3156 = vmatmul.bf16.gmra.mxu0 %v1942
  %v3157 = vpop.f32.mrf.mxu0
  %v3158 = vadd.f32 %v567, %v3157
  %v3159 = vpop.f32.mrf.mxu0
  %v3160 = vadd.f32 %v572, %v3159
  %3161 = vmatmul.bf16.gmra.mxu0 %v1946
  %v3162 = vpop.f32.mrf.mxu0
  %v3163 = vadd.f32 %v577, %v3162
  %v3164 = vpop.f32.mrf.mxu0
  %v3165 = vadd.f32 %v582, %v3164
  %3166 = vmatmul.bf16.gmra.mxu0 %v1950
  %v3167 = vpop.f32.mrf.mxu0
  %v3168 = vadd.f32 %v587, %v3167
  %v3169 = vpop.f32.mrf.mxu0
  %v3170 = vadd.f32 %v592, %v3169
  %3171 = vmatmul.bf16.gmra.mxu0 %v1954
  %v3172 = vpop.f32.mrf.mxu0
  %v3173 = vadd.f32 %v597, %v3172
  %v3174 = vpop.f32.mrf.mxu0
  %v3175 = vadd.f32 %v602, %v3174
  %3176 = vmatmul.bf16.gmra.mxu0 %v1958
  %v3177 = vpop.f32.mrf.mxu0
  %v3178 = vadd.f32 %v607, %v3177
  %v3179 = vpop.f32.mrf.mxu0
  %v3180 = vadd.f32 %v612, %v3179
  %3181 = vmatmul.bf16.gmra.mxu0 %v1962
  %v3182 = vpop.f32.mrf.mxu0
  %v3183 = vadd.f32 %v617, %v3182
  %v3184 = vpop.f32.mrf.mxu0
  %v3185 = vadd.f32 %v622, %v3184
  %3186 = vmatmul.bf16.gmra.mxu0 %v1966
  %v3187 = vpop.f32.mrf.mxu0
  %v3188 = vadd.f32 %v627, %v3187
  %v3189 = vpop.f32.mrf.mxu0
  %v3190 = vadd.f32 %v632, %v3189
  %3191 = vmatmul.bf16.gmra.mxu0 %v1970
  %v3192 = vpop.f32.mrf.mxu0
  %v3193 = vadd.f32 %v637, %v3192
  %v3194 = vpop.f32.mrf.mxu0
  %v3195 = vadd.f32 %v642, %v3194
  %3196 = vmatmul.bf16.gmra.mxu0 %v1974
  %v3197 = vpop.f32.mrf.mxu0
  %v3198 = vadd.f32 %v647, %v3197
  %v3199 = vpop.f32.mrf.mxu0
  %v3200 = vadd.f32 %v652, %v3199
  %3201 = vmatmul.bf16.gmra.mxu0 %v1978
  %v3202 = vpop.f32.mrf.mxu0
  %v3203 = vadd.f32 %v657, %v3202
  %v3204 = vpop.f32.mrf.mxu0
  %v3205 = vadd.f32 %v662, %v3204
  %3206 = vmatmul.bf16.gmra.mxu0 %v1982
  %v3207 = vpop.f32.mrf.mxu0
  %v3208 = vadd.f32 %v667, %v3207
  %v3209 = vpop.f32.mrf.mxu0
  %v3210 = vadd.f32 %v672, %v3209
  %3211 = vmatmul.bf16.gmra.mxu0 %v1986
  %v3212 = vpop.f32.mrf.mxu0
  %v3213 = vadd.f32 %v677, %v3212
  %v3214 = vpop.f32.mrf.mxu0
  %v3215 = vadd.f32 %v682, %v3214
  %3216 = vmatmul.bf16.gmra.mxu0 %v1990
  %v3217 = vpop.f32.mrf.mxu0
  %v3218 = vadd.f32 %v687, %v3217
  %v3219 = vpop.f32.mrf.mxu0
  %v3220 = vadd.f32 %v692, %v3219
  %3221 = vmatmul.bf16.gmra.mxu0 %v1994
  %v3222 = vpop.f32.mrf.mxu0
  %v3223 = vadd.f32 %v697, %v3222
  %v3224 = vpop.f32.mrf.mxu0
  %v3225 = vadd.f32 %v702, %v3224
  %3226 = vmatmul.bf16.gmra.mxu0 %v1998
  %v3227 = vpop.f32.mrf.mxu0
  %v3228 = vadd.f32 %v707, %v3227
  %v3229 = vpop.f32.mrf.mxu0
  %v3230 = vadd.f32 %v712, %v3229
  %3231 = vmatmul.bf16.gmra.mxu0 %v2002
  %v3232 = vpop.f32.mrf.mxu0
  %v3233 = vadd.f32 %v717, %v3232
  %v3234 = vpop.f32.mrf.mxu0
  %v3235 = vadd.f32 %v722, %v3234
  %3236 = vmatmul.bf16.gmra.mxu0 %v2006
  %v3237 = vpop.f32.mrf.mxu0
  %v3238 = vadd.f32 %v727, %v3237
  %v3239 = vpop.f32.mrf.mxu0
  %v3240 = vadd.f32 %v732, %v3239
  %3241 = vmatmul.bf16.gmra.mxu0 %v2010
  %v3242 = vpop.f32.mrf.mxu0
  %v3243 = vadd.f32 %v737, %v3242
  %v3244 = vpop.f32.mrf.mxu0
  %v3245 = vadd.f32 %v742, %v3244
  %3246 = vmatmul.bf16.gmra.mxu0 %v2014
  %v3247 = vpop.f32.mrf.mxu0
  %v3248 = vadd.f32 %v747, %v3247
  %v3249 = vpop.f32.mrf.mxu0
  %v3250 = vadd.f32 %v752, %v3249
  %3251 = vmatmul.bf16.gmra.mxu0 %v2018
  %v3252 = vpop.f32.mrf.mxu0
  %v3253 = vadd.f32 %v757, %v3252
  %v3254 = vpop.f32.mrf.mxu0
  %v3255 = vadd.f32 %v762, %v3254
  %3256 = vmatmul.bf16.gmra.mxu0 %v2022
  %v3257 = vpop.f32.mrf.mxu0
  %v3258 = vadd.f32 %v767, %v3257
  %v3259 = vpop.f32.mrf.mxu0
  %v3260 = vadd.f32 %v772, %v3259
  %3261 = vmatmul.bf16.gmra.mxu0 %v2026
  %v3262 = vpop.f32.mrf.mxu0
  %v3263 = vadd.f32 %v777, %v3262
  %v3264 = vpop.f32.mrf.mxu0
  %v3265 = vadd.f32 %v782, %v3264
  %3266 = vmatmul.bf16.gmra.mxu0 %v2030
  %v3267 = vpop.f32.mrf.mxu0
  %v3268 = vadd.f32 %v787, %v3267
  %v3269 = vpop.f32.mrf.mxu0
  %v3270 = vadd.f32 %v792, %v3269
  %3271 = vmatmul.bf16.gmra.mxu0 %v2034
  %v3272 = vpop.f32.mrf.mxu0
  %v3273 = vadd.f32 %v797, %v3272
  %v3274 = vpop.f32.mrf.mxu0
  %v3275 = vadd.f32 %v802, %v3274
  %3276 = vmatmul.bf16.gmra.mxu0 %v2038
  %v3277 = vpop.f32.mrf.mxu0
  %v3278 = vadd.f32 %v807, %v3277
  %v3279 = vpop.f32.mrf.mxu0
  %v3280 = vadd.f32 %v812, %v3279
  %3281 = vmatmul.bf16.gmra.mxu0 %v2042
  %v3282 = vpop.f32.mrf.mxu0
  %v3283 = vadd.f32 %v817, %v3282
  %v3284 = vpop.f32.mrf.mxu0
  %v3285 = vadd.f32 %v822, %v3284
  %3286 = vmatmul.bf16.gmra.mxu0 %v2046
  %v3287 = vpop.f32.mrf.mxu0
  %v3288 = vadd.f32 %v827, %v3287
  %v3289 = vpop.f32.mrf.mxu0
  %v3290 = vadd.f32 %v832, %v3289
  %3291 = vmatmul.bf16.gmra.mxu0 %v2050
  %v3292 = vpop.f32.mrf.mxu0
  %v3293 = vadd.f32 %v837, %v3292
  %v3294 = vpop.f32.mrf.mxu0
  %v3295 = vadd.f32 %v842, %v3294
  %3296 = vmatmul.bf16.gmra.mxu0 %v2054
  %v3297 = vpop.f32.mrf.mxu0
  %v3298 = vadd.f32 %v847, %v3297
  %v3299 = vpop.f32.mrf.mxu0
  %v3300 = vadd.f32 %v852, %v3299
  %3301 = vmatmul.bf16.gmra.mxu0 %v2058
  %v3302 = vpop.f32.mrf.mxu0
  %v3303 = vadd.f32 %v857, %v3302
  %v3304 = vpop.f32.mrf.mxu0
  %v3305 = vadd.f32 %v862, %v3304
  %3306 = vmatmul.bf16.gmra.mxu0 %v2062
  %v3307 = vpop.f32.mrf.mxu0
  %v3308 = vadd.f32 %v867, %v3307
  %v3309 = vpop.f32.mrf.mxu0
  %v3310 = vadd.f32 %v872, %v3309
  %3311 = vmatmul.bf16.gmra.mxu0 %v2066
  %v3312 = vpop.f32.mrf.mxu0
  %v3313 = vadd.f32 %v877, %v3312
  %v3314 = vpop.f32.mrf.mxu0
  %v3315 = vadd.f32 %v882, %v3314
  %3316 = vmatmul.bf16.gmra.mxu0 %v2070
  %v3317 = vpop.f32.mrf.mxu0
  %v3318 = vadd.f32 %v887, %v3317
  %v3319 = vpop.f32.mrf.mxu0
  %v3320 = vadd.f32 %v892, %v3319
  %3321 = vmatmul.bf16.gmra.mxu0 %v2074
  %v3322 = vpop.f32.mrf.mxu0
  %v3323 = vadd.f32 %v897, %v3322
  %v3324 = vpop.f32.mrf.mxu0
  %v3325 = vadd.f32 %v902, %v3324
  %3326 = vmatmul.bf16.gmra.mxu0 %v2078
  %v3327 = vpop.f32.mrf.mxu0
  %v3328 = vadd.f32 %v907, %v3327
  %v3329 = vpop.f32.mrf.mxu0
  %v3330 = vadd.f32 %v912, %v3329
  %3331 = vmatmul.bf16.gmra.mxu0 %v2082
  %v3332 = vpop.f32.mrf.mxu0
  %v3333 = vadd.f32 %v917, %v3332
  %v3334 = vpop.f32.mrf.mxu0
  %v3335 = vadd.f32 %v922, %v3334
  %3336 = vmatmul.bf16.gmra.mxu0 %v2086
  %v3337 = vpop.f32.mrf.mxu0
  %v3338 = vadd.f32 %v927, %v3337
  %v3339 = vpop.f32.mrf.mxu0
  %v3340 = vadd.f32 %v932, %v3339
  %3341 = vmatmul.bf16.gmra.mxu0 %v2090
  %v3342 = vpop.f32.mrf.mxu0
  %v3343 = vadd.f32 %v937, %v3342
  %v3344 = vpop.f32.mrf.mxu0
  %v3345 = vadd.f32 %v942, %v3344
  %3346 = vmatmul.bf16.gmra.mxu0 %v2094
  %v3347 = vpop.f32.mrf.mxu0
  %v3348 = vadd.f32 %v947, %v3347
  %v3349 = vpop.f32.mrf.mxu0
  %v3350 = vadd.f32 %v952, %v3349
  %3351 = vmatmul.bf16.gmra.mxu0 %v2098
  %v3352 = vpop.f32.mrf.mxu0
  %v3353 = vadd.f32 %v957, %v3352
  %v3354 = vpop.f32.mrf.mxu0
  %v3355 = vadd.f32 %v962, %v3354
  %3356 = vmatmul.bf16.gmra.mxu0 %v2102
  %v3357 = vpop.f32.mrf.mxu0
  %v3358 = vadd.f32 %v967, %v3357
  %v3359 = vpop.f32.mrf.mxu0
  %v3360 = vadd.f32 %v972, %v3359
  %3361 = vmatmul.bf16.gmra.mxu0 %v2106
  %v3362 = vpop.f32.mrf.mxu0
  %v3363 = vadd.f32 %v977, %v3362
  %v3364 = vpop.f32.mrf.mxu0
  %v3365 = vadd.f32 %v982, %v3364
  %3366 = vmatmul.bf16.gmra.mxu0 %v2110
  %v3367 = vpop.f32.mrf.mxu0
  %v3368 = vadd.f32 %v987, %v3367
  %v3369 = vpop.f32.mrf.mxu0
  %v3370 = vadd.f32 %v992, %v3369
  %3371 = vmatmul.bf16.gmra.mxu0 %v2114
  %v3372 = vpop.f32.mrf.mxu0
  %v3373 = vadd.f32 %v997, %v3372
  %v3374 = vpop.f32.mrf.mxu0
  %v3375 = vadd.f32 %v1002, %v3374
  %3376 = vmatmul.bf16.gmra.mxu0 %v2118
  %v3377 = vpop.f32.mrf.mxu0
  %v3378 = vadd.f32 %v1007, %v3377
  %v3379 = vpop.f32.mrf.mxu0
  %v3380 = vadd.f32 %v1012, %v3379
  %3381 = vmatmul.bf16.gmra.mxu0 %v2122
  %v3382 = vpop.f32.mrf.mxu0
  %v3383 = vadd.f32 %v1017, %v3382
  %v3384 = vpop.f32.mrf.mxu0
  %v3385 = vadd.f32 %v1022, %v3384
  %3386 = vmatmul.bf16.gmra.mxu0 %v2126
  %v3387 = vpop.f32.mrf.mxu0
  %v3388 = vadd.f32 %v1027, %v3387
  %v3389 = vpop.f32.mrf.mxu0
  %v3390 = vadd.f32 %v1032, %v3389
  %3391 = vmatmul.bf16.gmra.mxu0 %v2130
  %v3392 = vpop.f32.mrf.mxu0
  %v3393 = vadd.f32 %v1037, %v3392
  %v3394 = vpop.f32.mrf.mxu0
  %v3395 = vadd.f32 %v1042, %v3394
  %3396 = vmatmul.bf16.gmra.mxu0 %v2134
  %v3397 = vpop.f32.mrf.mxu0
  %v3398 = vadd.f32 %v1047, %v3397
  %v3399 = vpop.f32.mrf.mxu0
  %v3400 = vadd.f32 %v1052, %v3399
  %3401 = vmatmul.bf16.gmra.mxu0 %v2138
  %v3402 = vpop.f32.mrf.mxu0
  %v3403 = vadd.f32 %v1057, %v3402
  %v3404 = vpop.f32.mrf.mxu0
  %v3405 = vadd.f32 %v1062, %v3404
  %3406 = vmatmul.bf16.gmra.mxu0 %v2142
  %v3407 = vpop.f32.mrf.mxu0
  %v3408 = vadd.f32 %v1067, %v3407
  %v3409 = vpop.f32.mrf.mxu0
  %v3410 = vadd.f32 %v1072, %v3409
  %3411 = vmatmul.bf16.gmra.mxu0 %v2146
  %v3412 = vpop.f32.mrf.mxu0
  %v3413 = vadd.f32 %v1077, %v3412
  %v3414 = vpop.f32.mrf.mxu0
  %v3415 = vadd.f32 %v1082, %v3414
  %3416 = vmatmul.bf16.gmra.mxu0 %v2150
  %v3417 = vpop.f32.mrf.mxu0
  %v3418 = vadd.f32 %v1087, %v3417
  %v3419 = vpop.f32.mrf.mxu0
  %v3420 = vadd.f32 %v1092, %v3419
  %3421 = vmatmul.bf16.gmra.mxu0 %v2154
  %v3422 = vpop.f32.mrf.mxu0
  %v3423 = vadd.f32 %v1097, %v3422
  %v3424 = vpop.f32.mrf.mxu0
  %v3425 = vadd.f32 %v1102, %v3424
  %3426 = vmatmul.bf16.gmra.mxu0 %v2158
  %v3427 = vpop.f32.mrf.mxu0
  %v3428 = vadd.f32 %v1107, %v3427
  %v3429 = vpop.f32.mrf.mxu0
  %v3430 = vadd.f32 %v1112, %v3429
  %3431 = vmatmul.bf16.gmra.mxu0 %v2162
  %v3432 = vpop.f32.mrf.mxu0
  %v3433 = vadd.f32 %v1117, %v3432
  %v3434 = vpop.f32.mrf.mxu0
  %v3435 = vadd.f32 %v1122, %v3434
  %3436 = vmatmul.bf16.gmra.mxu0 %v2166
  %v3437 = vpop.f32.mrf.mxu0
  %v3438 = vadd.f32 %v1127, %v3437
  %v3439 = vpop.f32.mrf.mxu0
  %v3440 = vadd.f32 %v1132, %v3439
  %3441 = vmatmul.bf16.gmra.mxu0 %v2170
  %v3442 = vpop.f32.mrf.mxu0
  %v3443 = vadd.f32 %v1137, %v3442
  %v3444 = vpop.f32.mrf.mxu0
  %v3445 = vadd.f32 %v1142, %v3444
  %3446 = vmatmul.bf16.gmra.mxu0 %v2174
  %v3447 = vpop.f32.mrf.mxu0
  %v3448 = vadd.f32 %v1147, %v3447
  %v3449 = vpop.f32.mrf.mxu0
  %v3450 = vadd.f32 %v1152, %v3449
  %3451 = vdwg.mxu0
  %3452 = vmatpush.bf16.msra.mxu0 %v2766
  %3453 = vmatpush.bf16.msra.mxu0 %v2762
  %3454 = vmatpush.bf16.msra.mxu0 %v2758
  %3455 = vmatpush.bf16.msra.mxu0 %v2754
  %3456 = vmatpush.bf16.msra.mxu0 %v2750
  %3457 = vmatpush.bf16.msra.mxu0 %v2746
  %3458 = vmatpush.bf16.msra.mxu0 %v2742
  %3459 = vmatpush.bf16.msra.mxu0 %v2738
  %3460 = vmatmul.bf16.gmra.mxu0 %v1923
  %v3461 = vpop.f32.mrf.mxu0
  %v3462 = vadd.f32 %v3133, %v3461
  %v3463 = vpop.f32.mrf.mxu0
  %v3464 = vadd.f32 %v3135, %v3463
  %3465 = vmatmul.bf16.gmra.mxu0 %v1927
  %v3466 = vpop.f32.mrf.mxu0
  %v3467 = vadd.f32 %v3138, %v3466
  %v3468 = vpop.f32.mrf.mxu0
  %v3469 = vadd.f32 %v3140, %v3468
  %3470 = vmatmul.bf16.gmra.mxu0 %v1931
  %v3471 = vpop.f32.mrf.mxu0
  %v3472 = vadd.f32 %v3143, %v3471
  %v3473 = vpop.f32.mrf.mxu0
  %v3474 = vadd.f32 %v3145, %v3473
  %3475 = vmatmul.bf16.gmra.mxu0 %v1935
  %v3476 = vpop.f32.mrf.mxu0
  %v3477 = vadd.f32 %v3148, %v3476
  %v3478 = vpop.f32.mrf.mxu0
  %v3479 = vadd.f32 %v3150, %v3478
  %3480 = vmatmul.bf16.gmra.mxu0 %v1939
  %v3481 = vpop.f32.mrf.mxu0
  %v3482 = vadd.f32 %v3153, %v3481
  %v3483 = vpop.f32.mrf.mxu0
  %v3484 = vadd.f32 %v3155, %v3483
  %3485 = vmatmul.bf16.gmra.mxu0 %v1943
  %v3486 = vpop.f32.mrf.mxu0
  %v3487 = vadd.f32 %v3158, %v3486
  %v3488 = vpop.f32.mrf.mxu0
  %v3489 = vadd.f32 %v3160, %v3488
  %3490 = vmatmul.bf16.gmra.mxu0 %v1947
  %v3491 = vpop.f32.mrf.mxu0
  %v3492 = vadd.f32 %v3163, %v3491
  %v3493 = vpop.f32.mrf.mxu0
  %v3494 = vadd.f32 %v3165, %v3493
  %3495 = vmatmul.bf16.gmra.mxu0 %v1951
  %v3496 = vpop.f32.mrf.mxu0
  %v3497 = vadd.f32 %v3168, %v3496
  %v3498 = vpop.f32.mrf.mxu0
  %v3499 = vadd.f32 %v3170, %v3498
  %3500 = vmatmul.bf16.gmra.mxu0 %v1955
  %v3501 = vpop.f32.mrf.mxu0
  %v3502 = vadd.f32 %v3173, %v3501
  %v3503 = vpop.f32.mrf.mxu0
  %v3504 = vadd.f32 %v3175, %v3503
  %3505 = vmatmul.bf16.gmra.mxu0 %v1959
  %v3506 = vpop.f32.mrf.mxu0
  %v3507 = vadd.f32 %v3178, %v3506
  %v3508 = vpop.f32.mrf.mxu0
  %v3509 = vadd.f32 %v3180, %v3508
  %3510 = vmatmul.bf16.gmra.mxu0 %v1963
  %v3511 = vpop.f32.mrf.mxu0
  %v3512 = vadd.f32 %v3183, %v3511
  %v3513 = vpop.f32.mrf.mxu0
  %v3514 = vadd.f32 %v3185, %v3513
  %3515 = vmatmul.bf16.gmra.mxu0 %v1967
  %v3516 = vpop.f32.mrf.mxu0
  %v3517 = vadd.f32 %v3188, %v3516
  %v3518 = vpop.f32.mrf.mxu0
  %v3519 = vadd.f32 %v3190, %v3518
  %3520 = vmatmul.bf16.gmra.mxu0 %v1971
  %v3521 = vpop.f32.mrf.mxu0
  %v3522 = vadd.f32 %v3193, %v3521
  %v3523 = vpop.f32.mrf.mxu0
  %v3524 = vadd.f32 %v3195, %v3523
  %3525 = vmatmul.bf16.gmra.mxu0 %v1975
  %v3526 = vpop.f32.mrf.mxu0
  %v3527 = vadd.f32 %v3198, %v3526
  %v3528 = vpop.f32.mrf.mxu0
  %v3529 = vadd.f32 %v3200, %v3528
  %3530 = vmatmul.bf16.gmra.mxu0 %v1979
  %v3531 = vpop.f32.mrf.mxu0
  %v3532 = vadd.f32 %v3203, %v3531
  %v3533 = vpop.f32.mrf.mxu0
  %v3534 = vadd.f32 %v3205, %v3533
  %3535 = vmatmul.bf16.gmra.mxu0 %v1983
  %v3536 = vpop.f32.mrf.mxu0
  %v3537 = vadd.f32 %v3208, %v3536
  %v3538 = vpop.f32.mrf.mxu0
  %v3539 = vadd.f32 %v3210, %v3538
  %3540 = vmatmul.bf16.gmra.mxu0 %v1987
  %v3541 = vpop.f32.mrf.mxu0
  %v3542 = vadd.f32 %v3213, %v3541
  %v3543 = vpop.f32.mrf.mxu0
  %v3544 = vadd.f32 %v3215, %v3543
  %3545 = vmatmul.bf16.gmra.mxu0 %v1991
  %v3546 = vpop.f32.mrf.mxu0
  %v3547 = vadd.f32 %v3218, %v3546
  %v3548 = vpop.f32.mrf.mxu0
  %v3549 = vadd.f32 %v3220, %v3548
  %3550 = vmatmul.bf16.gmra.mxu0 %v1995
  %v3551 = vpop.f32.mrf.mxu0
  %v3552 = vadd.f32 %v3223, %v3551
  %v3553 = vpop.f32.mrf.mxu0
  %v3554 = vadd.f32 %v3225, %v3553
  %3555 = vmatmul.bf16.gmra.mxu0 %v1999
  %v3556 = vpop.f32.mrf.mxu0
  %v3557 = vadd.f32 %v3228, %v3556
  %v3558 = vpop.f32.mrf.mxu0
  %v3559 = vadd.f32 %v3230, %v3558
  %3560 = vmatmul.bf16.gmra.mxu0 %v2003
  %v3561 = vpop.f32.mrf.mxu0
  %v3562 = vadd.f32 %v3233, %v3561
  %v3563 = vpop.f32.mrf.mxu0
  %v3564 = vadd.f32 %v3235, %v3563
  %3565 = vmatmul.bf16.gmra.mxu0 %v2007
  %v3566 = vpop.f32.mrf.mxu0
  %v3567 = vadd.f32 %v3238, %v3566
  %v3568 = vpop.f32.mrf.mxu0
  %v3569 = vadd.f32 %v3240, %v3568
  %3570 = vmatmul.bf16.gmra.mxu0 %v2011
  %v3571 = vpop.f32.mrf.mxu0
  %v3572 = vadd.f32 %v3243, %v3571
  %v3573 = vpop.f32.mrf.mxu0
  %v3574 = vadd.f32 %v3245, %v3573
  %3575 = vmatmul.bf16.gmra.mxu0 %v2015
  %v3576 = vpop.f32.mrf.mxu0
  %v3577 = vadd.f32 %v3248, %v3576
  %v3578 = vpop.f32.mrf.mxu0
  %v3579 = vadd.f32 %v3250, %v3578
  %3580 = vmatmul.bf16.gmra.mxu0 %v2019
  %v3581 = vpop.f32.mrf.mxu0
  %v3582 = vadd.f32 %v3253, %v3581
  %v3583 = vpop.f32.mrf.mxu0
  %v3584 = vadd.f32 %v3255, %v3583
  %3585 = vmatmul.bf16.gmra.mxu0 %v2023
  %v3586 = vpop.f32.mrf.mxu0
  %v3587 = vadd.f32 %v3258, %v3586
  %v3588 = vpop.f32.mrf.mxu0
  %v3589 = vadd.f32 %v3260, %v3588
  %3590 = vmatmul.bf16.gmra.mxu0 %v2027
  %v3591 = vpop.f32.mrf.mxu0
  %v3592 = vadd.f32 %v3263, %v3591
  %v3593 = vpop.f32.mrf.mxu0
  %v3594 = vadd.f32 %v3265, %v3593
  %3595 = vmatmul.bf16.gmra.mxu0 %v2031
  %v3596 = vpop.f32.mrf.mxu0
  %v3597 = vadd.f32 %v3268, %v3596
  %v3598 = vpop.f32.mrf.mxu0
  %v3599 = vadd.f32 %v3270, %v3598
  %3600 = vmatmul.bf16.gmra.mxu0 %v2035
  %v3601 = vpop.f32.mrf.mxu0
  %v3602 = vadd.f32 %v3273, %v3601
  %v3603 = vpop.f32.mrf.mxu0
  %v3604 = vadd.f32 %v3275, %v3603
  %3605 = vmatmul.bf16.gmra.mxu0 %v2039
  %v3606 = vpop.f32.mrf.mxu0
  %v3607 = vadd.f32 %v3278, %v3606
  %v3608 = vpop.f32.mrf.mxu0
  %v3609 = vadd.f32 %v3280, %v3608
  %3610 = vmatmul.bf16.gmra.mxu0 %v2043
  %v3611 = vpop.f32.mrf.mxu0
  %v3612 = vadd.f32 %v3283, %v3611
  %v3613 = vpop.f32.mrf.mxu0
  %v3614 = vadd.f32 %v3285, %v3613
  %3615 = vmatmul.bf16.gmra.mxu0 %v2047
  %v3616 = vpop.f32.mrf.mxu0
  %v3617 = vadd.f32 %v3288, %v3616
  %v3618 = vpop.f32.mrf.mxu0
  %v3619 = vadd.f32 %v3290, %v3618
  %3620 = vmatmul.bf16.gmra.mxu0 %v2051
  %v3621 = vpop.f32.mrf.mxu0
  %v3622 = vadd.f32 %v3293, %v3621
  %v3623 = vpop.f32.mrf.mxu0
  %v3624 = vadd.f32 %v3295, %v3623
  %3625 = vmatmul.bf16.gmra.mxu0 %v2055
  %v3626 = vpop.f32.mrf.mxu0
  %v3627 = vadd.f32 %v3298, %v3626
  %v3628 = vpop.f32.mrf.mxu0
  %v3629 = vadd.f32 %v3300, %v3628
  %3630 = vmatmul.bf16.gmra.mxu0 %v2059
  %v3631 = vpop.f32.mrf.mxu0
  %v3632 = vadd.f32 %v3303, %v3631
  %v3633 = vpop.f32.mrf.mxu0
  %v3634 = vadd.f32 %v3305, %v3633
  %3635 = vmatmul.bf16.gmra.mxu0 %v2063
  %v3636 = vpop.f32.mrf.mxu0
  %v3637 = vadd.f32 %v3308, %v3636
  %v3638 = vpop.f32.mrf.mxu0
  %v3639 = vadd.f32 %v3310, %v3638
  %3640 = vmatmul.bf16.gmra.mxu0 %v2067
  %v3641 = vpop.f32.mrf.mxu0
  %v3642 = vadd.f32 %v3313, %v3641
  %v3643 = vpop.f32.mrf.mxu0
  %v3644 = vadd.f32 %v3315, %v3643
  %3645 = vmatmul.bf16.gmra.mxu0 %v2071
  %v3646 = vpop.f32.mrf.mxu0
  %v3647 = vadd.f32 %v3318, %v3646
  %v3648 = vpop.f32.mrf.mxu0
  %v3649 = vadd.f32 %v3320, %v3648
  %3650 = vmatmul.bf16.gmra.mxu0 %v2075
  %v3651 = vpop.f32.mrf.mxu0
  %v3652 = vadd.f32 %v3323, %v3651
  %v3653 = vpop.f32.mrf.mxu0
  %v3654 = vadd.f32 %v3325, %v3653
  %3655 = vmatmul.bf16.gmra.mxu0 %v2079
  %v3656 = vpop.f32.mrf.mxu0
  %v3657 = vadd.f32 %v3328, %v3656
  %v3658 = vpop.f32.mrf.mxu0
  %v3659 = vadd.f32 %v3330, %v3658
  %3660 = vmatmul.bf16.gmra.mxu0 %v2083
  %v3661 = vpop.f32.mrf.mxu0
  %v3662 = vadd.f32 %v3333, %v3661
  %v3663 = vpop.f32.mrf.mxu0
  %v3664 = vadd.f32 %v3335, %v3663
  %3665 = vmatmul.bf16.gmra.mxu0 %v2087
  %v3666 = vpop.f32.mrf.mxu0
  %v3667 = vadd.f32 %v3338, %v3666
  %v3668 = vpop.f32.mrf.mxu0
  %v3669 = vadd.f32 %v3340, %v3668
  %3670 = vmatmul.bf16.gmra.mxu0 %v2091
  %v3671 = vpop.f32.mrf.mxu0
  %v3672 = vadd.f32 %v3343, %v3671
  %v3673 = vpop.f32.mrf.mxu0
  %v3674 = vadd.f32 %v3345, %v3673
  %3675 = vmatmul.bf16.gmra.mxu0 %v2095
  %v3676 = vpop.f32.mrf.mxu0
  %v3677 = vadd.f32 %v3348, %v3676
  %v3678 = vpop.f32.mrf.mxu0
  %v3679 = vadd.f32 %v3350, %v3678
  %3680 = vmatmul.bf16.gmra.mxu0 %v2099
  %v3681 = vpop.f32.mrf.mxu0
  %v3682 = vadd.f32 %v3353, %v3681
  %v3683 = vpop.f32.mrf.mxu0
  %v3684 = vadd.f32 %v3355, %v3683
  %3685 = vmatmul.bf16.gmra.mxu0 %v2103
  %v3686 = vpop.f32.mrf.mxu0
  %v3687 = vadd.f32 %v3358, %v3686
  %v3688 = vpop.f32.mrf.mxu0
  %v3689 = vadd.f32 %v3360, %v3688
  %3690 = vmatmul.bf16.gmra.mxu0 %v2107
  %v3691 = vpop.f32.mrf.mxu0
  %v3692 = vadd.f32 %v3363, %v3691
  %v3693 = vpop.f32.mrf.mxu0
  %v3694 = vadd.f32 %v3365, %v3693
  %3695 = vmatmul.bf16.gmra.mxu0 %v2111
  %v3696 = vpop.f32.mrf.mxu0
  %v3697 = vadd.f32 %v3368, %v3696
  %v3698 = vpop.f32.mrf.mxu0
  %v3699 = vadd.f32 %v3370, %v3698
  %3700 = vmatmul.bf16.gmra.mxu0 %v2115
  %v3701 = vpop.f32.mrf.mxu0
  %v3702 = vadd.f32 %v3373, %v3701
  %v3703 = vpop.f32.mrf.mxu0
  %v3704 = vadd.f32 %v3375, %v3703
  %3705 = vmatmul.bf16.gmra.mxu0 %v2119
  %v3706 = vpop.f32.mrf.mxu0
  %v3707 = vadd.f32 %v3378, %v3706
  %v3708 = vpop.f32.mrf.mxu0
  %v3709 = vadd.f32 %v3380, %v3708
  %3710 = vmatmul.bf16.gmra.mxu0 %v2123
  %v3711 = vpop.f32.mrf.mxu0
  %v3712 = vadd.f32 %v3383, %v3711
  %v3713 = vpop.f32.mrf.mxu0
  %v3714 = vadd.f32 %v3385, %v3713
  %3715 = vmatmul.bf16.gmra.mxu0 %v2127
  %v3716 = vpop.f32.mrf.mxu0
  %v3717 = vadd.f32 %v3388, %v3716
  %v3718 = vpop.f32.mrf.mxu0
  %v3719 = vadd.f32 %v3390, %v3718
  %3720 = vmatmul.bf16.gmra.mxu0 %v2131
  %v3721 = vpop.f32.mrf.mxu0
  %v3722 = vadd.f32 %v3393, %v3721
  %v3723 = vpop.f32.mrf.mxu0
  %v3724 = vadd.f32 %v3395, %v3723
  %3725 = vmatmul.bf16.gmra.mxu0 %v2135
  %v3726 = vpop.f32.mrf.mxu0
  %v3727 = vadd.f32 %v3398, %v3726
  %v3728 = vpop.f32.mrf.mxu0
  %v3729 = vadd.f32 %v3400, %v3728
  %3730 = vmatmul.bf16.gmra.mxu0 %v2139
  %v3731 = vpop.f32.mrf.mxu0
  %v3732 = vadd.f32 %v3403, %v3731
  %v3733 = vpop.f32.mrf.mxu0
  %v3734 = vadd.f32 %v3405, %v3733
  %3735 = vmatmul.bf16.gmra.mxu0 %v2143
  %v3736 = vpop.f32.mrf.mxu0
  %v3737 = vadd.f32 %v3408, %v3736
  %v3738 = vpop.f32.mrf.mxu0
  %v3739 = vadd.f32 %v3410, %v3738
  %3740 = vmatmul.bf16.gmra.mxu0 %v2147
  %v3741 = vpop.f32.mrf.mxu0
  %v3742 = vadd.f32 %v3413, %v3741
  %v3743 = vpop.f32.mrf.mxu0
  %v3744 = vadd.f32 %v3415, %v3743
  %3745 = vmatmul.bf16.gmra.mxu0 %v2151
  %v3746 = vpop.f32.mrf.mxu0
  %v3747 = vadd.f32 %v3418, %v3746
  %v3748 = vpop.f32.mrf.mxu0
  %v3749 = vadd.f32 %v3420, %v3748
  %3750 = vmatmul.bf16.gmra.mxu0 %v2155
  %v3751 = vpop.f32.mrf.mxu0
  %v3752 = vadd.f32 %v3423, %v3751
  %v3753 = vpop.f32.mrf.mxu0
  %v3754 = vadd.f32 %v3425, %v3753
  %3755 = vmatmul.bf16.gmra.mxu0 %v2159
  %v3756 = vpop.f32.mrf.mxu0
  %v3757 = vadd.f32 %v3428, %v3756
  %v3758 = vpop.f32.mrf.mxu0
  %v3759 = vadd.f32 %v3430, %v3758
  %3760 = vmatmul.bf16.gmra.mxu0 %v2163
  %v3761 = vpop.f32.mrf.mxu0
  %v3762 = vadd.f32 %v3433, %v3761
  %v3763 = vpop.f32.mrf.mxu0
  %v3764 = vadd.f32 %v3435, %v3763
  %3765 = vmatmul.bf16.gmra.mxu0 %v2167
  %v3766 = vpop.f32.mrf.mxu0
  %v3767 = vadd.f32 %v3438, %v3766
  %v3768 = vpop.f32.mrf.mxu0
  %v3769 = vadd.f32 %v3440, %v3768
  %3770 = vmatmul.bf16.gmra.mxu0 %v2171
  %v3771 = vpop.f32.mrf.mxu0
  %v3772 = vadd.f32 %v3443, %v3771
  %v3773 = vpop.f32.mrf.mxu0
  %v3774 = vadd.f32 %v3445, %v3773
  %3775 = vmatmul.bf16.gmra.mxu0 %v2175
  %v3776 = vpop.f32.mrf.mxu0
  %v3777 = vadd.f32 %v3448, %v3776
  %v3778 = vpop.f32.mrf.mxu0
  %v3779 = vadd.f32 %v3450, %v3778
  %3780 = vdwg.mxu0
  %3781 = vmatpush.bf16.msra.mxu0 %v2798
  %3782 = vmatpush.bf16.msra.mxu0 %v2794
  %3783 = vmatpush.bf16.msra.mxu0 %v2790
  %3784 = vmatpush.bf16.msra.mxu0 %v2786
  %3785 = vmatpush.bf16.msra.mxu0 %v2782
  %3786 = vmatpush.bf16.msra.mxu0 %v2778
  %3787 = vmatpush.bf16.msra.mxu0 %v2774
  %3788 = vmatpush.bf16.msra.mxu0 %v2770
  %3789 = vmatmul.bf16.gmra.mxu0 %v1924
  %v3790 = vpop.f32.mrf.mxu0
  %v3791 = vadd.f32 %v3462, %v3790
  %v3792 = vpop.f32.mrf.mxu0
  %v3793 = vadd.f32 %v3464, %v3792
  %3794 = vmatmul.bf16.gmra.mxu0 %v1928
  %v3795 = vpop.f32.mrf.mxu0
  %v3796 = vadd.f32 %v3467, %v3795
  %v3797 = vpop.f32.mrf.mxu0
  %v3798 = vadd.f32 %v3469, %v3797
  %3799 = vmatmul.bf16.gmra.mxu0 %v1932
  %v3800 = vpop.f32.mrf.mxu0
  %v3801 = vadd.f32 %v3472, %v3800
  %v3802 = vpop.f32.mrf.mxu0
  %v3803 = vadd.f32 %v3474, %v3802
  %3804 = vmatmul.bf16.gmra.mxu0 %v1936
  %v3805 = vpop.f32.mrf.mxu0
  %v3806 = vadd.f32 %v3477, %v3805
  %v3807 = vpop.f32.mrf.mxu0
  %v3808 = vadd.f32 %v3479, %v3807
  %3809 = vmatmul.bf16.gmra.mxu0 %v1940
  %v3810 = vpop.f32.mrf.mxu0
  %v3811 = vadd.f32 %v3482, %v3810
  %v3812 = vpop.f32.mrf.mxu0
  %v3813 = vadd.f32 %v3484, %v3812
  %3814 = vmatmul.bf16.gmra.mxu0 %v1944
  %v3815 = vpop.f32.mrf.mxu0
  %v3816 = vadd.f32 %v3487, %v3815
  %v3817 = vpop.f32.mrf.mxu0
  %v3818 = vadd.f32 %v3489, %v3817
  %3819 = vmatmul.bf16.gmra.mxu0 %v1948
  %v3820 = vpop.f32.mrf.mxu0
  %v3821 = vadd.f32 %v3492, %v3820
  %v3822 = vpop.f32.mrf.mxu0
  %v3823 = vadd.f32 %v3494, %v3822
  %3824 = vmatmul.bf16.gmra.mxu0 %v1952
  %v3825 = vpop.f32.mrf.mxu0
  %v3826 = vadd.f32 %v3497, %v3825
  %v3827 = vpop.f32.mrf.mxu0
  %v3828 = vadd.f32 %v3499, %v3827
  %3829 = vmatmul.bf16.gmra.mxu0 %v1956
  %v3830 = vpop.f32.mrf.mxu0
  %v3831 = vadd.f32 %v3502, %v3830
  %v3832 = vpop.f32.mrf.mxu0
  %v3833 = vadd.f32 %v3504, %v3832
  %3834 = vmatmul.bf16.gmra.mxu0 %v1960
  %v3835 = vpop.f32.mrf.mxu0
  %v3836 = vadd.f32 %v3507, %v3835
  %v3837 = vpop.f32.mrf.mxu0
  %v3838 = vadd.f32 %v3509, %v3837
  %3839 = vmatmul.bf16.gmra.mxu0 %v1964
  %v3840 = vpop.f32.mrf.mxu0
  %v3841 = vadd.f32 %v3512, %v3840
  %v3842 = vpop.f32.mrf.mxu0
  %v3843 = vadd.f32 %v3514, %v3842
  %3844 = vmatmul.bf16.gmra.mxu0 %v1968
  %v3845 = vpop.f32.mrf.mxu0
  %v3846 = vadd.f32 %v3517, %v3845
  %v3847 = vpop.f32.mrf.mxu0
  %v3848 = vadd.f32 %v3519, %v3847
  %3849 = vmatmul.bf16.gmra.mxu0 %v1972
  %v3850 = vpop.f32.mrf.mxu0
  %v3851 = vadd.f32 %v3522, %v3850
  %v3852 = vpop.f32.mrf.mxu0
  %v3853 = vadd.f32 %v3524, %v3852
  %3854 = vmatmul.bf16.gmra.mxu0 %v1976
  %v3855 = vpop.f32.mrf.mxu0
  %v3856 = vadd.f32 %v3527, %v3855
  %v3857 = vpop.f32.mrf.mxu0
  %v3858 = vadd.f32 %v3529, %v3857
  %3859 = vmatmul.bf16.gmra.mxu0 %v1980
  %v3860 = vpop.f32.mrf.mxu0
  %v3861 = vadd.f32 %v3532, %v3860
  %v3862 = vpop.f32.mrf.mxu0
  %v3863 = vadd.f32 %v3534, %v3862
  %3864 = vmatmul.bf16.gmra.mxu0 %v1984
  %v3865 = vpop.f32.mrf.mxu0
  %v3866 = vadd.f32 %v3537, %v3865
  %v3867 = vpop.f32.mrf.mxu0
  %v3868 = vadd.f32 %v3539, %v3867
  %3869 = vmatmul.bf16.gmra.mxu0 %v1988
  %v3870 = vpop.f32.mrf.mxu0
  %v3871 = vadd.f32 %v3542, %v3870
  %v3872 = vpop.f32.mrf.mxu0
  %v3873 = vadd.f32 %v3544, %v3872
  %3874 = vmatmul.bf16.gmra.mxu0 %v1992
  %v3875 = vpop.f32.mrf.mxu0
  %v3876 = vadd.f32 %v3547, %v3875
  %v3877 = vpop.f32.mrf.mxu0
  %v3878 = vadd.f32 %v3549, %v3877
  %3879 = vmatmul.bf16.gmra.mxu0 %v1996
  %v3880 = vpop.f32.mrf.mxu0
  %v3881 = vadd.f32 %v3552, %v3880
  %v3882 = vpop.f32.mrf.mxu0
  %v3883 = vadd.f32 %v3554, %v3882
  %3884 = vmatmul.bf16.gmra.mxu0 %v2000
  %v3885 = vpop.f32.mrf.mxu0
  %v3886 = vadd.f32 %v3557, %v3885
  %v3887 = vpop.f32.mrf.mxu0
  %v3888 = vadd.f32 %v3559, %v3887
  %3889 = vmatmul.bf16.gmra.mxu0 %v2004
  %v3890 = vpop.f32.mrf.mxu0
  %v3891 = vadd.f32 %v3562, %v3890
  %v3892 = vpop.f32.mrf.mxu0
  %v3893 = vadd.f32 %v3564, %v3892
  %3894 = vmatmul.bf16.gmra.mxu0 %v2008
  %v3895 = vpop.f32.mrf.mxu0
  %v3896 = vadd.f32 %v3567, %v3895
  %v3897 = vpop.f32.mrf.mxu0
  %v3898 = vadd.f32 %v3569, %v3897
  %3899 = vmatmul.bf16.gmra.mxu0 %v2012
  %v3900 = vpop.f32.mrf.mxu0
  %v3901 = vadd.f32 %v3572, %v3900
  %v3902 = vpop.f32.mrf.mxu0
  %v3903 = vadd.f32 %v3574, %v3902
  %3904 = vmatmul.bf16.gmra.mxu0 %v2016
  %v3905 = vpop.f32.mrf.mxu0
  %v3906 = vadd.f32 %v3577, %v3905
  %v3907 = vpop.f32.mrf.mxu0
  %v3908 = vadd.f32 %v3579, %v3907
  %3909 = vmatmul.bf16.gmra.mxu0 %v2020
  %v3910 = vpop.f32.mrf.mxu0
  %v3911 = vadd.f32 %v3582, %v3910
  %v3912 = vpop.f32.mrf.mxu0
  %v3913 = vadd.f32 %v3584, %v3912
  %3914 = vmatmul.bf16.gmra.mxu0 %v2024
  %v3915 = vpop.f32.mrf.mxu0
  %v3916 = vadd.f32 %v3587, %v3915
  %v3917 = vpop.f32.mrf.mxu0
  %v3918 = vadd.f32 %v3589, %v3917
  %3919 = vmatmul.bf16.gmra.mxu0 %v2028
  %v3920 = vpop.f32.mrf.mxu0
  %v3921 = vadd.f32 %v3592, %v3920
  %v3922 = vpop.f32.mrf.mxu0
  %v3923 = vadd.f32 %v3594, %v3922
  %3924 = vmatmul.bf16.gmra.mxu0 %v2032
  %v3925 = vpop.f32.mrf.mxu0
  %v3926 = vadd.f32 %v3597, %v3925
  %v3927 = vpop.f32.mrf.mxu0
  %v3928 = vadd.f32 %v3599, %v3927
  %3929 = vmatmul.bf16.gmra.mxu0 %v2036
  %v3930 = vpop.f32.mrf.mxu0
  %v3931 = vadd.f32 %v3602, %v3930
  %v3932 = vpop.f32.mrf.mxu0
  %v3933 = vadd.f32 %v3604, %v3932
  %3934 = vmatmul.bf16.gmra.mxu0 %v2040
  %v3935 = vpop.f32.mrf.mxu0
  %v3936 = vadd.f32 %v3607, %v3935
  %v3937 = vpop.f32.mrf.mxu0
  %v3938 = vadd.f32 %v3609, %v3937
  %3939 = vmatmul.bf16.gmra.mxu0 %v2044
  %v3940 = vpop.f32.mrf.mxu0
  %v3941 = vadd.f32 %v3612, %v3940
  %v3942 = vpop.f32.mrf.mxu0
  %v3943 = vadd.f32 %v3614, %v3942
  %3944 = vmatmul.bf16.gmra.mxu0 %v2048
  %v3945 = vpop.f32.mrf.mxu0
  %v3946 = vadd.f32 %v3617, %v3945
  %v3947 = vpop.f32.mrf.mxu0
  %v3948 = vadd.f32 %v3619, %v3947
  %3949 = vmatmul.bf16.gmra.mxu0 %v2052
  %v3950 = vpop.f32.mrf.mxu0
  %v3951 = vadd.f32 %v3622, %v3950
  %v3952 = vpop.f32.mrf.mxu0
  %v3953 = vadd.f32 %v3624, %v3952
  %3954 = vmatmul.bf16.gmra.mxu0 %v2056
  %v3955 = vpop.f32.mrf.mxu0
  %v3956 = vadd.f32 %v3627, %v3955
  %v3957 = vpop.f32.mrf.mxu0
  %v3958 = vadd.f32 %v3629, %v3957
  %3959 = vmatmul.bf16.gmra.mxu0 %v2060
  %v3960 = vpop.f32.mrf.mxu0
  %v3961 = vadd.f32 %v3632, %v3960
  %v3962 = vpop.f32.mrf.mxu0
  %v3963 = vadd.f32 %v3634, %v3962
  %3964 = vmatmul.bf16.gmra.mxu0 %v2064
  %v3965 = vpop.f32.mrf.mxu0
  %v3966 = vadd.f32 %v3637, %v3965
  %v3967 = vpop.f32.mrf.mxu0
  %v3968 = vadd.f32 %v3639, %v3967
  %3969 = vmatmul.bf16.gmra.mxu0 %v2068
  %v3970 = vpop.f32.mrf.mxu0
  %v3971 = vadd.f32 %v3642, %v3970
  %v3972 = vpop.f32.mrf.mxu0
  %v3973 = vadd.f32 %v3644, %v3972
  %3974 = vmatmul.bf16.gmra.mxu0 %v2072
  %v3975 = vpop.f32.mrf.mxu0
  %v3976 = vadd.f32 %v3647, %v3975
  %v3977 = vpop.f32.mrf.mxu0
  %v3978 = vadd.f32 %v3649, %v3977
  %3979 = vmatmul.bf16.gmra.mxu0 %v2076
  %v3980 = vpop.f32.mrf.mxu0
  %v3981 = vadd.f32 %v3652, %v3980
  %v3982 = vpop.f32.mrf.mxu0
  %v3983 = vadd.f32 %v3654, %v3982
  %3984 = vmatmul.bf16.gmra.mxu0 %v2080
  %v3985 = vpop.f32.mrf.mxu0
  %v3986 = vadd.f32 %v3657, %v3985
  %v3987 = vpop.f32.mrf.mxu0
  %v3988 = vadd.f32 %v3659, %v3987
  %3989 = vmatmul.bf16.gmra.mxu0 %v2084
  %v3990 = vpop.f32.mrf.mxu0
  %v3991 = vadd.f32 %v3662, %v3990
  %v3992 = vpop.f32.mrf.mxu0
  %v3993 = vadd.f32 %v3664, %v3992
  %3994 = vmatmul.bf16.gmra.mxu0 %v2088
  %v3995 = vpop.f32.mrf.mxu0
  %v3996 = vadd.f32 %v3667, %v3995
  %v3997 = vpop.f32.mrf.mxu0
  %v3998 = vadd.f32 %v3669, %v3997
  %3999 = vmatmul.bf16.gmra.mxu0 %v2092
  %v4000 = vpop.f32.mrf.mxu0
  %v4001 = vadd.f32 %v3672, %v4000
  %v4002 = vpop.f32.mrf.mxu0
  %v4003 = vadd.f32 %v3674, %v4002
  %4004 = vmatmul.bf16.gmra.mxu0 %v2096
  %v4005 = vpop.f32.mrf.mxu0
  %v4006 = vadd.f32 %v3677, %v4005
  %v4007 = vpop.f32.mrf.mxu0
  %v4008 = vadd.f32 %v3679, %v4007
  %4009 = vmatmul.bf16.gmra.mxu0 %v2100
  %v4010 = vpop.f32.mrf.mxu0
  %v4011 = vadd.f32 %v3682, %v4010
  %v4012 = vpop.f32.mrf.mxu0
  %v4013 = vadd.f32 %v3684, %v4012
  %4014 = vmatmul.bf16.gmra.mxu0 %v2104
  %v4015 = vpop.f32.mrf.mxu0
  %v4016 = vadd.f32 %v3687, %v4015
  %v4017 = vpop.f32.mrf.mxu0
  %v4018 = vadd.f32 %v3689, %v4017
  %4019 = vmatmul.bf16.gmra.mxu0 %v2108
  %v4020 = vpop.f32.mrf.mxu0
  %v4021 = vadd.f32 %v3692, %v4020
  %v4022 = vpop.f32.mrf.mxu0
  %v4023 = vadd.f32 %v3694, %v4022
  %4024 = vmatmul.bf16.gmra.mxu0 %v2112
  %v4025 = vpop.f32.mrf.mxu0
  %v4026 = vadd.f32 %v3697, %v4025
  %v4027 = vpop.f32.mrf.mxu0
  %v4028 = vadd.f32 %v3699, %v4027
  %4029 = vmatmul.bf16.gmra.mxu0 %v2116
  %v4030 = vpop.f32.mrf.mxu0
  %v4031 = vadd.f32 %v3702, %v4030
  %v4032 = vpop.f32.mrf.mxu0
  %v4033 = vadd.f32 %v3704, %v4032
  %4034 = vmatmul.bf16.gmra.mxu0 %v2120
  %v4035 = vpop.f32.mrf.mxu0
  %v4036 = vadd.f32 %v3707, %v4035
  %v4037 = vpop.f32.mrf.mxu0
  %v4038 = vadd.f32 %v3709, %v4037
  %4039 = vmatmul.bf16.gmra.mxu0 %v2124
  %v4040 = vpop.f32.mrf.mxu0
  %v4041 = vadd.f32 %v3712, %v4040
  %v4042 = vpop.f32.mrf.mxu0
  %v4043 = vadd.f32 %v3714, %v4042
  %4044 = vmatmul.bf16.gmra.mxu0 %v2128
  %v4045 = vpop.f32.mrf.mxu0
  %v4046 = vadd.f32 %v3717, %v4045
  %v4047 = vpop.f32.mrf.mxu0
  %v4048 = vadd.f32 %v3719, %v4047
  %4049 = vmatmul.bf16.gmra.mxu0 %v2132
  %v4050 = vpop.f32.mrf.mxu0
  %v4051 = vadd.f32 %v3722, %v4050
  %v4052 = vpop.f32.mrf.mxu0
  %v4053 = vadd.f32 %v3724, %v4052
  %4054 = vmatmul.bf16.gmra.mxu0 %v2136
  %v4055 = vpop.f32.mrf.mxu0
  %v4056 = vadd.f32 %v3727, %v4055
  %v4057 = vpop.f32.mrf.mxu0
  %v4058 = vadd.f32 %v3729, %v4057
  %4059 = vmatmul.bf16.gmra.mxu0 %v2140
  %v4060 = vpop.f32.mrf.mxu0
  %v4061 = vadd.f32 %v3732, %v4060
  %v4062 = vpop.f32.mrf.mxu0
  %v4063 = vadd.f32 %v3734, %v4062
  %4064 = vmatmul.bf16.gmra.mxu0 %v2144
  %v4065 = vpop.f32.mrf.mxu0
  %v4066 = vadd.f32 %v3737, %v4065
  %v4067 = vpop.f32.mrf.mxu0
  %v4068 = vadd.f32 %v3739, %v4067
  %4069 = vmatmul.bf16.gmra.mxu0 %v2148
  %v4070 = vpop.f32.mrf.mxu0
  %v4071 = vadd.f32 %v3742, %v4070
  %v4072 = vpop.f32.mrf.mxu0
  %v4073 = vadd.f32 %v3744, %v4072
  %4074 = vmatmul.bf16.gmra.mxu0 %v2152
  %v4075 = vpop.f32.mrf.mxu0
  %v4076 = vadd.f32 %v3747, %v4075
  %v4077 = vpop.f32.mrf.mxu0
  %v4078 = vadd.f32 %v3749, %v4077
  %4079 = vmatmul.bf16.gmra.mxu0 %v2156
  %v4080 = vpop.f32.mrf.mxu0
  %v4081 = vadd.f32 %v3752, %v4080
  %v4082 = vpop.f32.mrf.mxu0
  %v4083 = vadd.f32 %v3754, %v4082
  %4084 = vmatmul.bf16.gmra.mxu0 %v2160
  %v4085 = vpop.f32.mrf.mxu0
  %v4086 = vadd.f32 %v3757, %v4085
  %v4087 = vpop.f32.mrf.mxu0
  %v4088 = vadd.f32 %v3759, %v4087
  %4089 = vmatmul.bf16.gmra.mxu0 %v2164
  %v4090 = vpop.f32.mrf.mxu0
  %v4091 = vadd.f32 %v3762, %v4090
  %v4092 = vpop.f32.mrf.mxu0
  %v4093 = vadd.f32 %v3764, %v4092
  %4094 = vmatmul.bf16.gmra.mxu0 %v2168
  %v4095 = vpop.f32.mrf.mxu0
  %v4096 = vadd.f32 %v3767, %v4095
  %v4097 = vpop.f32.mrf.mxu0
  %v4098 = vadd.f32 %v3769, %v4097
  %4099 = vmatmul.bf16.gmra.mxu0 %v2172
  %v4100 = vpop.f32.mrf.mxu0
  %v4101 = vadd.f32 %v3772, %v4100
  %v4102 = vpop.f32.mrf.mxu0
  %v4103 = vadd.f32 %v3774, %v4102
  %4104 = vmatmul.bf16.gmra.mxu0 %v2176
  %v4105 = vpop.f32.mrf.mxu0
  %v4106 = vadd.f32 %v3777, %v4105
  %v4107 = vpop.f32.mrf.mxu0
  %v4108 = vadd.f32 %v3779, %v4107
  %4109 = vdwg.mxu0
  %4110 = vmatpush.bf16.msra.mxu0 0
  %4111 = vmatpush.bf16.msra.mxu0 0
  %4112 = vmatpush.bf16.msra.mxu0 0
  %4113 = vmatpush.bf16.msra.mxu0 0
  %4114 = vmatpush.bf16.msra.mxu0 %v2814
  %4115 = vmatpush.bf16.msra.mxu0 %v2810
  %4116 = vmatpush.bf16.msra.mxu0 %v2806
  %4117 = vmatpush.bf16.msra.mxu0 %v2802
  %4118 = vmatmul.bf16.gmra.mxu0 %v2932
  %v4119 = vpop.f32.mrf.mxu0
  %v4120 = vadd.f32 %v3791, %v4119
  %v4121 = vpop.f32.mrf.mxu0
  %v4122 = vadd.f32 %v3793, %v4121
  %4123 = vmatmul.bf16.gmra.mxu0 %v2935
  %v4124 = vpop.f32.mrf.mxu0
  %v4125 = vadd.f32 %v3796, %v4124
  %v4126 = vpop.f32.mrf.mxu0
  %v4127 = vadd.f32 %v3798, %v4126
  %4128 = vmatmul.bf16.gmra.mxu0 %v2938
  %v4129 = vpop.f32.mrf.mxu0
  %v4130 = vadd.f32 %v3801, %v4129
  %v4131 = vpop.f32.mrf.mxu0
  %v4132 = vadd.f32 %v3803, %v4131
  %4133 = vmatmul.bf16.gmra.mxu0 %v2941
  %v4134 = vpop.f32.mrf.mxu0
  %v4135 = vadd.f32 %v3806, %v4134
  %v4136 = vpop.f32.mrf.mxu0
  %v4137 = vadd.f32 %v3808, %v4136
  %4138 = vmatmul.bf16.gmra.mxu0 %v2944
  %v4139 = vpop.f32.mrf.mxu0
  %v4140 = vadd.f32 %v3811, %v4139
  %v4141 = vpop.f32.mrf.mxu0
  %v4142 = vadd.f32 %v3813, %v4141
  %4143 = vmatmul.bf16.gmra.mxu0 %v2947
  %v4144 = vpop.f32.mrf.mxu0
  %v4145 = vadd.f32 %v3816, %v4144
  %v4146 = vpop.f32.mrf.mxu0
  %v4147 = vadd.f32 %v3818, %v4146
  %4148 = vmatmul.bf16.gmra.mxu0 %v2950
  %v4149 = vpop.f32.mrf.mxu0
  %v4150 = vadd.f32 %v3821, %v4149
  %v4151 = vpop.f32.mrf.mxu0
  %v4152 = vadd.f32 %v3823, %v4151
  %4153 = vmatmul.bf16.gmra.mxu0 %v2953
  %v4154 = vpop.f32.mrf.mxu0
  %v4155 = vadd.f32 %v3826, %v4154
  %v4156 = vpop.f32.mrf.mxu0
  %v4157 = vadd.f32 %v3828, %v4156
  %4158 = vmatmul.bf16.gmra.mxu0 %v2956
  %v4159 = vpop.f32.mrf.mxu0
  %v4160 = vadd.f32 %v3831, %v4159
  %v4161 = vpop.f32.mrf.mxu0
  %v4162 = vadd.f32 %v3833, %v4161
  %4163 = vmatmul.bf16.gmra.mxu0 %v2959
  %v4164 = vpop.f32.mrf.mxu0
  %v4165 = vadd.f32 %v3836, %v4164
  %v4166 = vpop.f32.mrf.mxu0
  %v4167 = vadd.f32 %v3838, %v4166
  %4168 = vmatmul.bf16.gmra.mxu0 %v2962
  %v4169 = vpop.f32.mrf.mxu0
  %v4170 = vadd.f32 %v3841, %v4169
  %v4171 = vpop.f32.mrf.mxu0
  %v4172 = vadd.f32 %v3843, %v4171
  %4173 = vmatmul.bf16.gmra.mxu0 %v2965
  %v4174 = vpop.f32.mrf.mxu0
  %v4175 = vadd.f32 %v3846, %v4174
  %v4176 = vpop.f32.mrf.mxu0
  %v4177 = vadd.f32 %v3848, %v4176
  %4178 = vmatmul.bf16.gmra.mxu0 %v2968
  %v4179 = vpop.f32.mrf.mxu0
  %v4180 = vadd.f32 %v3851, %v4179
  %v4181 = vpop.f32.mrf.mxu0
  %v4182 = vadd.f32 %v3853, %v4181
  %4183 = vmatmul.bf16.gmra.mxu0 %v2971
  %v4184 = vpop.f32.mrf.mxu0
  %v4185 = vadd.f32 %v3856, %v4184
  %v4186 = vpop.f32.mrf.mxu0
  %v4187 = vadd.f32 %v3858, %v4186
  %4188 = vmatmul.bf16.gmra.mxu0 %v2974
  %v4189 = vpop.f32.mrf.mxu0
  %v4190 = vadd.f32 %v3861, %v4189
  %v4191 = vpop.f32.mrf.mxu0
  %v4192 = vadd.f32 %v3863, %v4191
  %4193 = vmatmul.bf16.gmra.mxu0 %v2977
  %v4194 = vpop.f32.mrf.mxu0
  %v4195 = vadd.f32 %v3866, %v4194
  %v4196 = vpop.f32.mrf.mxu0
  %v4197 = vadd.f32 %v3868, %v4196
  %4198 = vmatmul.bf16.gmra.mxu0 %v2980
  %v4199 = vpop.f32.mrf.mxu0
  %v4200 = vadd.f32 %v3871, %v4199
  %v4201 = vpop.f32.mrf.mxu0
  %v4202 = vadd.f32 %v3873, %v4201
  %4203 = vmatmul.bf16.gmra.mxu0 %v2983
  %v4204 = vpop.f32.mrf.mxu0
  %v4205 = vadd.f32 %v3876, %v4204
  %v4206 = vpop.f32.mrf.mxu0
  %v4207 = vadd.f32 %v3878, %v4206
  %4208 = vmatmul.bf16.gmra.mxu0 %v2986
  %v4209 = vpop.f32.mrf.mxu0
  %v4210 = vadd.f32 %v3881, %v4209
  %v4211 = vpop.f32.mrf.mxu0
  %v4212 = vadd.f32 %v3883, %v4211
  %4213 = vmatmul.bf16.gmra.mxu0 %v2989
  %v4214 = vpop.f32.mrf.mxu0
  %v4215 = vadd.f32 %v3886, %v4214
  %v4216 = vpop.f32.mrf.mxu0
  %v4217 = vadd.f32 %v3888, %v4216
  %4218 = vmatmul.bf16.gmra.mxu0 %v2992
  %v4219 = vpop.f32.mrf.mxu0
  %v4220 = vadd.f32 %v3891, %v4219
  %v4221 = vpop.f32.mrf.mxu0
  %v4222 = vadd.f32 %v3893, %v4221
  %4223 = vmatmul.bf16.gmra.mxu0 %v2995
  %v4224 = vpop.f32.mrf.mxu0
  %v4225 = vadd.f32 %v3896, %v4224
  %v4226 = vpop.f32.mrf.mxu0
  %v4227 = vadd.f32 %v3898, %v4226
  %4228 = vmatmul.bf16.gmra.mxu0 %v2998
  %v4229 = vpop.f32.mrf.mxu0
  %v4230 = vadd.f32 %v3901, %v4229
  %v4231 = vpop.f32.mrf.mxu0
  %v4232 = vadd.f32 %v3903, %v4231
  %4233 = vmatmul.bf16.gmra.mxu0 %v3001
  %v4234 = vpop.f32.mrf.mxu0
  %v4235 = vadd.f32 %v3906, %v4234
  %v4236 = vpop.f32.mrf.mxu0
  %v4237 = vadd.f32 %v3908, %v4236
  %4238 = vmatmul.bf16.gmra.mxu0 %v3004
  %v4239 = vpop.f32.mrf.mxu0
  %v4240 = vadd.f32 %v3911, %v4239
  %v4241 = vpop.f32.mrf.mxu0
  %v4242 = vadd.f32 %v3913, %v4241
  %4243 = vmatmul.bf16.gmra.mxu0 %v3007
  %v4244 = vpop.f32.mrf.mxu0
  %v4245 = vadd.f32 %v3916, %v4244
  %v4246 = vpop.f32.mrf.mxu0
  %v4247 = vadd.f32 %v3918, %v4246
  %4248 = vmatmul.bf16.gmra.mxu0 %v3010
  %v4249 = vpop.f32.mrf.mxu0
  %v4250 = vadd.f32 %v3921, %v4249
  %v4251 = vpop.f32.mrf.mxu0
  %v4252 = vadd.f32 %v3923, %v4251
  %4253 = vmatmul.bf16.gmra.mxu0 %v3013
  %v4254 = vpop.f32.mrf.mxu0
  %v4255 = vadd.f32 %v3926, %v4254
  %v4256 = vpop.f32.mrf.mxu0
  %v4257 = vadd.f32 %v3928, %v4256
  %4258 = vmatmul.bf16.gmra.mxu0 %v3016
  %v4259 = vpop.f32.mrf.mxu0
  %v4260 = vadd.f32 %v3931, %v4259
  %v4261 = vpop.f32.mrf.mxu0
  %v4262 = vadd.f32 %v3933, %v4261
  %4263 = vmatmul.bf16.gmra.mxu0 %v3019
  %v4264 = vpop.f32.mrf.mxu0
  %v4265 = vadd.f32 %v3936, %v4264
  %v4266 = vpop.f32.mrf.mxu0
  %v4267 = vadd.f32 %v3938, %v4266
  %4268 = vmatmul.bf16.gmra.mxu0 %v3022
  %v4269 = vpop.f32.mrf.mxu0
  %v4270 = vadd.f32 %v3941, %v4269
  %v4271 = vpop.f32.mrf.mxu0
  %v4272 = vadd.f32 %v3943, %v4271
  %4273 = vmatmul.bf16.gmra.mxu0 %v3025
  %v4274 = vpop.f32.mrf.mxu0
  %v4275 = vadd.f32 %v3946, %v4274
  %v4276 = vpop.f32.mrf.mxu0
  %v4277 = vadd.f32 %v3948, %v4276
  %4278 = vmatmul.bf16.gmra.mxu0 %v3028
  %v4279 = vpop.f32.mrf.mxu0
  %v4280 = vadd.f32 %v3951, %v4279
  %v4281 = vpop.f32.mrf.mxu0
  %v4282 = vadd.f32 %v3953, %v4281
  %4283 = vmatmul.bf16.gmra.mxu0 %v3031
  %v4284 = vpop.f32.mrf.mxu0
  %v4285 = vadd.f32 %v3956, %v4284
  %v4286 = vpop.f32.mrf.mxu0
  %v4287 = vadd.f32 %v3958, %v4286
  %4288 = vmatmul.bf16.gmra.mxu0 %v3034
  %v4289 = vpop.f32.mrf.mxu0
  %v4290 = vadd.f32 %v3961, %v4289
  %v4291 = vpop.f32.mrf.mxu0
  %v4292 = vadd.f32 %v3963, %v4291
  %4293 = vmatmul.bf16.gmra.mxu0 %v3037
  %v4294 = vpop.f32.mrf.mxu0
  %v4295 = vadd.f32 %v3966, %v4294
  %v4296 = vpop.f32.mrf.mxu0
  %v4297 = vadd.f32 %v3968, %v4296
  %4298 = vmatmul.bf16.gmra.mxu0 %v3040
  %v4299 = vpop.f32.mrf.mxu0
  %v4300 = vadd.f32 %v3971, %v4299
  %v4301 = vpop.f32.mrf.mxu0
  %v4302 = vadd.f32 %v3973, %v4301
  %4303 = vmatmul.bf16.gmra.mxu0 %v3043
  %v4304 = vpop.f32.mrf.mxu0
  %v4305 = vadd.f32 %v3976, %v4304
  %v4306 = vpop.f32.mrf.mxu0
  %v4307 = vadd.f32 %v3978, %v4306
  %4308 = vmatmul.bf16.gmra.mxu0 %v3046
  %v4309 = vpop.f32.mrf.mxu0
  %v4310 = vadd.f32 %v3981, %v4309
  %v4311 = vpop.f32.mrf.mxu0
  %v4312 = vadd.f32 %v3983, %v4311
  %4313 = vmatmul.bf16.gmra.mxu0 %v3049
  %v4314 = vpop.f32.mrf.mxu0
  %v4315 = vadd.f32 %v3986, %v4314
  %v4316 = vpop.f32.mrf.mxu0
  %v4317 = vadd.f32 %v3988, %v4316
  %4318 = vmatmul.bf16.gmra.mxu0 %v3052
  %v4319 = vpop.f32.mrf.mxu0
  %v4320 = vadd.f32 %v3991, %v4319
  %v4321 = vpop.f32.mrf.mxu0
  %v4322 = vadd.f32 %v3993, %v4321
  %4323 = vmatmul.bf16.gmra.mxu0 %v3055
  %v4324 = vpop.f32.mrf.mxu0
  %v4325 = vadd.f32 %v3996, %v4324
  %v4326 = vpop.f32.mrf.mxu0
  %v4327 = vadd.f32 %v3998, %v4326
  %4328 = vmatmul.bf16.gmra.mxu0 %v3058
  %v4329 = vpop.f32.mrf.mxu0
  %v4330 = vadd.f32 %v4001, %v4329
  %v4331 = vpop.f32.mrf.mxu0
  %v4332 = vadd.f32 %v4003, %v4331
  %4333 = vmatmul.bf16.gmra.mxu0 %v3061
  %v4334 = vpop.f32.mrf.mxu0
  %v4335 = vadd.f32 %v4006, %v4334
  %v4336 = vpop.f32.mrf.mxu0
  %v4337 = vadd.f32 %v4008, %v4336
  %4338 = vmatmul.bf16.gmra.mxu0 %v3064
  %v4339 = vpop.f32.mrf.mxu0
  %v4340 = vadd.f32 %v4011, %v4339
  %v4341 = vpop.f32.mrf.mxu0
  %v4342 = vadd.f32 %v4013, %v4341
  %4343 = vmatmul.bf16.gmra.mxu0 %v3067
  %v4344 = vpop.f32.mrf.mxu0
  %v4345 = vadd.f32 %v4016, %v4344
  %v4346 = vpop.f32.mrf.mxu0
  %v4347 = vadd.f32 %v4018, %v4346
  %4348 = vmatmul.bf16.gmra.mxu0 %v3070
  %v4349 = vpop.f32.mrf.mxu0
  %v4350 = vadd.f32 %v4021, %v4349
  %v4351 = vpop.f32.mrf.mxu0
  %v4352 = vadd.f32 %v4023, %v4351
  %4353 = vmatmul.bf16.gmra.mxu0 %v3073
  %v4354 = vpop.f32.mrf.mxu0
  %v4355 = vadd.f32 %v4026, %v4354
  %v4356 = vpop.f32.mrf.mxu0
  %v4357 = vadd.f32 %v4028, %v4356
  %4358 = vmatmul.bf16.gmra.mxu0 %v3076
  %v4359 = vpop.f32.mrf.mxu0
  %v4360 = vadd.f32 %v4031, %v4359
  %v4361 = vpop.f32.mrf.mxu0
  %v4362 = vadd.f32 %v4033, %v4361
  %4363 = vmatmul.bf16.gmra.mxu0 %v3079
  %v4364 = vpop.f32.mrf.mxu0
  %v4365 = vadd.f32 %v4036, %v4364
  %v4366 = vpop.f32.mrf.mxu0
  %v4367 = vadd.f32 %v4038, %v4366
  %4368 = vmatmul.bf16.gmra.mxu0 %v3082
  %v4369 = vpop.f32.mrf.mxu0
  %v4370 = vadd.f32 %v4041, %v4369
  %v4371 = vpop.f32.mrf.mxu0
  %v4372 = vadd.f32 %v4043, %v4371
  %4373 = vmatmul.bf16.gmra.mxu0 %v3085
  %v4374 = vpop.f32.mrf.mxu0
  %v4375 = vadd.f32 %v4046, %v4374
  %v4376 = vpop.f32.mrf.mxu0
  %v4377 = vadd.f32 %v4048, %v4376
  %4378 = vmatmul.bf16.gmra.mxu0 %v3088
  %v4379 = vpop.f32.mrf.mxu0
  %v4380 = vadd.f32 %v4051, %v4379
  %v4381 = vpop.f32.mrf.mxu0
  %v4382 = vadd.f32 %v4053, %v4381
  %4383 = vmatmul.bf16.gmra.mxu0 %v3091
  %v4384 = vpop.f32.mrf.mxu0
  %v4385 = vadd.f32 %v4056, %v4384
  %v4386 = vpop.f32.mrf.mxu0
  %v4387 = vadd.f32 %v4058, %v4386
  %4388 = vmatmul.bf16.gmra.mxu0 %v3094
  %v4389 = vpop.f32.mrf.mxu0
  %v4390 = vadd.f32 %v4061, %v4389
  %v4391 = vpop.f32.mrf.mxu0
  %v4392 = vadd.f32 %v4063, %v4391
  %4393 = vmatmul.bf16.gmra.mxu0 %v3097
  %v4394 = vpop.f32.mrf.mxu0
  %v4395 = vadd.f32 %v4066, %v4394
  %v4396 = vpop.f32.mrf.mxu0
  %v4397 = vadd.f32 %v4068, %v4396
  %4398 = vmatmul.bf16.gmra.mxu0 %v3100
  %v4399 = vpop.f32.mrf.mxu0
  %v4400 = vadd.f32 %v4071, %v4399
  %v4401 = vpop.f32.mrf.mxu0
  %v4402 = vadd.f32 %v4073, %v4401
  %4403 = vmatmul.bf16.gmra.mxu0 %v3103
  %v4404 = vpop.f32.mrf.mxu0
  %v4405 = vadd.f32 %v4076, %v4404
  %v4406 = vpop.f32.mrf.mxu0
  %v4407 = vadd.f32 %v4078, %v4406
  %4408 = vmatmul.bf16.gmra.mxu0 %v3106
  %v4409 = vpop.f32.mrf.mxu0
  %v4410 = vadd.f32 %v4081, %v4409
  %v4411 = vpop.f32.mrf.mxu0
  %v4412 = vadd.f32 %v4083, %v4411
  %4413 = vmatmul.bf16.gmra.mxu0 %v3109
  %v4414 = vpop.f32.mrf.mxu0
  %v4415 = vadd.f32 %v4086, %v4414
  %v4416 = vpop.f32.mrf.mxu0
  %v4417 = vadd.f32 %v4088, %v4416
  %4418 = vmatmul.bf16.gmra.mxu0 %v3112
  %v4419 = vpop.f32.mrf.mxu0
  %v4420 = vadd.f32 %v4091, %v4419
  %v4421 = vpop.f32.mrf.mxu0
  %v4422 = vadd.f32 %v4093, %v4421
  %4423 = vmatmul.bf16.gmra.mxu0 %v3115
  %v4424 = vpop.f32.mrf.mxu0
  %v4425 = vadd.f32 %v4096, %v4424
  %v4426 = vpop.f32.mrf.mxu0
  %v4427 = vadd.f32 %v4098, %v4426
  %4428 = vmatmul.bf16.gmra.mxu0 %v3118
  %v4429 = vpop.f32.mrf.mxu0
  %v4430 = vadd.f32 %v4101, %v4429
  %v4431 = vpop.f32.mrf.mxu0
  %v4432 = vadd.f32 %v4103, %v4431
  %4433 = vmatmul.bf16.gmra.mxu0 %v3121
  %v4434 = vpop.f32.mrf.mxu0
  %v4435 = vadd.f32 %v4106, %v4434
  %v4436 = vpop.f32.mrf.mxu0
  %v4437 = vadd.f32 %v4108, %v4436
  %4438 = vdwg.mxu0
  %4439 = vmatpush.bf16.msra.mxu0 %v2735
  %4440 = vmatpush.bf16.msra.mxu0 %v2731
  %4441 = vmatpush.bf16.msra.mxu0 %v2727
  %4442 = vmatpush.bf16.msra.mxu0 %v2723
  %4443 = vmatpush.bf16.msra.mxu0 %v2719
  %4444 = vmatpush.bf16.msra.mxu0 %v2715
  %4445 = vmatpush.bf16.msra.mxu0 %v2711
  %4446 = vmatpush.bf16.msra.mxu0 %v2707
  %4447 = vmatmul.bf16.gmra.mxu0 %v1922
  %v4448 = vpop.f32.mrf.mxu0
  %v4449 = vadd.f32 %v517, %v4448
  %v4450 = vpop.f32.mrf.mxu0
  %v4451 = vadd.f32 %v522, %v4450
  %4452 = vmatmul.bf16.gmra.mxu0 %v1926
  %v4453 = vpop.f32.mrf.mxu0
  %v4454 = vadd.f32 %v527, %v4453
  %v4455 = vpop.f32.mrf.mxu0
  %v4456 = vadd.f32 %v532, %v4455
  %4457 = vmatmul.bf16.gmra.mxu0 %v1930
  %v4458 = vpop.f32.mrf.mxu0
  %v4459 = vadd.f32 %v537, %v4458
  %v4460 = vpop.f32.mrf.mxu0
  %v4461 = vadd.f32 %v542, %v4460
  %4462 = vmatmul.bf16.gmra.mxu0 %v1934
  %v4463 = vpop.f32.mrf.mxu0
  %v4464 = vadd.f32 %v547, %v4463
  %v4465 = vpop.f32.mrf.mxu0
  %v4466 = vadd.f32 %v552, %v4465
  %4467 = vmatmul.bf16.gmra.mxu0 %v1938
  %v4468 = vpop.f32.mrf.mxu0
  %v4469 = vadd.f32 %v557, %v4468
  %v4470 = vpop.f32.mrf.mxu0
  %v4471 = vadd.f32 %v562, %v4470
  %4472 = vmatmul.bf16.gmra.mxu0 %v1942
  %v4473 = vpop.f32.mrf.mxu0
  %v4474 = vadd.f32 %v567, %v4473
  %v4475 = vpop.f32.mrf.mxu0
  %v4476 = vadd.f32 %v572, %v4475
  %4477 = vmatmul.bf16.gmra.mxu0 %v1946
  %v4478 = vpop.f32.mrf.mxu0
  %v4479 = vadd.f32 %v577, %v4478
  %v4480 = vpop.f32.mrf.mxu0
  %v4481 = vadd.f32 %v582, %v4480
  %4482 = vmatmul.bf16.gmra.mxu0 %v1950
  %v4483 = vpop.f32.mrf.mxu0
  %v4484 = vadd.f32 %v587, %v4483
  %v4485 = vpop.f32.mrf.mxu0
  %v4486 = vadd.f32 %v592, %v4485
  %4487 = vmatmul.bf16.gmra.mxu0 %v1954
  %v4488 = vpop.f32.mrf.mxu0
  %v4489 = vadd.f32 %v597, %v4488
  %v4490 = vpop.f32.mrf.mxu0
  %v4491 = vadd.f32 %v602, %v4490
  %4492 = vmatmul.bf16.gmra.mxu0 %v1958
  %v4493 = vpop.f32.mrf.mxu0
  %v4494 = vadd.f32 %v607, %v4493
  %v4495 = vpop.f32.mrf.mxu0
  %v4496 = vadd.f32 %v612, %v4495
  %4497 = vmatmul.bf16.gmra.mxu0 %v1962
  %v4498 = vpop.f32.mrf.mxu0
  %v4499 = vadd.f32 %v617, %v4498
  %v4500 = vpop.f32.mrf.mxu0
  %v4501 = vadd.f32 %v622, %v4500
  %4502 = vmatmul.bf16.gmra.mxu0 %v1966
  %v4503 = vpop.f32.mrf.mxu0
  %v4504 = vadd.f32 %v627, %v4503
  %v4505 = vpop.f32.mrf.mxu0
  %v4506 = vadd.f32 %v632, %v4505
  %4507 = vmatmul.bf16.gmra.mxu0 %v1970
  %v4508 = vpop.f32.mrf.mxu0
  %v4509 = vadd.f32 %v637, %v4508
  %v4510 = vpop.f32.mrf.mxu0
  %v4511 = vadd.f32 %v642, %v4510
  %4512 = vmatmul.bf16.gmra.mxu0 %v1974
  %v4513 = vpop.f32.mrf.mxu0
  %v4514 = vadd.f32 %v647, %v4513
  %v4515 = vpop.f32.mrf.mxu0
  %v4516 = vadd.f32 %v652, %v4515
  %4517 = vmatmul.bf16.gmra.mxu0 %v1978
  %v4518 = vpop.f32.mrf.mxu0
  %v4519 = vadd.f32 %v657, %v4518
  %v4520 = vpop.f32.mrf.mxu0
  %v4521 = vadd.f32 %v662, %v4520
  %4522 = vmatmul.bf16.gmra.mxu0 %v1982
  %v4523 = vpop.f32.mrf.mxu0
  %v4524 = vadd.f32 %v667, %v4523
  %v4525 = vpop.f32.mrf.mxu0
  %v4526 = vadd.f32 %v672, %v4525
  %4527 = vmatmul.bf16.gmra.mxu0 %v1986
  %v4528 = vpop.f32.mrf.mxu0
  %v4529 = vadd.f32 %v677, %v4528
  %v4530 = vpop.f32.mrf.mxu0
  %v4531 = vadd.f32 %v682, %v4530
  %4532 = vmatmul.bf16.gmra.mxu0 %v1990
  %v4533 = vpop.f32.mrf.mxu0
  %v4534 = vadd.f32 %v687, %v4533
  %v4535 = vpop.f32.mrf.mxu0
  %v4536 = vadd.f32 %v692, %v4535
  %4537 = vmatmul.bf16.gmra.mxu0 %v1994
  %v4538 = vpop.f32.mrf.mxu0
  %v4539 = vadd.f32 %v697, %v4538
  %v4540 = vpop.f32.mrf.mxu0
  %v4541 = vadd.f32 %v702, %v4540
  %4542 = vmatmul.bf16.gmra.mxu0 %v1998
  %v4543 = vpop.f32.mrf.mxu0
  %v4544 = vadd.f32 %v707, %v4543
  %v4545 = vpop.f32.mrf.mxu0
  %v4546 = vadd.f32 %v712, %v4545
  %4547 = vmatmul.bf16.gmra.mxu0 %v2002
  %v4548 = vpop.f32.mrf.mxu0
  %v4549 = vadd.f32 %v717, %v4548
  %v4550 = vpop.f32.mrf.mxu0
  %v4551 = vadd.f32 %v722, %v4550
  %4552 = vmatmul.bf16.gmra.mxu0 %v2006
  %v4553 = vpop.f32.mrf.mxu0
  %v4554 = vadd.f32 %v727, %v4553
  %v4555 = vpop.f32.mrf.mxu0
  %v4556 = vadd.f32 %v732, %v4555
  %4557 = vmatmul.bf16.gmra.mxu0 %v2010
  %v4558 = vpop.f32.mrf.mxu0
  %v4559 = vadd.f32 %v737, %v4558
  %v4560 = vpop.f32.mrf.mxu0
  %v4561 = vadd.f32 %v742, %v4560
  %4562 = vmatmul.bf16.gmra.mxu0 %v2014
  %v4563 = vpop.f32.mrf.mxu0
  %v4564 = vadd.f32 %v747, %v4563
  %v4565 = vpop.f32.mrf.mxu0
  %v4566 = vadd.f32 %v752, %v4565
  %4567 = vmatmul.bf16.gmra.mxu0 %v2018
  %v4568 = vpop.f32.mrf.mxu0
  %v4569 = vadd.f32 %v757, %v4568
  %v4570 = vpop.f32.mrf.mxu0
  %v4571 = vadd.f32 %v762, %v4570
  %4572 = vmatmul.bf16.gmra.mxu0 %v2022
  %v4573 = vpop.f32.mrf.mxu0
  %v4574 = vadd.f32 %v767, %v4573
  %v4575 = vpop.f32.mrf.mxu0
  %v4576 = vadd.f32 %v772, %v4575
  %4577 = vmatmul.bf16.gmra.mxu0 %v2026
  %v4578 = vpop.f32.mrf.mxu0
  %v4579 = vadd.f32 %v777, %v4578
  %v4580 = vpop.f32.mrf.mxu0
  %v4581 = vadd.f32 %v782, %v4580
  %4582 = vmatmul.bf16.gmra.mxu0 %v2030
  %v4583 = vpop.f32.mrf.mxu0
  %v4584 = vadd.f32 %v787, %v4583
  %v4585 = vpop.f32.mrf.mxu0
  %v4586 = vadd.f32 %v792, %v4585
  %4587 = vmatmul.bf16.gmra.mxu0 %v2034
  %v4588 = vpop.f32.mrf.mxu0
  %v4589 = vadd.f32 %v797, %v4588
  %v4590 = vpop.f32.mrf.mxu0
  %v4591 = vadd.f32 %v802, %v4590
  %4592 = vmatmul.bf16.gmra.mxu0 %v2038
  %v4593 = vpop.f32.mrf.mxu0
  %v4594 = vadd.f32 %v807, %v4593
  %v4595 = vpop.f32.mrf.mxu0
  %v4596 = vadd.f32 %v812, %v4595
  %4597 = vmatmul.bf16.gmra.mxu0 %v2042
  %v4598 = vpop.f32.mrf.mxu0
  %v4599 = vadd.f32 %v817, %v4598
  %v4600 = vpop.f32.mrf.mxu0
  %v4601 = vadd.f32 %v822, %v4600
  %4602 = vmatmul.bf16.gmra.mxu0 %v2046
  %v4603 = vpop.f32.mrf.mxu0
  %v4604 = vadd.f32 %v827, %v4603
  %v4605 = vpop.f32.mrf.mxu0
  %v4606 = vadd.f32 %v832, %v4605
  %4607 = vmatmul.bf16.gmra.mxu0 %v2050
  %v4608 = vpop.f32.mrf.mxu0
  %v4609 = vadd.f32 %v837, %v4608
  %v4610 = vpop.f32.mrf.mxu0
  %v4611 = vadd.f32 %v842, %v4610
  %4612 = vmatmul.bf16.gmra.mxu0 %v2054
  %v4613 = vpop.f32.mrf.mxu0
  %v4614 = vadd.f32 %v847, %v4613
  %v4615 = vpop.f32.mrf.mxu0
  %v4616 = vadd.f32 %v852, %v4615
  %4617 = vmatmul.bf16.gmra.mxu0 %v2058
  %v4618 = vpop.f32.mrf.mxu0
  %v4619 = vadd.f32 %v857, %v4618
  %v4620 = vpop.f32.mrf.mxu0
  %v4621 = vadd.f32 %v862, %v4620
  %4622 = vmatmul.bf16.gmra.mxu0 %v2062
  %v4623 = vpop.f32.mrf.mxu0
  %v4624 = vadd.f32 %v867, %v4623
  %v4625 = vpop.f32.mrf.mxu0
  %v4626 = vadd.f32 %v872, %v4625
  %4627 = vmatmul.bf16.gmra.mxu0 %v2066
  %v4628 = vpop.f32.mrf.mxu0
  %v4629 = vadd.f32 %v877, %v4628
  %v4630 = vpop.f32.mrf.mxu0
  %v4631 = vadd.f32 %v882, %v4630
  %4632 = vmatmul.bf16.gmra.mxu0 %v2070
  %v4633 = vpop.f32.mrf.mxu0
  %v4634 = vadd.f32 %v887, %v4633
  %v4635 = vpop.f32.mrf.mxu0
  %v4636 = vadd.f32 %v892, %v4635
  %4637 = vmatmul.bf16.gmra.mxu0 %v2074
  %v4638 = vpop.f32.mrf.mxu0
  %v4639 = vadd.f32 %v897, %v4638
  %v4640 = vpop.f32.mrf.mxu0
  %v4641 = vadd.f32 %v902, %v4640
  %4642 = vmatmul.bf16.gmra.mxu0 %v2078
  %v4643 = vpop.f32.mrf.mxu0
  %v4644 = vadd.f32 %v907, %v4643
  %v4645 = vpop.f32.mrf.mxu0
  %v4646 = vadd.f32 %v912, %v4645
  %4647 = vmatmul.bf16.gmra.mxu0 %v2082
  %v4648 = vpop.f32.mrf.mxu0
  %v4649 = vadd.f32 %v917, %v4648
  %v4650 = vpop.f32.mrf.mxu0
  %v4651 = vadd.f32 %v922, %v4650
  %4652 = vmatmul.bf16.gmra.mxu0 %v2086
  %v4653 = vpop.f32.mrf.mxu0
  %v4654 = vadd.f32 %v927, %v4653
  %v4655 = vpop.f32.mrf.mxu0
  %v4656 = vadd.f32 %v932, %v4655
  %4657 = vmatmul.bf16.gmra.mxu0 %v2090
  %v4658 = vpop.f32.mrf.mxu0
  %v4659 = vadd.f32 %v937, %v4658
  %v4660 = vpop.f32.mrf.mxu0
  %v4661 = vadd.f32 %v942, %v4660
  %4662 = vmatmul.bf16.gmra.mxu0 %v2094
  %v4663 = vpop.f32.mrf.mxu0
  %v4664 = vadd.f32 %v947, %v4663
  %v4665 = vpop.f32.mrf.mxu0
  %v4666 = vadd.f32 %v952, %v4665
  %4667 = vmatmul.bf16.gmra.mxu0 %v2098
  %v4668 = vpop.f32.mrf.mxu0
  %v4669 = vadd.f32 %v957, %v4668
  %v4670 = vpop.f32.mrf.mxu0
  %v4671 = vadd.f32 %v962, %v4670
  %4672 = vmatmul.bf16.gmra.mxu0 %v2102
  %v4673 = vpop.f32.mrf.mxu0
  %v4674 = vadd.f32 %v967, %v4673
  %v4675 = vpop.f32.mrf.mxu0
  %v4676 = vadd.f32 %v972, %v4675
  %4677 = vmatmul.bf16.gmra.mxu0 %v2106
  %v4678 = vpop.f32.mrf.mxu0
  %v4679 = vadd.f32 %v977, %v4678
  %v4680 = vpop.f32.mrf.mxu0
  %v4681 = vadd.f32 %v982, %v4680
  %4682 = vmatmul.bf16.gmra.mxu0 %v2110
  %v4683 = vpop.f32.mrf.mxu0
  %v4684 = vadd.f32 %v987, %v4683
  %v4685 = vpop.f32.mrf.mxu0
  %v4686 = vadd.f32 %v992, %v4685
  %4687 = vmatmul.bf16.gmra.mxu0 %v2114
  %v4688 = vpop.f32.mrf.mxu0
  %v4689 = vadd.f32 %v997, %v4688
  %v4690 = vpop.f32.mrf.mxu0
  %v4691 = vadd.f32 %v1002, %v4690
  %4692 = vmatmul.bf16.gmra.mxu0 %v2118
  %v4693 = vpop.f32.mrf.mxu0
  %v4694 = vadd.f32 %v1007, %v4693
  %v4695 = vpop.f32.mrf.mxu0
  %v4696 = vadd.f32 %v1012, %v4695
  %4697 = vmatmul.bf16.gmra.mxu0 %v2122
  %v4698 = vpop.f32.mrf.mxu0
  %v4699 = vadd.f32 %v1017, %v4698
  %v4700 = vpop.f32.mrf.mxu0
  %v4701 = vadd.f32 %v1022, %v4700
  %4702 = vmatmul.bf16.gmra.mxu0 %v2126
  %v4703 = vpop.f32.mrf.mxu0
  %v4704 = vadd.f32 %v1027, %v4703
  %v4705 = vpop.f32.mrf.mxu0
  %v4706 = vadd.f32 %v1032, %v4705
  %4707 = vmatmul.bf16.gmra.mxu0 %v2130
  %v4708 = vpop.f32.mrf.mxu0
  %v4709 = vadd.f32 %v1037, %v4708
  %v4710 = vpop.f32.mrf.mxu0
  %v4711 = vadd.f32 %v1042, %v4710
  %4712 = vmatmul.bf16.gmra.mxu0 %v2134
  %v4713 = vpop.f32.mrf.mxu0
  %v4714 = vadd.f32 %v1047, %v4713
  %v4715 = vpop.f32.mrf.mxu0
  %v4716 = vadd.f32 %v1052, %v4715
  %4717 = vmatmul.bf16.gmra.mxu0 %v2138
  %v4718 = vpop.f32.mrf.mxu0
  %v4719 = vadd.f32 %v1057, %v4718
  %v4720 = vpop.f32.mrf.mxu0
  %v4721 = vadd.f32 %v1062, %v4720
  %4722 = vmatmul.bf16.gmra.mxu0 %v2142
  %v4723 = vpop.f32.mrf.mxu0
  %v4724 = vadd.f32 %v1067, %v4723
  %v4725 = vpop.f32.mrf.mxu0
  %v4726 = vadd.f32 %v1072, %v4725
  %4727 = vmatmul.bf16.gmra.mxu0 %v2146
  %v4728 = vpop.f32.mrf.mxu0
  %v4729 = vadd.f32 %v1077, %v4728
  %v4730 = vpop.f32.mrf.mxu0
  %v4731 = vadd.f32 %v1082, %v4730
  %4732 = vmatmul.bf16.gmra.mxu0 %v2150
  %v4733 = vpop.f32.mrf.mxu0
  %v4734 = vadd.f32 %v1087, %v4733
  %v4735 = vpop.f32.mrf.mxu0
  %v4736 = vadd.f32 %v1092, %v4735
  %4737 = vmatmul.bf16.gmra.mxu0 %v2154
  %v4738 = vpop.f32.mrf.mxu0
  %v4739 = vadd.f32 %v1097, %v4738
  %v4740 = vpop.f32.mrf.mxu0
  %v4741 = vadd.f32 %v1102, %v4740
  %4742 = vmatmul.bf16.gmra.mxu0 %v2158
  %v4743 = vpop.f32.mrf.mxu0
  %v4744 = vadd.f32 %v1107, %v4743
  %v4745 = vpop.f32.mrf.mxu0
  %v4746 = vadd.f32 %v1112, %v4745
  %4747 = vmatmul.bf16.gmra.mxu0 %v2162
  %v4748 = vpop.f32.mrf.mxu0
  %v4749 = vadd.f32 %v1117, %v4748
  %v4750 = vpop.f32.mrf.mxu0
  %v4751 = vadd.f32 %v1122, %v4750
  %4752 = vmatmul.bf16.gmra.mxu0 %v2166
  %v4753 = vpop.f32.mrf.mxu0
  %v4754 = vadd.f32 %v1127, %v4753
  %v4755 = vpop.f32.mrf.mxu0
  %v4756 = vadd.f32 %v1132, %v4755
  %4757 = vmatmul.bf16.gmra.mxu0 %v2170
  %v4758 = vpop.f32.mrf.mxu0
  %v4759 = vadd.f32 %v1137, %v4758
  %v4760 = vpop.f32.mrf.mxu0
  %v4761 = vadd.f32 %v1142, %v4760
  %4762 = vmatmul.bf16.gmra.mxu0 %v2174
  %v4763 = vpop.f32.mrf.mxu0
  %v4764 = vadd.f32 %v1147, %v4763
  %v4765 = vpop.f32.mrf.mxu0
  %v4766 = vadd.f32 %v1152, %v4765
  %4767 = vdwg.mxu0
  %4768 = vmatpush.bf16.msra.mxu0 %v2767
  %4769 = vmatpush.bf16.msra.mxu0 %v2763
  %4770 = vmatpush.bf16.msra.mxu0 %v2759
  %4771 = vmatpush.bf16.msra.mxu0 %v2755
  %4772 = vmatpush.bf16.msra.mxu0 %v2751
  %4773 = vmatpush.bf16.msra.mxu0 %v2747
  %4774 = vmatpush.bf16.msra.mxu0 %v2743
  %4775 = vmatpush.bf16.msra.mxu0 %v2739
  %4776 = vmatmul.bf16.gmra.mxu0 %v1923
  %v4777 = vpop.f32.mrf.mxu0
  %v4778 = vadd.f32 %v4449, %v4777
  %v4779 = vpop.f32.mrf.mxu0
  %v4780 = vadd.f32 %v4451, %v4779
  %4781 = vmatmul.bf16.gmra.mxu0 %v1927
  %v4782 = vpop.f32.mrf.mxu0
  %v4783 = vadd.f32 %v4454, %v4782
  %v4784 = vpop.f32.mrf.mxu0
  %v4785 = vadd.f32 %v4456, %v4784
  %4786 = vmatmul.bf16.gmra.mxu0 %v1931
  %v4787 = vpop.f32.mrf.mxu0
  %v4788 = vadd.f32 %v4459, %v4787
  %v4789 = vpop.f32.mrf.mxu0
  %v4790 = vadd.f32 %v4461, %v4789
  %4791 = vmatmul.bf16.gmra.mxu0 %v1935
  %v4792 = vpop.f32.mrf.mxu0
  %v4793 = vadd.f32 %v4464, %v4792
  %v4794 = vpop.f32.mrf.mxu0
  %v4795 = vadd.f32 %v4466, %v4794
  %4796 = vmatmul.bf16.gmra.mxu0 %v1939
  %v4797 = vpop.f32.mrf.mxu0
  %v4798 = vadd.f32 %v4469, %v4797
  %v4799 = vpop.f32.mrf.mxu0
  %v4800 = vadd.f32 %v4471, %v4799
  %4801 = vmatmul.bf16.gmra.mxu0 %v1943
  %v4802 = vpop.f32.mrf.mxu0
  %v4803 = vadd.f32 %v4474, %v4802
  %v4804 = vpop.f32.mrf.mxu0
  %v4805 = vadd.f32 %v4476, %v4804
  %4806 = vmatmul.bf16.gmra.mxu0 %v1947
  %v4807 = vpop.f32.mrf.mxu0
  %v4808 = vadd.f32 %v4479, %v4807
  %v4809 = vpop.f32.mrf.mxu0
  %v4810 = vadd.f32 %v4481, %v4809
  %4811 = vmatmul.bf16.gmra.mxu0 %v1951
  %v4812 = vpop.f32.mrf.mxu0
  %v4813 = vadd.f32 %v4484, %v4812
  %v4814 = vpop.f32.mrf.mxu0
  %v4815 = vadd.f32 %v4486, %v4814
  %4816 = vmatmul.bf16.gmra.mxu0 %v1955
  %v4817 = vpop.f32.mrf.mxu0
  %v4818 = vadd.f32 %v4489, %v4817
  %v4819 = vpop.f32.mrf.mxu0
  %v4820 = vadd.f32 %v4491, %v4819
  %4821 = vmatmul.bf16.gmra.mxu0 %v1959
  %v4822 = vpop.f32.mrf.mxu0
  %v4823 = vadd.f32 %v4494, %v4822
  %v4824 = vpop.f32.mrf.mxu0
  %v4825 = vadd.f32 %v4496, %v4824
  %4826 = vmatmul.bf16.gmra.mxu0 %v1963
  %v4827 = vpop.f32.mrf.mxu0
  %v4828 = vadd.f32 %v4499, %v4827
  %v4829 = vpop.f32.mrf.mxu0
  %v4830 = vadd.f32 %v4501, %v4829
  %4831 = vmatmul.bf16.gmra.mxu0 %v1967
  %v4832 = vpop.f32.mrf.mxu0
  %v4833 = vadd.f32 %v4504, %v4832
  %v4834 = vpop.f32.mrf.mxu0
  %v4835 = vadd.f32 %v4506, %v4834
  %4836 = vmatmul.bf16.gmra.mxu0 %v1971
  %v4837 = vpop.f32.mrf.mxu0
  %v4838 = vadd.f32 %v4509, %v4837
  %v4839 = vpop.f32.mrf.mxu0
  %v4840 = vadd.f32 %v4511, %v4839
  %4841 = vmatmul.bf16.gmra.mxu0 %v1975
  %v4842 = vpop.f32.mrf.mxu0
  %v4843 = vadd.f32 %v4514, %v4842
  %v4844 = vpop.f32.mrf.mxu0
  %v4845 = vadd.f32 %v4516, %v4844
  %4846 = vmatmul.bf16.gmra.mxu0 %v1979
  %v4847 = vpop.f32.mrf.mxu0
  %v4848 = vadd.f32 %v4519, %v4847
  %v4849 = vpop.f32.mrf.mxu0
  %v4850 = vadd.f32 %v4521, %v4849
  %4851 = vmatmul.bf16.gmra.mxu0 %v1983
  %v4852 = vpop.f32.mrf.mxu0
  %v4853 = vadd.f32 %v4524, %v4852
  %v4854 = vpop.f32.mrf.mxu0
  %v4855 = vadd.f32 %v4526, %v4854
  %4856 = vmatmul.bf16.gmra.mxu0 %v1987
  %v4857 = vpop.f32.mrf.mxu0
  %v4858 = vadd.f32 %v4529, %v4857
  %v4859 = vpop.f32.mrf.mxu0
  %v4860 = vadd.f32 %v4531, %v4859
  %4861 = vmatmul.bf16.gmra.mxu0 %v1991
  %v4862 = vpop.f32.mrf.mxu0
  %v4863 = vadd.f32 %v4534, %v4862
  %v4864 = vpop.f32.mrf.mxu0
  %v4865 = vadd.f32 %v4536, %v4864
  %4866 = vmatmul.bf16.gmra.mxu0 %v1995
  %v4867 = vpop.f32.mrf.mxu0
  %v4868 = vadd.f32 %v4539, %v4867
  %v4869 = vpop.f32.mrf.mxu0
  %v4870 = vadd.f32 %v4541, %v4869
  %4871 = vmatmul.bf16.gmra.mxu0 %v1999
  %v4872 = vpop.f32.mrf.mxu0
  %v4873 = vadd.f32 %v4544, %v4872
  %v4874 = vpop.f32.mrf.mxu0
  %v4875 = vadd.f32 %v4546, %v4874
  %4876 = vmatmul.bf16.gmra.mxu0 %v2003
  %v4877 = vpop.f32.mrf.mxu0
  %v4878 = vadd.f32 %v4549, %v4877
  %v4879 = vpop.f32.mrf.mxu0
  %v4880 = vadd.f32 %v4551, %v4879
  %4881 = vmatmul.bf16.gmra.mxu0 %v2007
  %v4882 = vpop.f32.mrf.mxu0
  %v4883 = vadd.f32 %v4554, %v4882
  %v4884 = vpop.f32.mrf.mxu0
  %v4885 = vadd.f32 %v4556, %v4884
  %4886 = vmatmul.bf16.gmra.mxu0 %v2011
  %v4887 = vpop.f32.mrf.mxu0
  %v4888 = vadd.f32 %v4559, %v4887
  %v4889 = vpop.f32.mrf.mxu0
  %v4890 = vadd.f32 %v4561, %v4889
  %4891 = vmatmul.bf16.gmra.mxu0 %v2015
  %v4892 = vpop.f32.mrf.mxu0
  %v4893 = vadd.f32 %v4564, %v4892
  %v4894 = vpop.f32.mrf.mxu0
  %v4895 = vadd.f32 %v4566, %v4894
  %4896 = vmatmul.bf16.gmra.mxu0 %v2019
  %v4897 = vpop.f32.mrf.mxu0
  %v4898 = vadd.f32 %v4569, %v4897
  %v4899 = vpop.f32.mrf.mxu0
  %v4900 = vadd.f32 %v4571, %v4899
  %4901 = vmatmul.bf16.gmra.mxu0 %v2023
  %v4902 = vpop.f32.mrf.mxu0
  %v4903 = vadd.f32 %v4574, %v4902
  %v4904 = vpop.f32.mrf.mxu0
  %v4905 = vadd.f32 %v4576, %v4904
  %4906 = vmatmul.bf16.gmra.mxu0 %v2027
  %v4907 = vpop.f32.mrf.mxu0
  %v4908 = vadd.f32 %v4579, %v4907
  %v4909 = vpop.f32.mrf.mxu0
  %v4910 = vadd.f32 %v4581, %v4909
  %4911 = vmatmul.bf16.gmra.mxu0 %v2031
  %v4912 = vpop.f32.mrf.mxu0
  %v4913 = vadd.f32 %v4584, %v4912
  %v4914 = vpop.f32.mrf.mxu0
  %v4915 = vadd.f32 %v4586, %v4914
  %4916 = vmatmul.bf16.gmra.mxu0 %v2035
  %v4917 = vpop.f32.mrf.mxu0
  %v4918 = vadd.f32 %v4589, %v4917
  %v4919 = vpop.f32.mrf.mxu0
  %v4920 = vadd.f32 %v4591, %v4919
  %4921 = vmatmul.bf16.gmra.mxu0 %v2039
  %v4922 = vpop.f32.mrf.mxu0
  %v4923 = vadd.f32 %v4594, %v4922
  %v4924 = vpop.f32.mrf.mxu0
  %v4925 = vadd.f32 %v4596, %v4924
  %4926 = vmatmul.bf16.gmra.mxu0 %v2043
  %v4927 = vpop.f32.mrf.mxu0
  %v4928 = vadd.f32 %v4599, %v4927
  %v4929 = vpop.f32.mrf.mxu0
  %v4930 = vadd.f32 %v4601, %v4929
  %4931 = vmatmul.bf16.gmra.mxu0 %v2047
  %v4932 = vpop.f32.mrf.mxu0
  %v4933 = vadd.f32 %v4604, %v4932
  %v4934 = vpop.f32.mrf.mxu0
  %v4935 = vadd.f32 %v4606, %v4934
  %4936 = vmatmul.bf16.gmra.mxu0 %v2051
  %v4937 = vpop.f32.mrf.mxu0
  %v4938 = vadd.f32 %v4609, %v4937
  %v4939 = vpop.f32.mrf.mxu0
  %v4940 = vadd.f32 %v4611, %v4939
  %4941 = vmatmul.bf16.gmra.mxu0 %v2055
  %v4942 = vpop.f32.mrf.mxu0
  %v4943 = vadd.f32 %v4614, %v4942
  %v4944 = vpop.f32.mrf.mxu0
  %v4945 = vadd.f32 %v4616, %v4944
  %4946 = vmatmul.bf16.gmra.mxu0 %v2059
  %v4947 = vpop.f32.mrf.mxu0
  %v4948 = vadd.f32 %v4619, %v4947
  %v4949 = vpop.f32.mrf.mxu0
  %v4950 = vadd.f32 %v4621, %v4949
  %4951 = vmatmul.bf16.gmra.mxu0 %v2063
  %v4952 = vpop.f32.mrf.mxu0
  %v4953 = vadd.f32 %v4624, %v4952
  %v4954 = vpop.f32.mrf.mxu0
  %v4955 = vadd.f32 %v4626, %v4954
  %4956 = vmatmul.bf16.gmra.mxu0 %v2067
  %v4957 = vpop.f32.mrf.mxu0
  %v4958 = vadd.f32 %v4629, %v4957
  %v4959 = vpop.f32.mrf.mxu0
  %v4960 = vadd.f32 %v4631, %v4959
  %4961 = vmatmul.bf16.gmra.mxu0 %v2071
  %v4962 = vpop.f32.mrf.mxu0
  %v4963 = vadd.f32 %v4634, %v4962
  %v4964 = vpop.f32.mrf.mxu0
  %v4965 = vadd.f32 %v4636, %v4964
  %4966 = vmatmul.bf16.gmra.mxu0 %v2075
  %v4967 = vpop.f32.mrf.mxu0
  %v4968 = vadd.f32 %v4639, %v4967
  %v4969 = vpop.f32.mrf.mxu0
  %v4970 = vadd.f32 %v4641, %v4969
  %4971 = vmatmul.bf16.gmra.mxu0 %v2079
  %v4972 = vpop.f32.mrf.mxu0
  %v4973 = vadd.f32 %v4644, %v4972
  %v4974 = vpop.f32.mrf.mxu0
  %v4975 = vadd.f32 %v4646, %v4974
  %4976 = vmatmul.bf16.gmra.mxu0 %v2083
  %v4977 = vpop.f32.mrf.mxu0
  %v4978 = vadd.f32 %v4649, %v4977
  %v4979 = vpop.f32.mrf.mxu0
  %v4980 = vadd.f32 %v4651, %v4979
  %4981 = vmatmul.bf16.gmra.mxu0 %v2087
  %v4982 = vpop.f32.mrf.mxu0
  %v4983 = vadd.f32 %v4654, %v4982
  %v4984 = vpop.f32.mrf.mxu0
  %v4985 = vadd.f32 %v4656, %v4984
  %4986 = vmatmul.bf16.gmra.mxu0 %v2091
  %v4987 = vpop.f32.mrf.mxu0
  %v4988 = vadd.f32 %v4659, %v4987
  %v4989 = vpop.f32.mrf.mxu0
  %v4990 = vadd.f32 %v4661, %v4989
  %4991 = vmatmul.bf16.gmra.mxu0 %v2095
  %v4992 = vpop.f32.mrf.mxu0
  %v4993 = vadd.f32 %v4664, %v4992
  %v4994 = vpop.f32.mrf.mxu0
  %v4995 = vadd.f32 %v4666, %v4994
  %4996 = vmatmul.bf16.gmra.mxu0 %v2099
  %v4997 = vpop.f32.mrf.mxu0
  %v4998 = vadd.f32 %v4669, %v4997
  %v4999 = vpop.f32.mrf.mxu0
  %v5000 = vadd.f32 %v4671, %v4999
  %5001 = vmatmul.bf16.gmra.mxu0 %v2103
  %v5002 = vpop.f32.mrf.mxu0
  %v5003 = vadd.f32 %v4674, %v5002
  %v5004 = vpop.f32.mrf.mxu0
  %v5005 = vadd.f32 %v4676, %v5004
  %5006 = vmatmul.bf16.gmra.mxu0 %v2107
  %v5007 = vpop.f32.mrf.mxu0
  %v5008 = vadd.f32 %v4679, %v5007
  %v5009 = vpop.f32.mrf.mxu0
  %v5010 = vadd.f32 %v4681, %v5009
  %5011 = vmatmul.bf16.gmra.mxu0 %v2111
  %v5012 = vpop.f32.mrf.mxu0
  %v5013 = vadd.f32 %v4684, %v5012
  %v5014 = vpop.f32.mrf.mxu0
  %v5015 = vadd.f32 %v4686, %v5014
  %5016 = vmatmul.bf16.gmra.mxu0 %v2115
  %v5017 = vpop.f32.mrf.mxu0
  %v5018 = vadd.f32 %v4689, %v5017
  %v5019 = vpop.f32.mrf.mxu0
  %v5020 = vadd.f32 %v4691, %v5019
  %5021 = vmatmul.bf16.gmra.mxu0 %v2119
  %v5022 = vpop.f32.mrf.mxu0
  %v5023 = vadd.f32 %v4694, %v5022
  %v5024 = vpop.f32.mrf.mxu0
  %v5025 = vadd.f32 %v4696, %v5024
  %5026 = vmatmul.bf16.gmra.mxu0 %v2123
  %v5027 = vpop.f32.mrf.mxu0
  %v5028 = vadd.f32 %v4699, %v5027
  %v5029 = vpop.f32.mrf.mxu0
  %v5030 = vadd.f32 %v4701, %v5029
  %5031 = vmatmul.bf16.gmra.mxu0 %v2127
  %v5032 = vpop.f32.mrf.mxu0
  %v5033 = vadd.f32 %v4704, %v5032
  %v5034 = vpop.f32.mrf.mxu0
  %v5035 = vadd.f32 %v4706, %v5034
  %5036 = vmatmul.bf16.gmra.mxu0 %v2131
  %v5037 = vpop.f32.mrf.mxu0
  %v5038 = vadd.f32 %v4709, %v5037
  %v5039 = vpop.f32.mrf.mxu0
  %v5040 = vadd.f32 %v4711, %v5039
  %5041 = vmatmul.bf16.gmra.mxu0 %v2135
  %v5042 = vpop.f32.mrf.mxu0
  %v5043 = vadd.f32 %v4714, %v5042
  %v5044 = vpop.f32.mrf.mxu0
  %v5045 = vadd.f32 %v4716, %v5044
  %5046 = vmatmul.bf16.gmra.mxu0 %v2139
  %v5047 = vpop.f32.mrf.mxu0
  %v5048 = vadd.f32 %v4719, %v5047
  %v5049 = vpop.f32.mrf.mxu0
  %v5050 = vadd.f32 %v4721, %v5049
  %5051 = vmatmul.bf16.gmra.mxu0 %v2143
  %v5052 = vpop.f32.mrf.mxu0
  %v5053 = vadd.f32 %v4724, %v5052
  %v5054 = vpop.f32.mrf.mxu0
  %v5055 = vadd.f32 %v4726, %v5054
  %5056 = vmatmul.bf16.gmra.mxu0 %v2147
  %v5057 = vpop.f32.mrf.mxu0
  %v5058 = vadd.f32 %v4729, %v5057
  %v5059 = vpop.f32.mrf.mxu0
  %v5060 = vadd.f32 %v4731, %v5059
  %5061 = vmatmul.bf16.gmra.mxu0 %v2151
  %v5062 = vpop.f32.mrf.mxu0
  %v5063 = vadd.f32 %v4734, %v5062
  %v5064 = vpop.f32.mrf.mxu0
  %v5065 = vadd.f32 %v4736, %v5064
  %5066 = vmatmul.bf16.gmra.mxu0 %v2155
  %v5067 = vpop.f32.mrf.mxu0
  %v5068 = vadd.f32 %v4739, %v5067
  %v5069 = vpop.f32.mrf.mxu0
  %v5070 = vadd.f32 %v4741, %v5069
  %5071 = vmatmul.bf16.gmra.mxu0 %v2159
  %v5072 = vpop.f32.mrf.mxu0
  %v5073 = vadd.f32 %v4744, %v5072
  %v5074 = vpop.f32.mrf.mxu0
  %v5075 = vadd.f32 %v4746, %v5074
  %5076 = vmatmul.bf16.gmra.mxu0 %v2163
  %v5077 = vpop.f32.mrf.mxu0
  %v5078 = vadd.f32 %v4749, %v5077
  %v5079 = vpop.f32.mrf.mxu0
  %v5080 = vadd.f32 %v4751, %v5079
  %5081 = vmatmul.bf16.gmra.mxu0 %v2167
  %v5082 = vpop.f32.mrf.mxu0
  %v5083 = vadd.f32 %v4754, %v5082
  %v5084 = vpop.f32.mrf.mxu0
  %v5085 = vadd.f32 %v4756, %v5084
  %5086 = vmatmul.bf16.gmra.mxu0 %v2171
  %v5087 = vpop.f32.mrf.mxu0
  %v5088 = vadd.f32 %v4759, %v5087
  %v5089 = vpop.f32.mrf.mxu0
  %v5090 = vadd.f32 %v4761, %v5089
  %5091 = vmatmul.bf16.gmra.mxu0 %v2175
  %v5092 = vpop.f32.mrf.mxu0
  %v5093 = vadd.f32 %v4764, %v5092
  %v5094 = vpop.f32.mrf.mxu0
  %v5095 = vadd.f32 %v4766, %v5094
  %5096 = vdwg.mxu0
  %5097 = vmatpush.bf16.msra.mxu0 %v2799
  %5098 = vmatpush.bf16.msra.mxu0 %v2795
  %5099 = vmatpush.bf16.msra.mxu0 %v2791
  %5100 = vmatpush.bf16.msra.mxu0 %v2787
  %5101 = vmatpush.bf16.msra.mxu0 %v2783
  %5102 = vmatpush.bf16.msra.mxu0 %v2779
  %5103 = vmatpush.bf16.msra.mxu0 %v2775
  %5104 = vmatpush.bf16.msra.mxu0 %v2771
  %5105 = vmatmul.bf16.gmra.mxu0 %v1924
  %v5106 = vpop.f32.mrf.mxu0
  %v5107 = vadd.f32 %v4778, %v5106
  %v5108 = vpop.f32.mrf.mxu0
  %v5109 = vadd.f32 %v4780, %v5108
  %5110 = vmatmul.bf16.gmra.mxu0 %v1928
  %v5111 = vpop.f32.mrf.mxu0
  %v5112 = vadd.f32 %v4783, %v5111
  %v5113 = vpop.f32.mrf.mxu0
  %v5114 = vadd.f32 %v4785, %v5113
  %5115 = vmatmul.bf16.gmra.mxu0 %v1932
  %v5116 = vpop.f32.mrf.mxu0
  %v5117 = vadd.f32 %v4788, %v5116
  %v5118 = vpop.f32.mrf.mxu0
  %v5119 = vadd.f32 %v4790, %v5118
  %5120 = vmatmul.bf16.gmra.mxu0 %v1936
  %v5121 = vpop.f32.mrf.mxu0
  %v5122 = vadd.f32 %v4793, %v5121
  %v5123 = vpop.f32.mrf.mxu0
  %v5124 = vadd.f32 %v4795, %v5123
  %5125 = vmatmul.bf16.gmra.mxu0 %v1940
  %v5126 = vpop.f32.mrf.mxu0
  %v5127 = vadd.f32 %v4798, %v5126
  %v5128 = vpop.f32.mrf.mxu0
  %v5129 = vadd.f32 %v4800, %v5128
  %5130 = vmatmul.bf16.gmra.mxu0 %v1944
  %v5131 = vpop.f32.mrf.mxu0
  %v5132 = vadd.f32 %v4803, %v5131
  %v5133 = vpop.f32.mrf.mxu0
  %v5134 = vadd.f32 %v4805, %v5133
  %5135 = vmatmul.bf16.gmra.mxu0 %v1948
  %v5136 = vpop.f32.mrf.mxu0
  %v5137 = vadd.f32 %v4808, %v5136
  %v5138 = vpop.f32.mrf.mxu0
  %v5139 = vadd.f32 %v4810, %v5138
  %5140 = vmatmul.bf16.gmra.mxu0 %v1952
  %v5141 = vpop.f32.mrf.mxu0
  %v5142 = vadd.f32 %v4813, %v5141
  %v5143 = vpop.f32.mrf.mxu0
  %v5144 = vadd.f32 %v4815, %v5143
  %5145 = vmatmul.bf16.gmra.mxu0 %v1956
  %v5146 = vpop.f32.mrf.mxu0
  %v5147 = vadd.f32 %v4818, %v5146
  %v5148 = vpop.f32.mrf.mxu0
  %v5149 = vadd.f32 %v4820, %v5148
  %5150 = vmatmul.bf16.gmra.mxu0 %v1960
  %v5151 = vpop.f32.mrf.mxu0
  %v5152 = vadd.f32 %v4823, %v5151
  %v5153 = vpop.f32.mrf.mxu0
  %v5154 = vadd.f32 %v4825, %v5153
  %5155 = vmatmul.bf16.gmra.mxu0 %v1964
  %v5156 = vpop.f32.mrf.mxu0
  %v5157 = vadd.f32 %v4828, %v5156
  %v5158 = vpop.f32.mrf.mxu0
  %v5159 = vadd.f32 %v4830, %v5158
  %5160 = vmatmul.bf16.gmra.mxu0 %v1968
  %v5161 = vpop.f32.mrf.mxu0
  %v5162 = vadd.f32 %v4833, %v5161
  %v5163 = vpop.f32.mrf.mxu0
  %v5164 = vadd.f32 %v4835, %v5163
  %5165 = vmatmul.bf16.gmra.mxu0 %v1972
  %v5166 = vpop.f32.mrf.mxu0
  %v5167 = vadd.f32 %v4838, %v5166
  %v5168 = vpop.f32.mrf.mxu0
  %v5169 = vadd.f32 %v4840, %v5168
  %5170 = vmatmul.bf16.gmra.mxu0 %v1976
  %v5171 = vpop.f32.mrf.mxu0
  %v5172 = vadd.f32 %v4843, %v5171
  %v5173 = vpop.f32.mrf.mxu0
  %v5174 = vadd.f32 %v4845, %v5173
  %5175 = vmatmul.bf16.gmra.mxu0 %v1980
  %v5176 = vpop.f32.mrf.mxu0
  %v5177 = vadd.f32 %v4848, %v5176
  %v5178 = vpop.f32.mrf.mxu0
  %v5179 = vadd.f32 %v4850, %v5178
  %5180 = vmatmul.bf16.gmra.mxu0 %v1984
  %v5181 = vpop.f32.mrf.mxu0
  %v5182 = vadd.f32 %v4853, %v5181
  %v5183 = vpop.f32.mrf.mxu0
  %v5184 = vadd.f32 %v4855, %v5183
  %5185 = vmatmul.bf16.gmra.mxu0 %v1988
  %v5186 = vpop.f32.mrf.mxu0
  %v5187 = vadd.f32 %v4858, %v5186
  %v5188 = vpop.f32.mrf.mxu0
  %v5189 = vadd.f32 %v4860, %v5188
  %5190 = vmatmul.bf16.gmra.mxu0 %v1992
  %v5191 = vpop.f32.mrf.mxu0
  %v5192 = vadd.f32 %v4863, %v5191
  %v5193 = vpop.f32.mrf.mxu0
  %v5194 = vadd.f32 %v4865, %v5193
  %5195 = vmatmul.bf16.gmra.mxu0 %v1996
  %v5196 = vpop.f32.mrf.mxu0
  %v5197 = vadd.f32 %v4868, %v5196
  %v5198 = vpop.f32.mrf.mxu0
  %v5199 = vadd.f32 %v4870, %v5198
  %5200 = vmatmul.bf16.gmra.mxu0 %v2000
  %v5201 = vpop.f32.mrf.mxu0
  %v5202 = vadd.f32 %v4873, %v5201
  %v5203 = vpop.f32.mrf.mxu0
  %v5204 = vadd.f32 %v4875, %v5203
  %5205 = vmatmul.bf16.gmra.mxu0 %v2004
  %v5206 = vpop.f32.mrf.mxu0
  %v5207 = vadd.f32 %v4878, %v5206
  %v5208 = vpop.f32.mrf.mxu0
  %v5209 = vadd.f32 %v4880, %v5208
  %5210 = vmatmul.bf16.gmra.mxu0 %v2008
  %v5211 = vpop.f32.mrf.mxu0
  %v5212 = vadd.f32 %v4883, %v5211
  %v5213 = vpop.f32.mrf.mxu0
  %v5214 = vadd.f32 %v4885, %v5213
  %5215 = vmatmul.bf16.gmra.mxu0 %v2012
  %v5216 = vpop.f32.mrf.mxu0
  %v5217 = vadd.f32 %v4888, %v5216
  %v5218 = vpop.f32.mrf.mxu0
  %v5219 = vadd.f32 %v4890, %v5218
  %5220 = vmatmul.bf16.gmra.mxu0 %v2016
  %v5221 = vpop.f32.mrf.mxu0
  %v5222 = vadd.f32 %v4893, %v5221
  %v5223 = vpop.f32.mrf.mxu0
  %v5224 = vadd.f32 %v4895, %v5223
  %5225 = vmatmul.bf16.gmra.mxu0 %v2020
  %v5226 = vpop.f32.mrf.mxu0
  %v5227 = vadd.f32 %v4898, %v5226
  %v5228 = vpop.f32.mrf.mxu0
  %v5229 = vadd.f32 %v4900, %v5228
  %5230 = vmatmul.bf16.gmra.mxu0 %v2024
  %v5231 = vpop.f32.mrf.mxu0
  %v5232 = vadd.f32 %v4903, %v5231
  %v5233 = vpop.f32.mrf.mxu0
  %v5234 = vadd.f32 %v4905, %v5233
  %5235 = vmatmul.bf16.gmra.mxu0 %v2028
  %v5236 = vpop.f32.mrf.mxu0
  %v5237 = vadd.f32 %v4908, %v5236
  %v5238 = vpop.f32.mrf.mxu0
  %v5239 = vadd.f32 %v4910, %v5238
  %5240 = vmatmul.bf16.gmra.mxu0 %v2032
  %v5241 = vpop.f32.mrf.mxu0
  %v5242 = vadd.f32 %v4913, %v5241
  %v5243 = vpop.f32.mrf.mxu0
  %v5244 = vadd.f32 %v4915, %v5243
  %5245 = vmatmul.bf16.gmra.mxu0 %v2036
  %v5246 = vpop.f32.mrf.mxu0
  %v5247 = vadd.f32 %v4918, %v5246
  %v5248 = vpop.f32.mrf.mxu0
  %v5249 = vadd.f32 %v4920, %v5248
  %5250 = vmatmul.bf16.gmra.mxu0 %v2040
  %v5251 = vpop.f32.mrf.mxu0
  %v5252 = vadd.f32 %v4923, %v5251
  %v5253 = vpop.f32.mrf.mxu0
  %v5254 = vadd.f32 %v4925, %v5253
  %5255 = vmatmul.bf16.gmra.mxu0 %v2044
  %v5256 = vpop.f32.mrf.mxu0
  %v5257 = vadd.f32 %v4928, %v5256
  %v5258 = vpop.f32.mrf.mxu0
  %v5259 = vadd.f32 %v4930, %v5258
  %5260 = vmatmul.bf16.gmra.mxu0 %v2048
  %v5261 = vpop.f32.mrf.mxu0
  %v5262 = vadd.f32 %v4933, %v5261
  %v5263 = vpop.f32.mrf.mxu0
  %v5264 = vadd.f32 %v4935, %v5263
  %5265 = vmatmul.bf16.gmra.mxu0 %v2052
  %v5266 = vpop.f32.mrf.mxu0
  %v5267 = vadd.f32 %v4938, %v5266
  %v5268 = vpop.f32.mrf.mxu0
  %v5269 = vadd.f32 %v4940, %v5268
  %5270 = vmatmul.bf16.gmra.mxu0 %v2056
  %v5271 = vpop.f32.mrf.mxu0
  %v5272 = vadd.f32 %v4943, %v5271
  %v5273 = vpop.f32.mrf.mxu0
  %v5274 = vadd.f32 %v4945, %v5273
  %5275 = vmatmul.bf16.gmra.mxu0 %v2060
  %v5276 = vpop.f32.mrf.mxu0
  %v5277 = vadd.f32 %v4948, %v5276
  %v5278 = vpop.f32.mrf.mxu0
  %v5279 = vadd.f32 %v4950, %v5278
  %5280 = vmatmul.bf16.gmra.mxu0 %v2064
  %v5281 = vpop.f32.mrf.mxu0
  %v5282 = vadd.f32 %v4953, %v5281
  %v5283 = vpop.f32.mrf.mxu0
  %v5284 = vadd.f32 %v4955, %v5283
  %5285 = vmatmul.bf16.gmra.mxu0 %v2068
  %v5286 = vpop.f32.mrf.mxu0
  %v5287 = vadd.f32 %v4958, %v5286
  %v5288 = vpop.f32.mrf.mxu0
  %v5289 = vadd.f32 %v4960, %v5288
  %5290 = vmatmul.bf16.gmra.mxu0 %v2072
  %v5291 = vpop.f32.mrf.mxu0
  %v5292 = vadd.f32 %v4963, %v5291
  %v5293 = vpop.f32.mrf.mxu0
  %v5294 = vadd.f32 %v4965, %v5293
  %5295 = vmatmul.bf16.gmra.mxu0 %v2076
  %v5296 = vpop.f32.mrf.mxu0
  %v5297 = vadd.f32 %v4968, %v5296
  %v5298 = vpop.f32.mrf.mxu0
  %v5299 = vadd.f32 %v4970, %v5298
  %5300 = vmatmul.bf16.gmra.mxu0 %v2080
  %v5301 = vpop.f32.mrf.mxu0
  %v5302 = vadd.f32 %v4973, %v5301
  %v5303 = vpop.f32.mrf.mxu0
  %v5304 = vadd.f32 %v4975, %v5303
  %5305 = vmatmul.bf16.gmra.mxu0 %v2084
  %v5306 = vpop.f32.mrf.mxu0
  %v5307 = vadd.f32 %v4978, %v5306
  %v5308 = vpop.f32.mrf.mxu0
  %v5309 = vadd.f32 %v4980, %v5308
  %5310 = vmatmul.bf16.gmra.mxu0 %v2088
  %v5311 = vpop.f32.mrf.mxu0
  %v5312 = vadd.f32 %v4983, %v5311
  %v5313 = vpop.f32.mrf.mxu0
  %v5314 = vadd.f32 %v4985, %v5313
  %5315 = vmatmul.bf16.gmra.mxu0 %v2092
  %v5316 = vpop.f32.mrf.mxu0
  %v5317 = vadd.f32 %v4988, %v5316
  %v5318 = vpop.f32.mrf.mxu0
  %v5319 = vadd.f32 %v4990, %v5318
  %5320 = vmatmul.bf16.gmra.mxu0 %v2096
  %v5321 = vpop.f32.mrf.mxu0
  %v5322 = vadd.f32 %v4993, %v5321
  %v5323 = vpop.f32.mrf.mxu0
  %v5324 = vadd.f32 %v4995, %v5323
  %5325 = vmatmul.bf16.gmra.mxu0 %v2100
  %v5326 = vpop.f32.mrf.mxu0
  %v5327 = vadd.f32 %v4998, %v5326
  %v5328 = vpop.f32.mrf.mxu0
  %v5329 = vadd.f32 %v5000, %v5328
  %5330 = vmatmul.bf16.gmra.mxu0 %v2104
  %v5331 = vpop.f32.mrf.mxu0
  %v5332 = vadd.f32 %v5003, %v5331
  %v5333 = vpop.f32.mrf.mxu0
  %v5334 = vadd.f32 %v5005, %v5333
  %5335 = vmatmul.bf16.gmra.mxu0 %v2108
  %v5336 = vpop.f32.mrf.mxu0
  %v5337 = vadd.f32 %v5008, %v5336
  %v5338 = vpop.f32.mrf.mxu0
  %v5339 = vadd.f32 %v5010, %v5338
  %5340 = vmatmul.bf16.gmra.mxu0 %v2112
  %v5341 = vpop.f32.mrf.mxu0
  %v5342 = vadd.f32 %v5013, %v5341
  %v5343 = vpop.f32.mrf.mxu0
  %v5344 = vadd.f32 %v5015, %v5343
  %5345 = vmatmul.bf16.gmra.mxu0 %v2116
  %v5346 = vpop.f32.mrf.mxu0
  %v5347 = vadd.f32 %v5018, %v5346
  %v5348 = vpop.f32.mrf.mxu0
  %v5349 = vadd.f32 %v5020, %v5348
  %5350 = vmatmul.bf16.gmra.mxu0 %v2120
  %v5351 = vpop.f32.mrf.mxu0
  %v5352 = vadd.f32 %v5023, %v5351
  %v5353 = vpop.f32.mrf.mxu0
  %v5354 = vadd.f32 %v5025, %v5353
  %5355 = vmatmul.bf16.gmra.mxu0 %v2124
  %v5356 = vpop.f32.mrf.mxu0
  %v5357 = vadd.f32 %v5028, %v5356
  %v5358 = vpop.f32.mrf.mxu0
  %v5359 = vadd.f32 %v5030, %v5358
  %5360 = vmatmul.bf16.gmra.mxu0 %v2128
  %v5361 = vpop.f32.mrf.mxu0
  %v5362 = vadd.f32 %v5033, %v5361
  %v5363 = vpop.f32.mrf.mxu0
  %v5364 = vadd.f32 %v5035, %v5363
  %5365 = vmatmul.bf16.gmra.mxu0 %v2132
  %v5366 = vpop.f32.mrf.mxu0
  %v5367 = vadd.f32 %v5038, %v5366
  %v5368 = vpop.f32.mrf.mxu0
  %v5369 = vadd.f32 %v5040, %v5368
  %5370 = vmatmul.bf16.gmra.mxu0 %v2136
  %v5371 = vpop.f32.mrf.mxu0
  %v5372 = vadd.f32 %v5043, %v5371
  %v5373 = vpop.f32.mrf.mxu0
  %v5374 = vadd.f32 %v5045, %v5373
  %5375 = vmatmul.bf16.gmra.mxu0 %v2140
  %v5376 = vpop.f32.mrf.mxu0
  %v5377 = vadd.f32 %v5048, %v5376
  %v5378 = vpop.f32.mrf.mxu0
  %v5379 = vadd.f32 %v5050, %v5378
  %5380 = vmatmul.bf16.gmra.mxu0 %v2144
  %v5381 = vpop.f32.mrf.mxu0
  %v5382 = vadd.f32 %v5053, %v5381
  %v5383 = vpop.f32.mrf.mxu0
  %v5384 = vadd.f32 %v5055, %v5383
  %5385 = vmatmul.bf16.gmra.mxu0 %v2148
  %v5386 = vpop.f32.mrf.mxu0
  %v5387 = vadd.f32 %v5058, %v5386
  %v5388 = vpop.f32.mrf.mxu0
  %v5389 = vadd.f32 %v5060, %v5388
  %5390 = vmatmul.bf16.gmra.mxu0 %v2152
  %v5391 = vpop.f32.mrf.mxu0
  %v5392 = vadd.f32 %v5063, %v5391
  %v5393 = vpop.f32.mrf.mxu0
  %v5394 = vadd.f32 %v5065, %v5393
  %5395 = vmatmul.bf16.gmra.mxu0 %v2156
  %v5396 = vpop.f32.mrf.mxu0
  %v5397 = vadd.f32 %v5068, %v5396
  %v5398 = vpop.f32.mrf.mxu0
  %v5399 = vadd.f32 %v5070, %v5398
  %5400 = vmatmul.bf16.gmra.mxu0 %v2160
  %v5401 = vpop.f32.mrf.mxu0
  %v5402 = vadd.f32 %v5073, %v5401
  %v5403 = vpop.f32.mrf.mxu0
  %v5404 = vadd.f32 %v5075, %v5403
  %5405 = vmatmul.bf16.gmra.mxu0 %v2164
  %v5406 = vpop.f32.mrf.mxu0
  %v5407 = vadd.f32 %v5078, %v5406
  %v5408 = vpop.f32.mrf.mxu0
  %v5409 = vadd.f32 %v5080, %v5408
  %5410 = vmatmul.bf16.gmra.mxu0 %v2168
  %v5411 = vpop.f32.mrf.mxu0
  %v5412 = vadd.f32 %v5083, %v5411
  %v5413 = vpop.f32.mrf.mxu0
  %v5414 = vadd.f32 %v5085, %v5413
  %5415 = vmatmul.bf16.gmra.mxu0 %v2172
  %v5416 = vpop.f32.mrf.mxu0
  %v5417 = vadd.f32 %v5088, %v5416
  %v5418 = vpop.f32.mrf.mxu0
  %v5419 = vadd.f32 %v5090, %v5418
  %5420 = vmatmul.bf16.gmra.mxu0 %v2176
  %v5421 = vpop.f32.mrf.mxu0
  %v5422 = vadd.f32 %v5093, %v5421
  %v5423 = vpop.f32.mrf.mxu0
  %v5424 = vadd.f32 %v5095, %v5423
  %5425 = vdwg.mxu0
  %5426 = vmatpush.bf16.msra.mxu0 0
  %5427 = vmatpush.bf16.msra.mxu0 0
  %5428 = vmatpush.bf16.msra.mxu0 0
  %5429 = vmatpush.bf16.msra.mxu0 0
  %5430 = vmatpush.bf16.msra.mxu0 %v2815
  %5431 = vmatpush.bf16.msra.mxu0 %v2811
  %5432 = vmatpush.bf16.msra.mxu0 %v2807
  %5433 = vmatpush.bf16.msra.mxu0 %v2803
  %5434 = vmatmul.bf16.gmra.mxu0 %v2932
  %v5435 = vpop.f32.mrf.mxu0
  %v5436 = vadd.f32 %v5107, %v5435
  %v5437 = vpop.f32.mrf.mxu0
  %v5438 = vadd.f32 %v5109, %v5437
  %5439 = vmatmul.bf16.gmra.mxu0 %v2935
  %v5440 = vpop.f32.mrf.mxu0
  %v5441 = vadd.f32 %v5112, %v5440
  %v5442 = vpop.f32.mrf.mxu0
  %v5443 = vadd.f32 %v5114, %v5442
  %5444 = vmatmul.bf16.gmra.mxu0 %v2938
  %v5445 = vpop.f32.mrf.mxu0
  %v5446 = vadd.f32 %v5117, %v5445
  %v5447 = vpop.f32.mrf.mxu0
  %v5448 = vadd.f32 %v5119, %v5447
  %5449 = vmatmul.bf16.gmra.mxu0 %v2941
  %v5450 = vpop.f32.mrf.mxu0
  %v5451 = vadd.f32 %v5122, %v5450
  %v5452 = vpop.f32.mrf.mxu0
  %v5453 = vadd.f32 %v5124, %v5452
  %5454 = vmatmul.bf16.gmra.mxu0 %v2944
  %v5455 = vpop.f32.mrf.mxu0
  %v5456 = vadd.f32 %v5127, %v5455
  %v5457 = vpop.f32.mrf.mxu0
  %v5458 = vadd.f32 %v5129, %v5457
  %5459 = vmatmul.bf16.gmra.mxu0 %v2947
  %v5460 = vpop.f32.mrf.mxu0
  %v5461 = vadd.f32 %v5132, %v5460
  %v5462 = vpop.f32.mrf.mxu0
  %v5463 = vadd.f32 %v5134, %v5462
  %5464 = vmatmul.bf16.gmra.mxu0 %v2950
  %v5465 = vpop.f32.mrf.mxu0
  %v5466 = vadd.f32 %v5137, %v5465
  %v5467 = vpop.f32.mrf.mxu0
  %v5468 = vadd.f32 %v5139, %v5467
  %5469 = vmatmul.bf16.gmra.mxu0 %v2953
  %v5470 = vpop.f32.mrf.mxu0
  %v5471 = vadd.f32 %v5142, %v5470
  %v5472 = vpop.f32.mrf.mxu0
  %v5473 = vadd.f32 %v5144, %v5472
  %5474 = vmatmul.bf16.gmra.mxu0 %v2956
  %v5475 = vpop.f32.mrf.mxu0
  %v5476 = vadd.f32 %v5147, %v5475
  %v5477 = vpop.f32.mrf.mxu0
  %v5478 = vadd.f32 %v5149, %v5477
  %5479 = vmatmul.bf16.gmra.mxu0 %v2959
  %v5480 = vpop.f32.mrf.mxu0
  %v5481 = vadd.f32 %v5152, %v5480
  %v5482 = vpop.f32.mrf.mxu0
  %v5483 = vadd.f32 %v5154, %v5482
  %5484 = vmatmul.bf16.gmra.mxu0 %v2962
  %v5485 = vpop.f32.mrf.mxu0
  %v5486 = vadd.f32 %v5157, %v5485
  %v5487 = vpop.f32.mrf.mxu0
  %v5488 = vadd.f32 %v5159, %v5487
  %5489 = vmatmul.bf16.gmra.mxu0 %v2965
  %v5490 = vpop.f32.mrf.mxu0
  %v5491 = vadd.f32 %v5162, %v5490
  %v5492 = vpop.f32.mrf.mxu0
  %v5493 = vadd.f32 %v5164, %v5492
  %5494 = vmatmul.bf16.gmra.mxu0 %v2968
  %v5495 = vpop.f32.mrf.mxu0
  %v5496 = vadd.f32 %v5167, %v5495
  %v5497 = vpop.f32.mrf.mxu0
  %v5498 = vadd.f32 %v5169, %v5497
  %5499 = vmatmul.bf16.gmra.mxu0 %v2971
  %v5500 = vpop.f32.mrf.mxu0
  %v5501 = vadd.f32 %v5172, %v5500
  %v5502 = vpop.f32.mrf.mxu0
  %v5503 = vadd.f32 %v5174, %v5502
  %5504 = vmatmul.bf16.gmra.mxu0 %v2974
  %v5505 = vpop.f32.mrf.mxu0
  %v5506 = vadd.f32 %v5177, %v5505
  %v5507 = vpop.f32.mrf.mxu0
  %v5508 = vadd.f32 %v5179, %v5507
  %5509 = vmatmul.bf16.gmra.mxu0 %v2977
  %v5510 = vpop.f32.mrf.mxu0
  %v5511 = vadd.f32 %v5182, %v5510
  %v5512 = vpop.f32.mrf.mxu0
  %v5513 = vadd.f32 %v5184, %v5512
  %5514 = vmatmul.bf16.gmra.mxu0 %v2980
  %v5515 = vpop.f32.mrf.mxu0
  %v5516 = vadd.f32 %v5187, %v5515
  %v5517 = vpop.f32.mrf.mxu0
  %v5518 = vadd.f32 %v5189, %v5517
  %5519 = vmatmul.bf16.gmra.mxu0 %v2983
  %v5520 = vpop.f32.mrf.mxu0
  %v5521 = vadd.f32 %v5192, %v5520
  %v5522 = vpop.f32.mrf.mxu0
  %v5523 = vadd.f32 %v5194, %v5522
  %5524 = vmatmul.bf16.gmra.mxu0 %v2986
  %v5525 = vpop.f32.mrf.mxu0
  %v5526 = vadd.f32 %v5197, %v5525
  %v5527 = vpop.f32.mrf.mxu0
  %v5528 = vadd.f32 %v5199, %v5527
  %5529 = vmatmul.bf16.gmra.mxu0 %v2989
  %v5530 = vpop.f32.mrf.mxu0
  %v5531 = vadd.f32 %v5202, %v5530
  %v5532 = vpop.f32.mrf.mxu0
  %v5533 = vadd.f32 %v5204, %v5532
  %5534 = vmatmul.bf16.gmra.mxu0 %v2992
  %v5535 = vpop.f32.mrf.mxu0
  %v5536 = vadd.f32 %v5207, %v5535
  %v5537 = vpop.f32.mrf.mxu0
  %v5538 = vadd.f32 %v5209, %v5537
  %5539 = vmatmul.bf16.gmra.mxu0 %v2995
  %v5540 = vpop.f32.mrf.mxu0
  %v5541 = vadd.f32 %v5212, %v5540
  %v5542 = vpop.f32.mrf.mxu0
  %v5543 = vadd.f32 %v5214, %v5542
  %5544 = vmatmul.bf16.gmra.mxu0 %v2998
  %v5545 = vpop.f32.mrf.mxu0
  %v5546 = vadd.f32 %v5217, %v5545
  %v5547 = vpop.f32.mrf.mxu0
  %v5548 = vadd.f32 %v5219, %v5547
  %5549 = vmatmul.bf16.gmra.mxu0 %v3001
  %v5550 = vpop.f32.mrf.mxu0
  %v5551 = vadd.f32 %v5222, %v5550
  %v5552 = vpop.f32.mrf.mxu0
  %v5553 = vadd.f32 %v5224, %v5552
  %5554 = vmatmul.bf16.gmra.mxu0 %v3004
  %v5555 = vpop.f32.mrf.mxu0
  %v5556 = vadd.f32 %v5227, %v5555
  %v5557 = vpop.f32.mrf.mxu0
  %v5558 = vadd.f32 %v5229, %v5557
  %5559 = vmatmul.bf16.gmra.mxu0 %v3007
  %v5560 = vpop.f32.mrf.mxu0
  %v5561 = vadd.f32 %v5232, %v5560
  %v5562 = vpop.f32.mrf.mxu0
  %v5563 = vadd.f32 %v5234, %v5562
  %5564 = vmatmul.bf16.gmra.mxu0 %v3010
  %v5565 = vpop.f32.mrf.mxu0
  %v5566 = vadd.f32 %v5237, %v5565
  %v5567 = vpop.f32.mrf.mxu0
  %v5568 = vadd.f32 %v5239, %v5567
  %5569 = vmatmul.bf16.gmra.mxu0 %v3013
  %v5570 = vpop.f32.mrf.mxu0
  %v5571 = vadd.f32 %v5242, %v5570
  %v5572 = vpop.f32.mrf.mxu0
  %v5573 = vadd.f32 %v5244, %v5572
  %5574 = vmatmul.bf16.gmra.mxu0 %v3016
  %v5575 = vpop.f32.mrf.mxu0
  %v5576 = vadd.f32 %v5247, %v5575
  %v5577 = vpop.f32.mrf.mxu0
  %v5578 = vadd.f32 %v5249, %v5577
  %5579 = vmatmul.bf16.gmra.mxu0 %v3019
  %v5580 = vpop.f32.mrf.mxu0
  %v5581 = vadd.f32 %v5252, %v5580
  %v5582 = vpop.f32.mrf.mxu0
  %v5583 = vadd.f32 %v5254, %v5582
  %5584 = vmatmul.bf16.gmra.mxu0 %v3022
  %v5585 = vpop.f32.mrf.mxu0
  %v5586 = vadd.f32 %v5257, %v5585
  %v5587 = vpop.f32.mrf.mxu0
  %v5588 = vadd.f32 %v5259, %v5587
  %5589 = vmatmul.bf16.gmra.mxu0 %v3025
  %v5590 = vpop.f32.mrf.mxu0
  %v5591 = vadd.f32 %v5262, %v5590
  %v5592 = vpop.f32.mrf.mxu0
  %v5593 = vadd.f32 %v5264, %v5592
  %5594 = vmatmul.bf16.gmra.mxu0 %v3028
  %v5595 = vpop.f32.mrf.mxu0
  %v5596 = vadd.f32 %v5267, %v5595
  %v5597 = vpop.f32.mrf.mxu0
  %v5598 = vadd.f32 %v5269, %v5597
  %5599 = vmatmul.bf16.gmra.mxu0 %v3031
  %v5600 = vpop.f32.mrf.mxu0
  %v5601 = vadd.f32 %v5272, %v5600
  %v5602 = vpop.f32.mrf.mxu0
  %v5603 = vadd.f32 %v5274, %v5602
  %5604 = vmatmul.bf16.gmra.mxu0 %v3034
  %v5605 = vpop.f32.mrf.mxu0
  %v5606 = vadd.f32 %v5277, %v5605
  %v5607 = vpop.f32.mrf.mxu0
  %v5608 = vadd.f32 %v5279, %v5607
  %5609 = vmatmul.bf16.gmra.mxu0 %v3037
  %v5610 = vpop.f32.mrf.mxu0
  %v5611 = vadd.f32 %v5282, %v5610
  %v5612 = vpop.f32.mrf.mxu0
  %v5613 = vadd.f32 %v5284, %v5612
  %5614 = vmatmul.bf16.gmra.mxu0 %v3040
  %v5615 = vpop.f32.mrf.mxu0
  %v5616 = vadd.f32 %v5287, %v5615
  %v5617 = vpop.f32.mrf.mxu0
  %v5618 = vadd.f32 %v5289, %v5617
  %5619 = vmatmul.bf16.gmra.mxu0 %v3043
  %v5620 = vpop.f32.mrf.mxu0
  %v5621 = vadd.f32 %v5292, %v5620
  %v5622 = vpop.f32.mrf.mxu0
  %v5623 = vadd.f32 %v5294, %v5622
  %5624 = vmatmul.bf16.gmra.mxu0 %v3046
  %v5625 = vpop.f32.mrf.mxu0
  %v5626 = vadd.f32 %v5297, %v5625
  %v5627 = vpop.f32.mrf.mxu0
  %v5628 = vadd.f32 %v5299, %v5627
  %5629 = vmatmul.bf16.gmra.mxu0 %v3049
  %v5630 = vpop.f32.mrf.mxu0
  %v5631 = vadd.f32 %v5302, %v5630
  %v5632 = vpop.f32.mrf.mxu0
  %v5633 = vadd.f32 %v5304, %v5632
  %5634 = vmatmul.bf16.gmra.mxu0 %v3052
  %v5635 = vpop.f32.mrf.mxu0
  %v5636 = vadd.f32 %v5307, %v5635
  %v5637 = vpop.f32.mrf.mxu0
  %v5638 = vadd.f32 %v5309, %v5637
  %5639 = vmatmul.bf16.gmra.mxu0 %v3055
  %v5640 = vpop.f32.mrf.mxu0
  %v5641 = vadd.f32 %v5312, %v5640
  %v5642 = vpop.f32.mrf.mxu0
  %v5643 = vadd.f32 %v5314, %v5642
  %5644 = vmatmul.bf16.gmra.mxu0 %v3058
  %v5645 = vpop.f32.mrf.mxu0
  %v5646 = vadd.f32 %v5317, %v5645
  %v5647 = vpop.f32.mrf.mxu0
  %v5648 = vadd.f32 %v5319, %v5647
  %5649 = vmatmul.bf16.gmra.mxu0 %v3061
  %v5650 = vpop.f32.mrf.mxu0
  %v5651 = vadd.f32 %v5322, %v5650
  %v5652 = vpop.f32.mrf.mxu0
  %v5653 = vadd.f32 %v5324, %v5652
  %5654 = vmatmul.bf16.gmra.mxu0 %v3064
  %v5655 = vpop.f32.mrf.mxu0
  %v5656 = vadd.f32 %v5327, %v5655
  %v5657 = vpop.f32.mrf.mxu0
  %v5658 = vadd.f32 %v5329, %v5657
  %5659 = vmatmul.bf16.gmra.mxu0 %v3067
  %v5660 = vpop.f32.mrf.mxu0
  %v5661 = vadd.f32 %v5332, %v5660
  %v5662 = vpop.f32.mrf.mxu0
  %v5663 = vadd.f32 %v5334, %v5662
  %5664 = vmatmul.bf16.gmra.mxu0 %v3070
  %v5665 = vpop.f32.mrf.mxu0
  %v5666 = vadd.f32 %v5337, %v5665
  %v5667 = vpop.f32.mrf.mxu0
  %v5668 = vadd.f32 %v5339, %v5667
  %5669 = vmatmul.bf16.gmra.mxu0 %v3073
  %v5670 = vpop.f32.mrf.mxu0
  %v5671 = vadd.f32 %v5342, %v5670
  %v5672 = vpop.f32.mrf.mxu0
  %v5673 = vadd.f32 %v5344, %v5672
  %5674 = vmatmul.bf16.gmra.mxu0 %v3076
  %v5675 = vpop.f32.mrf.mxu0
  %v5676 = vadd.f32 %v5347, %v5675
  %v5677 = vpop.f32.mrf.mxu0
  %v5678 = vadd.f32 %v5349, %v5677
  %5679 = vmatmul.bf16.gmra.mxu0 %v3079
  %v5680 = vpop.f32.mrf.mxu0
  %v5681 = vadd.f32 %v5352, %v5680
  %v5682 = vpop.f32.mrf.mxu0
  %v5683 = vadd.f32 %v5354, %v5682
  %5684 = vmatmul.bf16.gmra.mxu0 %v3082
  %v5685 = vpop.f32.mrf.mxu0
  %v5686 = vadd.f32 %v5357, %v5685
  %v5687 = vpop.f32.mrf.mxu0
  %v5688 = vadd.f32 %v5359, %v5687
  %5689 = vmatmul.bf16.gmra.mxu0 %v3085
  %v5690 = vpop.f32.mrf.mxu0
  %v5691 = vadd.f32 %v5362, %v5690
  %v5692 = vpop.f32.mrf.mxu0
  %v5693 = vadd.f32 %v5364, %v5692
  %5694 = vmatmul.bf16.gmra.mxu0 %v3088
  %v5695 = vpop.f32.mrf.mxu0
  %v5696 = vadd.f32 %v5367, %v5695
  %v5697 = vpop.f32.mrf.mxu0
  %v5698 = vadd.f32 %v5369, %v5697
  %5699 = vmatmul.bf16.gmra.mxu0 %v3091
  %v5700 = vpop.f32.mrf.mxu0
  %v5701 = vadd.f32 %v5372, %v5700
  %v5702 = vpop.f32.mrf.mxu0
  %v5703 = vadd.f32 %v5374, %v5702
  %5704 = vmatmul.bf16.gmra.mxu0 %v3094
  %v5705 = vpop.f32.mrf.mxu0
  %v5706 = vadd.f32 %v5377, %v5705
  %v5707 = vpop.f32.mrf.mxu0
  %v5708 = vadd.f32 %v5379, %v5707
  %5709 = vmatmul.bf16.gmra.mxu0 %v3097
  %v5710 = vpop.f32.mrf.mxu0
  %v5711 = vadd.f32 %v5382, %v5710
  %v5712 = vpop.f32.mrf.mxu0
  %v5713 = vadd.f32 %v5384, %v5712
  %5714 = vmatmul.bf16.gmra.mxu0 %v3100
  %v5715 = vpop.f32.mrf.mxu0
  %v5716 = vadd.f32 %v5387, %v5715
  %v5717 = vpop.f32.mrf.mxu0
  %v5718 = vadd.f32 %v5389, %v5717
  %5719 = vmatmul.bf16.gmra.mxu0 %v3103
  %v5720 = vpop.f32.mrf.mxu0
  %v5721 = vadd.f32 %v5392, %v5720
  %v5722 = vpop.f32.mrf.mxu0
  %v5723 = vadd.f32 %v5394, %v5722
  %5724 = vmatmul.bf16.gmra.mxu0 %v3106
  %v5725 = vpop.f32.mrf.mxu0
  %v5726 = vadd.f32 %v5397, %v5725
  %v5727 = vpop.f32.mrf.mxu0
  %v5728 = vadd.f32 %v5399, %v5727
  %5729 = vmatmul.bf16.gmra.mxu0 %v3109
  %v5730 = vpop.f32.mrf.mxu0
  %v5731 = vadd.f32 %v5402, %v5730
  %v5732 = vpop.f32.mrf.mxu0
  %v5733 = vadd.f32 %v5404, %v5732
  %5734 = vmatmul.bf16.gmra.mxu0 %v3112
  %v5735 = vpop.f32.mrf.mxu0
  %v5736 = vadd.f32 %v5407, %v5735
  %v5737 = vpop.f32.mrf.mxu0
  %v5738 = vadd.f32 %v5409, %v5737
  %5739 = vmatmul.bf16.gmra.mxu0 %v3115
  %v5740 = vpop.f32.mrf.mxu0
  %v5741 = vadd.f32 %v5412, %v5740
  %v5742 = vpop.f32.mrf.mxu0
  %v5743 = vadd.f32 %v5414, %v5742
  %5744 = vmatmul.bf16.gmra.mxu0 %v3118
  %v5745 = vpop.f32.mrf.mxu0
  %v5746 = vadd.f32 %v5417, %v5745
  %v5747 = vpop.f32.mrf.mxu0
  %v5748 = vadd.f32 %v5419, %v5747
  %5749 = vmatmul.bf16.gmra.mxu0 %v3121
  %v5750 = vpop.f32.mrf.mxu0
  %v5751 = vadd.f32 %v5422, %v5750
  %v5752 = vpop.f32.mrf.mxu0
  %v5753 = vadd.f32 %v5424, %v5752
  %5754 = vdwg.mxu0
  %5755 = vmatpush.bf16.msra.mxu0 %v2736
  %5756 = vmatpush.bf16.msra.mxu0 %v2732
  %5757 = vmatpush.bf16.msra.mxu0 %v2728
  %5758 = vmatpush.bf16.msra.mxu0 %v2724
  %5759 = vmatpush.bf16.msra.mxu0 %v2720
  %5760 = vmatpush.bf16.msra.mxu0 %v2716
  %5761 = vmatpush.bf16.msra.mxu0 %v2712
  %5762 = vmatpush.bf16.msra.mxu0 %v2708
  %5763 = vmatmul.bf16.gmra.mxu0 %v1922
  %v5764 = vpop.f32.mrf.mxu0
  %v5765 = vadd.f32 %v517, %v5764
  %v5766 = vpop.f32.mrf.mxu0
  %v5767 = vadd.f32 %v522, %v5766
  %5768 = vmatmul.bf16.gmra.mxu0 %v1926
  %v5769 = vpop.f32.mrf.mxu0
  %v5770 = vadd.f32 %v527, %v5769
  %v5771 = vpop.f32.mrf.mxu0
  %v5772 = vadd.f32 %v532, %v5771
  %5773 = vmatmul.bf16.gmra.mxu0 %v1930
  %v5774 = vpop.f32.mrf.mxu0
  %v5775 = vadd.f32 %v537, %v5774
  %v5776 = vpop.f32.mrf.mxu0
  %v5777 = vadd.f32 %v542, %v5776
  %5778 = vmatmul.bf16.gmra.mxu0 %v1934
  %v5779 = vpop.f32.mrf.mxu0
  %v5780 = vadd.f32 %v547, %v5779
  %v5781 = vpop.f32.mrf.mxu0
  %v5782 = vadd.f32 %v552, %v5781
  %5783 = vmatmul.bf16.gmra.mxu0 %v1938
  %v5784 = vpop.f32.mrf.mxu0
  %v5785 = vadd.f32 %v557, %v5784
  %v5786 = vpop.f32.mrf.mxu0
  %v5787 = vadd.f32 %v562, %v5786
  %5788 = vmatmul.bf16.gmra.mxu0 %v1942
  %v5789 = vpop.f32.mrf.mxu0
  %v5790 = vadd.f32 %v567, %v5789
  %v5791 = vpop.f32.mrf.mxu0
  %v5792 = vadd.f32 %v572, %v5791
  %5793 = vmatmul.bf16.gmra.mxu0 %v1946
  %v5794 = vpop.f32.mrf.mxu0
  %v5795 = vadd.f32 %v577, %v5794
  %v5796 = vpop.f32.mrf.mxu0
  %v5797 = vadd.f32 %v582, %v5796
  %5798 = vmatmul.bf16.gmra.mxu0 %v1950
  %v5799 = vpop.f32.mrf.mxu0
  %v5800 = vadd.f32 %v587, %v5799
  %v5801 = vpop.f32.mrf.mxu0
  %v5802 = vadd.f32 %v592, %v5801
  %5803 = vmatmul.bf16.gmra.mxu0 %v1954
  %v5804 = vpop.f32.mrf.mxu0
  %v5805 = vadd.f32 %v597, %v5804
  %v5806 = vpop.f32.mrf.mxu0
  %v5807 = vadd.f32 %v602, %v5806
  %5808 = vmatmul.bf16.gmra.mxu0 %v1958
  %v5809 = vpop.f32.mrf.mxu0
  %v5810 = vadd.f32 %v607, %v5809
  %v5811 = vpop.f32.mrf.mxu0
  %v5812 = vadd.f32 %v612, %v5811
  %5813 = vmatmul.bf16.gmra.mxu0 %v1962
  %v5814 = vpop.f32.mrf.mxu0
  %v5815 = vadd.f32 %v617, %v5814
  %v5816 = vpop.f32.mrf.mxu0
  %v5817 = vadd.f32 %v622, %v5816
  %5818 = vmatmul.bf16.gmra.mxu0 %v1966
  %v5819 = vpop.f32.mrf.mxu0
  %v5820 = vadd.f32 %v627, %v5819
  %v5821 = vpop.f32.mrf.mxu0
  %v5822 = vadd.f32 %v632, %v5821
  %5823 = vmatmul.bf16.gmra.mxu0 %v1970
  %v5824 = vpop.f32.mrf.mxu0
  %v5825 = vadd.f32 %v637, %v5824
  %v5826 = vpop.f32.mrf.mxu0
  %v5827 = vadd.f32 %v642, %v5826
  %5828 = vmatmul.bf16.gmra.mxu0 %v1974
  %v5829 = vpop.f32.mrf.mxu0
  %v5830 = vadd.f32 %v647, %v5829
  %v5831 = vpop.f32.mrf.mxu0
  %v5832 = vadd.f32 %v652, %v5831
  %5833 = vmatmul.bf16.gmra.mxu0 %v1978
  %v5834 = vpop.f32.mrf.mxu0
  %v5835 = vadd.f32 %v657, %v5834
  %v5836 = vpop.f32.mrf.mxu0
  %v5837 = vadd.f32 %v662, %v5836
  %5838 = vmatmul.bf16.gmra.mxu0 %v1982
  %v5839 = vpop.f32.mrf.mxu0
  %v5840 = vadd.f32 %v667, %v5839
  %v5841 = vpop.f32.mrf.mxu0
  %v5842 = vadd.f32 %v672, %v5841
  %5843 = vmatmul.bf16.gmra.mxu0 %v1986
  %v5844 = vpop.f32.mrf.mxu0
  %v5845 = vadd.f32 %v677, %v5844
  %v5846 = vpop.f32.mrf.mxu0
  %v5847 = vadd.f32 %v682, %v5846
  %5848 = vmatmul.bf16.gmra.mxu0 %v1990
  %v5849 = vpop.f32.mrf.mxu0
  %v5850 = vadd.f32 %v687, %v5849
  %v5851 = vpop.f32.mrf.mxu0
  %v5852 = vadd.f32 %v692, %v5851
  %5853 = vmatmul.bf16.gmra.mxu0 %v1994
  %v5854 = vpop.f32.mrf.mxu0
  %v5855 = vadd.f32 %v697, %v5854
  %v5856 = vpop.f32.mrf.mxu0
  %v5857 = vadd.f32 %v702, %v5856
  %5858 = vmatmul.bf16.gmra.mxu0 %v1998
  %v5859 = vpop.f32.mrf.mxu0
  %v5860 = vadd.f32 %v707, %v5859
  %v5861 = vpop.f32.mrf.mxu0
  %v5862 = vadd.f32 %v712, %v5861
  %5863 = vmatmul.bf16.gmra.mxu0 %v2002
  %v5864 = vpop.f32.mrf.mxu0
  %v5865 = vadd.f32 %v717, %v5864
  %v5866 = vpop.f32.mrf.mxu0
  %v5867 = vadd.f32 %v722, %v5866
  %5868 = vmatmul.bf16.gmra.mxu0 %v2006
  %v5869 = vpop.f32.mrf.mxu0
  %v5870 = vadd.f32 %v727, %v5869
  %v5871 = vpop.f32.mrf.mxu0
  %v5872 = vadd.f32 %v732, %v5871
  %5873 = vmatmul.bf16.gmra.mxu0 %v2010
  %v5874 = vpop.f32.mrf.mxu0
  %v5875 = vadd.f32 %v737, %v5874
  %v5876 = vpop.f32.mrf.mxu0
  %v5877 = vadd.f32 %v742, %v5876
  %5878 = vmatmul.bf16.gmra.mxu0 %v2014
  %v5879 = vpop.f32.mrf.mxu0
  %v5880 = vadd.f32 %v747, %v5879
  %v5881 = vpop.f32.mrf.mxu0
  %v5882 = vadd.f32 %v752, %v5881
  %5883 = vmatmul.bf16.gmra.mxu0 %v2018
  %v5884 = vpop.f32.mrf.mxu0
  %v5885 = vadd.f32 %v757, %v5884
  %v5886 = vpop.f32.mrf.mxu0
  %v5887 = vadd.f32 %v762, %v5886
  %5888 = vmatmul.bf16.gmra.mxu0 %v2022
  %v5889 = vpop.f32.mrf.mxu0
  %v5890 = vadd.f32 %v767, %v5889
  %v5891 = vpop.f32.mrf.mxu0
  %v5892 = vadd.f32 %v772, %v5891
  %5893 = vmatmul.bf16.gmra.mxu0 %v2026
  %v5894 = vpop.f32.mrf.mxu0
  %v5895 = vadd.f32 %v777, %v5894
  %v5896 = vpop.f32.mrf.mxu0
  %v5897 = vadd.f32 %v782, %v5896
  %5898 = vmatmul.bf16.gmra.mxu0 %v2030
  %v5899 = vpop.f32.mrf.mxu0
  %v5900 = vadd.f32 %v787, %v5899
  %v5901 = vpop.f32.mrf.mxu0
  %v5902 = vadd.f32 %v792, %v5901
  %5903 = vmatmul.bf16.gmra.mxu0 %v2034
  %v5904 = vpop.f32.mrf.mxu0
  %v5905 = vadd.f32 %v797, %v5904
  %v5906 = vpop.f32.mrf.mxu0
  %v5907 = vadd.f32 %v802, %v5906
  %5908 = vmatmul.bf16.gmra.mxu0 %v2038
  %v5909 = vpop.f32.mrf.mxu0
  %v5910 = vadd.f32 %v807, %v5909
  %v5911 = vpop.f32.mrf.mxu0
  %v5912 = vadd.f32 %v812, %v5911
  %5913 = vmatmul.bf16.gmra.mxu0 %v2042
  %v5914 = vpop.f32.mrf.mxu0
  %v5915 = vadd.f32 %v817, %v5914
  %v5916 = vpop.f32.mrf.mxu0
  %v5917 = vadd.f32 %v822, %v5916
  %5918 = vmatmul.bf16.gmra.mxu0 %v2046
  %v5919 = vpop.f32.mrf.mxu0
  %v5920 = vadd.f32 %v827, %v5919
  %v5921 = vpop.f32.mrf.mxu0
  %v5922 = vadd.f32 %v832, %v5921
  %5923 = vmatmul.bf16.gmra.mxu0 %v2050
  %v5924 = vpop.f32.mrf.mxu0
  %v5925 = vadd.f32 %v837, %v5924
  %v5926 = vpop.f32.mrf.mxu0
  %v5927 = vadd.f32 %v842, %v5926
  %5928 = vmatmul.bf16.gmra.mxu0 %v2054
  %v5929 = vpop.f32.mrf.mxu0
  %v5930 = vadd.f32 %v847, %v5929
  %v5931 = vpop.f32.mrf.mxu0
  %v5932 = vadd.f32 %v852, %v5931
  %5933 = vmatmul.bf16.gmra.mxu0 %v2058
  %v5934 = vpop.f32.mrf.mxu0
  %v5935 = vadd.f32 %v857, %v5934
  %v5936 = vpop.f32.mrf.mxu0
  %v5937 = vadd.f32 %v862, %v5936
  %5938 = vmatmul.bf16.gmra.mxu0 %v2062
  %v5939 = vpop.f32.mrf.mxu0
  %v5940 = vadd.f32 %v867, %v5939
  %v5941 = vpop.f32.mrf.mxu0
  %v5942 = vadd.f32 %v872, %v5941
  %5943 = vmatmul.bf16.gmra.mxu0 %v2066
  %v5944 = vpop.f32.mrf.mxu0
  %v5945 = vadd.f32 %v877, %v5944
  %v5946 = vpop.f32.mrf.mxu0
  %v5947 = vadd.f32 %v882, %v5946
  %5948 = vmatmul.bf16.gmra.mxu0 %v2070
  %v5949 = vpop.f32.mrf.mxu0
  %v5950 = vadd.f32 %v887, %v5949
  %v5951 = vpop.f32.mrf.mxu0
  %v5952 = vadd.f32 %v892, %v5951
  %5953 = vmatmul.bf16.gmra.mxu0 %v2074
  %v5954 = vpop.f32.mrf.mxu0
  %v5955 = vadd.f32 %v897, %v5954
  %v5956 = vpop.f32.mrf.mxu0
  %v5957 = vadd.f32 %v902, %v5956
  %5958 = vmatmul.bf16.gmra.mxu0 %v2078
  %v5959 = vpop.f32.mrf.mxu0
  %v5960 = vadd.f32 %v907, %v5959
  %v5961 = vpop.f32.mrf.mxu0
  %v5962 = vadd.f32 %v912, %v5961
  %5963 = vmatmul.bf16.gmra.mxu0 %v2082
  %v5964 = vpop.f32.mrf.mxu0
  %v5965 = vadd.f32 %v917, %v5964
  %v5966 = vpop.f32.mrf.mxu0
  %v5967 = vadd.f32 %v922, %v5966
  %5968 = vmatmul.bf16.gmra.mxu0 %v2086
  %v5969 = vpop.f32.mrf.mxu0
  %v5970 = vadd.f32 %v927, %v5969
  %v5971 = vpop.f32.mrf.mxu0
  %v5972 = vadd.f32 %v932, %v5971
  %5973 = vmatmul.bf16.gmra.mxu0 %v2090
  %v5974 = vpop.f32.mrf.mxu0
  %v5975 = vadd.f32 %v937, %v5974
  %v5976 = vpop.f32.mrf.mxu0
  %v5977 = vadd.f32 %v942, %v5976
  %5978 = vmatmul.bf16.gmra.mxu0 %v2094
  %v5979 = vpop.f32.mrf.mxu0
  %v5980 = vadd.f32 %v947, %v5979
  %v5981 = vpop.f32.mrf.mxu0
  %v5982 = vadd.f32 %v952, %v5981
  %5983 = vmatmul.bf16.gmra.mxu0 %v2098
  %v5984 = vpop.f32.mrf.mxu0
  %v5985 = vadd.f32 %v957, %v5984
  %v5986 = vpop.f32.mrf.mxu0
  %v5987 = vadd.f32 %v962, %v5986
  %5988 = vmatmul.bf16.gmra.mxu0 %v2102
  %v5989 = vpop.f32.mrf.mxu0
  %v5990 = vadd.f32 %v967, %v5989
  %v5991 = vpop.f32.mrf.mxu0
  %v5992 = vadd.f32 %v972, %v5991
  %5993 = vmatmul.bf16.gmra.mxu0 %v2106
  %v5994 = vpop.f32.mrf.mxu0
  %v5995 = vadd.f32 %v977, %v5994
  %v5996 = vpop.f32.mrf.mxu0
  %v5997 = vadd.f32 %v982, %v5996
  %5998 = vmatmul.bf16.gmra.mxu0 %v2110
  %v5999 = vpop.f32.mrf.mxu0
  %v6000 = vadd.f32 %v987, %v5999
  %v6001 = vpop.f32.mrf.mxu0
  %v6002 = vadd.f32 %v992, %v6001
  %6003 = vmatmul.bf16.gmra.mxu0 %v2114
  %v6004 = vpop.f32.mrf.mxu0
  %v6005 = vadd.f32 %v997, %v6004
  %v6006 = vpop.f32.mrf.mxu0
  %v6007 = vadd.f32 %v1002, %v6006
  %6008 = vmatmul.bf16.gmra.mxu0 %v2118
  %v6009 = vpop.f32.mrf.mxu0
  %v6010 = vadd.f32 %v1007, %v6009
  %v6011 = vpop.f32.mrf.mxu0
  %v6012 = vadd.f32 %v1012, %v6011
  %6013 = vmatmul.bf16.gmra.mxu0 %v2122
  %v6014 = vpop.f32.mrf.mxu0
  %v6015 = vadd.f32 %v1017, %v6014
  %v6016 = vpop.f32.mrf.mxu0
  %v6017 = vadd.f32 %v1022, %v6016
  %6018 = vmatmul.bf16.gmra.mxu0 %v2126
  %v6019 = vpop.f32.mrf.mxu0
  %v6020 = vadd.f32 %v1027, %v6019
  %v6021 = vpop.f32.mrf.mxu0
  %v6022 = vadd.f32 %v1032, %v6021
  %6023 = vmatmul.bf16.gmra.mxu0 %v2130
  %v6024 = vpop.f32.mrf.mxu0
  %v6025 = vadd.f32 %v1037, %v6024
  %v6026 = vpop.f32.mrf.mxu0
  %v6027 = vadd.f32 %v1042, %v6026
  %6028 = vmatmul.bf16.gmra.mxu0 %v2134
  %v6029 = vpop.f32.mrf.mxu0
  %v6030 = vadd.f32 %v1047, %v6029
  %v6031 = vpop.f32.mrf.mxu0
  %v6032 = vadd.f32 %v1052, %v6031
  %6033 = vmatmul.bf16.gmra.mxu0 %v2138
  %v6034 = vpop.f32.mrf.mxu0
  %v6035 = vadd.f32 %v1057, %v6034
  %v6036 = vpop.f32.mrf.mxu0
  %v6037 = vadd.f32 %v1062, %v6036
  %6038 = vmatmul.bf16.gmra.mxu0 %v2142
  %v6039 = vpop.f32.mrf.mxu0
  %v6040 = vadd.f32 %v1067, %v6039
  %v6041 = vpop.f32.mrf.mxu0
  %v6042 = vadd.f32 %v1072, %v6041
  %6043 = vmatmul.bf16.gmra.mxu0 %v2146
  %v6044 = vpop.f32.mrf.mxu0
  %v6045 = vadd.f32 %v1077, %v6044
  %v6046 = vpop.f32.mrf.mxu0
  %v6047 = vadd.f32 %v1082, %v6046
  %6048 = vmatmul.bf16.gmra.mxu0 %v2150
  %v6049 = vpop.f32.mrf.mxu0
  %v6050 = vadd.f32 %v1087, %v6049
  %v6051 = vpop.f32.mrf.mxu0
  %v6052 = vadd.f32 %v1092, %v6051
  %6053 = vmatmul.bf16.gmra.mxu0 %v2154
  %v6054 = vpop.f32.mrf.mxu0
  %v6055 = vadd.f32 %v1097, %v6054
  %v6056 = vpop.f32.mrf.mxu0
  %v6057 = vadd.f32 %v1102, %v6056
  %6058 = vmatmul.bf16.gmra.mxu0 %v2158
  %v6059 = vpop.f32.mrf.mxu0
  %v6060 = vadd.f32 %v1107, %v6059
  %v6061 = vpop.f32.mrf.mxu0
  %v6062 = vadd.f32 %v1112, %v6061
  %6063 = vmatmul.bf16.gmra.mxu0 %v2162
  %v6064 = vpop.f32.mrf.mxu0
  %v6065 = vadd.f32 %v1117, %v6064
  %v6066 = vpop.f32.mrf.mxu0
  %v6067 = vadd.f32 %v1122, %v6066
  %6068 = vmatmul.bf16.gmra.mxu0 %v2166
  %v6069 = vpop.f32.mrf.mxu0
  %v6070 = vadd.f32 %v1127, %v6069
  %v6071 = vpop.f32.mrf.mxu0
  %v6072 = vadd.f32 %v1132, %v6071
  %6073 = vmatmul.bf16.gmra.mxu0 %v2170
  %v6074 = vpop.f32.mrf.mxu0
  %v6075 = vadd.f32 %v1137, %v6074
  %v6076 = vpop.f32.mrf.mxu0
  %v6077 = vadd.f32 %v1142, %v6076
  %6078 = vmatmul.bf16.gmra.mxu0 %v2174
  %v6079 = vpop.f32.mrf.mxu0
  %v6080 = vadd.f32 %v1147, %v6079
  %v6081 = vpop.f32.mrf.mxu0
  %v6082 = vadd.f32 %v1152, %v6081
  %6083 = vdwg.mxu0
  %6084 = vmatpush.bf16.msra.mxu0 %v2768
  %6085 = vmatpush.bf16.msra.mxu0 %v2764
  %6086 = vmatpush.bf16.msra.mxu0 %v2760
  %6087 = vmatpush.bf16.msra.mxu0 %v2756
  %6088 = vmatpush.bf16.msra.mxu0 %v2752
  %6089 = vmatpush.bf16.msra.mxu0 %v2748
  %6090 = vmatpush.bf16.msra.mxu0 %v2744
  %6091 = vmatpush.bf16.msra.mxu0 %v2740
  %6092 = vmatmul.bf16.gmra.mxu0 %v1923
  %v6093 = vpop.f32.mrf.mxu0
  %v6094 = vadd.f32 %v5765, %v6093
  %v6095 = vpop.f32.mrf.mxu0
  %v6096 = vadd.f32 %v5767, %v6095
  %6097 = vmatmul.bf16.gmra.mxu0 %v1927
  %v6098 = vpop.f32.mrf.mxu0
  %v6099 = vadd.f32 %v5770, %v6098
  %v6100 = vpop.f32.mrf.mxu0
  %v6101 = vadd.f32 %v5772, %v6100
  %6102 = vmatmul.bf16.gmra.mxu0 %v1931
  %v6103 = vpop.f32.mrf.mxu0
  %v6104 = vadd.f32 %v5775, %v6103
  %v6105 = vpop.f32.mrf.mxu0
  %v6106 = vadd.f32 %v5777, %v6105
  %6107 = vmatmul.bf16.gmra.mxu0 %v1935
  %v6108 = vpop.f32.mrf.mxu0
  %v6109 = vadd.f32 %v5780, %v6108
  %v6110 = vpop.f32.mrf.mxu0
  %v6111 = vadd.f32 %v5782, %v6110
  %6112 = vmatmul.bf16.gmra.mxu0 %v1939
  %v6113 = vpop.f32.mrf.mxu0
  %v6114 = vadd.f32 %v5785, %v6113
  %v6115 = vpop.f32.mrf.mxu0
  %v6116 = vadd.f32 %v5787, %v6115
  %6117 = vmatmul.bf16.gmra.mxu0 %v1943
  %v6118 = vpop.f32.mrf.mxu0
  %v6119 = vadd.f32 %v5790, %v6118
  %v6120 = vpop.f32.mrf.mxu0
  %v6121 = vadd.f32 %v5792, %v6120
  %6122 = vmatmul.bf16.gmra.mxu0 %v1947
  %v6123 = vpop.f32.mrf.mxu0
  %v6124 = vadd.f32 %v5795, %v6123
  %v6125 = vpop.f32.mrf.mxu0
  %v6126 = vadd.f32 %v5797, %v6125
  %6127 = vmatmul.bf16.gmra.mxu0 %v1951
  %v6128 = vpop.f32.mrf.mxu0
  %v6129 = vadd.f32 %v5800, %v6128
  %v6130 = vpop.f32.mrf.mxu0
  %v6131 = vadd.f32 %v5802, %v6130
  %6132 = vmatmul.bf16.gmra.mxu0 %v1955
  %v6133 = vpop.f32.mrf.mxu0
  %v6134 = vadd.f32 %v5805, %v6133
  %v6135 = vpop.f32.mrf.mxu0
  %v6136 = vadd.f32 %v5807, %v6135
  %6137 = vmatmul.bf16.gmra.mxu0 %v1959
  %v6138 = vpop.f32.mrf.mxu0
  %v6139 = vadd.f32 %v5810, %v6138
  %v6140 = vpop.f32.mrf.mxu0
  %v6141 = vadd.f32 %v5812, %v6140
  %6142 = vmatmul.bf16.gmra.mxu0 %v1963
  %v6143 = vpop.f32.mrf.mxu0
  %v6144 = vadd.f32 %v5815, %v6143
  %v6145 = vpop.f32.mrf.mxu0
  %v6146 = vadd.f32 %v5817, %v6145
  %6147 = vmatmul.bf16.gmra.mxu0 %v1967
  %v6148 = vpop.f32.mrf.mxu0
  %v6149 = vadd.f32 %v5820, %v6148
  %v6150 = vpop.f32.mrf.mxu0
  %v6151 = vadd.f32 %v5822, %v6150
  %6152 = vmatmul.bf16.gmra.mxu0 %v1971
  %v6153 = vpop.f32.mrf.mxu0
  %v6154 = vadd.f32 %v5825, %v6153
  %v6155 = vpop.f32.mrf.mxu0
  %v6156 = vadd.f32 %v5827, %v6155
  %6157 = vmatmul.bf16.gmra.mxu0 %v1975
  %v6158 = vpop.f32.mrf.mxu0
  %v6159 = vadd.f32 %v5830, %v6158
  %v6160 = vpop.f32.mrf.mxu0
  %v6161 = vadd.f32 %v5832, %v6160
  %6162 = vmatmul.bf16.gmra.mxu0 %v1979
  %v6163 = vpop.f32.mrf.mxu0
  %v6164 = vadd.f32 %v5835, %v6163
  %v6165 = vpop.f32.mrf.mxu0
  %v6166 = vadd.f32 %v5837, %v6165
  %6167 = vmatmul.bf16.gmra.mxu0 %v1983
  %v6168 = vpop.f32.mrf.mxu0
  %v6169 = vadd.f32 %v5840, %v6168
  %v6170 = vpop.f32.mrf.mxu0
  %v6171 = vadd.f32 %v5842, %v6170
  %6172 = vmatmul.bf16.gmra.mxu0 %v1987
  %v6173 = vpop.f32.mrf.mxu0
  %v6174 = vadd.f32 %v5845, %v6173
  %v6175 = vpop.f32.mrf.mxu0
  %v6176 = vadd.f32 %v5847, %v6175
  %6177 = vmatmul.bf16.gmra.mxu0 %v1991
  %v6178 = vpop.f32.mrf.mxu0
  %v6179 = vadd.f32 %v5850, %v6178
  %v6180 = vpop.f32.mrf.mxu0
  %v6181 = vadd.f32 %v5852, %v6180
  %6182 = vmatmul.bf16.gmra.mxu0 %v1995
  %v6183 = vpop.f32.mrf.mxu0
  %v6184 = vadd.f32 %v5855, %v6183
  %v6185 = vpop.f32.mrf.mxu0
  %v6186 = vadd.f32 %v5857, %v6185
  %6187 = vmatmul.bf16.gmra.mxu0 %v1999
  %v6188 = vpop.f32.mrf.mxu0
  %v6189 = vadd.f32 %v5860, %v6188
  %v6190 = vpop.f32.mrf.mxu0
  %v6191 = vadd.f32 %v5862, %v6190
  %6192 = vmatmul.bf16.gmra.mxu0 %v2003
  %v6193 = vpop.f32.mrf.mxu0
  %v6194 = vadd.f32 %v5865, %v6193
  %v6195 = vpop.f32.mrf.mxu0
  %v6196 = vadd.f32 %v5867, %v6195
  %6197 = vmatmul.bf16.gmra.mxu0 %v2007
  %v6198 = vpop.f32.mrf.mxu0
  %v6199 = vadd.f32 %v5870, %v6198
  %v6200 = vpop.f32.mrf.mxu0
  %v6201 = vadd.f32 %v5872, %v6200
  %6202 = vmatmul.bf16.gmra.mxu0 %v2011
  %v6203 = vpop.f32.mrf.mxu0
  %v6204 = vadd.f32 %v5875, %v6203
  %v6205 = vpop.f32.mrf.mxu0
  %v6206 = vadd.f32 %v5877, %v6205
  %6207 = vmatmul.bf16.gmra.mxu0 %v2015
  %v6208 = vpop.f32.mrf.mxu0
  %v6209 = vadd.f32 %v5880, %v6208
  %v6210 = vpop.f32.mrf.mxu0
  %v6211 = vadd.f32 %v5882, %v6210
  %6212 = vmatmul.bf16.gmra.mxu0 %v2019
  %v6213 = vpop.f32.mrf.mxu0
  %v6214 = vadd.f32 %v5885, %v6213
  %v6215 = vpop.f32.mrf.mxu0
  %v6216 = vadd.f32 %v5887, %v6215
  %6217 = vmatmul.bf16.gmra.mxu0 %v2023
  %v6218 = vpop.f32.mrf.mxu0
  %v6219 = vadd.f32 %v5890, %v6218
  %v6220 = vpop.f32.mrf.mxu0
  %v6221 = vadd.f32 %v5892, %v6220
  %6222 = vmatmul.bf16.gmra.mxu0 %v2027
  %v6223 = vpop.f32.mrf.mxu0
  %v6224 = vadd.f32 %v5895, %v6223
  %v6225 = vpop.f32.mrf.mxu0
  %v6226 = vadd.f32 %v5897, %v6225
  %6227 = vmatmul.bf16.gmra.mxu0 %v2031
  %v6228 = vpop.f32.mrf.mxu0
  %v6229 = vadd.f32 %v5900, %v6228
  %v6230 = vpop.f32.mrf.mxu0
  %v6231 = vadd.f32 %v5902, %v6230
  %6232 = vmatmul.bf16.gmra.mxu0 %v2035
  %v6233 = vpop.f32.mrf.mxu0
  %v6234 = vadd.f32 %v5905, %v6233
  %v6235 = vpop.f32.mrf.mxu0
  %v6236 = vadd.f32 %v5907, %v6235
  %6237 = vmatmul.bf16.gmra.mxu0 %v2039
  %v6238 = vpop.f32.mrf.mxu0
  %v6239 = vadd.f32 %v5910, %v6238
  %v6240 = vpop.f32.mrf.mxu0
  %v6241 = vadd.f32 %v5912, %v6240
  %6242 = vmatmul.bf16.gmra.mxu0 %v2043
  %v6243 = vpop.f32.mrf.mxu0
  %v6244 = vadd.f32 %v5915, %v6243
  %v6245 = vpop.f32.mrf.mxu0
  %v6246 = vadd.f32 %v5917, %v6245
  %6247 = vmatmul.bf16.gmra.mxu0 %v2047
  %v6248 = vpop.f32.mrf.mxu0
  %v6249 = vadd.f32 %v5920, %v6248
  %v6250 = vpop.f32.mrf.mxu0
  %v6251 = vadd.f32 %v5922, %v6250
  %6252 = vmatmul.bf16.gmra.mxu0 %v2051
  %v6253 = vpop.f32.mrf.mxu0
  %v6254 = vadd.f32 %v5925, %v6253
  %v6255 = vpop.f32.mrf.mxu0
  %v6256 = vadd.f32 %v5927, %v6255
  %6257 = vmatmul.bf16.gmra.mxu0 %v2055
  %v6258 = vpop.f32.mrf.mxu0
  %v6259 = vadd.f32 %v5930, %v6258
  %v6260 = vpop.f32.mrf.mxu0
  %v6261 = vadd.f32 %v5932, %v6260
  %6262 = vmatmul.bf16.gmra.mxu0 %v2059
  %v6263 = vpop.f32.mrf.mxu0
  %v6264 = vadd.f32 %v5935, %v6263
  %v6265 = vpop.f32.mrf.mxu0
  %v6266 = vadd.f32 %v5937, %v6265
  %6267 = vmatmul.bf16.gmra.mxu0 %v2063
  %v6268 = vpop.f32.mrf.mxu0
  %v6269 = vadd.f32 %v5940, %v6268
  %v6270 = vpop.f32.mrf.mxu0
  %v6271 = vadd.f32 %v5942, %v6270
  %6272 = vmatmul.bf16.gmra.mxu0 %v2067
  %v6273 = vpop.f32.mrf.mxu0
  %v6274 = vadd.f32 %v5945, %v6273
  %v6275 = vpop.f32.mrf.mxu0
  %v6276 = vadd.f32 %v5947, %v6275
  %6277 = vmatmul.bf16.gmra.mxu0 %v2071
  %v6278 = vpop.f32.mrf.mxu0
  %v6279 = vadd.f32 %v5950, %v6278
  %v6280 = vpop.f32.mrf.mxu0
  %v6281 = vadd.f32 %v5952, %v6280
  %6282 = vmatmul.bf16.gmra.mxu0 %v2075
  %v6283 = vpop.f32.mrf.mxu0
  %v6284 = vadd.f32 %v5955, %v6283
  %v6285 = vpop.f32.mrf.mxu0
  %v6286 = vadd.f32 %v5957, %v6285
  %6287 = vmatmul.bf16.gmra.mxu0 %v2079
  %v6288 = vpop.f32.mrf.mxu0
  %v6289 = vadd.f32 %v5960, %v6288
  %v6290 = vpop.f32.mrf.mxu0
  %v6291 = vadd.f32 %v5962, %v6290
  %6292 = vmatmul.bf16.gmra.mxu0 %v2083
  %v6293 = vpop.f32.mrf.mxu0
  %v6294 = vadd.f32 %v5965, %v6293
  %v6295 = vpop.f32.mrf.mxu0
  %v6296 = vadd.f32 %v5967, %v6295
  %6297 = vmatmul.bf16.gmra.mxu0 %v2087
  %v6298 = vpop.f32.mrf.mxu0
  %v6299 = vadd.f32 %v5970, %v6298
  %v6300 = vpop.f32.mrf.mxu0
  %v6301 = vadd.f32 %v5972, %v6300
  %6302 = vmatmul.bf16.gmra.mxu0 %v2091
  %v6303 = vpop.f32.mrf.mxu0
  %v6304 = vadd.f32 %v5975, %v6303
  %v6305 = vpop.f32.mrf.mxu0
  %v6306 = vadd.f32 %v5977, %v6305
  %6307 = vmatmul.bf16.gmra.mxu0 %v2095
  %v6308 = vpop.f32.mrf.mxu0
  %v6309 = vadd.f32 %v5980, %v6308
  %v6310 = vpop.f32.mrf.mxu0
  %v6311 = vadd.f32 %v5982, %v6310
  %6312 = vmatmul.bf16.gmra.mxu0 %v2099
  %v6313 = vpop.f32.mrf.mxu0
  %v6314 = vadd.f32 %v5985, %v6313
  %v6315 = vpop.f32.mrf.mxu0
  %v6316 = vadd.f32 %v5987, %v6315
  %6317 = vmatmul.bf16.gmra.mxu0 %v2103
  %v6318 = vpop.f32.mrf.mxu0
  %v6319 = vadd.f32 %v5990, %v6318
  %v6320 = vpop.f32.mrf.mxu0
  %v6321 = vadd.f32 %v5992, %v6320
  %6322 = vmatmul.bf16.gmra.mxu0 %v2107
  %v6323 = vpop.f32.mrf.mxu0
  %v6324 = vadd.f32 %v5995, %v6323
  %v6325 = vpop.f32.mrf.mxu0
  %v6326 = vadd.f32 %v5997, %v6325
  %6327 = vmatmul.bf16.gmra.mxu0 %v2111
  %v6328 = vpop.f32.mrf.mxu0
  %v6329 = vadd.f32 %v6000, %v6328
  %v6330 = vpop.f32.mrf.mxu0
  %v6331 = vadd.f32 %v6002, %v6330
  %6332 = vmatmul.bf16.gmra.mxu0 %v2115
  %v6333 = vpop.f32.mrf.mxu0
  %v6334 = vadd.f32 %v6005, %v6333
  %v6335 = vpop.f32.mrf.mxu0
  %v6336 = vadd.f32 %v6007, %v6335
  %6337 = vmatmul.bf16.gmra.mxu0 %v2119
  %v6338 = vpop.f32.mrf.mxu0
  %v6339 = vadd.f32 %v6010, %v6338
  %v6340 = vpop.f32.mrf.mxu0
  %v6341 = vadd.f32 %v6012, %v6340
  %6342 = vmatmul.bf16.gmra.mxu0 %v2123
  %v6343 = vpop.f32.mrf.mxu0
  %v6344 = vadd.f32 %v6015, %v6343
  %v6345 = vpop.f32.mrf.mxu0
  %v6346 = vadd.f32 %v6017, %v6345
  %6347 = vmatmul.bf16.gmra.mxu0 %v2127
  %v6348 = vpop.f32.mrf.mxu0
  %v6349 = vadd.f32 %v6020, %v6348
  %v6350 = vpop.f32.mrf.mxu0
  %v6351 = vadd.f32 %v6022, %v6350
  %6352 = vmatmul.bf16.gmra.mxu0 %v2131
  %v6353 = vpop.f32.mrf.mxu0
  %v6354 = vadd.f32 %v6025, %v6353
  %v6355 = vpop.f32.mrf.mxu0
  %v6356 = vadd.f32 %v6027, %v6355
  %6357 = vmatmul.bf16.gmra.mxu0 %v2135
  %v6358 = vpop.f32.mrf.mxu0
  %v6359 = vadd.f32 %v6030, %v6358
  %v6360 = vpop.f32.mrf.mxu0
  %v6361 = vadd.f32 %v6032, %v6360
  %6362 = vmatmul.bf16.gmra.mxu0 %v2139
  %v6363 = vpop.f32.mrf.mxu0
  %v6364 = vadd.f32 %v6035, %v6363
  %v6365 = vpop.f32.mrf.mxu0
  %v6366 = vadd.f32 %v6037, %v6365
  %6367 = vmatmul.bf16.gmra.mxu0 %v2143
  %v6368 = vpop.f32.mrf.mxu0
  %v6369 = vadd.f32 %v6040, %v6368
  %v6370 = vpop.f32.mrf.mxu0
  %v6371 = vadd.f32 %v6042, %v6370
  %6372 = vmatmul.bf16.gmra.mxu0 %v2147
  %v6373 = vpop.f32.mrf.mxu0
  %v6374 = vadd.f32 %v6045, %v6373
  %v6375 = vpop.f32.mrf.mxu0
  %v6376 = vadd.f32 %v6047, %v6375
  %6377 = vmatmul.bf16.gmra.mxu0 %v2151
  %v6378 = vpop.f32.mrf.mxu0
  %v6379 = vadd.f32 %v6050, %v6378
  %v6380 = vpop.f32.mrf.mxu0
  %v6381 = vadd.f32 %v6052, %v6380
  %6382 = vmatmul.bf16.gmra.mxu0 %v2155
  %v6383 = vpop.f32.mrf.mxu0
  %v6384 = vadd.f32 %v6055, %v6383
  %v6385 = vpop.f32.mrf.mxu0
  %v6386 = vadd.f32 %v6057, %v6385
  %6387 = vmatmul.bf16.gmra.mxu0 %v2159
  %v6388 = vpop.f32.mrf.mxu0
  %v6389 = vadd.f32 %v6060, %v6388
  %v6390 = vpop.f32.mrf.mxu0
  %v6391 = vadd.f32 %v6062, %v6390
  %6392 = vmatmul.bf16.gmra.mxu0 %v2163
  %v6393 = vpop.f32.mrf.mxu0
  %v6394 = vadd.f32 %v6065, %v6393
  %v6395 = vpop.f32.mrf.mxu0
  %v6396 = vadd.f32 %v6067, %v6395
  %6397 = vmatmul.bf16.gmra.mxu0 %v2167
  %v6398 = vpop.f32.mrf.mxu0
  %v6399 = vadd.f32 %v6070, %v6398
  %v6400 = vpop.f32.mrf.mxu0
  %v6401 = vadd.f32 %v6072, %v6400
  %6402 = vmatmul.bf16.gmra.mxu0 %v2171
  %v6403 = vpop.f32.mrf.mxu0
  %v6404 = vadd.f32 %v6075, %v6403
  %v6405 = vpop.f32.mrf.mxu0
  %v6406 = vadd.f32 %v6077, %v6405
  %6407 = vmatmul.bf16.gmra.mxu0 %v2175
  %v6408 = vpop.f32.mrf.mxu0
  %v6409 = vadd.f32 %v6080, %v6408
  %v6410 = vpop.f32.mrf.mxu0
  %v6411 = vadd.f32 %v6082, %v6410
  %6412 = vdwg.mxu0
  %6413 = vmatpush.bf16.msra.mxu0 %v2800
  %6414 = vmatpush.bf16.msra.mxu0 %v2796
  %6415 = vmatpush.bf16.msra.mxu0 %v2792
  %6416 = vmatpush.bf16.msra.mxu0 %v2788
  %6417 = vmatpush.bf16.msra.mxu0 %v2784
  %6418 = vmatpush.bf16.msra.mxu0 %v2780
  %6419 = vmatpush.bf16.msra.mxu0 %v2776
  %6420 = vmatpush.bf16.msra.mxu0 %v2772
  %6421 = vmatmul.bf16.gmra.mxu0 %v1924
  %v6422 = vpop.f32.mrf.mxu0
  %v6423 = vadd.f32 %v6094, %v6422
  %v6424 = vpop.f32.mrf.mxu0
  %v6425 = vadd.f32 %v6096, %v6424
  %6426 = vmatmul.bf16.gmra.mxu0 %v1928
  %v6427 = vpop.f32.mrf.mxu0
  %v6428 = vadd.f32 %v6099, %v6427
  %v6429 = vpop.f32.mrf.mxu0
  %v6430 = vadd.f32 %v6101, %v6429
  %6431 = vmatmul.bf16.gmra.mxu0 %v1932
  %v6432 = vpop.f32.mrf.mxu0
  %v6433 = vadd.f32 %v6104, %v6432
  %v6434 = vpop.f32.mrf.mxu0
  %v6435 = vadd.f32 %v6106, %v6434
  %6436 = vmatmul.bf16.gmra.mxu0 %v1936
  %v6437 = vpop.f32.mrf.mxu0
  %v6438 = vadd.f32 %v6109, %v6437
  %v6439 = vpop.f32.mrf.mxu0
  %v6440 = vadd.f32 %v6111, %v6439
  %6441 = vmatmul.bf16.gmra.mxu0 %v1940
  %v6442 = vpop.f32.mrf.mxu0
  %v6443 = vadd.f32 %v6114, %v6442
  %v6444 = vpop.f32.mrf.mxu0
  %v6445 = vadd.f32 %v6116, %v6444
  %6446 = vmatmul.bf16.gmra.mxu0 %v1944
  %v6447 = vpop.f32.mrf.mxu0
  %v6448 = vadd.f32 %v6119, %v6447
  %v6449 = vpop.f32.mrf.mxu0
  %v6450 = vadd.f32 %v6121, %v6449
  %6451 = vmatmul.bf16.gmra.mxu0 %v1948
  %v6452 = vpop.f32.mrf.mxu0
  %v6453 = vadd.f32 %v6124, %v6452
  %v6454 = vpop.f32.mrf.mxu0
  %v6455 = vadd.f32 %v6126, %v6454
  %6456 = vmatmul.bf16.gmra.mxu0 %v1952
  %v6457 = vpop.f32.mrf.mxu0
  %v6458 = vadd.f32 %v6129, %v6457
  %v6459 = vpop.f32.mrf.mxu0
  %v6460 = vadd.f32 %v6131, %v6459
  %6461 = vmatmul.bf16.gmra.mxu0 %v1956
  %v6462 = vpop.f32.mrf.mxu0
  %v6463 = vadd.f32 %v6134, %v6462
  %v6464 = vpop.f32.mrf.mxu0
  %v6465 = vadd.f32 %v6136, %v6464
  %6466 = vmatmul.bf16.gmra.mxu0 %v1960
  %v6467 = vpop.f32.mrf.mxu0
  %v6468 = vadd.f32 %v6139, %v6467
  %v6469 = vpop.f32.mrf.mxu0
  %v6470 = vadd.f32 %v6141, %v6469
  %6471 = vmatmul.bf16.gmra.mxu0 %v1964
  %v6472 = vpop.f32.mrf.mxu0
  %v6473 = vadd.f32 %v6144, %v6472
  %v6474 = vpop.f32.mrf.mxu0
  %v6475 = vadd.f32 %v6146, %v6474
  %6476 = vmatmul.bf16.gmra.mxu0 %v1968
  %v6477 = vpop.f32.mrf.mxu0
  %v6478 = vadd.f32 %v6149, %v6477
  %v6479 = vpop.f32.mrf.mxu0
  %v6480 = vadd.f32 %v6151, %v6479
  %6481 = vmatmul.bf16.gmra.mxu0 %v1972
  %v6482 = vpop.f32.mrf.mxu0
  %v6483 = vadd.f32 %v6154, %v6482
  %v6484 = vpop.f32.mrf.mxu0
  %v6485 = vadd.f32 %v6156, %v6484
  %6486 = vmatmul.bf16.gmra.mxu0 %v1976
  %v6487 = vpop.f32.mrf.mxu0
  %v6488 = vadd.f32 %v6159, %v6487
  %v6489 = vpop.f32.mrf.mxu0
  %v6490 = vadd.f32 %v6161, %v6489
  %6491 = vmatmul.bf16.gmra.mxu0 %v1980
  %v6492 = vpop.f32.mrf.mxu0
  %v6493 = vadd.f32 %v6164, %v6492
  %v6494 = vpop.f32.mrf.mxu0
  %v6495 = vadd.f32 %v6166, %v6494
  %6496 = vmatmul.bf16.gmra.mxu0 %v1984
  %v6497 = vpop.f32.mrf.mxu0
  %v6498 = vadd.f32 %v6169, %v6497
  %v6499 = vpop.f32.mrf.mxu0
  %v6500 = vadd.f32 %v6171, %v6499
  %6501 = vmatmul.bf16.gmra.mxu0 %v1988
  %v6502 = vpop.f32.mrf.mxu0
  %v6503 = vadd.f32 %v6174, %v6502
  %v6504 = vpop.f32.mrf.mxu0
  %v6505 = vadd.f32 %v6176, %v6504
  %6506 = vmatmul.bf16.gmra.mxu0 %v1992
  %v6507 = vpop.f32.mrf.mxu0
  %v6508 = vadd.f32 %v6179, %v6507
  %v6509 = vpop.f32.mrf.mxu0
  %v6510 = vadd.f32 %v6181, %v6509
  %6511 = vmatmul.bf16.gmra.mxu0 %v1996
  %v6512 = vpop.f32.mrf.mxu0
  %v6513 = vadd.f32 %v6184, %v6512
  %v6514 = vpop.f32.mrf.mxu0
  %v6515 = vadd.f32 %v6186, %v6514
  %6516 = vmatmul.bf16.gmra.mxu0 %v2000
  %v6517 = vpop.f32.mrf.mxu0
  %v6518 = vadd.f32 %v6189, %v6517
  %v6519 = vpop.f32.mrf.mxu0
  %v6520 = vadd.f32 %v6191, %v6519
  %6521 = vmatmul.bf16.gmra.mxu0 %v2004
  %v6522 = vpop.f32.mrf.mxu0
  %v6523 = vadd.f32 %v6194, %v6522
  %v6524 = vpop.f32.mrf.mxu0
  %v6525 = vadd.f32 %v6196, %v6524
  %6526 = vmatmul.bf16.gmra.mxu0 %v2008
  %v6527 = vpop.f32.mrf.mxu0
  %v6528 = vadd.f32 %v6199, %v6527
  %v6529 = vpop.f32.mrf.mxu0
  %v6530 = vadd.f32 %v6201, %v6529
  %6531 = vmatmul.bf16.gmra.mxu0 %v2012
  %v6532 = vpop.f32.mrf.mxu0
  %v6533 = vadd.f32 %v6204, %v6532
  %v6534 = vpop.f32.mrf.mxu0
  %v6535 = vadd.f32 %v6206, %v6534
  %6536 = vmatmul.bf16.gmra.mxu0 %v2016
  %v6537 = vpop.f32.mrf.mxu0
  %v6538 = vadd.f32 %v6209, %v6537
  %v6539 = vpop.f32.mrf.mxu0
  %v6540 = vadd.f32 %v6211, %v6539
  %6541 = vmatmul.bf16.gmra.mxu0 %v2020
  %v6542 = vpop.f32.mrf.mxu0
  %v6543 = vadd.f32 %v6214, %v6542
  %v6544 = vpop.f32.mrf.mxu0
  %v6545 = vadd.f32 %v6216, %v6544
  %6546 = vmatmul.bf16.gmra.mxu0 %v2024
  %v6547 = vpop.f32.mrf.mxu0
  %v6548 = vadd.f32 %v6219, %v6547
  %v6549 = vpop.f32.mrf.mxu0
  %v6550 = vadd.f32 %v6221, %v6549
  %6551 = vmatmul.bf16.gmra.mxu0 %v2028
  %v6552 = vpop.f32.mrf.mxu0
  %v6553 = vadd.f32 %v6224, %v6552
  %v6554 = vpop.f32.mrf.mxu0
  %v6555 = vadd.f32 %v6226, %v6554
  %6556 = vmatmul.bf16.gmra.mxu0 %v2032
  %v6557 = vpop.f32.mrf.mxu0
  %v6558 = vadd.f32 %v6229, %v6557
  %v6559 = vpop.f32.mrf.mxu0
  %v6560 = vadd.f32 %v6231, %v6559
  %6561 = vmatmul.bf16.gmra.mxu0 %v2036
  %v6562 = vpop.f32.mrf.mxu0
  %v6563 = vadd.f32 %v6234, %v6562
  %v6564 = vpop.f32.mrf.mxu0
  %v6565 = vadd.f32 %v6236, %v6564
  %6566 = vmatmul.bf16.gmra.mxu0 %v2040
  %v6567 = vpop.f32.mrf.mxu0
  %v6568 = vadd.f32 %v6239, %v6567
  %v6569 = vpop.f32.mrf.mxu0
  %v6570 = vadd.f32 %v6241, %v6569
  %6571 = vmatmul.bf16.gmra.mxu0 %v2044
  %v6572 = vpop.f32.mrf.mxu0
  %v6573 = vadd.f32 %v6244, %v6572
  %v6574 = vpop.f32.mrf.mxu0
  %v6575 = vadd.f32 %v6246, %v6574
  %6576 = vmatmul.bf16.gmra.mxu0 %v2048
  %v6577 = vpop.f32.mrf.mxu0
  %v6578 = vadd.f32 %v6249, %v6577
  %v6579 = vpop.f32.mrf.mxu0
  %v6580 = vadd.f32 %v6251, %v6579
  %6581 = vmatmul.bf16.gmra.mxu0 %v2052
  %v6582 = vpop.f32.mrf.mxu0
  %v6583 = vadd.f32 %v6254, %v6582
  %v6584 = vpop.f32.mrf.mxu0
  %v6585 = vadd.f32 %v6256, %v6584
  %6586 = vmatmul.bf16.gmra.mxu0 %v2056
  %v6587 = vpop.f32.mrf.mxu0
  %v6588 = vadd.f32 %v6259, %v6587
  %v6589 = vpop.f32.mrf.mxu0
  %v6590 = vadd.f32 %v6261, %v6589
  %6591 = vmatmul.bf16.gmra.mxu0 %v2060
  %v6592 = vpop.f32.mrf.mxu0
  %v6593 = vadd.f32 %v6264, %v6592
  %v6594 = vpop.f32.mrf.mxu0
  %v6595 = vadd.f32 %v6266, %v6594
  %6596 = vmatmul.bf16.gmra.mxu0 %v2064
  %v6597 = vpop.f32.mrf.mxu0
  %v6598 = vadd.f32 %v6269, %v6597
  %v6599 = vpop.f32.mrf.mxu0
  %v6600 = vadd.f32 %v6271, %v6599
  %6601 = vmatmul.bf16.gmra.mxu0 %v2068
  %v6602 = vpop.f32.mrf.mxu0
  %v6603 = vadd.f32 %v6274, %v6602
  %v6604 = vpop.f32.mrf.mxu0
  %v6605 = vadd.f32 %v6276, %v6604
  %6606 = vmatmul.bf16.gmra.mxu0 %v2072
  %v6607 = vpop.f32.mrf.mxu0
  %v6608 = vadd.f32 %v6279, %v6607
  %v6609 = vpop.f32.mrf.mxu0
  %v6610 = vadd.f32 %v6281, %v6609
  %6611 = vmatmul.bf16.gmra.mxu0 %v2076
  %v6612 = vpop.f32.mrf.mxu0
  %v6613 = vadd.f32 %v6284, %v6612
  %v6614 = vpop.f32.mrf.mxu0
  %v6615 = vadd.f32 %v6286, %v6614
  %6616 = vmatmul.bf16.gmra.mxu0 %v2080
  %v6617 = vpop.f32.mrf.mxu0
  %v6618 = vadd.f32 %v6289, %v6617
  %v6619 = vpop.f32.mrf.mxu0
  %v6620 = vadd.f32 %v6291, %v6619
  %6621 = vmatmul.bf16.gmra.mxu0 %v2084
  %v6622 = vpop.f32.mrf.mxu0
  %v6623 = vadd.f32 %v6294, %v6622
  %v6624 = vpop.f32.mrf.mxu0
  %v6625 = vadd.f32 %v6296, %v6624
  %6626 = vmatmul.bf16.gmra.mxu0 %v2088
  %v6627 = vpop.f32.mrf.mxu0
  %v6628 = vadd.f32 %v6299, %v6627
  %v6629 = vpop.f32.mrf.mxu0
  %v6630 = vadd.f32 %v6301, %v6629
  %6631 = vmatmul.bf16.gmra.mxu0 %v2092
  %v6632 = vpop.f32.mrf.mxu0
  %v6633 = vadd.f32 %v6304, %v6632
  %v6634 = vpop.f32.mrf.mxu0
  %v6635 = vadd.f32 %v6306, %v6634
  %6636 = vmatmul.bf16.gmra.mxu0 %v2096
  %v6637 = vpop.f32.mrf.mxu0
  %v6638 = vadd.f32 %v6309, %v6637
  %v6639 = vpop.f32.mrf.mxu0
  %v6640 = vadd.f32 %v6311, %v6639
  %6641 = vmatmul.bf16.gmra.mxu0 %v2100
  %v6642 = vpop.f32.mrf.mxu0
  %v6643 = vadd.f32 %v6314, %v6642
  %v6644 = vpop.f32.mrf.mxu0
  %v6645 = vadd.f32 %v6316, %v6644
  %6646 = vmatmul.bf16.gmra.mxu0 %v2104
  %v6647 = vpop.f32.mrf.mxu0
  %v6648 = vadd.f32 %v6319, %v6647
  %v6649 = vpop.f32.mrf.mxu0
  %v6650 = vadd.f32 %v6321, %v6649
  %6651 = vmatmul.bf16.gmra.mxu0 %v2108
  %v6652 = vpop.f32.mrf.mxu0
  %v6653 = vadd.f32 %v6324, %v6652
  %v6654 = vpop.f32.mrf.mxu0
  %v6655 = vadd.f32 %v6326, %v6654
  %6656 = vmatmul.bf16.gmra.mxu0 %v2112
  %v6657 = vpop.f32.mrf.mxu0
  %v6658 = vadd.f32 %v6329, %v6657
  %v6659 = vpop.f32.mrf.mxu0
  %v6660 = vadd.f32 %v6331, %v6659
  %6661 = vmatmul.bf16.gmra.mxu0 %v2116
  %v6662 = vpop.f32.mrf.mxu0
  %v6663 = vadd.f32 %v6334, %v6662
  %v6664 = vpop.f32.mrf.mxu0
  %v6665 = vadd.f32 %v6336, %v6664
  %6666 = vmatmul.bf16.gmra.mxu0 %v2120
  %v6667 = vpop.f32.mrf.mxu0
  %v6668 = vadd.f32 %v6339, %v6667
  %v6669 = vpop.f32.mrf.mxu0
  %v6670 = vadd.f32 %v6341, %v6669
  %6671 = vmatmul.bf16.gmra.mxu0 %v2124
  %v6672 = vpop.f32.mrf.mxu0
  %v6673 = vadd.f32 %v6344, %v6672
  %v6674 = vpop.f32.mrf.mxu0
  %v6675 = vadd.f32 %v6346, %v6674
  %6676 = vmatmul.bf16.gmra.mxu0 %v2128
  %v6677 = vpop.f32.mrf.mxu0
  %v6678 = vadd.f32 %v6349, %v6677
  %v6679 = vpop.f32.mrf.mxu0
  %v6680 = vadd.f32 %v6351, %v6679
  %6681 = vmatmul.bf16.gmra.mxu0 %v2132
  %v6682 = vpop.f32.mrf.mxu0
  %v6683 = vadd.f32 %v6354, %v6682
  %v6684 = vpop.f32.mrf.mxu0
  %v6685 = vadd.f32 %v6356, %v6684
  %6686 = vmatmul.bf16.gmra.mxu0 %v2136
  %v6687 = vpop.f32.mrf.mxu0
  %v6688 = vadd.f32 %v6359, %v6687
  %v6689 = vpop.f32.mrf.mxu0
  %v6690 = vadd.f32 %v6361, %v6689
  %6691 = vmatmul.bf16.gmra.mxu0 %v2140
  %v6692 = vpop.f32.mrf.mxu0
  %v6693 = vadd.f32 %v6364, %v6692
  %v6694 = vpop.f32.mrf.mxu0
  %v6695 = vadd.f32 %v6366, %v6694
  %6696 = vmatmul.bf16.gmra.mxu0 %v2144
  %v6697 = vpop.f32.mrf.mxu0
  %v6698 = vadd.f32 %v6369, %v6697
  %v6699 = vpop.f32.mrf.mxu0
  %v6700 = vadd.f32 %v6371, %v6699
  %6701 = vmatmul.bf16.gmra.mxu0 %v2148
  %v6702 = vpop.f32.mrf.mxu0
  %v6703 = vadd.f32 %v6374, %v6702
  %v6704 = vpop.f32.mrf.mxu0
  %v6705 = vadd.f32 %v6376, %v6704
  %6706 = vmatmul.bf16.gmra.mxu0 %v2152
  %v6707 = vpop.f32.mrf.mxu0
  %v6708 = vadd.f32 %v6379, %v6707
  %v6709 = vpop.f32.mrf.mxu0
  %v6710 = vadd.f32 %v6381, %v6709
  %6711 = vmatmul.bf16.gmra.mxu0 %v2156
  %v6712 = vpop.f32.mrf.mxu0
  %v6713 = vadd.f32 %v6384, %v6712
  %v6714 = vpop.f32.mrf.mxu0
  %v6715 = vadd.f32 %v6386, %v6714
  %6716 = vmatmul.bf16.gmra.mxu0 %v2160
  %v6717 = vpop.f32.mrf.mxu0
  %v6718 = vadd.f32 %v6389, %v6717
  %v6719 = vpop.f32.mrf.mxu0
  %v6720 = vadd.f32 %v6391, %v6719
  %6721 = vmatmul.bf16.gmra.mxu0 %v2164
  %v6722 = vpop.f32.mrf.mxu0
  %v6723 = vadd.f32 %v6394, %v6722
  %v6724 = vpop.f32.mrf.mxu0
  %v6725 = vadd.f32 %v6396, %v6724
  %6726 = vmatmul.bf16.gmra.mxu0 %v2168
  %v6727 = vpop.f32.mrf.mxu0
  %v6728 = vadd.f32 %v6399, %v6727
  %v6729 = vpop.f32.mrf.mxu0
  %v6730 = vadd.f32 %v6401, %v6729
  %6731 = vmatmul.bf16.gmra.mxu0 %v2172
  %v6732 = vpop.f32.mrf.mxu0
  %v6733 = vadd.f32 %v6404, %v6732
  %v6734 = vpop.f32.mrf.mxu0
  %v6735 = vadd.f32 %v6406, %v6734
  %6736 = vmatmul.bf16.gmra.mxu0 %v2176
  %v6737 = vpop.f32.mrf.mxu0
  %v6738 = vadd.f32 %v6409, %v6737
  %v6739 = vpop.f32.mrf.mxu0
  %v6740 = vadd.f32 %v6411, %v6739
  %6741 = vdwg.mxu0
  %6742 = vmatpush.bf16.msra.mxu0 0
  %6743 = vmatpush.bf16.msra.mxu0 0
  %6744 = vmatpush.bf16.msra.mxu0 0
  %6745 = vmatpush.bf16.msra.mxu0 0
  %6746 = vmatpush.bf16.msra.mxu0 %v2816
  %6747 = vmatpush.bf16.msra.mxu0 %v2812
  %6748 = vmatpush.bf16.msra.mxu0 %v2808
  %6749 = vmatpush.bf16.msra.mxu0 %v2804
  %6750 = vmatmul.bf16.gmra.mxu0 %v2932
  %v6751 = vpop.f32.mrf.mxu0
  %v6752 = vadd.f32 %v6423, %v6751
  %v6753 = vpop.f32.mrf.mxu0
  %v6754 = vadd.f32 %v6425, %v6753
  %6755 = vmatmul.bf16.gmra.mxu0 %v2935
  %v6756 = vpop.f32.mrf.mxu0
  %v6757 = vadd.f32 %v6428, %v6756
  %v6758 = vpop.f32.mrf.mxu0
  %v6759 = vadd.f32 %v6430, %v6758
  %6760 = vmatmul.bf16.gmra.mxu0 %v2938
  %v6761 = vpop.f32.mrf.mxu0
  %v6762 = vadd.f32 %v6433, %v6761
  %v6763 = vpop.f32.mrf.mxu0
  %v6764 = vadd.f32 %v6435, %v6763
  %6765 = vmatmul.bf16.gmra.mxu0 %v2941
  %v6766 = vpop.f32.mrf.mxu0
  %v6767 = vadd.f32 %v6438, %v6766
  %v6768 = vpop.f32.mrf.mxu0
  %v6769 = vadd.f32 %v6440, %v6768
  %6770 = vmatmul.bf16.gmra.mxu0 %v2944
  %v6771 = vpop.f32.mrf.mxu0
  %v6772 = vadd.f32 %v6443, %v6771
  %v6773 = vpop.f32.mrf.mxu0
  %v6774 = vadd.f32 %v6445, %v6773
  %6775 = vmatmul.bf16.gmra.mxu0 %v2947
  %v6776 = vpop.f32.mrf.mxu0
  %v6777 = vadd.f32 %v6448, %v6776
  %v6778 = vpop.f32.mrf.mxu0
  %v6779 = vadd.f32 %v6450, %v6778
  %6780 = vmatmul.bf16.gmra.mxu0 %v2950
  %v6781 = vpop.f32.mrf.mxu0
  %v6782 = vadd.f32 %v6453, %v6781
  %v6783 = vpop.f32.mrf.mxu0
  %v6784 = vadd.f32 %v6455, %v6783
  %6785 = vmatmul.bf16.gmra.mxu0 %v2953
  %v6786 = vpop.f32.mrf.mxu0
  %v6787 = vadd.f32 %v6458, %v6786
  %v6788 = vpop.f32.mrf.mxu0
  %v6789 = vadd.f32 %v6460, %v6788
  %6790 = vmatmul.bf16.gmra.mxu0 %v2956
  %v6791 = vpop.f32.mrf.mxu0
  %v6792 = vadd.f32 %v6463, %v6791
  %v6793 = vpop.f32.mrf.mxu0
  %v6794 = vadd.f32 %v6465, %v6793
  %6795 = vmatmul.bf16.gmra.mxu0 %v2959
  %v6796 = vpop.f32.mrf.mxu0
  %v6797 = vadd.f32 %v6468, %v6796
  %v6798 = vpop.f32.mrf.mxu0
  %v6799 = vadd.f32 %v6470, %v6798
  %6800 = vmatmul.bf16.gmra.mxu0 %v2962
  %v6801 = vpop.f32.mrf.mxu0
  %v6802 = vadd.f32 %v6473, %v6801
  %v6803 = vpop.f32.mrf.mxu0
  %v6804 = vadd.f32 %v6475, %v6803
  %6805 = vmatmul.bf16.gmra.mxu0 %v2965
  %v6806 = vpop.f32.mrf.mxu0
  %v6807 = vadd.f32 %v6478, %v6806
  %v6808 = vpop.f32.mrf.mxu0
  %v6809 = vadd.f32 %v6480, %v6808
  %6810 = vmatmul.bf16.gmra.mxu0 %v2968
  %v6811 = vpop.f32.mrf.mxu0
  %v6812 = vadd.f32 %v6483, %v6811
  %v6813 = vpop.f32.mrf.mxu0
  %v6814 = vadd.f32 %v6485, %v6813
  %6815 = vmatmul.bf16.gmra.mxu0 %v2971
  %v6816 = vpop.f32.mrf.mxu0
  %v6817 = vadd.f32 %v6488, %v6816
  %v6818 = vpop.f32.mrf.mxu0
  %v6819 = vadd.f32 %v6490, %v6818
  %6820 = vmatmul.bf16.gmra.mxu0 %v2974
  %v6821 = vpop.f32.mrf.mxu0
  %v6822 = vadd.f32 %v6493, %v6821
  %v6823 = vpop.f32.mrf.mxu0
  %v6824 = vadd.f32 %v6495, %v6823
  %6825 = vmatmul.bf16.gmra.mxu0 %v2977
  %v6826 = vpop.f32.mrf.mxu0
  %v6827 = vadd.f32 %v6498, %v6826
  %v6828 = vpop.f32.mrf.mxu0
  %v6829 = vadd.f32 %v6500, %v6828
  %6830 = vmatmul.bf16.gmra.mxu0 %v2980
  %v6831 = vpop.f32.mrf.mxu0
  %v6832 = vadd.f32 %v6503, %v6831
  %v6833 = vpop.f32.mrf.mxu0
  %v6834 = vadd.f32 %v6505, %v6833
  %6835 = vmatmul.bf16.gmra.mxu0 %v2983
  %v6836 = vpop.f32.mrf.mxu0
  %v6837 = vadd.f32 %v6508, %v6836
  %v6838 = vpop.f32.mrf.mxu0
  %v6839 = vadd.f32 %v6510, %v6838
  %6840 = vmatmul.bf16.gmra.mxu0 %v2986
  %v6841 = vpop.f32.mrf.mxu0
  %v6842 = vadd.f32 %v6513, %v6841
  %v6843 = vpop.f32.mrf.mxu0
  %v6844 = vadd.f32 %v6515, %v6843
  %6845 = vmatmul.bf16.gmra.mxu0 %v2989
  %v6846 = vpop.f32.mrf.mxu0
  %v6847 = vadd.f32 %v6518, %v6846
  %v6848 = vpop.f32.mrf.mxu0
  %v6849 = vadd.f32 %v6520, %v6848
  %6850 = vmatmul.bf16.gmra.mxu0 %v2992
  %v6851 = vpop.f32.mrf.mxu0
  %v6852 = vadd.f32 %v6523, %v6851
  %v6853 = vpop.f32.mrf.mxu0
  %v6854 = vadd.f32 %v6525, %v6853
  %6855 = vmatmul.bf16.gmra.mxu0 %v2995
  %v6856 = vpop.f32.mrf.mxu0
  %v6857 = vadd.f32 %v6528, %v6856
  %v6858 = vpop.f32.mrf.mxu0
  %v6859 = vadd.f32 %v6530, %v6858
  %6860 = vmatmul.bf16.gmra.mxu0 %v2998
  %v6861 = vpop.f32.mrf.mxu0
  %v6862 = vadd.f32 %v6533, %v6861
  %v6863 = vpop.f32.mrf.mxu0
  %v6864 = vadd.f32 %v6535, %v6863
  %6865 = vmatmul.bf16.gmra.mxu0 %v3001
  %v6866 = vpop.f32.mrf.mxu0
  %v6867 = vadd.f32 %v6538, %v6866
  %v6868 = vpop.f32.mrf.mxu0
  %v6869 = vadd.f32 %v6540, %v6868
  %6870 = vmatmul.bf16.gmra.mxu0 %v3004
  %v6871 = vpop.f32.mrf.mxu0
  %v6872 = vadd.f32 %v6543, %v6871
  %v6873 = vpop.f32.mrf.mxu0
  %v6874 = vadd.f32 %v6545, %v6873
  %6875 = vmatmul.bf16.gmra.mxu0 %v3007
  %v6876 = vpop.f32.mrf.mxu0
  %v6877 = vadd.f32 %v6548, %v6876
  %v6878 = vpop.f32.mrf.mxu0
  %v6879 = vadd.f32 %v6550, %v6878
  %6880 = vmatmul.bf16.gmra.mxu0 %v3010
  %v6881 = vpop.f32.mrf.mxu0
  %v6882 = vadd.f32 %v6553, %v6881
  %v6883 = vpop.f32.mrf.mxu0
  %v6884 = vadd.f32 %v6555, %v6883
  %6885 = vmatmul.bf16.gmra.mxu0 %v3013
  %v6886 = vpop.f32.mrf.mxu0
  %v6887 = vadd.f32 %v6558, %v6886
  %v6888 = vpop.f32.mrf.mxu0
  %v6889 = vadd.f32 %v6560, %v6888
  %6890 = vmatmul.bf16.gmra.mxu0 %v3016
  %v6891 = vpop.f32.mrf.mxu0
  %v6892 = vadd.f32 %v6563, %v6891
  %v6893 = vpop.f32.mrf.mxu0
  %v6894 = vadd.f32 %v6565, %v6893
  %6895 = vmatmul.bf16.gmra.mxu0 %v3019
  %v6896 = vpop.f32.mrf.mxu0
  %v6897 = vadd.f32 %v6568, %v6896
  %v6898 = vpop.f32.mrf.mxu0
  %v6899 = vadd.f32 %v6570, %v6898
  %6900 = vmatmul.bf16.gmra.mxu0 %v3022
  %v6901 = vpop.f32.mrf.mxu0
  %v6902 = vadd.f32 %v6573, %v6901
  %v6903 = vpop.f32.mrf.mxu0
  %v6904 = vadd.f32 %v6575, %v6903
  %6905 = vmatmul.bf16.gmra.mxu0 %v3025
  %v6906 = vpop.f32.mrf.mxu0
  %v6907 = vadd.f32 %v6578, %v6906
  %v6908 = vpop.f32.mrf.mxu0
  %v6909 = vadd.f32 %v6580, %v6908
  %6910 = vmatmul.bf16.gmra.mxu0 %v3028
  %v6911 = vpop.f32.mrf.mxu0
  %v6912 = vadd.f32 %v6583, %v6911
  %v6913 = vpop.f32.mrf.mxu0
  %v6914 = vadd.f32 %v6585, %v6913
  %6915 = vmatmul.bf16.gmra.mxu0 %v3031
  %v6916 = vpop.f32.mrf.mxu0
  %v6917 = vadd.f32 %v6588, %v6916
  %v6918 = vpop.f32.mrf.mxu0
  %v6919 = vadd.f32 %v6590, %v6918
  %6920 = vmatmul.bf16.gmra.mxu0 %v3034
  %v6921 = vpop.f32.mrf.mxu0
  %v6922 = vadd.f32 %v6593, %v6921
  %v6923 = vpop.f32.mrf.mxu0
  %v6924 = vadd.f32 %v6595, %v6923
  %6925 = vmatmul.bf16.gmra.mxu0 %v3037
  %v6926 = vpop.f32.mrf.mxu0
  %v6927 = vadd.f32 %v6598, %v6926
  %v6928 = vpop.f32.mrf.mxu0
  %v6929 = vadd.f32 %v6600, %v6928
  %6930 = vmatmul.bf16.gmra.mxu0 %v3040
  %v6931 = vpop.f32.mrf.mxu0
  %v6932 = vadd.f32 %v6603, %v6931
  %v6933 = vpop.f32.mrf.mxu0
  %v6934 = vadd.f32 %v6605, %v6933
  %6935 = vmatmul.bf16.gmra.mxu0 %v3043
  %v6936 = vpop.f32.mrf.mxu0
  %v6937 = vadd.f32 %v6608, %v6936
  %v6938 = vpop.f32.mrf.mxu0
  %v6939 = vadd.f32 %v6610, %v6938
  %6940 = vmatmul.bf16.gmra.mxu0 %v3046
  %v6941 = vpop.f32.mrf.mxu0
  %v6942 = vadd.f32 %v6613, %v6941
  %v6943 = vpop.f32.mrf.mxu0
  %v6944 = vadd.f32 %v6615, %v6943
  %6945 = vmatmul.bf16.gmra.mxu0 %v3049
  %v6946 = vpop.f32.mrf.mxu0
  %v6947 = vadd.f32 %v6618, %v6946
  %v6948 = vpop.f32.mrf.mxu0
  %v6949 = vadd.f32 %v6620, %v6948
  %6950 = vmatmul.bf16.gmra.mxu0 %v3052
  %v6951 = vpop.f32.mrf.mxu0
  %v6952 = vadd.f32 %v6623, %v6951
  %v6953 = vpop.f32.mrf.mxu0
  %v6954 = vadd.f32 %v6625, %v6953
  %6955 = vmatmul.bf16.gmra.mxu0 %v3055
  %v6956 = vpop.f32.mrf.mxu0
  %v6957 = vadd.f32 %v6628, %v6956
  %v6958 = vpop.f32.mrf.mxu0
  %v6959 = vadd.f32 %v6630, %v6958
  %6960 = vmatmul.bf16.gmra.mxu0 %v3058
  %v6961 = vpop.f32.mrf.mxu0
  %v6962 = vadd.f32 %v6633, %v6961
  %v6963 = vpop.f32.mrf.mxu0
  %v6964 = vadd.f32 %v6635, %v6963
  %6965 = vmatmul.bf16.gmra.mxu0 %v3061
  %v6966 = vpop.f32.mrf.mxu0
  %v6967 = vadd.f32 %v6638, %v6966
  %v6968 = vpop.f32.mrf.mxu0
  %v6969 = vadd.f32 %v6640, %v6968
  %6970 = vmatmul.bf16.gmra.mxu0 %v3064
  %v6971 = vpop.f32.mrf.mxu0
  %v6972 = vadd.f32 %v6643, %v6971
  %v6973 = vpop.f32.mrf.mxu0
  %v6974 = vadd.f32 %v6645, %v6973
  %6975 = vmatmul.bf16.gmra.mxu0 %v3067
  %v6976 = vpop.f32.mrf.mxu0
  %v6977 = vadd.f32 %v6648, %v6976
  %v6978 = vpop.f32.mrf.mxu0
  %v6979 = vadd.f32 %v6650, %v6978
  %6980 = vmatmul.bf16.gmra.mxu0 %v3070
  %v6981 = vpop.f32.mrf.mxu0
  %v6982 = vadd.f32 %v6653, %v6981
  %v6983 = vpop.f32.mrf.mxu0
  %v6984 = vadd.f32 %v6655, %v6983
  %6985 = vmatmul.bf16.gmra.mxu0 %v3073
  %v6986 = vpop.f32.mrf.mxu0
  %v6987 = vadd.f32 %v6658, %v6986
  %v6988 = vpop.f32.mrf.mxu0
  %v6989 = vadd.f32 %v6660, %v6988
  %6990 = vmatmul.bf16.gmra.mxu0 %v3076
  %v6991 = vpop.f32.mrf.mxu0
  %v6992 = vadd.f32 %v6663, %v6991
  %v6993 = vpop.f32.mrf.mxu0
  %v6994 = vadd.f32 %v6665, %v6993
  %6995 = vmatmul.bf16.gmra.mxu0 %v3079
  %v6996 = vpop.f32.mrf.mxu0
  %v6997 = vadd.f32 %v6668, %v6996
  %v6998 = vpop.f32.mrf.mxu0
  %v6999 = vadd.f32 %v6670, %v6998
  %7000 = vmatmul.bf16.gmra.mxu0 %v3082
  %v7001 = vpop.f32.mrf.mxu0
  %v7002 = vadd.f32 %v6673, %v7001
  %v7003 = vpop.f32.mrf.mxu0
  %v7004 = vadd.f32 %v6675, %v7003
  %7005 = vmatmul.bf16.gmra.mxu0 %v3085
  %v7006 = vpop.f32.mrf.mxu0
  %v7007 = vadd.f32 %v6678, %v7006
  %v7008 = vpop.f32.mrf.mxu0
  %v7009 = vadd.f32 %v6680, %v7008
  %7010 = vmatmul.bf16.gmra.mxu0 %v3088
  %v7011 = vpop.f32.mrf.mxu0
  %v7012 = vadd.f32 %v6683, %v7011
  %v7013 = vpop.f32.mrf.mxu0
  %v7014 = vadd.f32 %v6685, %v7013
  %7015 = vmatmul.bf16.gmra.mxu0 %v3091
  %v7016 = vpop.f32.mrf.mxu0
  %v7017 = vadd.f32 %v6688, %v7016
  %v7018 = vpop.f32.mrf.mxu0
  %v7019 = vadd.f32 %v6690, %v7018
  %7020 = vmatmul.bf16.gmra.mxu0 %v3094
  %v7021 = vpop.f32.mrf.mxu0
  %v7022 = vadd.f32 %v6693, %v7021
  %v7023 = vpop.f32.mrf.mxu0
  %v7024 = vadd.f32 %v6695, %v7023
  %7025 = vmatmul.bf16.gmra.mxu0 %v3097
  %v7026 = vpop.f32.mrf.mxu0
  %v7027 = vadd.f32 %v6698, %v7026
  %v7028 = vpop.f32.mrf.mxu0
  %v7029 = vadd.f32 %v6700, %v7028
  %7030 = vmatmul.bf16.gmra.mxu0 %v3100
  %v7031 = vpop.f32.mrf.mxu0
  %v7032 = vadd.f32 %v6703, %v7031
  %v7033 = vpop.f32.mrf.mxu0
  %v7034 = vadd.f32 %v6705, %v7033
  %7035 = vmatmul.bf16.gmra.mxu0 %v3103
  %v7036 = vpop.f32.mrf.mxu0
  %v7037 = vadd.f32 %v6708, %v7036
  %v7038 = vpop.f32.mrf.mxu0
  %v7039 = vadd.f32 %v6710, %v7038
  %7040 = vmatmul.bf16.gmra.mxu0 %v3106
  %v7041 = vpop.f32.mrf.mxu0
  %v7042 = vadd.f32 %v6713, %v7041
  %v7043 = vpop.f32.mrf.mxu0
  %v7044 = vadd.f32 %v6715, %v7043
  %7045 = vmatmul.bf16.gmra.mxu0 %v3109
  %v7046 = vpop.f32.mrf.mxu0
  %v7047 = vadd.f32 %v6718, %v7046
  %v7048 = vpop.f32.mrf.mxu0
  %v7049 = vadd.f32 %v6720, %v7048
  %7050 = vmatmul.bf16.gmra.mxu0 %v3112
  %v7051 = vpop.f32.mrf.mxu0
  %v7052 = vadd.f32 %v6723, %v7051
  %v7053 = vpop.f32.mrf.mxu0
  %v7054 = vadd.f32 %v6725, %v7053
  %7055 = vmatmul.bf16.gmra.mxu0 %v3115
  %v7056 = vpop.f32.mrf.mxu0
  %v7057 = vadd.f32 %v6728, %v7056
  %v7058 = vpop.f32.mrf.mxu0
  %v7059 = vadd.f32 %v6730, %v7058
  %7060 = vmatmul.bf16.gmra.mxu0 %v3118
  %v7061 = vpop.f32.mrf.mxu0
  %v7062 = vadd.f32 %v6733, %v7061
  %v7063 = vpop.f32.mrf.mxu0
  %v7064 = vadd.f32 %v6735, %v7063
  %7065 = vmatmul.bf16.gmra.mxu0 %v3121
  %v7066 = vpop.f32.mrf.mxu0
  %v7067 = vadd.f32 %v6738, %v7066
  %v7068 = vpop.f32.mrf.mxu0
  %v7069 = vadd.f32 %v6740, %v7068
  %7070 = vdwg.mxu0
  %7071 = vmatpush.bf16.msra.mxu0 %v2737
  %7072 = vmatpush.bf16.msra.mxu0 %v2733
  %7073 = vmatpush.bf16.msra.mxu0 %v2729
  %7074 = vmatpush.bf16.msra.mxu0 %v2725
  %7075 = vmatpush.bf16.msra.mxu0 %v2721
  %7076 = vmatpush.bf16.msra.mxu0 %v2717
  %7077 = vmatpush.bf16.msra.mxu0 %v2713
  %7078 = vmatpush.bf16.msra.mxu0 %v2709
  %7079 = vmatmul.bf16.gmra.mxu0 %v1922
  %v7080 = vpop.f32.mrf.mxu0
  %v7081 = vadd.f32 %v517, %v7080
  %v7082 = vpop.f32.mrf.mxu0
  %v7083 = vadd.f32 %v522, %v7082
  %7084 = vmatmul.bf16.gmra.mxu0 %v1926
  %v7085 = vpop.f32.mrf.mxu0
  %v7086 = vadd.f32 %v527, %v7085
  %v7087 = vpop.f32.mrf.mxu0
  %v7088 = vadd.f32 %v532, %v7087
  %7089 = vmatmul.bf16.gmra.mxu0 %v1930
  %v7090 = vpop.f32.mrf.mxu0
  %v7091 = vadd.f32 %v537, %v7090
  %v7092 = vpop.f32.mrf.mxu0
  %v7093 = vadd.f32 %v542, %v7092
  %7094 = vmatmul.bf16.gmra.mxu0 %v1934
  %v7095 = vpop.f32.mrf.mxu0
  %v7096 = vadd.f32 %v547, %v7095
  %v7097 = vpop.f32.mrf.mxu0
  %v7098 = vadd.f32 %v552, %v7097
  %7099 = vmatmul.bf16.gmra.mxu0 %v1938
  %v7100 = vpop.f32.mrf.mxu0
  %v7101 = vadd.f32 %v557, %v7100
  %v7102 = vpop.f32.mrf.mxu0
  %v7103 = vadd.f32 %v562, %v7102
  %7104 = vmatmul.bf16.gmra.mxu0 %v1942
  %v7105 = vpop.f32.mrf.mxu0
  %v7106 = vadd.f32 %v567, %v7105
  %v7107 = vpop.f32.mrf.mxu0
  %v7108 = vadd.f32 %v572, %v7107
  %7109 = vmatmul.bf16.gmra.mxu0 %v1946
  %v7110 = vpop.f32.mrf.mxu0
  %v7111 = vadd.f32 %v577, %v7110
  %v7112 = vpop.f32.mrf.mxu0
  %v7113 = vadd.f32 %v582, %v7112
  %7114 = vmatmul.bf16.gmra.mxu0 %v1950
  %v7115 = vpop.f32.mrf.mxu0
  %v7116 = vadd.f32 %v587, %v7115
  %v7117 = vpop.f32.mrf.mxu0
  %v7118 = vadd.f32 %v592, %v7117
  %7119 = vmatmul.bf16.gmra.mxu0 %v1954
  %v7120 = vpop.f32.mrf.mxu0
  %v7121 = vadd.f32 %v597, %v7120
  %v7122 = vpop.f32.mrf.mxu0
  %v7123 = vadd.f32 %v602, %v7122
  %7124 = vmatmul.bf16.gmra.mxu0 %v1958
  %v7125 = vpop.f32.mrf.mxu0
  %v7126 = vadd.f32 %v607, %v7125
  %v7127 = vpop.f32.mrf.mxu0
  %v7128 = vadd.f32 %v612, %v7127
  %7129 = vmatmul.bf16.gmra.mxu0 %v1962
  %v7130 = vpop.f32.mrf.mxu0
  %v7131 = vadd.f32 %v617, %v7130
  %v7132 = vpop.f32.mrf.mxu0
  %v7133 = vadd.f32 %v622, %v7132
  %7134 = vmatmul.bf16.gmra.mxu0 %v1966
  %v7135 = vpop.f32.mrf.mxu0
  %v7136 = vadd.f32 %v627, %v7135
  %v7137 = vpop.f32.mrf.mxu0
  %v7138 = vadd.f32 %v632, %v7137
  %7139 = vmatmul.bf16.gmra.mxu0 %v1970
  %v7140 = vpop.f32.mrf.mxu0
  %v7141 = vadd.f32 %v637, %v7140
  %v7142 = vpop.f32.mrf.mxu0
  %v7143 = vadd.f32 %v642, %v7142
  %7144 = vmatmul.bf16.gmra.mxu0 %v1974
  %v7145 = vpop.f32.mrf.mxu0
  %v7146 = vadd.f32 %v647, %v7145
  %v7147 = vpop.f32.mrf.mxu0
  %v7148 = vadd.f32 %v652, %v7147
  %7149 = vmatmul.bf16.gmra.mxu0 %v1978
  %v7150 = vpop.f32.mrf.mxu0
  %v7151 = vadd.f32 %v657, %v7150
  %v7152 = vpop.f32.mrf.mxu0
  %v7153 = vadd.f32 %v662, %v7152
  %7154 = vmatmul.bf16.gmra.mxu0 %v1982
  %v7155 = vpop.f32.mrf.mxu0
  %v7156 = vadd.f32 %v667, %v7155
  %v7157 = vpop.f32.mrf.mxu0
  %v7158 = vadd.f32 %v672, %v7157
  %7159 = vmatmul.bf16.gmra.mxu0 %v1986
  %v7160 = vpop.f32.mrf.mxu0
  %v7161 = vadd.f32 %v677, %v7160
  %v7162 = vpop.f32.mrf.mxu0
  %v7163 = vadd.f32 %v682, %v7162
  %7164 = vmatmul.bf16.gmra.mxu0 %v1990
  %v7165 = vpop.f32.mrf.mxu0
  %v7166 = vadd.f32 %v687, %v7165
  %v7167 = vpop.f32.mrf.mxu0
  %v7168 = vadd.f32 %v692, %v7167
  %7169 = vmatmul.bf16.gmra.mxu0 %v1994
  %v7170 = vpop.f32.mrf.mxu0
  %v7171 = vadd.f32 %v697, %v7170
  %v7172 = vpop.f32.mrf.mxu0
  %v7173 = vadd.f32 %v702, %v7172
  %7174 = vmatmul.bf16.gmra.mxu0 %v1998
  %v7175 = vpop.f32.mrf.mxu0
  %v7176 = vadd.f32 %v707, %v7175
  %v7177 = vpop.f32.mrf.mxu0
  %v7178 = vadd.f32 %v712, %v7177
  %7179 = vmatmul.bf16.gmra.mxu0 %v2002
  %v7180 = vpop.f32.mrf.mxu0
  %v7181 = vadd.f32 %v717, %v7180
  %v7182 = vpop.f32.mrf.mxu0
  %v7183 = vadd.f32 %v722, %v7182
  %7184 = vmatmul.bf16.gmra.mxu0 %v2006
  %v7185 = vpop.f32.mrf.mxu0
  %v7186 = vadd.f32 %v727, %v7185
  %v7187 = vpop.f32.mrf.mxu0
  %v7188 = vadd.f32 %v732, %v7187
  %7189 = vmatmul.bf16.gmra.mxu0 %v2010
  %v7190 = vpop.f32.mrf.mxu0
  %v7191 = vadd.f32 %v737, %v7190
  %v7192 = vpop.f32.mrf.mxu0
  %v7193 = vadd.f32 %v742, %v7192
  %7194 = vmatmul.bf16.gmra.mxu0 %v2014
  %v7195 = vpop.f32.mrf.mxu0
  %v7196 = vadd.f32 %v747, %v7195
  %v7197 = vpop.f32.mrf.mxu0
  %v7198 = vadd.f32 %v752, %v7197
  %7199 = vmatmul.bf16.gmra.mxu0 %v2018
  %v7200 = vpop.f32.mrf.mxu0
  %v7201 = vadd.f32 %v757, %v7200
  %v7202 = vpop.f32.mrf.mxu0
  %v7203 = vadd.f32 %v762, %v7202
  %7204 = vmatmul.bf16.gmra.mxu0 %v2022
  %v7205 = vpop.f32.mrf.mxu0
  %v7206 = vadd.f32 %v767, %v7205
  %v7207 = vpop.f32.mrf.mxu0
  %v7208 = vadd.f32 %v772, %v7207
  %7209 = vmatmul.bf16.gmra.mxu0 %v2026
  %v7210 = vpop.f32.mrf.mxu0
  %v7211 = vadd.f32 %v777, %v7210
  %v7212 = vpop.f32.mrf.mxu0
  %v7213 = vadd.f32 %v782, %v7212
  %7214 = vmatmul.bf16.gmra.mxu0 %v2030
  %v7215 = vpop.f32.mrf.mxu0
  %v7216 = vadd.f32 %v787, %v7215
  %v7217 = vpop.f32.mrf.mxu0
  %v7218 = vadd.f32 %v792, %v7217
  %7219 = vmatmul.bf16.gmra.mxu0 %v2034
  %v7220 = vpop.f32.mrf.mxu0
  %v7221 = vadd.f32 %v797, %v7220
  %v7222 = vpop.f32.mrf.mxu0
  %v7223 = vadd.f32 %v802, %v7222
  %7224 = vmatmul.bf16.gmra.mxu0 %v2038
  %v7225 = vpop.f32.mrf.mxu0
  %v7226 = vadd.f32 %v807, %v7225
  %v7227 = vpop.f32.mrf.mxu0
  %v7228 = vadd.f32 %v812, %v7227
  %7229 = vmatmul.bf16.gmra.mxu0 %v2042
  %v7230 = vpop.f32.mrf.mxu0
  %v7231 = vadd.f32 %v817, %v7230
  %v7232 = vpop.f32.mrf.mxu0
  %v7233 = vadd.f32 %v822, %v7232
  %7234 = vmatmul.bf16.gmra.mxu0 %v2046
  %v7235 = vpop.f32.mrf.mxu0
  %v7236 = vadd.f32 %v827, %v7235
  %v7237 = vpop.f32.mrf.mxu0
  %v7238 = vadd.f32 %v832, %v7237
  %7239 = vmatmul.bf16.gmra.mxu0 %v2050
  %v7240 = vpop.f32.mrf.mxu0
  %v7241 = vadd.f32 %v837, %v7240
  %v7242 = vpop.f32.mrf.mxu0
  %v7243 = vadd.f32 %v842, %v7242
  %7244 = vmatmul.bf16.gmra.mxu0 %v2054
  %v7245 = vpop.f32.mrf.mxu0
  %v7246 = vadd.f32 %v847, %v7245
  %v7247 = vpop.f32.mrf.mxu0
  %v7248 = vadd.f32 %v852, %v7247
  %7249 = vmatmul.bf16.gmra.mxu0 %v2058
  %v7250 = vpop.f32.mrf.mxu0
  %v7251 = vadd.f32 %v857, %v7250
  %v7252 = vpop.f32.mrf.mxu0
  %v7253 = vadd.f32 %v862, %v7252
  %7254 = vmatmul.bf16.gmra.mxu0 %v2062
  %v7255 = vpop.f32.mrf.mxu0
  %v7256 = vadd.f32 %v867, %v7255
  %v7257 = vpop.f32.mrf.mxu0
  %v7258 = vadd.f32 %v872, %v7257
  %7259 = vmatmul.bf16.gmra.mxu0 %v2066
  %v7260 = vpop.f32.mrf.mxu0
  %v7261 = vadd.f32 %v877, %v7260
  %v7262 = vpop.f32.mrf.mxu0
  %v7263 = vadd.f32 %v882, %v7262
  %7264 = vmatmul.bf16.gmra.mxu0 %v2070
  %v7265 = vpop.f32.mrf.mxu0
  %v7266 = vadd.f32 %v887, %v7265
  %v7267 = vpop.f32.mrf.mxu0
  %v7268 = vadd.f32 %v892, %v7267
  %7269 = vmatmul.bf16.gmra.mxu0 %v2074
  %v7270 = vpop.f32.mrf.mxu0
  %v7271 = vadd.f32 %v897, %v7270
  %v7272 = vpop.f32.mrf.mxu0
  %v7273 = vadd.f32 %v902, %v7272
  %7274 = vmatmul.bf16.gmra.mxu0 %v2078
  %v7275 = vpop.f32.mrf.mxu0
  %v7276 = vadd.f32 %v907, %v7275
  %v7277 = vpop.f32.mrf.mxu0
  %v7278 = vadd.f32 %v912, %v7277
  %7279 = vmatmul.bf16.gmra.mxu0 %v2082
  %v7280 = vpop.f32.mrf.mxu0
  %v7281 = vadd.f32 %v917, %v7280
  %v7282 = vpop.f32.mrf.mxu0
  %v7283 = vadd.f32 %v922, %v7282
  %7284 = vmatmul.bf16.gmra.mxu0 %v2086
  %v7285 = vpop.f32.mrf.mxu0
  %v7286 = vadd.f32 %v927, %v7285
  %v7287 = vpop.f32.mrf.mxu0
  %v7288 = vadd.f32 %v932, %v7287
  %7289 = vmatmul.bf16.gmra.mxu0 %v2090
  %v7290 = vpop.f32.mrf.mxu0
  %v7291 = vadd.f32 %v937, %v7290
  %v7292 = vpop.f32.mrf.mxu0
  %v7293 = vadd.f32 %v942, %v7292
  %7294 = vmatmul.bf16.gmra.mxu0 %v2094
  %v7295 = vpop.f32.mrf.mxu0
  %v7296 = vadd.f32 %v947, %v7295
  %v7297 = vpop.f32.mrf.mxu0
  %v7298 = vadd.f32 %v952, %v7297
  %7299 = vmatmul.bf16.gmra.mxu0 %v2098
  %v7300 = vpop.f32.mrf.mxu0
  %v7301 = vadd.f32 %v957, %v7300
  %v7302 = vpop.f32.mrf.mxu0
  %v7303 = vadd.f32 %v962, %v7302
  %7304 = vmatmul.bf16.gmra.mxu0 %v2102
  %v7305 = vpop.f32.mrf.mxu0
  %v7306 = vadd.f32 %v967, %v7305
  %v7307 = vpop.f32.mrf.mxu0
  %v7308 = vadd.f32 %v972, %v7307
  %7309 = vmatmul.bf16.gmra.mxu0 %v2106
  %v7310 = vpop.f32.mrf.mxu0
  %v7311 = vadd.f32 %v977, %v7310
  %v7312 = vpop.f32.mrf.mxu0
  %v7313 = vadd.f32 %v982, %v7312
  %7314 = vmatmul.bf16.gmra.mxu0 %v2110
  %v7315 = vpop.f32.mrf.mxu0
  %v7316 = vadd.f32 %v987, %v7315
  %v7317 = vpop.f32.mrf.mxu0
  %v7318 = vadd.f32 %v992, %v7317
  %7319 = vmatmul.bf16.gmra.mxu0 %v2114
  %v7320 = vpop.f32.mrf.mxu0
  %v7321 = vadd.f32 %v997, %v7320
  %v7322 = vpop.f32.mrf.mxu0
  %v7323 = vadd.f32 %v1002, %v7322
  %7324 = vmatmul.bf16.gmra.mxu0 %v2118
  %v7325 = vpop.f32.mrf.mxu0
  %v7326 = vadd.f32 %v1007, %v7325
  %v7327 = vpop.f32.mrf.mxu0
  %v7328 = vadd.f32 %v1012, %v7327
  %7329 = vmatmul.bf16.gmra.mxu0 %v2122
  %v7330 = vpop.f32.mrf.mxu0
  %v7331 = vadd.f32 %v1017, %v7330
  %v7332 = vpop.f32.mrf.mxu0
  %v7333 = vadd.f32 %v1022, %v7332
  %7334 = vmatmul.bf16.gmra.mxu0 %v2126
  %v7335 = vpop.f32.mrf.mxu0
  %v7336 = vadd.f32 %v1027, %v7335
  %v7337 = vpop.f32.mrf.mxu0
  %v7338 = vadd.f32 %v1032, %v7337
  %7339 = vmatmul.bf16.gmra.mxu0 %v2130
  %v7340 = vpop.f32.mrf.mxu0
  %v7341 = vadd.f32 %v1037, %v7340
  %v7342 = vpop.f32.mrf.mxu0
  %v7343 = vadd.f32 %v1042, %v7342
  %7344 = vmatmul.bf16.gmra.mxu0 %v2134
  %v7345 = vpop.f32.mrf.mxu0
  %v7346 = vadd.f32 %v1047, %v7345
  %v7347 = vpop.f32.mrf.mxu0
  %v7348 = vadd.f32 %v1052, %v7347
  %7349 = vmatmul.bf16.gmra.mxu0 %v2138
  %v7350 = vpop.f32.mrf.mxu0
  %v7351 = vadd.f32 %v1057, %v7350
  %v7352 = vpop.f32.mrf.mxu0
  %v7353 = vadd.f32 %v1062, %v7352
  %7354 = vmatmul.bf16.gmra.mxu0 %v2142
  %v7355 = vpop.f32.mrf.mxu0
  %v7356 = vadd.f32 %v1067, %v7355
  %v7357 = vpop.f32.mrf.mxu0
  %v7358 = vadd.f32 %v1072, %v7357
  %7359 = vmatmul.bf16.gmra.mxu0 %v2146
  %v7360 = vpop.f32.mrf.mxu0
  %v7361 = vadd.f32 %v1077, %v7360
  %v7362 = vpop.f32.mrf.mxu0
  %v7363 = vadd.f32 %v1082, %v7362
  %7364 = vmatmul.bf16.gmra.mxu0 %v2150
  %v7365 = vpop.f32.mrf.mxu0
  %v7366 = vadd.f32 %v1087, %v7365
  %v7367 = vpop.f32.mrf.mxu0
  %v7368 = vadd.f32 %v1092, %v7367
  %7369 = vmatmul.bf16.gmra.mxu0 %v2154
  %v7370 = vpop.f32.mrf.mxu0
  %v7371 = vadd.f32 %v1097, %v7370
  %v7372 = vpop.f32.mrf.mxu0
  %v7373 = vadd.f32 %v1102, %v7372
  %7374 = vmatmul.bf16.gmra.mxu0 %v2158
  %v7375 = vpop.f32.mrf.mxu0
  %v7376 = vadd.f32 %v1107, %v7375
  %v7377 = vpop.f32.mrf.mxu0
  %v7378 = vadd.f32 %v1112, %v7377
  %7379 = vmatmul.bf16.gmra.mxu0 %v2162
  %v7380 = vpop.f32.mrf.mxu0
  %v7381 = vadd.f32 %v1117, %v7380
  %v7382 = vpop.f32.mrf.mxu0
  %v7383 = vadd.f32 %v1122, %v7382
  %7384 = vmatmul.bf16.gmra.mxu0 %v2166
  %v7385 = vpop.f32.mrf.mxu0
  %v7386 = vadd.f32 %v1127, %v7385
  %v7387 = vpop.f32.mrf.mxu0
  %v7388 = vadd.f32 %v1132, %v7387
  %7389 = vmatmul.bf16.gmra.mxu0 %v2170
  %v7390 = vpop.f32.mrf.mxu0
  %v7391 = vadd.f32 %v1137, %v7390
  %v7392 = vpop.f32.mrf.mxu0
  %v7393 = vadd.f32 %v1142, %v7392
  %7394 = vmatmul.bf16.gmra.mxu0 %v2174
  %v7395 = vpop.f32.mrf.mxu0
  %v7396 = vadd.f32 %v1147, %v7395
  %v7397 = vpop.f32.mrf.mxu0
  %v7398 = vadd.f32 %v1152, %v7397
  %7399 = vdwg.mxu0
  %7400 = vmatpush.bf16.msra.mxu0 %v2769
  %7401 = vmatpush.bf16.msra.mxu0 %v2765
  %7402 = vmatpush.bf16.msra.mxu0 %v2761
  %7403 = vmatpush.bf16.msra.mxu0 %v2757
  %7404 = vmatpush.bf16.msra.mxu0 %v2753
  %7405 = vmatpush.bf16.msra.mxu0 %v2749
  %7406 = vmatpush.bf16.msra.mxu0 %v2745
  %7407 = vmatpush.bf16.msra.mxu0 %v2741
  %7408 = vmatmul.bf16.gmra.mxu0 %v1923
  %v7409 = vpop.f32.mrf.mxu0
  %v7410 = vadd.f32 %v7081, %v7409
  %v7411 = vpop.f32.mrf.mxu0
  %v7412 = vadd.f32 %v7083, %v7411
  %7413 = vmatmul.bf16.gmra.mxu0 %v1927
  %v7414 = vpop.f32.mrf.mxu0
  %v7415 = vadd.f32 %v7086, %v7414
  %v7416 = vpop.f32.mrf.mxu0
  %v7417 = vadd.f32 %v7088, %v7416
  %7418 = vmatmul.bf16.gmra.mxu0 %v1931
  %v7419 = vpop.f32.mrf.mxu0
  %v7420 = vadd.f32 %v7091, %v7419
  %v7421 = vpop.f32.mrf.mxu0
  %v7422 = vadd.f32 %v7093, %v7421
  %7423 = vmatmul.bf16.gmra.mxu0 %v1935
  %v7424 = vpop.f32.mrf.mxu0
  %v7425 = vadd.f32 %v7096, %v7424
  %v7426 = vpop.f32.mrf.mxu0
  %v7427 = vadd.f32 %v7098, %v7426
  %7428 = vmatmul.bf16.gmra.mxu0 %v1939
  %v7429 = vpop.f32.mrf.mxu0
  %v7430 = vadd.f32 %v7101, %v7429
  %v7431 = vpop.f32.mrf.mxu0
  %v7432 = vadd.f32 %v7103, %v7431
  %7433 = vmatmul.bf16.gmra.mxu0 %v1943
  %v7434 = vpop.f32.mrf.mxu0
  %v7435 = vadd.f32 %v7106, %v7434
  %v7436 = vpop.f32.mrf.mxu0
  %v7437 = vadd.f32 %v7108, %v7436
  %7438 = vmatmul.bf16.gmra.mxu0 %v1947
  %v7439 = vpop.f32.mrf.mxu0
  %v7440 = vadd.f32 %v7111, %v7439
  %v7441 = vpop.f32.mrf.mxu0
  %v7442 = vadd.f32 %v7113, %v7441
  %7443 = vmatmul.bf16.gmra.mxu0 %v1951
  %v7444 = vpop.f32.mrf.mxu0
  %v7445 = vadd.f32 %v7116, %v7444
  %v7446 = vpop.f32.mrf.mxu0
  %v7447 = vadd.f32 %v7118, %v7446
  %7448 = vmatmul.bf16.gmra.mxu0 %v1955
  %v7449 = vpop.f32.mrf.mxu0
  %v7450 = vadd.f32 %v7121, %v7449
  %v7451 = vpop.f32.mrf.mxu0
  %v7452 = vadd.f32 %v7123, %v7451
  %7453 = vmatmul.bf16.gmra.mxu0 %v1959
  %v7454 = vpop.f32.mrf.mxu0
  %v7455 = vadd.f32 %v7126, %v7454
  %v7456 = vpop.f32.mrf.mxu0
  %v7457 = vadd.f32 %v7128, %v7456
  %7458 = vmatmul.bf16.gmra.mxu0 %v1963
  %v7459 = vpop.f32.mrf.mxu0
  %v7460 = vadd.f32 %v7131, %v7459
  %v7461 = vpop.f32.mrf.mxu0
  %v7462 = vadd.f32 %v7133, %v7461
  %7463 = vmatmul.bf16.gmra.mxu0 %v1967
  %v7464 = vpop.f32.mrf.mxu0
  %v7465 = vadd.f32 %v7136, %v7464
  %v7466 = vpop.f32.mrf.mxu0
  %v7467 = vadd.f32 %v7138, %v7466
  %7468 = vmatmul.bf16.gmra.mxu0 %v1971
  %v7469 = vpop.f32.mrf.mxu0
  %v7470 = vadd.f32 %v7141, %v7469
  %v7471 = vpop.f32.mrf.mxu0
  %v7472 = vadd.f32 %v7143, %v7471
  %7473 = vmatmul.bf16.gmra.mxu0 %v1975
  %v7474 = vpop.f32.mrf.mxu0
  %v7475 = vadd.f32 %v7146, %v7474
  %v7476 = vpop.f32.mrf.mxu0
  %v7477 = vadd.f32 %v7148, %v7476
  %7478 = vmatmul.bf16.gmra.mxu0 %v1979
  %v7479 = vpop.f32.mrf.mxu0
  %v7480 = vadd.f32 %v7151, %v7479
  %v7481 = vpop.f32.mrf.mxu0
  %v7482 = vadd.f32 %v7153, %v7481
  %7483 = vmatmul.bf16.gmra.mxu0 %v1983
  %v7484 = vpop.f32.mrf.mxu0
  %v7485 = vadd.f32 %v7156, %v7484
  %v7486 = vpop.f32.mrf.mxu0
  %v7487 = vadd.f32 %v7158, %v7486
  %7488 = vmatmul.bf16.gmra.mxu0 %v1987
  %v7489 = vpop.f32.mrf.mxu0
  %v7490 = vadd.f32 %v7161, %v7489
  %v7491 = vpop.f32.mrf.mxu0
  %v7492 = vadd.f32 %v7163, %v7491
  %7493 = vmatmul.bf16.gmra.mxu0 %v1991
  %v7494 = vpop.f32.mrf.mxu0
  %v7495 = vadd.f32 %v7166, %v7494
  %v7496 = vpop.f32.mrf.mxu0
  %v7497 = vadd.f32 %v7168, %v7496
  %7498 = vmatmul.bf16.gmra.mxu0 %v1995
  %v7499 = vpop.f32.mrf.mxu0
  %v7500 = vadd.f32 %v7171, %v7499
  %v7501 = vpop.f32.mrf.mxu0
  %v7502 = vadd.f32 %v7173, %v7501
  %7503 = vmatmul.bf16.gmra.mxu0 %v1999
  %v7504 = vpop.f32.mrf.mxu0
  %v7505 = vadd.f32 %v7176, %v7504
  %v7506 = vpop.f32.mrf.mxu0
  %v7507 = vadd.f32 %v7178, %v7506
  %7508 = vmatmul.bf16.gmra.mxu0 %v2003
  %v7509 = vpop.f32.mrf.mxu0
  %v7510 = vadd.f32 %v7181, %v7509
  %v7511 = vpop.f32.mrf.mxu0
  %v7512 = vadd.f32 %v7183, %v7511
  %7513 = vmatmul.bf16.gmra.mxu0 %v2007
  %v7514 = vpop.f32.mrf.mxu0
  %v7515 = vadd.f32 %v7186, %v7514
  %v7516 = vpop.f32.mrf.mxu0
  %v7517 = vadd.f32 %v7188, %v7516
  %7518 = vmatmul.bf16.gmra.mxu0 %v2011
  %v7519 = vpop.f32.mrf.mxu0
  %v7520 = vadd.f32 %v7191, %v7519
  %v7521 = vpop.f32.mrf.mxu0
  %v7522 = vadd.f32 %v7193, %v7521
  %7523 = vmatmul.bf16.gmra.mxu0 %v2015
  %v7524 = vpop.f32.mrf.mxu0
  %v7525 = vadd.f32 %v7196, %v7524
  %v7526 = vpop.f32.mrf.mxu0
  %v7527 = vadd.f32 %v7198, %v7526
  %7528 = vmatmul.bf16.gmra.mxu0 %v2019
  %v7529 = vpop.f32.mrf.mxu0
  %v7530 = vadd.f32 %v7201, %v7529
  %v7531 = vpop.f32.mrf.mxu0
  %v7532 = vadd.f32 %v7203, %v7531
  %7533 = vmatmul.bf16.gmra.mxu0 %v2023
  %v7534 = vpop.f32.mrf.mxu0
  %v7535 = vadd.f32 %v7206, %v7534
  %v7536 = vpop.f32.mrf.mxu0
  %v7537 = vadd.f32 %v7208, %v7536
  %7538 = vmatmul.bf16.gmra.mxu0 %v2027
  %v7539 = vpop.f32.mrf.mxu0
  %v7540 = vadd.f32 %v7211, %v7539
  %v7541 = vpop.f32.mrf.mxu0
  %v7542 = vadd.f32 %v7213, %v7541
  %7543 = vmatmul.bf16.gmra.mxu0 %v2031
  %v7544 = vpop.f32.mrf.mxu0
  %v7545 = vadd.f32 %v7216, %v7544
  %v7546 = vpop.f32.mrf.mxu0
  %v7547 = vadd.f32 %v7218, %v7546
  %7548 = vmatmul.bf16.gmra.mxu0 %v2035
  %v7549 = vpop.f32.mrf.mxu0
  %v7550 = vadd.f32 %v7221, %v7549
  %v7551 = vpop.f32.mrf.mxu0
  %v7552 = vadd.f32 %v7223, %v7551
  %7553 = vmatmul.bf16.gmra.mxu0 %v2039
  %v7554 = vpop.f32.mrf.mxu0
  %v7555 = vadd.f32 %v7226, %v7554
  %v7556 = vpop.f32.mrf.mxu0
  %v7557 = vadd.f32 %v7228, %v7556
  %7558 = vmatmul.bf16.gmra.mxu0 %v2043
  %v7559 = vpop.f32.mrf.mxu0
  %v7560 = vadd.f32 %v7231, %v7559
  %v7561 = vpop.f32.mrf.mxu0
  %v7562 = vadd.f32 %v7233, %v7561
  %7563 = vmatmul.bf16.gmra.mxu0 %v2047
  %v7564 = vpop.f32.mrf.mxu0
  %v7565 = vadd.f32 %v7236, %v7564
  %v7566 = vpop.f32.mrf.mxu0
  %v7567 = vadd.f32 %v7238, %v7566
  %7568 = vmatmul.bf16.gmra.mxu0 %v2051
  %v7569 = vpop.f32.mrf.mxu0
  %v7570 = vadd.f32 %v7241, %v7569
  %v7571 = vpop.f32.mrf.mxu0
  %v7572 = vadd.f32 %v7243, %v7571
  %7573 = vmatmul.bf16.gmra.mxu0 %v2055
  %v7574 = vpop.f32.mrf.mxu0
  %v7575 = vadd.f32 %v7246, %v7574
  %v7576 = vpop.f32.mrf.mxu0
  %v7577 = vadd.f32 %v7248, %v7576
  %7578 = vmatmul.bf16.gmra.mxu0 %v2059
  %v7579 = vpop.f32.mrf.mxu0
  %v7580 = vadd.f32 %v7251, %v7579
  %v7581 = vpop.f32.mrf.mxu0
  %v7582 = vadd.f32 %v7253, %v7581
  %7583 = vmatmul.bf16.gmra.mxu0 %v2063
  %v7584 = vpop.f32.mrf.mxu0
  %v7585 = vadd.f32 %v7256, %v7584
  %v7586 = vpop.f32.mrf.mxu0
  %v7587 = vadd.f32 %v7258, %v7586
  %7588 = vmatmul.bf16.gmra.mxu0 %v2067
  %v7589 = vpop.f32.mrf.mxu0
  %v7590 = vadd.f32 %v7261, %v7589
  %v7591 = vpop.f32.mrf.mxu0
  %v7592 = vadd.f32 %v7263, %v7591
  %7593 = vmatmul.bf16.gmra.mxu0 %v2071
  %v7594 = vpop.f32.mrf.mxu0
  %v7595 = vadd.f32 %v7266, %v7594
  %v7596 = vpop.f32.mrf.mxu0
  %v7597 = vadd.f32 %v7268, %v7596
  %7598 = vmatmul.bf16.gmra.mxu0 %v2075
  %v7599 = vpop.f32.mrf.mxu0
  %v7600 = vadd.f32 %v7271, %v7599
  %v7601 = vpop.f32.mrf.mxu0
  %v7602 = vadd.f32 %v7273, %v7601
  %7603 = vmatmul.bf16.gmra.mxu0 %v2079
  %v7604 = vpop.f32.mrf.mxu0
  %v7605 = vadd.f32 %v7276, %v7604
  %v7606 = vpop.f32.mrf.mxu0
  %v7607 = vadd.f32 %v7278, %v7606
  %7608 = vmatmul.bf16.gmra.mxu0 %v2083
  %v7609 = vpop.f32.mrf.mxu0
  %v7610 = vadd.f32 %v7281, %v7609
  %v7611 = vpop.f32.mrf.mxu0
  %v7612 = vadd.f32 %v7283, %v7611
  %7613 = vmatmul.bf16.gmra.mxu0 %v2087
  %v7614 = vpop.f32.mrf.mxu0
  %v7615 = vadd.f32 %v7286, %v7614
  %v7616 = vpop.f32.mrf.mxu0
  %v7617 = vadd.f32 %v7288, %v7616
  %7618 = vmatmul.bf16.gmra.mxu0 %v2091
  %v7619 = vpop.f32.mrf.mxu0
  %v7620 = vadd.f32 %v7291, %v7619
  %v7621 = vpop.f32.mrf.mxu0
  %v7622 = vadd.f32 %v7293, %v7621
  %7623 = vmatmul.bf16.gmra.mxu0 %v2095
  %v7624 = vpop.f32.mrf.mxu0
  %v7625 = vadd.f32 %v7296, %v7624
  %v7626 = vpop.f32.mrf.mxu0
  %v7627 = vadd.f32 %v7298, %v7626
  %7628 = vmatmul.bf16.gmra.mxu0 %v2099
  %v7629 = vpop.f32.mrf.mxu0
  %v7630 = vadd.f32 %v7301, %v7629
  %v7631 = vpop.f32.mrf.mxu0
  %v7632 = vadd.f32 %v7303, %v7631
  %7633 = vmatmul.bf16.gmra.mxu0 %v2103
  %v7634 = vpop.f32.mrf.mxu0
  %v7635 = vadd.f32 %v7306, %v7634
  %v7636 = vpop.f32.mrf.mxu0
  %v7637 = vadd.f32 %v7308, %v7636
  %7638 = vmatmul.bf16.gmra.mxu0 %v2107
  %v7639 = vpop.f32.mrf.mxu0
  %v7640 = vadd.f32 %v7311, %v7639
  %v7641 = vpop.f32.mrf.mxu0
  %v7642 = vadd.f32 %v7313, %v7641
  %7643 = vmatmul.bf16.gmra.mxu0 %v2111
  %v7644 = vpop.f32.mrf.mxu0
  %v7645 = vadd.f32 %v7316, %v7644
  %v7646 = vpop.f32.mrf.mxu0
  %v7647 = vadd.f32 %v7318, %v7646
  %7648 = vmatmul.bf16.gmra.mxu0 %v2115
  %v7649 = vpop.f32.mrf.mxu0
  %v7650 = vadd.f32 %v7321, %v7649
  %v7651 = vpop.f32.mrf.mxu0
  %v7652 = vadd.f32 %v7323, %v7651
  %7653 = vmatmul.bf16.gmra.mxu0 %v2119
  %v7654 = vpop.f32.mrf.mxu0
  %v7655 = vadd.f32 %v7326, %v7654
  %v7656 = vpop.f32.mrf.mxu0
  %v7657 = vadd.f32 %v7328, %v7656
  %7658 = vmatmul.bf16.gmra.mxu0 %v2123
  %v7659 = vpop.f32.mrf.mxu0
  %v7660 = vadd.f32 %v7331, %v7659
  %v7661 = vpop.f32.mrf.mxu0
  %v7662 = vadd.f32 %v7333, %v7661
  %7663 = vmatmul.bf16.gmra.mxu0 %v2127
  %v7664 = vpop.f32.mrf.mxu0
  %v7665 = vadd.f32 %v7336, %v7664
  %v7666 = vpop.f32.mrf.mxu0
  %v7667 = vadd.f32 %v7338, %v7666
  %7668 = vmatmul.bf16.gmra.mxu0 %v2131
  %v7669 = vpop.f32.mrf.mxu0
  %v7670 = vadd.f32 %v7341, %v7669
  %v7671 = vpop.f32.mrf.mxu0
  %v7672 = vadd.f32 %v7343, %v7671
  %7673 = vmatmul.bf16.gmra.mxu0 %v2135
  %v7674 = vpop.f32.mrf.mxu0
  %v7675 = vadd.f32 %v7346, %v7674
  %v7676 = vpop.f32.mrf.mxu0
  %v7677 = vadd.f32 %v7348, %v7676
  %7678 = vmatmul.bf16.gmra.mxu0 %v2139
  %v7679 = vpop.f32.mrf.mxu0
  %v7680 = vadd.f32 %v7351, %v7679
  %v7681 = vpop.f32.mrf.mxu0
  %v7682 = vadd.f32 %v7353, %v7681
  %7683 = vmatmul.bf16.gmra.mxu0 %v2143
  %v7684 = vpop.f32.mrf.mxu0
  %v7685 = vadd.f32 %v7356, %v7684
  %v7686 = vpop.f32.mrf.mxu0
  %v7687 = vadd.f32 %v7358, %v7686
  %7688 = vmatmul.bf16.gmra.mxu0 %v2147
  %v7689 = vpop.f32.mrf.mxu0
  %v7690 = vadd.f32 %v7361, %v7689
  %v7691 = vpop.f32.mrf.mxu0
  %v7692 = vadd.f32 %v7363, %v7691
  %7693 = vmatmul.bf16.gmra.mxu0 %v2151
  %v7694 = vpop.f32.mrf.mxu0
  %v7695 = vadd.f32 %v7366, %v7694
  %v7696 = vpop.f32.mrf.mxu0
  %v7697 = vadd.f32 %v7368, %v7696
  %7698 = vmatmul.bf16.gmra.mxu0 %v2155
  %v7699 = vpop.f32.mrf.mxu0
  %v7700 = vadd.f32 %v7371, %v7699
  %v7701 = vpop.f32.mrf.mxu0
  %v7702 = vadd.f32 %v7373, %v7701
  %7703 = vmatmul.bf16.gmra.mxu0 %v2159
  %v7704 = vpop.f32.mrf.mxu0
  %v7705 = vadd.f32 %v7376, %v7704
  %v7706 = vpop.f32.mrf.mxu0
  %v7707 = vadd.f32 %v7378, %v7706
  %7708 = vmatmul.bf16.gmra.mxu0 %v2163
  %v7709 = vpop.f32.mrf.mxu0
  %v7710 = vadd.f32 %v7381, %v7709
  %v7711 = vpop.f32.mrf.mxu0
  %v7712 = vadd.f32 %v7383, %v7711
  %7713 = vmatmul.bf16.gmra.mxu0 %v2167
  %v7714 = vpop.f32.mrf.mxu0
  %v7715 = vadd.f32 %v7386, %v7714
  %v7716 = vpop.f32.mrf.mxu0
  %v7717 = vadd.f32 %v7388, %v7716
  %7718 = vmatmul.bf16.gmra.mxu0 %v2171
  %v7719 = vpop.f32.mrf.mxu0
  %v7720 = vadd.f32 %v7391, %v7719
  %v7721 = vpop.f32.mrf.mxu0
  %v7722 = vadd.f32 %v7393, %v7721
  %7723 = vmatmul.bf16.gmra.mxu0 %v2175
  %v7724 = vpop.f32.mrf.mxu0
  %v7725 = vadd.f32 %v7396, %v7724
  %v7726 = vpop.f32.mrf.mxu0
  %v7727 = vadd.f32 %v7398, %v7726
  %7728 = vdwg.mxu0
  %7729 = vmatpush.bf16.msra.mxu0 %v2801
  %7730 = vmatpush.bf16.msra.mxu0 %v2797
  %7731 = vmatpush.bf16.msra.mxu0 %v2793
  %7732 = vmatpush.bf16.msra.mxu0 %v2789
  %7733 = vmatpush.bf16.msra.mxu0 %v2785
  %7734 = vmatpush.bf16.msra.mxu0 %v2781
  %7735 = vmatpush.bf16.msra.mxu0 %v2777
  %7736 = vmatpush.bf16.msra.mxu0 %v2773
  %7737 = vmatmul.bf16.gmra.mxu0 %v1924
  %v7738 = vpop.f32.mrf.mxu0
  %v7739 = vadd.f32 %v7410, %v7738
  %v7740 = vpop.f32.mrf.mxu0
  %v7741 = vadd.f32 %v7412, %v7740
  %7742 = vmatmul.bf16.gmra.mxu0 %v1928
  %v7743 = vpop.f32.mrf.mxu0
  %v7744 = vadd.f32 %v7415, %v7743
  %v7745 = vpop.f32.mrf.mxu0
  %v7746 = vadd.f32 %v7417, %v7745
  %7747 = vmatmul.bf16.gmra.mxu0 %v1932
  %v7748 = vpop.f32.mrf.mxu0
  %v7749 = vadd.f32 %v7420, %v7748
  %v7750 = vpop.f32.mrf.mxu0
  %v7751 = vadd.f32 %v7422, %v7750
  %7752 = vmatmul.bf16.gmra.mxu0 %v1936
  %v7753 = vpop.f32.mrf.mxu0
  %v7754 = vadd.f32 %v7425, %v7753
  %v7755 = vpop.f32.mrf.mxu0
  %v7756 = vadd.f32 %v7427, %v7755
  %7757 = vmatmul.bf16.gmra.mxu0 %v1940
  %v7758 = vpop.f32.mrf.mxu0
  %v7759 = vadd.f32 %v7430, %v7758
  %v7760 = vpop.f32.mrf.mxu0
  %v7761 = vadd.f32 %v7432, %v7760
  %7762 = vmatmul.bf16.gmra.mxu0 %v1944
  %v7763 = vpop.f32.mrf.mxu0
  %v7764 = vadd.f32 %v7435, %v7763
  %v7765 = vpop.f32.mrf.mxu0
  %v7766 = vadd.f32 %v7437, %v7765
  %7767 = vmatmul.bf16.gmra.mxu0 %v1948
  %v7768 = vpop.f32.mrf.mxu0
  %v7769 = vadd.f32 %v7440, %v7768
  %v7770 = vpop.f32.mrf.mxu0
  %v7771 = vadd.f32 %v7442, %v7770
  %7772 = vmatmul.bf16.gmra.mxu0 %v1952
  %v7773 = vpop.f32.mrf.mxu0
  %v7774 = vadd.f32 %v7445, %v7773
  %v7775 = vpop.f32.mrf.mxu0
  %v7776 = vadd.f32 %v7447, %v7775
  %7777 = vmatmul.bf16.gmra.mxu0 %v1956
  %v7778 = vpop.f32.mrf.mxu0
  %v7779 = vadd.f32 %v7450, %v7778
  %v7780 = vpop.f32.mrf.mxu0
  %v7781 = vadd.f32 %v7452, %v7780
  %7782 = vmatmul.bf16.gmra.mxu0 %v1960
  %v7783 = vpop.f32.mrf.mxu0
  %v7784 = vadd.f32 %v7455, %v7783
  %v7785 = vpop.f32.mrf.mxu0
  %v7786 = vadd.f32 %v7457, %v7785
  %7787 = vmatmul.bf16.gmra.mxu0 %v1964
  %v7788 = vpop.f32.mrf.mxu0
  %v7789 = vadd.f32 %v7460, %v7788
  %v7790 = vpop.f32.mrf.mxu0
  %v7791 = vadd.f32 %v7462, %v7790
  %7792 = vmatmul.bf16.gmra.mxu0 %v1968
  %v7793 = vpop.f32.mrf.mxu0
  %v7794 = vadd.f32 %v7465, %v7793
  %v7795 = vpop.f32.mrf.mxu0
  %v7796 = vadd.f32 %v7467, %v7795
  %7797 = vmatmul.bf16.gmra.mxu0 %v1972
  %v7798 = vpop.f32.mrf.mxu0
  %v7799 = vadd.f32 %v7470, %v7798
  %v7800 = vpop.f32.mrf.mxu0
  %v7801 = vadd.f32 %v7472, %v7800
  %7802 = vmatmul.bf16.gmra.mxu0 %v1976
  %v7803 = vpop.f32.mrf.mxu0
  %v7804 = vadd.f32 %v7475, %v7803
  %v7805 = vpop.f32.mrf.mxu0
  %v7806 = vadd.f32 %v7477, %v7805
  %7807 = vmatmul.bf16.gmra.mxu0 %v1980
  %v7808 = vpop.f32.mrf.mxu0
  %v7809 = vadd.f32 %v7480, %v7808
  %v7810 = vpop.f32.mrf.mxu0
  %v7811 = vadd.f32 %v7482, %v7810
  %7812 = vmatmul.bf16.gmra.mxu0 %v1984
  %v7813 = vpop.f32.mrf.mxu0
  %v7814 = vadd.f32 %v7485, %v7813
  %v7815 = vpop.f32.mrf.mxu0
  %v7816 = vadd.f32 %v7487, %v7815
  %7817 = vmatmul.bf16.gmra.mxu0 %v1988
  %v7818 = vpop.f32.mrf.mxu0
  %v7819 = vadd.f32 %v7490, %v7818
  %v7820 = vpop.f32.mrf.mxu0
  %v7821 = vadd.f32 %v7492, %v7820
  %7822 = vmatmul.bf16.gmra.mxu0 %v1992
  %v7823 = vpop.f32.mrf.mxu0
  %v7824 = vadd.f32 %v7495, %v7823
  %v7825 = vpop.f32.mrf.mxu0
  %v7826 = vadd.f32 %v7497, %v7825
  %7827 = vmatmul.bf16.gmra.mxu0 %v1996
  %v7828 = vpop.f32.mrf.mxu0
  %v7829 = vadd.f32 %v7500, %v7828
  %v7830 = vpop.f32.mrf.mxu0
  %v7831 = vadd.f32 %v7502, %v7830
  %7832 = vmatmul.bf16.gmra.mxu0 %v2000
  %v7833 = vpop.f32.mrf.mxu0
  %v7834 = vadd.f32 %v7505, %v7833
  %v7835 = vpop.f32.mrf.mxu0
  %v7836 = vadd.f32 %v7507, %v7835
  %7837 = vmatmul.bf16.gmra.mxu0 %v2004
  %v7838 = vpop.f32.mrf.mxu0
  %v7839 = vadd.f32 %v7510, %v7838
  %v7840 = vpop.f32.mrf.mxu0
  %v7841 = vadd.f32 %v7512, %v7840
  %7842 = vmatmul.bf16.gmra.mxu0 %v2008
  %v7843 = vpop.f32.mrf.mxu0
  %v7844 = vadd.f32 %v7515, %v7843
  %v7845 = vpop.f32.mrf.mxu0
  %v7846 = vadd.f32 %v7517, %v7845
  %7847 = vmatmul.bf16.gmra.mxu0 %v2012
  %v7848 = vpop.f32.mrf.mxu0
  %v7849 = vadd.f32 %v7520, %v7848
  %v7850 = vpop.f32.mrf.mxu0
  %v7851 = vadd.f32 %v7522, %v7850
  %7852 = vmatmul.bf16.gmra.mxu0 %v2016
  %v7853 = vpop.f32.mrf.mxu0
  %v7854 = vadd.f32 %v7525, %v7853
  %v7855 = vpop.f32.mrf.mxu0
  %v7856 = vadd.f32 %v7527, %v7855
  %7857 = vmatmul.bf16.gmra.mxu0 %v2020
  %v7858 = vpop.f32.mrf.mxu0
  %v7859 = vadd.f32 %v7530, %v7858
  %v7860 = vpop.f32.mrf.mxu0
  %v7861 = vadd.f32 %v7532, %v7860
  %7862 = vmatmul.bf16.gmra.mxu0 %v2024
  %v7863 = vpop.f32.mrf.mxu0
  %v7864 = vadd.f32 %v7535, %v7863
  %v7865 = vpop.f32.mrf.mxu0
  %v7866 = vadd.f32 %v7537, %v7865
  %7867 = vmatmul.bf16.gmra.mxu0 %v2028
  %v7868 = vpop.f32.mrf.mxu0
  %v7869 = vadd.f32 %v7540, %v7868
  %v7870 = vpop.f32.mrf.mxu0
  %v7871 = vadd.f32 %v7542, %v7870
  %7872 = vmatmul.bf16.gmra.mxu0 %v2032
  %v7873 = vpop.f32.mrf.mxu0
  %v7874 = vadd.f32 %v7545, %v7873
  %v7875 = vpop.f32.mrf.mxu0
  %v7876 = vadd.f32 %v7547, %v7875
  %7877 = vmatmul.bf16.gmra.mxu0 %v2036
  %v7878 = vpop.f32.mrf.mxu0
  %v7879 = vadd.f32 %v7550, %v7878
  %v7880 = vpop.f32.mrf.mxu0
  %v7881 = vadd.f32 %v7552, %v7880
  %7882 = vmatmul.bf16.gmra.mxu0 %v2040
  %v7883 = vpop.f32.mrf.mxu0
  %v7884 = vadd.f32 %v7555, %v7883
  %v7885 = vpop.f32.mrf.mxu0
  %v7886 = vadd.f32 %v7557, %v7885
  %7887 = vmatmul.bf16.gmra.mxu0 %v2044
  %v7888 = vpop.f32.mrf.mxu0
  %v7889 = vadd.f32 %v7560, %v7888
  %v7890 = vpop.f32.mrf.mxu0
  %v7891 = vadd.f32 %v7562, %v7890
  %7892 = vmatmul.bf16.gmra.mxu0 %v2048
  %v7893 = vpop.f32.mrf.mxu0
  %v7894 = vadd.f32 %v7565, %v7893
  %v7895 = vpop.f32.mrf.mxu0
  %v7896 = vadd.f32 %v7567, %v7895
  %7897 = vmatmul.bf16.gmra.mxu0 %v2052
  %v7898 = vpop.f32.mrf.mxu0
  %v7899 = vadd.f32 %v7570, %v7898
  %v7900 = vpop.f32.mrf.mxu0
  %v7901 = vadd.f32 %v7572, %v7900
  %7902 = vmatmul.bf16.gmra.mxu0 %v2056
  %v7903 = vpop.f32.mrf.mxu0
  %v7904 = vadd.f32 %v7575, %v7903
  %v7905 = vpop.f32.mrf.mxu0
  %v7906 = vadd.f32 %v7577, %v7905
  %7907 = vmatmul.bf16.gmra.mxu0 %v2060
  %v7908 = vpop.f32.mrf.mxu0
  %v7909 = vadd.f32 %v7580, %v7908
  %v7910 = vpop.f32.mrf.mxu0
  %v7911 = vadd.f32 %v7582, %v7910
  %7912 = vmatmul.bf16.gmra.mxu0 %v2064
  %v7913 = vpop.f32.mrf.mxu0
  %v7914 = vadd.f32 %v7585, %v7913
  %v7915 = vpop.f32.mrf.mxu0
  %v7916 = vadd.f32 %v7587, %v7915
  %7917 = vmatmul.bf16.gmra.mxu0 %v2068
  %v7918 = vpop.f32.mrf.mxu0
  %v7919 = vadd.f32 %v7590, %v7918
  %v7920 = vpop.f32.mrf.mxu0
  %v7921 = vadd.f32 %v7592, %v7920
  %7922 = vmatmul.bf16.gmra.mxu0 %v2072
  %v7923 = vpop.f32.mrf.mxu0
  %v7924 = vadd.f32 %v7595, %v7923
  %v7925 = vpop.f32.mrf.mxu0
  %v7926 = vadd.f32 %v7597, %v7925
  %7927 = vmatmul.bf16.gmra.mxu0 %v2076
  %v7928 = vpop.f32.mrf.mxu0
  %v7929 = vadd.f32 %v7600, %v7928
  %v7930 = vpop.f32.mrf.mxu0
  %v7931 = vadd.f32 %v7602, %v7930
  %7932 = vmatmul.bf16.gmra.mxu0 %v2080
  %v7933 = vpop.f32.mrf.mxu0
  %v7934 = vadd.f32 %v7605, %v7933
  %v7935 = vpop.f32.mrf.mxu0
  %v7936 = vadd.f32 %v7607, %v7935
  %7937 = vmatmul.bf16.gmra.mxu0 %v2084
  %v7938 = vpop.f32.mrf.mxu0
  %v7939 = vadd.f32 %v7610, %v7938
  %v7940 = vpop.f32.mrf.mxu0
  %v7941 = vadd.f32 %v7612, %v7940
  %7942 = vmatmul.bf16.gmra.mxu0 %v2088
  %v7943 = vpop.f32.mrf.mxu0
  %v7944 = vadd.f32 %v7615, %v7943
  %v7945 = vpop.f32.mrf.mxu0
  %v7946 = vadd.f32 %v7617, %v7945
  %7947 = vmatmul.bf16.gmra.mxu0 %v2092
  %v7948 = vpop.f32.mrf.mxu0
  %v7949 = vadd.f32 %v7620, %v7948
  %v7950 = vpop.f32.mrf.mxu0
  %v7951 = vadd.f32 %v7622, %v7950
  %7952 = vmatmul.bf16.gmra.mxu0 %v2096
  %v7953 = vpop.f32.mrf.mxu0
  %v7954 = vadd.f32 %v7625, %v7953
  %v7955 = vpop.f32.mrf.mxu0
  %v7956 = vadd.f32 %v7627, %v7955
  %7957 = vmatmul.bf16.gmra.mxu0 %v2100
  %v7958 = vpop.f32.mrf.mxu0
  %v7959 = vadd.f32 %v7630, %v7958
  %v7960 = vpop.f32.mrf.mxu0
  %v7961 = vadd.f32 %v7632, %v7960
  %7962 = vmatmul.bf16.gmra.mxu0 %v2104
  %v7963 = vpop.f32.mrf.mxu0
  %v7964 = vadd.f32 %v7635, %v7963
  %v7965 = vpop.f32.mrf.mxu0
  %v7966 = vadd.f32 %v7637, %v7965
  %7967 = vmatmul.bf16.gmra.mxu0 %v2108
  %v7968 = vpop.f32.mrf.mxu0
  %v7969 = vadd.f32 %v7640, %v7968
  %v7970 = vpop.f32.mrf.mxu0
  %v7971 = vadd.f32 %v7642, %v7970
  %7972 = vmatmul.bf16.gmra.mxu0 %v2112
  %v7973 = vpop.f32.mrf.mxu0
  %v7974 = vadd.f32 %v7645, %v7973
  %v7975 = vpop.f32.mrf.mxu0
  %v7976 = vadd.f32 %v7647, %v7975
  %7977 = vmatmul.bf16.gmra.mxu0 %v2116
  %v7978 = vpop.f32.mrf.mxu0
  %v7979 = vadd.f32 %v7650, %v7978
  %v7980 = vpop.f32.mrf.mxu0
  %v7981 = vadd.f32 %v7652, %v7980
  %7982 = vmatmul.bf16.gmra.mxu0 %v2120
  %v7983 = vpop.f32.mrf.mxu0
  %v7984 = vadd.f32 %v7655, %v7983
  %v7985 = vpop.f32.mrf.mxu0
  %v7986 = vadd.f32 %v7657, %v7985
  %7987 = vmatmul.bf16.gmra.mxu0 %v2124
  %v7988 = vpop.f32.mrf.mxu0
  %v7989 = vadd.f32 %v7660, %v7988
  %v7990 = vpop.f32.mrf.mxu0
  %v7991 = vadd.f32 %v7662, %v7990
  %7992 = vmatmul.bf16.gmra.mxu0 %v2128
  %v7993 = vpop.f32.mrf.mxu0
  %v7994 = vadd.f32 %v7665, %v7993
  %v7995 = vpop.f32.mrf.mxu0
  %v7996 = vadd.f32 %v7667, %v7995
  %7997 = vmatmul.bf16.gmra.mxu0 %v2132
  %v7998 = vpop.f32.mrf.mxu0
  %v7999 = vadd.f32 %v7670, %v7998
  %v8000 = vpop.f32.mrf.mxu0
  %v8001 = vadd.f32 %v7672, %v8000
  %8002 = vmatmul.bf16.gmra.mxu0 %v2136
  %v8003 = vpop.f32.mrf.mxu0
  %v8004 = vadd.f32 %v7675, %v8003
  %v8005 = vpop.f32.mrf.mxu0
  %v8006 = vadd.f32 %v7677, %v8005
  %8007 = vmatmul.bf16.gmra.mxu0 %v2140
  %v8008 = vpop.f32.mrf.mxu0
  %v8009 = vadd.f32 %v7680, %v8008
  %v8010 = vpop.f32.mrf.mxu0
  %v8011 = vadd.f32 %v7682, %v8010
  %8012 = vmatmul.bf16.gmra.mxu0 %v2144
  %v8013 = vpop.f32.mrf.mxu0
  %v8014 = vadd.f32 %v7685, %v8013
  %v8015 = vpop.f32.mrf.mxu0
  %v8016 = vadd.f32 %v7687, %v8015
  %8017 = vmatmul.bf16.gmra.mxu0 %v2148
  %v8018 = vpop.f32.mrf.mxu0
  %v8019 = vadd.f32 %v7690, %v8018
  %v8020 = vpop.f32.mrf.mxu0
  %v8021 = vadd.f32 %v7692, %v8020
  %8022 = vmatmul.bf16.gmra.mxu0 %v2152
  %v8023 = vpop.f32.mrf.mxu0
  %v8024 = vadd.f32 %v7695, %v8023
  %v8025 = vpop.f32.mrf.mxu0
  %v8026 = vadd.f32 %v7697, %v8025
  %8027 = vmatmul.bf16.gmra.mxu0 %v2156
  %v8028 = vpop.f32.mrf.mxu0
  %v8029 = vadd.f32 %v7700, %v8028
  %v8030 = vpop.f32.mrf.mxu0
  %v8031 = vadd.f32 %v7702, %v8030
  %8032 = vmatmul.bf16.gmra.mxu0 %v2160
  %v8033 = vpop.f32.mrf.mxu0
  %v8034 = vadd.f32 %v7705, %v8033
  %v8035 = vpop.f32.mrf.mxu0
  %v8036 = vadd.f32 %v7707, %v8035
  %8037 = vmatmul.bf16.gmra.mxu0 %v2164
  %v8038 = vpop.f32.mrf.mxu0
  %v8039 = vadd.f32 %v7710, %v8038
  %v8040 = vpop.f32.mrf.mxu0
  %v8041 = vadd.f32 %v7712, %v8040
  %8042 = vmatmul.bf16.gmra.mxu0 %v2168
  %v8043 = vpop.f32.mrf.mxu0
  %v8044 = vadd.f32 %v7715, %v8043
  %v8045 = vpop.f32.mrf.mxu0
  %v8046 = vadd.f32 %v7717, %v8045
  %8047 = vmatmul.bf16.gmra.mxu0 %v2172
  %v8048 = vpop.f32.mrf.mxu0
  %v8049 = vadd.f32 %v7720, %v8048
  %v8050 = vpop.f32.mrf.mxu0
  %v8051 = vadd.f32 %v7722, %v8050
  %8052 = vmatmul.bf16.gmra.mxu0 %v2176
  %v8053 = vpop.f32.mrf.mxu0
  %v8054 = vadd.f32 %v7725, %v8053
  %v8055 = vpop.f32.mrf.mxu0
  %v8056 = vadd.f32 %v7727, %v8055
  %8057 = vdwg.mxu0
  %8058 = vmatpush.bf16.msra.mxu0 0
  %8059 = vmatpush.bf16.msra.mxu0 0
  %8060 = vmatpush.bf16.msra.mxu0 0
  %8061 = vmatpush.bf16.msra.mxu0 0
  %8062 = vmatpush.bf16.msra.mxu0 %v2817
  %8063 = vmatpush.bf16.msra.mxu0 %v2813
  %8064 = vmatpush.bf16.msra.mxu0 %v2809
  %8065 = vmatpush.bf16.msra.mxu0 %v2805
  %8066 = vmatmul.bf16.gmra.mxu0 %v2932
  %v8067 = vpop.f32.mrf.mxu0
  %v8068 = vadd.f32 %v7739, %v8067
  %v8069 = vpop.f32.mrf.mxu0
  %v8070 = vadd.f32 %v7741, %v8069
  %8071 = vmatmul.bf16.gmra.mxu0 %v2935
  %v8072 = vpop.f32.mrf.mxu0
  %v8073 = vadd.f32 %v7744, %v8072
  %v8074 = vpop.f32.mrf.mxu0
  %v8075 = vadd.f32 %v7746, %v8074
  %8076 = vmatmul.bf16.gmra.mxu0 %v2938
  %v8077 = vpop.f32.mrf.mxu0
  %v8078 = vadd.f32 %v7749, %v8077
  %v8079 = vpop.f32.mrf.mxu0
  %v8080 = vadd.f32 %v7751, %v8079
  %8081 = vmatmul.bf16.gmra.mxu0 %v2941
  %v8082 = vpop.f32.mrf.mxu0
  %v8083 = vadd.f32 %v7754, %v8082
  %v8084 = vpop.f32.mrf.mxu0
  %v8085 = vadd.f32 %v7756, %v8084
  %8086 = vmatmul.bf16.gmra.mxu0 %v2944
  %v8087 = vpop.f32.mrf.mxu0
  %v8088 = vadd.f32 %v7759, %v8087
  %v8089 = vpop.f32.mrf.mxu0
  %v8090 = vadd.f32 %v7761, %v8089
  %8091 = vmatmul.bf16.gmra.mxu0 %v2947
  %v8092 = vpop.f32.mrf.mxu0
  %v8093 = vadd.f32 %v7764, %v8092
  %v8094 = vpop.f32.mrf.mxu0
  %v8095 = vadd.f32 %v7766, %v8094
  %8096 = vmatmul.bf16.gmra.mxu0 %v2950
  %v8097 = vpop.f32.mrf.mxu0
  %v8098 = vadd.f32 %v7769, %v8097
  %v8099 = vpop.f32.mrf.mxu0
  %v8100 = vadd.f32 %v7771, %v8099
  %8101 = vmatmul.bf16.gmra.mxu0 %v2953
  %v8102 = vpop.f32.mrf.mxu0
  %v8103 = vadd.f32 %v7774, %v8102
  %v8104 = vpop.f32.mrf.mxu0
  %v8105 = vadd.f32 %v7776, %v8104
  %8106 = vmatmul.bf16.gmra.mxu0 %v2956
  %v8107 = vpop.f32.mrf.mxu0
  %v8108 = vadd.f32 %v7779, %v8107
  %v8109 = vpop.f32.mrf.mxu0
  %v8110 = vadd.f32 %v7781, %v8109
  %8111 = vmatmul.bf16.gmra.mxu0 %v2959
  %v8112 = vpop.f32.mrf.mxu0
  %v8113 = vadd.f32 %v7784, %v8112
  %v8114 = vpop.f32.mrf.mxu0
  %v8115 = vadd.f32 %v7786, %v8114
  %8116 = vmatmul.bf16.gmra.mxu0 %v2962
  %v8117 = vpop.f32.mrf.mxu0
  %v8118 = vadd.f32 %v7789, %v8117
  %v8119 = vpop.f32.mrf.mxu0
  %v8120 = vadd.f32 %v7791, %v8119
  %8121 = vmatmul.bf16.gmra.mxu0 %v2965
  %v8122 = vpop.f32.mrf.mxu0
  %v8123 = vadd.f32 %v7794, %v8122
  %v8124 = vpop.f32.mrf.mxu0
  %v8125 = vadd.f32 %v7796, %v8124
  %8126 = vmatmul.bf16.gmra.mxu0 %v2968
  %v8127 = vpop.f32.mrf.mxu0
  %v8128 = vadd.f32 %v7799, %v8127
  %v8129 = vpop.f32.mrf.mxu0
  %v8130 = vadd.f32 %v7801, %v8129
  %8131 = vmatmul.bf16.gmra.mxu0 %v2971
  %v8132 = vpop.f32.mrf.mxu0
  %v8133 = vadd.f32 %v7804, %v8132
  %v8134 = vpop.f32.mrf.mxu0
  %v8135 = vadd.f32 %v7806, %v8134
  %8136 = vmatmul.bf16.gmra.mxu0 %v2974
  %v8137 = vpop.f32.mrf.mxu0
  %v8138 = vadd.f32 %v7809, %v8137
  %v8139 = vpop.f32.mrf.mxu0
  %v8140 = vadd.f32 %v7811, %v8139
  %8141 = vmatmul.bf16.gmra.mxu0 %v2977
  %v8142 = vpop.f32.mrf.mxu0
  %v8143 = vadd.f32 %v7814, %v8142
  %v8144 = vpop.f32.mrf.mxu0
  %v8145 = vadd.f32 %v7816, %v8144
  %8146 = vmatmul.bf16.gmra.mxu0 %v2980
  %v8147 = vpop.f32.mrf.mxu0
  %v8148 = vadd.f32 %v7819, %v8147
  %v8149 = vpop.f32.mrf.mxu0
  %v8150 = vadd.f32 %v7821, %v8149
  %8151 = vmatmul.bf16.gmra.mxu0 %v2983
  %v8152 = vpop.f32.mrf.mxu0
  %v8153 = vadd.f32 %v7824, %v8152
  %v8154 = vpop.f32.mrf.mxu0
  %v8155 = vadd.f32 %v7826, %v8154
  %8156 = vmatmul.bf16.gmra.mxu0 %v2986
  %v8157 = vpop.f32.mrf.mxu0
  %v8158 = vadd.f32 %v7829, %v8157
  %v8159 = vpop.f32.mrf.mxu0
  %v8160 = vadd.f32 %v7831, %v8159
  %8161 = vmatmul.bf16.gmra.mxu0 %v2989
  %v8162 = vpop.f32.mrf.mxu0
  %v8163 = vadd.f32 %v7834, %v8162
  %v8164 = vpop.f32.mrf.mxu0
  %v8165 = vadd.f32 %v7836, %v8164
  %8166 = vmatmul.bf16.gmra.mxu0 %v2992
  %v8167 = vpop.f32.mrf.mxu0
  %v8168 = vadd.f32 %v7839, %v8167
  %v8169 = vpop.f32.mrf.mxu0
  %v8170 = vadd.f32 %v7841, %v8169
  %8171 = vmatmul.bf16.gmra.mxu0 %v2995
  %v8172 = vpop.f32.mrf.mxu0
  %v8173 = vadd.f32 %v7844, %v8172
  %v8174 = vpop.f32.mrf.mxu0
  %v8175 = vadd.f32 %v7846, %v8174
  %8176 = vmatmul.bf16.gmra.mxu0 %v2998
  %v8177 = vpop.f32.mrf.mxu0
  %v8178 = vadd.f32 %v7849, %v8177
  %v8179 = vpop.f32.mrf.mxu0
  %v8180 = vadd.f32 %v7851, %v8179
  %8181 = vmatmul.bf16.gmra.mxu0 %v3001
  %v8182 = vpop.f32.mrf.mxu0
  %v8183 = vadd.f32 %v7854, %v8182
  %v8184 = vpop.f32.mrf.mxu0
  %v8185 = vadd.f32 %v7856, %v8184
  %8186 = vmatmul.bf16.gmra.mxu0 %v3004
  %v8187 = vpop.f32.mrf.mxu0
  %v8188 = vadd.f32 %v7859, %v8187
  %v8189 = vpop.f32.mrf.mxu0
  %v8190 = vadd.f32 %v7861, %v8189
  %8191 = vmatmul.bf16.gmra.mxu0 %v3007
  %v8192 = vpop.f32.mrf.mxu0
  %v8193 = vadd.f32 %v7864, %v8192
  %v8194 = vpop.f32.mrf.mxu0
  %v8195 = vadd.f32 %v7866, %v8194
  %8196 = vmatmul.bf16.gmra.mxu0 %v3010
  %v8197 = vpop.f32.mrf.mxu0
  %v8198 = vadd.f32 %v7869, %v8197
  %v8199 = vpop.f32.mrf.mxu0
  %v8200 = vadd.f32 %v7871, %v8199
  %8201 = vmatmul.bf16.gmra.mxu0 %v3013
  %v8202 = vpop.f32.mrf.mxu0
  %v8203 = vadd.f32 %v7874, %v8202
  %v8204 = vpop.f32.mrf.mxu0
  %v8205 = vadd.f32 %v7876, %v8204
  %8206 = vmatmul.bf16.gmra.mxu0 %v3016
  %v8207 = vpop.f32.mrf.mxu0
  %v8208 = vadd.f32 %v7879, %v8207
  %v8209 = vpop.f32.mrf.mxu0
  %v8210 = vadd.f32 %v7881, %v8209
  %8211 = vmatmul.bf16.gmra.mxu0 %v3019
  %v8212 = vpop.f32.mrf.mxu0
  %v8213 = vadd.f32 %v7884, %v8212
  %v8214 = vpop.f32.mrf.mxu0
  %v8215 = vadd.f32 %v7886, %v8214
  %8216 = vmatmul.bf16.gmra.mxu0 %v3022
  %v8217 = vpop.f32.mrf.mxu0
  %v8218 = vadd.f32 %v7889, %v8217
  %v8219 = vpop.f32.mrf.mxu0
  %v8220 = vadd.f32 %v7891, %v8219
  %8221 = vmatmul.bf16.gmra.mxu0 %v3025
  %v8222 = vpop.f32.mrf.mxu0
  %v8223 = vadd.f32 %v7894, %v8222
  %v8224 = vpop.f32.mrf.mxu0
  %v8225 = vadd.f32 %v7896, %v8224
  %8226 = vmatmul.bf16.gmra.mxu0 %v3028
  %v8227 = vpop.f32.mrf.mxu0
  %v8228 = vadd.f32 %v7899, %v8227
  %v8229 = vpop.f32.mrf.mxu0
  %v8230 = vadd.f32 %v7901, %v8229
  %8231 = vmatmul.bf16.gmra.mxu0 %v3031
  %v8232 = vpop.f32.mrf.mxu0
  %v8233 = vadd.f32 %v7904, %v8232
  %v8234 = vpop.f32.mrf.mxu0
  %v8235 = vadd.f32 %v7906, %v8234
  %8236 = vmatmul.bf16.gmra.mxu0 %v3034
  %v8237 = vpop.f32.mrf.mxu0
  %v8238 = vadd.f32 %v7909, %v8237
  %v8239 = vpop.f32.mrf.mxu0
  %v8240 = vadd.f32 %v7911, %v8239
  %8241 = vmatmul.bf16.gmra.mxu0 %v3037
  %v8242 = vpop.f32.mrf.mxu0
  %v8243 = vadd.f32 %v7914, %v8242
  %v8244 = vpop.f32.mrf.mxu0
  %v8245 = vadd.f32 %v7916, %v8244
  %8246 = vmatmul.bf16.gmra.mxu0 %v3040
  %v8247 = vpop.f32.mrf.mxu0
  %v8248 = vadd.f32 %v7919, %v8247
  %v8249 = vpop.f32.mrf.mxu0
  %v8250 = vadd.f32 %v7921, %v8249
  %8251 = vmatmul.bf16.gmra.mxu0 %v3043
  %v8252 = vpop.f32.mrf.mxu0
  %v8253 = vadd.f32 %v7924, %v8252
  %v8254 = vpop.f32.mrf.mxu0
  %v8255 = vadd.f32 %v7926, %v8254
  %8256 = vmatmul.bf16.gmra.mxu0 %v3046
  %v8257 = vpop.f32.mrf.mxu0
  %v8258 = vadd.f32 %v7929, %v8257
  %v8259 = vpop.f32.mrf.mxu0
  %v8260 = vadd.f32 %v7931, %v8259
  %8261 = vmatmul.bf16.gmra.mxu0 %v3049
  %v8262 = vpop.f32.mrf.mxu0
  %v8263 = vadd.f32 %v7934, %v8262
  %v8264 = vpop.f32.mrf.mxu0
  %v8265 = vadd.f32 %v7936, %v8264
  %8266 = vmatmul.bf16.gmra.mxu0 %v3052
  %v8267 = vpop.f32.mrf.mxu0
  %v8268 = vadd.f32 %v7939, %v8267
  %v8269 = vpop.f32.mrf.mxu0
  %v8270 = vadd.f32 %v7941, %v8269
  %8271 = vmatmul.bf16.gmra.mxu0 %v3055
  %v8272 = vpop.f32.mrf.mxu0
  %v8273 = vadd.f32 %v7944, %v8272
  %v8274 = vpop.f32.mrf.mxu0
  %v8275 = vadd.f32 %v7946, %v8274
  %8276 = vmatmul.bf16.gmra.mxu0 %v3058
  %v8277 = vpop.f32.mrf.mxu0
  %v8278 = vadd.f32 %v7949, %v8277
  %v8279 = vpop.f32.mrf.mxu0
  %v8280 = vadd.f32 %v7951, %v8279
  %8281 = vmatmul.bf16.gmra.mxu0 %v3061
  %v8282 = vpop.f32.mrf.mxu0
  %v8283 = vadd.f32 %v7954, %v8282
  %v8284 = vpop.f32.mrf.mxu0
  %v8285 = vadd.f32 %v7956, %v8284
  %8286 = vmatmul.bf16.gmra.mxu0 %v3064
  %v8287 = vpop.f32.mrf.mxu0
  %v8288 = vadd.f32 %v7959, %v8287
  %v8289 = vpop.f32.mrf.mxu0
  %v8290 = vadd.f32 %v7961, %v8289
  %8291 = vmatmul.bf16.gmra.mxu0 %v3067
  %v8292 = vpop.f32.mrf.mxu0
  %v8293 = vadd.f32 %v7964, %v8292
  %v8294 = vpop.f32.mrf.mxu0
  %v8295 = vadd.f32 %v7966, %v8294
  %8296 = vmatmul.bf16.gmra.mxu0 %v3070
  %v8297 = vpop.f32.mrf.mxu0
  %v8298 = vadd.f32 %v7969, %v8297
  %v8299 = vpop.f32.mrf.mxu0
  %v8300 = vadd.f32 %v7971, %v8299
  %8301 = vmatmul.bf16.gmra.mxu0 %v3073
  %v8302 = vpop.f32.mrf.mxu0
  %v8303 = vadd.f32 %v7974, %v8302
  %v8304 = vpop.f32.mrf.mxu0
  %v8305 = vadd.f32 %v7976, %v8304
  %8306 = vmatmul.bf16.gmra.mxu0 %v3076
  %v8307 = vpop.f32.mrf.mxu0
  %v8308 = vadd.f32 %v7979, %v8307
  %v8309 = vpop.f32.mrf.mxu0
  %v8310 = vadd.f32 %v7981, %v8309
  %8311 = vmatmul.bf16.gmra.mxu0 %v3079
  %v8312 = vpop.f32.mrf.mxu0
  %v8313 = vadd.f32 %v7984, %v8312
  %v8314 = vpop.f32.mrf.mxu0
  %v8315 = vadd.f32 %v7986, %v8314
  %8316 = vmatmul.bf16.gmra.mxu0 %v3082
  %v8317 = vpop.f32.mrf.mxu0
  %v8318 = vadd.f32 %v7989, %v8317
  %v8319 = vpop.f32.mrf.mxu0
  %v8320 = vadd.f32 %v7991, %v8319
  %8321 = vmatmul.bf16.gmra.mxu0 %v3085
  %v8322 = vpop.f32.mrf.mxu0
  %v8323 = vadd.f32 %v7994, %v8322
  %v8324 = vpop.f32.mrf.mxu0
  %v8325 = vadd.f32 %v7996, %v8324
  %8326 = vmatmul.bf16.gmra.mxu0 %v3088
  %v8327 = vpop.f32.mrf.mxu0
  %v8328 = vadd.f32 %v7999, %v8327
  %v8329 = vpop.f32.mrf.mxu0
  %v8330 = vadd.f32 %v8001, %v8329
  %8331 = vmatmul.bf16.gmra.mxu0 %v3091
  %v8332 = vpop.f32.mrf.mxu0
  %v8333 = vadd.f32 %v8004, %v8332
  %v8334 = vpop.f32.mrf.mxu0
  %v8335 = vadd.f32 %v8006, %v8334
  %8336 = vmatmul.bf16.gmra.mxu0 %v3094
  %v8337 = vpop.f32.mrf.mxu0
  %v8338 = vadd.f32 %v8009, %v8337
  %v8339 = vpop.f32.mrf.mxu0
  %v8340 = vadd.f32 %v8011, %v8339
  %8341 = vmatmul.bf16.gmra.mxu0 %v3097
  %v8342 = vpop.f32.mrf.mxu0
  %v8343 = vadd.f32 %v8014, %v8342
  %v8344 = vpop.f32.mrf.mxu0
  %v8345 = vadd.f32 %v8016, %v8344
  %8346 = vmatmul.bf16.gmra.mxu0 %v3100
  %v8347 = vpop.f32.mrf.mxu0
  %v8348 = vadd.f32 %v8019, %v8347
  %v8349 = vpop.f32.mrf.mxu0
  %v8350 = vadd.f32 %v8021, %v8349
  %8351 = vmatmul.bf16.gmra.mxu0 %v3103
  %v8352 = vpop.f32.mrf.mxu0
  %v8353 = vadd.f32 %v8024, %v8352
  %v8354 = vpop.f32.mrf.mxu0
  %v8355 = vadd.f32 %v8026, %v8354
  %8356 = vmatmul.bf16.gmra.mxu0 %v3106
  %v8357 = vpop.f32.mrf.mxu0
  %v8358 = vadd.f32 %v8029, %v8357
  %v8359 = vpop.f32.mrf.mxu0
  %v8360 = vadd.f32 %v8031, %v8359
  %8361 = vmatmul.bf16.gmra.mxu0 %v3109
  %v8362 = vpop.f32.mrf.mxu0
  %v8363 = vadd.f32 %v8034, %v8362
  %v8364 = vpop.f32.mrf.mxu0
  %v8365 = vadd.f32 %v8036, %v8364
  %8366 = vmatmul.bf16.gmra.mxu0 %v3112
  %v8367 = vpop.f32.mrf.mxu0
  %v8368 = vadd.f32 %v8039, %v8367
  %v8369 = vpop.f32.mrf.mxu0
  %v8370 = vadd.f32 %v8041, %v8369
  %8371 = vmatmul.bf16.gmra.mxu0 %v3115
  %v8372 = vpop.f32.mrf.mxu0
  %v8373 = vadd.f32 %v8044, %v8372
  %v8374 = vpop.f32.mrf.mxu0
  %v8375 = vadd.f32 %v8046, %v8374
  %8376 = vmatmul.bf16.gmra.mxu0 %v3118
  %v8377 = vpop.f32.mrf.mxu0
  %v8378 = vadd.f32 %v8049, %v8377
  %v8379 = vpop.f32.mrf.mxu0
  %v8380 = vadd.f32 %v8051, %v8379
  %8381 = vmatmul.bf16.gmra.mxu0 %v3121
  %v8382 = vpop.f32.mrf.mxu0
  %v8383 = vadd.f32 %v8054, %v8382
  %v8384 = vpop.f32.mrf.mxu0
  %v8385 = vadd.f32 %v8056, %v8384
  %8386 = vdwg.mxu0
  %v8387 = vtanh.pop %v4120
  %v8388 = vtanh.pop %v5436
  %v8389 = vtanh.pop %v6752
  %v8390 = vtanh.pop %v8068
  %v8391 = vtanh.pop %v4122
  %v8392 = vtanh.pop %v5438
  %v8393 = vtanh.pop %v6754
  %v8394 = vtanh.pop %v8070
  %v8395 = vtanh.pop %v4125
  %v8396 = vtanh.pop %v5441
  %v8397 = vtanh.pop %v6757
  %v8398 = vtanh.pop %v8073
  %v8399 = vtanh.pop %v4127
  %v8400 = vtanh.pop %v5443
  %v8401 = vtanh.pop %v6759
  %v8402 = vtanh.pop %v8075
  %v8403 = vtanh.pop %v4130
  %v8404 = vtanh.pop %v5446
  %v8405 = vtanh.pop %v6762
  %v8406 = vtanh.pop %v8078
  %v8407 = vtanh.pop %v4132
  %v8408 = vtanh.pop %v5448
  %v8409 = vtanh.pop %v6764
  %v8410 = vtanh.pop %v8080
  %v8411 = vtanh.pop %v4135
  %v8412 = vtanh.pop %v5451
  %v8413 = vtanh.pop %v6767
  %v8414 = vtanh.pop %v8083
  %v8415 = vtanh.pop %v4137
  %v8416 = vtanh.pop %v5453
  %v8417 = vtanh.pop %v6769
  %v8418 = vtanh.pop %v8085
  %v8419 = vtanh.pop %v4140
  %v8420 = vtanh.pop %v5456
  %v8421 = vtanh.pop %v6772
  %v8422 = vtanh.pop %v8088
  %v8423 = vtanh.pop %v4142
  %v8424 = vtanh.pop %v5458
  %v8425 = vtanh.pop %v6774
  %v8426 = vtanh.pop %v8090
  %v8427 = vtanh.pop %v4145
  %v8428 = vtanh.pop %v5461
  %v8429 = vtanh.pop %v6777
  %v8430 = vtanh.pop %v8093
  %v8431 = vtanh.pop %v4147
  %v8432 = vtanh.pop %v5463
  %v8433 = vtanh.pop %v6779
  %v8434 = vtanh.pop %v8095
  %v8435 = vtanh.pop %v4150
  %v8436 = vtanh.pop %v5466
  %v8437 = vtanh.pop %v6782
  %v8438 = vtanh.pop %v8098
  %v8439 = vtanh.pop %v4152
  %v8440 = vtanh.pop %v5468
  %v8441 = vtanh.pop %v6784
  %v8442 = vtanh.pop %v8100
  %v8443 = vtanh.pop %v4155
  %v8444 = vtanh.pop %v5471
  %v8445 = vtanh.pop %v6787
  %v8446 = vtanh.pop %v8103
  %v8447 = vtanh.pop %v4157
  %v8448 = vtanh.pop %v5473
  %v8449 = vtanh.pop %v6789
  %v8450 = vtanh.pop %v8105
  %v8451 = vtanh.pop %v4160
  %v8452 = vtanh.pop %v5476
  %v8453 = vtanh.pop %v6792
  %v8454 = vtanh.pop %v8108
  %v8455 = vtanh.pop %v4162
  %v8456 = vtanh.pop %v5478
  %v8457 = vtanh.pop %v6794
  %v8458 = vtanh.pop %v8110
  %v8459 = vtanh.pop %v4165
  %v8460 = vtanh.pop %v5481
  %v8461 = vtanh.pop %v6797
  %v8462 = vtanh.pop %v8113
  %v8463 = vtanh.pop %v4167
  %v8464 = vtanh.pop %v5483
  %v8465 = vtanh.pop %v6799
  %v8466 = vtanh.pop %v8115
  %v8467 = vtanh.pop %v4170
  %v8468 = vtanh.pop %v5486
  %v8469 = vtanh.pop %v6802
  %v8470 = vtanh.pop %v8118
  %v8471 = vtanh.pop %v4172
  %v8472 = vtanh.pop %v5488
  %v8473 = vtanh.pop %v6804
  %v8474 = vtanh.pop %v8120
  %v8475 = vtanh.pop %v4175
  %v8476 = vtanh.pop %v5491
  %v8477 = vtanh.pop %v6807
  %v8478 = vtanh.pop %v8123
  %v8479 = vtanh.pop %v4177
  %v8480 = vtanh.pop %v5493
  %v8481 = vtanh.pop %v6809
  %v8482 = vtanh.pop %v8125
  %v8483 = vtanh.pop %v4180
  %v8484 = vtanh.pop %v5496
  %v8485 = vtanh.pop %v6812
  %v8486 = vtanh.pop %v8128
  %v8487 = vtanh.pop %v4182
  %v8488 = vtanh.pop %v5498
  %v8489 = vtanh.pop %v6814
  %v8490 = vtanh.pop %v8130
  %v8491 = vtanh.pop %v4185
  %v8492 = vtanh.pop %v5501
  %v8493 = vtanh.pop %v6817
  %v8494 = vtanh.pop %v8133
  %v8495 = vtanh.pop %v4187
  %v8496 = vtanh.pop %v5503
  %v8497 = vtanh.pop %v6819
  %v8498 = vtanh.pop %v8135
  %v8499 = vtanh.pop %v4190
  %v8500 = vtanh.pop %v5506
  %v8501 = vtanh.pop %v6822
  %v8502 = vtanh.pop %v8138
  %v8503 = vtanh.pop %v4192
  %v8504 = vtanh.pop %v5508
  %v8505 = vtanh.pop %v6824
  %v8506 = vtanh.pop %v8140
  %v8507 = vtanh.pop %v4195
  %v8508 = vtanh.pop %v5511
  %v8509 = vtanh.pop %v6827
  %v8510 = vtanh.pop %v8143
  %v8511 = vtanh.pop %v4197
  %v8512 = vtanh.pop %v5513
  %v8513 = vtanh.pop %v6829
  %v8514 = vtanh.pop %v8145
  %v8515 = vtanh.pop %v4200
  %v8516 = vtanh.pop %v5516
  %v8517 = vtanh.pop %v6832
  %v8518 = vtanh.pop %v8148
  %v8519 = vtanh.pop %v4202
  %v8520 = vtanh.pop %v5518
  %v8521 = vtanh.pop %v6834
  %v8522 = vtanh.pop %v8150
  %v8523 = vtanh.pop %v4205
  %v8524 = vtanh.pop %v5521
  %v8525 = vtanh.pop %v6837
  %v8526 = vtanh.pop %v8153
  %v8527 = vtanh.pop %v4207
  %v8528 = vtanh.pop %v5523
  %v8529 = vtanh.pop %v6839
  %v8530 = vtanh.pop %v8155
  %v8531 = vtanh.pop %v4210
  %v8532 = vtanh.pop %v5526
  %v8533 = vtanh.pop %v6842
  %v8534 = vtanh.pop %v8158
  %v8535 = vtanh.pop %v4212
  %v8536 = vtanh.pop %v5528
  %v8537 = vtanh.pop %v6844
  %v8538 = vtanh.pop %v8160
  %v8539 = vtanh.pop %v4215
  %v8540 = vtanh.pop %v5531
  %v8541 = vtanh.pop %v6847
  %v8542 = vtanh.pop %v8163
  %v8543 = vtanh.pop %v4217
  %v8544 = vtanh.pop %v5533
  %v8545 = vtanh.pop %v6849
  %v8546 = vtanh.pop %v8165
  %v8547 = vtanh.pop %v4220
  %v8548 = vtanh.pop %v5536
  %v8549 = vtanh.pop %v6852
  %v8550 = vtanh.pop %v8168
  %v8551 = vtanh.pop %v4222
  %v8552 = vtanh.pop %v5538
  %v8553 = vtanh.pop %v6854
  %v8554 = vtanh.pop %v8170
  %v8555 = vtanh.pop %v4225
  %v8556 = vtanh.pop %v5541
  %v8557 = vtanh.pop %v6857
  %v8558 = vtanh.pop %v8173
  %v8559 = vtanh.pop %v4227
  %v8560 = vtanh.pop %v5543
  %v8561 = vtanh.pop %v6859
  %v8562 = vtanh.pop %v8175
  %v8563 = vtanh.pop %v4230
  %v8564 = vtanh.pop %v5546
  %v8565 = vtanh.pop %v6862
  %v8566 = vtanh.pop %v8178
  %v8567 = vtanh.pop %v4232
  %v8568 = vtanh.pop %v5548
  %v8569 = vtanh.pop %v6864
  %v8570 = vtanh.pop %v8180
  %v8571 = vtanh.pop %v4235
  %v8572 = vtanh.pop %v5551
  %v8573 = vtanh.pop %v6867
  %v8574 = vtanh.pop %v8183
  %v8575 = vtanh.pop %v4237
  %v8576 = vtanh.pop %v5553
  %v8577 = vtanh.pop %v6869
  %v8578 = vtanh.pop %v8185
  %v8579 = vtanh.pop %v4240
  %v8580 = vtanh.pop %v5556
  %v8581 = vtanh.pop %v6872
  %v8582 = vtanh.pop %v8188
  %v8583 = vtanh.pop %v4242
  %v8584 = vtanh.pop %v5558
  %v8585 = vtanh.pop %v6874
  %v8586 = vtanh.pop %v8190
  %v8587 = vtanh.pop %v4245
  %v8588 = vtanh.pop %v5561
  %v8589 = vtanh.pop %v6877
  %v8590 = vtanh.pop %v8193
  %v8591 = vtanh.pop %v4247
  %v8592 = vtanh.pop %v5563
  %v8593 = vtanh.pop %v6879
  %v8594 = vtanh.pop %v8195
  %v8595 = vtanh.pop %v4250
  %v8596 = vtanh.pop %v5566
  %v8597 = vtanh.pop %v6882
  %v8598 = vtanh.pop %v8198
  %v8599 = vtanh.pop %v4252
  %v8600 = vtanh.pop %v5568
  %v8601 = vtanh.pop %v6884
  %v8602 = vtanh.pop %v8200
  %v8603 = vtanh.pop %v4255
  %v8604 = vtanh.pop %v5571
  %v8605 = vtanh.pop %v6887
  %v8606 = vtanh.pop %v8203
  %v8607 = vtanh.pop %v4257
  %v8608 = vtanh.pop %v5573
  %v8609 = vtanh.pop %v6889
  %v8610 = vtanh.pop %v8205
  %v8611 = vtanh.pop %v4260
  %v8612 = vtanh.pop %v5576
  %v8613 = vtanh.pop %v6892
  %v8614 = vtanh.pop %v8208
  %v8615 = vtanh.pop %v4262
  %v8616 = vtanh.pop %v5578
  %v8617 = vtanh.pop %v6894
  %v8618 = vtanh.pop %v8210
  %v8619 = vtanh.pop %v4265
  %v8620 = vtanh.pop %v5581
  %v8621 = vtanh.pop %v6897
  %v8622 = vtanh.pop %v8213
  %v8623 = vtanh.pop %v4267
  %v8624 = vtanh.pop %v5583
  %v8625 = vtanh.pop %v6899
  %v8626 = vtanh.pop %v8215
  %v8627 = vtanh.pop %v4270
  %v8628 = vtanh.pop %v5586
  %v8629 = vtanh.pop %v6902
  %v8630 = vtanh.pop %v8218
  %v8631 = vtanh.pop %v4272
  %v8632 = vtanh.pop %v5588
  %v8633 = vtanh.pop %v6904
  %v8634 = vtanh.pop %v8220
  %v8635 = vtanh.pop %v4275
  %v8636 = vtanh.pop %v5591
  %v8637 = vtanh.pop %v6907
  %v8638 = vtanh.pop %v8223
  %v8639 = vtanh.pop %v4277
  %v8640 = vtanh.pop %v5593
  %v8641 = vtanh.pop %v6909
  %v8642 = vtanh.pop %v8225
  %v8643 = vtanh.pop %v4280
  %v8644 = vtanh.pop %v5596
  %v8645 = vtanh.pop %v6912
  %v8646 = vtanh.pop %v8228
  %v8647 = vtanh.pop %v4282
  %v8648 = vtanh.pop %v5598
  %v8649 = vtanh.pop %v6914
  %v8650 = vtanh.pop %v8230
  %v8651 = vtanh.pop %v4285
  %v8652 = vtanh.pop %v5601
  %v8653 = vtanh.pop %v6917
  %v8654 = vtanh.pop %v8233
  %v8655 = vtanh.pop %v4287
  %v8656 = vtanh.pop %v5603
  %v8657 = vtanh.pop %v6919
  %v8658 = vtanh.pop %v8235
  %v8659 = vtanh.pop %v4290
  %v8660 = vtanh.pop %v5606
  %v8661 = vtanh.pop %v6922
  %v8662 = vtanh.pop %v8238
  %v8663 = vtanh.pop %v4292
  %v8664 = vtanh.pop %v5608
  %v8665 = vtanh.pop %v6924
  %v8666 = vtanh.pop %v8240
  %v8667 = vtanh.pop %v4295
  %v8668 = vtanh.pop %v5611
  %v8669 = vtanh.pop %v6927
  %v8670 = vtanh.pop %v8243
  %v8671 = vtanh.pop %v4297
  %v8672 = vtanh.pop %v5613
  %v8673 = vtanh.pop %v6929
  %v8674 = vtanh.pop %v8245
  %v8675 = vtanh.pop %v4300
  %v8676 = vtanh.pop %v5616
  %v8677 = vtanh.pop %v6932
  %v8678 = vtanh.pop %v8248
  %v8679 = vtanh.pop %v4302
  %v8680 = vtanh.pop %v5618
  %v8681 = vtanh.pop %v6934
  %v8682 = vtanh.pop %v8250
  %v8683 = vtanh.pop %v4305
  %v8684 = vtanh.pop %v5621
  %v8685 = vtanh.pop %v6937
  %v8686 = vtanh.pop %v8253
  %v8687 = vtanh.pop %v4307
  %v8688 = vtanh.pop %v5623
  %v8689 = vtanh.pop %v6939
  %v8690 = vtanh.pop %v8255
  %v8691 = vtanh.pop %v4310
  %v8692 = vtanh.pop %v5626
  %v8693 = vtanh.pop %v6942
  %v8694 = vtanh.pop %v8258
  %v8695 = vtanh.pop %v4312
  %v8696 = vtanh.pop %v5628
  %v8697 = vtanh.pop %v6944
  %v8698 = vtanh.pop %v8260
  %v8699 = vtanh.pop %v4315
  %v8700 = vtanh.pop %v5631
  %v8701 = vtanh.pop %v6947
  %v8702 = vtanh.pop %v8263
  %v8703 = vtanh.pop %v4317
  %v8704 = vtanh.pop %v5633
  %v8705 = vtanh.pop %v6949
  %v8706 = vtanh.pop %v8265
  %v8707 = vtanh.pop %v4320
  %v8708 = vtanh.pop %v5636
  %v8709 = vtanh.pop %v6952
  %v8710 = vtanh.pop %v8268
  %v8711 = vtanh.pop %v4322
  %v8712 = vtanh.pop %v5638
  %v8713 = vtanh.pop %v6954
  %v8714 = vtanh.pop %v8270
  %v8715 = vtanh.pop %v4325
  %v8716 = vtanh.pop %v5641
  %v8717 = vtanh.pop %v6957
  %v8718 = vtanh.pop %v8273
  %v8719 = vtanh.pop %v4327
  %v8720 = vtanh.pop %v5643
  %v8721 = vtanh.pop %v6959
  %v8722 = vtanh.pop %v8275
  %v8723 = vtanh.pop %v4330
  %v8724 = vtanh.pop %v5646
  %v8725 = vtanh.pop %v6962
  %v8726 = vtanh.pop %v8278
  %v8727 = vtanh.pop %v4332
  %v8728 = vtanh.pop %v5648
  %v8729 = vtanh.pop %v6964
  %v8730 = vtanh.pop %v8280
  %v8731 = vtanh.pop %v4335
  %v8732 = vtanh.pop %v5651
  %v8733 = vtanh.pop %v6967
  %v8734 = vtanh.pop %v8283
  %v8735 = vtanh.pop %v4337
  %v8736 = vtanh.pop %v5653
  %v8737 = vtanh.pop %v6969
  %v8738 = vtanh.pop %v8285
  %v8739 = vtanh.pop %v4340
  %v8740 = vtanh.pop %v5656
  %v8741 = vtanh.pop %v6972
  %v8742 = vtanh.pop %v8288
  %v8743 = vtanh.pop %v4342
  %v8744 = vtanh.pop %v5658
  %v8745 = vtanh.pop %v6974
  %v8746 = vtanh.pop %v8290
  %v8747 = vtanh.pop %v4345
  %v8748 = vtanh.pop %v5661
  %v8749 = vtanh.pop %v6977
  %v8750 = vtanh.pop %v8293
  %v8751 = vtanh.pop %v4347
  %v8752 = vtanh.pop %v5663
  %v8753 = vtanh.pop %v6979
  %v8754 = vtanh.pop %v8295
  %v8755 = vtanh.pop %v4350
  %v8756 = vtanh.pop %v5666
  %v8757 = vtanh.pop %v6982
  %v8758 = vtanh.pop %v8298
  %v8759 = vtanh.pop %v4352
  %v8760 = vtanh.pop %v5668
  %v8761 = vtanh.pop %v6984
  %v8762 = vtanh.pop %v8300
  %v8763 = vtanh.pop %v4355
  %v8764 = vtanh.pop %v5671
  %v8765 = vtanh.pop %v6987
  %v8766 = vtanh.pop %v8303
  %v8767 = vtanh.pop %v4357
  %v8768 = vtanh.pop %v5673
  %v8769 = vtanh.pop %v6989
  %v8770 = vtanh.pop %v8305
  %v8771 = vtanh.pop %v4360
  %v8772 = vtanh.pop %v5676
  %v8773 = vtanh.pop %v6992
  %v8774 = vtanh.pop %v8308
  %v8775 = vtanh.pop %v4362
  %v8776 = vtanh.pop %v5678
  %v8777 = vtanh.pop %v6994
  %v8778 = vtanh.pop %v8310
  %v8779 = vtanh.pop %v4365
  %v8780 = vtanh.pop %v5681
  %v8781 = vtanh.pop %v6997
  %v8782 = vtanh.pop %v8313
  %v8783 = vtanh.pop %v4367
  %v8784 = vtanh.pop %v5683
  %v8785 = vtanh.pop %v6999
  %v8786 = vtanh.pop %v8315
  %v8787 = vtanh.pop %v4370
  %v8788 = vtanh.pop %v5686
  %v8789 = vtanh.pop %v7002
  %v8790 = vtanh.pop %v8318
  %v8791 = vtanh.pop %v4372
  %v8792 = vtanh.pop %v5688
  %v8793 = vtanh.pop %v7004
  %v8794 = vtanh.pop %v8320
  %v8795 = vtanh.pop %v4375
  %v8796 = vtanh.pop %v5691
  %v8797 = vtanh.pop %v7007
  %v8798 = vtanh.pop %v8323
  %v8799 = vtanh.pop %v4377
  %v8800 = vtanh.pop %v5693
  %v8801 = vtanh.pop %v7009
  %v8802 = vtanh.pop %v8325
  %v8803 = vtanh.pop %v4380
  %v8804 = vtanh.pop %v5696
  %v8805 = vtanh.pop %v7012
  %v8806 = vtanh.pop %v8328
  %v8807 = vtanh.pop %v4382
  %v8808 = vtanh.pop %v5698
  %v8809 = vtanh.pop %v7014
  %v8810 = vtanh.pop %v8330
  %v8811 = vtanh.pop %v4385
  %v8812 = vtanh.pop %v5701
  %v8813 = vtanh.pop %v7017
  %v8814 = vtanh.pop %v8333
  %v8815 = vtanh.pop %v4387
  %v8816 = vtanh.pop %v5703
  %v8817 = vtanh.pop %v7019
  %v8818 = vtanh.pop %v8335
  %v8819 = vtanh.pop %v4390
  %v8820 = vtanh.pop %v5706
  %v8821 = vtanh.pop %v7022
  %v8822 = vtanh.pop %v8338
  %v8823 = vtanh.pop %v4392
  %v8824 = vtanh.pop %v5708
  %v8825 = vtanh.pop %v7024
  %v8826 = vtanh.pop %v8340
  %v8827 = vtanh.pop %v4395
  %v8828 = vtanh.pop %v5711
  %v8829 = vtanh.pop %v7027
  %v8830 = vtanh.pop %v8343
  %v8831 = vtanh.pop %v4397
  %v8832 = vtanh.pop %v5713
  %v8833 = vtanh.pop %v7029
  %v8834 = vtanh.pop %v8345
  %v8835 = vtanh.pop %v4400
  %v8836 = vtanh.pop %v5716
  %v8837 = vtanh.pop %v7032
  %v8838 = vtanh.pop %v8348
  %v8839 = vtanh.pop %v4402
  %v8840 = vtanh.pop %v5718
  %v8841 = vtanh.pop %v7034
  %v8842 = vtanh.pop %v8350
  %v8843 = vtanh.pop %v4405
  %v8844 = vtanh.pop %v5721
  %v8845 = vtanh.pop %v7037
  %v8846 = vtanh.pop %v8353
  %v8847 = vtanh.pop %v4407
  %v8848 = vtanh.pop %v5723
  %v8849 = vtanh.pop %v7039
  %v8850 = vtanh.pop %v8355
  %v8851 = vtanh.pop %v4410
  %v8852 = vtanh.pop %v5726
  %v8853 = vtanh.pop %v7042
  %v8854 = vtanh.pop %v8358
  %v8855 = vtanh.pop %v4412
  %v8856 = vtanh.pop %v5728
  %v8857 = vtanh.pop %v7044
  %v8858 = vtanh.pop %v8360
  %v8859 = vtanh.pop %v4415
  %v8860 = vtanh.pop %v5731
  %v8861 = vtanh.pop %v7047
  %v8862 = vtanh.pop %v8363
  %v8863 = vtanh.pop %v4417
  %v8864 = vtanh.pop %v5733
  %v8865 = vtanh.pop %v7049
  %v8866 = vtanh.pop %v8365
  %v8867 = vtanh.pop %v4420
  %v8868 = vtanh.pop %v5736
  %v8869 = vtanh.pop %v7052
  %v8870 = vtanh.pop %v8368
  %v8871 = vtanh.pop %v4422
  %v8872 = vtanh.pop %v5738
  %v8873 = vtanh.pop %v7054
  %v8874 = vtanh.pop %v8370
  %v8875 = vtanh.pop %v4425
  %v8876 = vtanh.pop %v5741
  %v8877 = vtanh.pop %v7057
  %v8878 = vtanh.pop %v8373
  %v8879 = vtanh.pop %v4427
  %v8880 = vtanh.pop %v5743
  %v8881 = vtanh.pop %v7059
  %v8882 = vtanh.pop %v8375
  %v8883 = vtanh.pop %v4430
  %v8884 = vtanh.pop %v5746
  %v8885 = vtanh.pop %v7062
  %v8886 = vtanh.pop %v8378
  %v8887 = vtanh.pop %v4432
  %v8888 = vtanh.pop %v5748
  %v8889 = vtanh.pop %v7064
  %v8890 = vtanh.pop %v8380
  %v8891 = vtanh.pop %v4435
  %v8892 = vtanh.pop %v5751
  %v8893 = vtanh.pop %v7067
  %v8894 = vtanh.pop %v8383
  %v8895 = vtanh.pop %v4437
  %v8896 = vtanh.pop %v5753
  %v8897 = vtanh.pop %v7069
  %v8898 = vtanh.pop %v8385
  %v8899 = vld [vmem:[%s2] sm:$0xff]
  %v8900 = vld [vmem:[%s2 + $0x8] sm:$0xff]
  %v8901 = vld [vmem:[%s2 + $0x10] sm:$0xff]
  %v8902 = vld [vmem:[%s2 + $0x18] sm:$0xff]
  %v8903 = vld [vmem:[%s2 + $0x20] sm:$0xff]
  %v8904 = vld [vmem:[%s2 + $0x28] sm:$0xff]
  %v8905 = vld [vmem:[%s2 + $0x30] sm:$0xff]
  %v8906 = vld [vmem:[%s2 + $0x38] sm:$0xff]
  %v8907 = vld [vmem:[%s2 + $0x40] sm:$0xff]
  %v8908 = vld [vmem:[%s2 + $0x48] sm:$0xff]
  %v8909 = vld [vmem:[%s2 + $0x50] sm:$0xff]
  %v8910 = vld [vmem:[%s2 + $0x58] sm:$0xff]
  %v8911 = vld [vmem:[%s2 + $0x60] sm:$0xff]
  %v8912 = vld [vmem:[%s2 + $0x68] sm:$0xff]
  %v8913 = vld [vmem:[%s2 + $0x70] sm:$0xff]
  %v8914 = vld [vmem:[%s2 + $0x78] sm:$0xff]
  %v8915 = vld [vmem:[%s2 + $0x80] sm:$0xff]
  %v8916 = vld [vmem:[%s2 + $0x88] sm:$0xff]
  %v8917 = vld [vmem:[%s2 + $0x90] sm:$0xff]
  %v8918 = vld [vmem:[%s2 + $0x98] sm:$0xff]
  %v8919 = vld [vmem:[%s2 + $0xa0] sm:$0xff]
  %v8920 = vld [vmem:[%s2 + $0xa8] sm:$0xff]
  %v8921 = vld [vmem:[%s2 + $0xb0] sm:$0xff]
  %v8922 = vld [vmem:[%s2 + $0xb8] sm:$0xff]
  %v8923 = vld [vmem:[%s2 + $0xc0] sm:$0xff]
  %v8924 = vld [vmem:[%s2 + $0xc8] sm:$0xff]
  %v8925 = vld [vmem:[%s2 + $0xd0] sm:$0xff]
  %v8926 = vld [vmem:[%s2 + $0xd8] sm:$0xff]
  %v8927 = vld [vmem:[%s2 + $0xe0] sm:$0xff]
  %v8928 = vld [vmem:[%s2 + $0xe8] sm:$0xff]
  %v8929 = vld [vmem:[%s2 + $0xf0] sm:$0xff]
  %v8930 = vld [vmem:[%s2 + $0xf8] sm:$0xff]
  %v8931 = vld [vmem:[%s2 + $0x100] sm:$0xff]
  %v8932 = vld [vmem:[%s2 + $0x108] sm:$0xff]
  %v8933 = vld [vmem:[%s2 + $0x110] sm:$0xff]
  %v8934 = vld [vmem:[%s2 + $0x118] sm:$0xff]
  %v8935 = vld [vmem:[%s2 + $0x120] sm:$0xff]
  %v8936 = vld [vmem:[%s2 + $0x128] sm:$0xff]
  %v8937 = vld [vmem:[%s2 + $0x130] sm:$0xff]
  %v8938 = vld [vmem:[%s2 + $0x138] sm:$0xff]
  %v8939 = vld [vmem:[%s2 + $0x140] sm:$0xff]
  %v8940 = vld [vmem:[%s2 + $0x148] sm:$0xff]
  %v8941 = vld [vmem:[%s2 + $0x150] sm:$0xff]
  %v8942 = vld [vmem:[%s2 + $0x158] sm:$0xff]
  %v8943 = vld [vmem:[%s2 + $0x160] sm:$0xff]
  %v8944 = vld [vmem:[%s2 + $0x168] sm:$0xff]
  %v8945 = vld [vmem:[%s2 + $0x170] sm:$0xff]
  %v8946 = vld [vmem:[%s2 + $0x178] sm:$0xff]
  %v8947 = vld [vmem:[%s2 + $0x180] sm:$0xff]
  %v8948 = vld [vmem:[%s2 + $0x188] sm:$0xff]
  %v8949 = vld [vmem:[%s2 + $0x190] sm:$0xff]
  %v8950 = vld [vmem:[%s2 + $0x198] sm:$0xff]
  %v8951 = vld [vmem:[%s2 + $0x1a0] sm:$0xff]
  %v8952 = vld [vmem:[%s2 + $0x1a8] sm:$0xff]
  %v8953 = vld [vmem:[%s2 + $0x1b0] sm:$0xff]
  %v8954 = vld [vmem:[%s2 + $0x1b8] sm:$0xff]
  %v8955 = vld [vmem:[%s2 + $0x1c0] sm:$0xff]
  %v8956 = vld [vmem:[%s2 + $0x1c8] sm:$0xff]
  %v8957 = vld [vmem:[%s2 + $0x1d0] sm:$0xff]
  %v8958 = vld [vmem:[%s2 + $0x1d8] sm:$0xff]
  %v8959 = vld [vmem:[%s2 + $0x1e0] sm:$0xff]
  %v8960 = vld [vmem:[%s2 + $0x1e8] sm:$0xff]
  %v8961 = vld [vmem:[%s2 + $0x1f0] sm:$0xff]
  %v8962 = vld [vmem:[%s2 + $0x1f8] sm:$0xff]
  %v8963 = vld [vmem:[%s2 + $0x200] sm:$0xff]
  %v8964 = vld [vmem:[%s2 + $0x208] sm:$0xff]
  %v8965 = vld [vmem:[%s2 + $0x210] sm:$0xff]
  %v8966 = vld [vmem:[%s2 + $0x218] sm:$0xff]
  %v8967 = vld [vmem:[%s2 + $0x220] sm:$0xff]
  %v8968 = vld [vmem:[%s2 + $0x228] sm:$0xff]
  %v8969 = vld [vmem:[%s2 + $0x230] sm:$0xff]
  %v8970 = vld [vmem:[%s2 + $0x238] sm:$0xff]
  %v8971 = vld [vmem:[%s2 + $0x240] sm:$0xff]
  %v8972 = vld [vmem:[%s2 + $0x248] sm:$0xff]
  %v8973 = vld [vmem:[%s2 + $0x250] sm:$0xff]
  %v8974 = vld [vmem:[%s2 + $0x258] sm:$0xff]
  %v8975 = vld [vmem:[%s2 + $0x260] sm:$0xff]
  %v8976 = vld [vmem:[%s2 + $0x268] sm:$0xff]
  %v8977 = vld [vmem:[%s2 + $0x270] sm:$0xff]
  %v8978 = vld [vmem:[%s2 + $0x278] sm:$0xff]
  %v8979 = vld [vmem:[%s2 + $0x280] sm:$0xff]
  %v8980 = vld [vmem:[%s2 + $0x288] sm:$0xff]
  %v8981 = vld [vmem:[%s2 + $0x290] sm:$0xff]
  %v8982 = vld [vmem:[%s2 + $0x298] sm:$0xff]
  %v8983 = vld [vmem:[%s2 + $0x2a0] sm:$0xff]
  %v8984 = vld [vmem:[%s2 + $0x2a8] sm:$0xff]
  %v8985 = vld [vmem:[%s2 + $0x2b0] sm:$0xff]
  %v8986 = vld [vmem:[%s2 + $0x2b8] sm:$0xff]
  %v8987 = vld [vmem:[%s2 + $0x2c0] sm:$0xff]
  %v8988 = vld [vmem:[%s2 + $0x2c8] sm:$0xff]
  %v8989 = vld [vmem:[%s2 + $0x2d0] sm:$0xff]
  %v8990 = vld [vmem:[%s2 + $0x2d8] sm:$0xff]
  %v8991 = vld [vmem:[%s2 + $0x2e0] sm:$0xff]
  %v8992 = vld [vmem:[%s2 + $0x2e8] sm:$0xff]
  %v8993 = vld [vmem:[%s2 + $0x2f0] sm:$0xff]
  %v8994 = vld [vmem:[%s2 + $0x2f8] sm:$0xff]
  %v8995 = vld [vmem:[%s2 + $0x300] sm:$0xff]
  %v8996 = vld [vmem:[%s2 + $0x308] sm:$0xff]
  %v8997 = vld [vmem:[%s2 + $0x310] sm:$0xff]
  %v8998 = vld [vmem:[%s2 + $0x318] sm:$0xff]
  %v8999 = vld [vmem:[%s2 + $0x320] sm:$0xff]
  %v9000 = vld [vmem:[%s2 + $0x328] sm:$0xff]
  %v9001 = vld [vmem:[%s2 + $0x330] sm:$0xff]
  %v9002 = vld [vmem:[%s2 + $0x338] sm:$0xff]
  %v9003 = vld [vmem:[%s2 + $0x340] sm:$0xff]
  %v9004 = vld [vmem:[%s2 + $0x348] sm:$0xff]
  %v9005 = vld [vmem:[%s2 + $0x350] sm:$0xff]
  %v9006 = vld [vmem:[%s2 + $0x358] sm:$0xff]
  %v9007 = vld [vmem:[%s2 + $0x360] sm:$0xff]
  %v9008 = vld [vmem:[%s2 + $0x368] sm:$0xff]
  %v9009 = vld [vmem:[%s2 + $0x370] sm:$0xff]
  %v9010 = vld [vmem:[%s2 + $0x378] sm:$0xff]
  %v9011 = vld [vmem:[%s2 + $0x380] sm:$0xff]
  %v9012 = vld [vmem:[%s2 + $0x388] sm:$0xff]
  %v9013 = vld [vmem:[%s2 + $0x390] sm:$0xff]
  %v9014 = vld [vmem:[%s2 + $0x398] sm:$0xff]
  %v9015 = vld [vmem:[%s2 + $0x3a0] sm:$0xff]
  %v9016 = vld [vmem:[%s2 + $0x3a8] sm:$0xff]
  %v9017 = vld [vmem:[%s2 + $0x3b0] sm:$0xff]
  %v9018 = vld [vmem:[%s2 + $0x3b8] sm:$0xff]
  %v9019 = vld [vmem:[%s2 + $0x3c0] sm:$0xff]
  %v9020 = vld [vmem:[%s2 + $0x3c8] sm:$0xff]
  %v9021 = vld [vmem:[%s2 + $0x3d0] sm:$0xff]
  %v9022 = vld [vmem:[%s2 + $0x3d8] sm:$0xff]
  %v9023 = vld [vmem:[%s2 + $0x3e0] sm:$0xff]
  %v9024 = vld [vmem:[%s2 + $0x3e8] sm:$0xff]
  %v9025 = vld [vmem:[%s2 + $0x3f0] sm:$0xff]
  %v9026 = vld [vmem:[%s2 + $0x3f8] sm:$0xff]
  %9028 = vset.pattern.permute.xlu0 0
  %9029 = vperm.xlu0 %9028, %v8899
  %v9030 = vpop.permute.xlu0 %9029
  %9033 = vset.pattern.permute.xlu0 0
  %9034 = vperm.xlu0 %9033, %v8900
  %v9035 = vpop.permute.xlu0 %9034
  %9038 = vset.pattern.permute.xlu0 0
  %9039 = vperm.xlu0 %9038, %v8901
  %v9040 = vpop.permute.xlu0 %9039
  %9043 = vset.pattern.permute.xlu0 0
  %9044 = vperm.xlu0 %9043, %v8902
  %v9045 = vpop.permute.xlu0 %9044
  %9048 = vset.pattern.permute.xlu0 0
  %9049 = vperm.xlu0 %9048, %v8903
  %v9050 = vpop.permute.xlu0 %9049
  %9053 = vset.pattern.permute.xlu0 0
  %9054 = vperm.xlu0 %9053, %v8904
  %v9055 = vpop.permute.xlu0 %9054
  %9058 = vset.pattern.permute.xlu0 0
  %9059 = vperm.xlu0 %9058, %v8905
  %v9060 = vpop.permute.xlu0 %9059
  %9063 = vset.pattern.permute.xlu0 0
  %9064 = vperm.xlu0 %9063, %v8906
  %v9065 = vpop.permute.xlu0 %9064
  %9068 = vset.pattern.permute.xlu0 0
  %9069 = vperm.xlu0 %9068, %v8907
  %v9070 = vpop.permute.xlu0 %9069
  %9073 = vset.pattern.permute.xlu0 0
  %9074 = vperm.xlu0 %9073, %v8908
  %v9075 = vpop.permute.xlu0 %9074
  %9078 = vset.pattern.permute.xlu0 0
  %9079 = vperm.xlu0 %9078, %v8909
  %v9080 = vpop.permute.xlu0 %9079
  %9083 = vset.pattern.permute.xlu0 0
  %9084 = vperm.xlu0 %9083, %v8910
  %v9085 = vpop.permute.xlu0 %9084
  %9088 = vset.pattern.permute.xlu0 0
  %9089 = vperm.xlu0 %9088, %v8911
  %v9090 = vpop.permute.xlu0 %9089
  %9093 = vset.pattern.permute.xlu0 0
  %9094 = vperm.xlu0 %9093, %v8912
  %v9095 = vpop.permute.xlu0 %9094
  %9098 = vset.pattern.permute.xlu0 0
  %9099 = vperm.xlu0 %9098, %v8913
  %v9100 = vpop.permute.xlu0 %9099
  %9103 = vset.pattern.permute.xlu0 0
  %9104 = vperm.xlu0 %9103, %v8914
  %v9105 = vpop.permute.xlu0 %9104
  %9108 = vset.pattern.permute.xlu0 0
  %9109 = vperm.xlu0 %9108, %v8915
  %v9110 = vpop.permute.xlu0 %9109
  %9113 = vset.pattern.permute.xlu0 0
  %9114 = vperm.xlu0 %9113, %v8916
  %v9115 = vpop.permute.xlu0 %9114
  %9118 = vset.pattern.permute.xlu0 0
  %9119 = vperm.xlu0 %9118, %v8917
  %v9120 = vpop.permute.xlu0 %9119
  %9123 = vset.pattern.permute.xlu0 0
  %9124 = vperm.xlu0 %9123, %v8918
  %v9125 = vpop.permute.xlu0 %9124
  %9128 = vset.pattern.permute.xlu0 0
  %9129 = vperm.xlu0 %9128, %v8919
  %v9130 = vpop.permute.xlu0 %9129
  %9133 = vset.pattern.permute.xlu0 0
  %9134 = vperm.xlu0 %9133, %v8920
  %v9135 = vpop.permute.xlu0 %9134
  %9138 = vset.pattern.permute.xlu0 0
  %9139 = vperm.xlu0 %9138, %v8921
  %v9140 = vpop.permute.xlu0 %9139
  %9143 = vset.pattern.permute.xlu0 0
  %9144 = vperm.xlu0 %9143, %v8922
  %v9145 = vpop.permute.xlu0 %9144
  %9148 = vset.pattern.permute.xlu0 0
  %9149 = vperm.xlu0 %9148, %v8923
  %v9150 = vpop.permute.xlu0 %9149
  %9153 = vset.pattern.permute.xlu0 0
  %9154 = vperm.xlu0 %9153, %v8924
  %v9155 = vpop.permute.xlu0 %9154
  %9158 = vset.pattern.permute.xlu0 0
  %9159 = vperm.xlu0 %9158, %v8925
  %v9160 = vpop.permute.xlu0 %9159
  %9163 = vset.pattern.permute.xlu0 0
  %9164 = vperm.xlu0 %9163, %v8926
  %v9165 = vpop.permute.xlu0 %9164
  %9168 = vset.pattern.permute.xlu0 0
  %9169 = vperm.xlu0 %9168, %v8927
  %v9170 = vpop.permute.xlu0 %9169
  %9173 = vset.pattern.permute.xlu0 0
  %9174 = vperm.xlu0 %9173, %v8928
  %v9175 = vpop.permute.xlu0 %9174
  %9178 = vset.pattern.permute.xlu0 0
  %9179 = vperm.xlu0 %9178, %v8929
  %v9180 = vpop.permute.xlu0 %9179
  %9183 = vset.pattern.permute.xlu0 0
  %9184 = vperm.xlu0 %9183, %v8930
  %v9185 = vpop.permute.xlu0 %9184
  %9188 = vset.pattern.permute.xlu0 0
  %9189 = vperm.xlu0 %9188, %v8931
  %v9190 = vpop.permute.xlu0 %9189
  %9193 = vset.pattern.permute.xlu0 0
  %9194 = vperm.xlu0 %9193, %v8932
  %v9195 = vpop.permute.xlu0 %9194
  %9198 = vset.pattern.permute.xlu0 0
  %9199 = vperm.xlu0 %9198, %v8933
  %v9200 = vpop.permute.xlu0 %9199
  %9203 = vset.pattern.permute.xlu0 0
  %9204 = vperm.xlu0 %9203, %v8934
  %v9205 = vpop.permute.xlu0 %9204
  %9208 = vset.pattern.permute.xlu0 0
  %9209 = vperm.xlu0 %9208, %v8935
  %v9210 = vpop.permute.xlu0 %9209
  %9213 = vset.pattern.permute.xlu0 0
  %9214 = vperm.xlu0 %9213, %v8936
  %v9215 = vpop.permute.xlu0 %9214
  %9218 = vset.pattern.permute.xlu0 0
  %9219 = vperm.xlu0 %9218, %v8937
  %v9220 = vpop.permute.xlu0 %9219
  %9223 = vset.pattern.permute.xlu0 0
  %9224 = vperm.xlu0 %9223, %v8938
  %v9225 = vpop.permute.xlu0 %9224
  %9228 = vset.pattern.permute.xlu0 0
  %9229 = vperm.xlu0 %9228, %v8939
  %v9230 = vpop.permute.xlu0 %9229
  %9233 = vset.pattern.permute.xlu0 0
  %9234 = vperm.xlu0 %9233, %v8940
  %v9235 = vpop.permute.xlu0 %9234
  %9238 = vset.pattern.permute.xlu0 0
  %9239 = vperm.xlu0 %9238, %v8941
  %v9240 = vpop.permute.xlu0 %9239
  %9243 = vset.pattern.permute.xlu0 0
  %9244 = vperm.xlu0 %9243, %v8942
  %v9245 = vpop.permute.xlu0 %9244
  %9248 = vset.pattern.permute.xlu0 0
  %9249 = vperm.xlu0 %9248, %v8943
  %v9250 = vpop.permute.xlu0 %9249
  %9253 = vset.pattern.permute.xlu0 0
  %9254 = vperm.xlu0 %9253, %v8944
  %v9255 = vpop.permute.xlu0 %9254
  %9258 = vset.pattern.permute.xlu0 0
  %9259 = vperm.xlu0 %9258, %v8945
  %v9260 = vpop.permute.xlu0 %9259
  %9263 = vset.pattern.permute.xlu0 0
  %9264 = vperm.xlu0 %9263, %v8946
  %v9265 = vpop.permute.xlu0 %9264
  %9268 = vset.pattern.permute.xlu0 0
  %9269 = vperm.xlu0 %9268, %v8947
  %v9270 = vpop.permute.xlu0 %9269
  %9273 = vset.pattern.permute.xlu0 0
  %9274 = vperm.xlu0 %9273, %v8948
  %v9275 = vpop.permute.xlu0 %9274
  %9278 = vset.pattern.permute.xlu0 0
  %9279 = vperm.xlu0 %9278, %v8949
  %v9280 = vpop.permute.xlu0 %9279
  %9283 = vset.pattern.permute.xlu0 0
  %9284 = vperm.xlu0 %9283, %v8950
  %v9285 = vpop.permute.xlu0 %9284
  %9288 = vset.pattern.permute.xlu0 0
  %9289 = vperm.xlu0 %9288, %v8951
  %v9290 = vpop.permute.xlu0 %9289
  %9293 = vset.pattern.permute.xlu0 0
  %9294 = vperm.xlu0 %9293, %v8952
  %v9295 = vpop.permute.xlu0 %9294
  %9298 = vset.pattern.permute.xlu0 0
  %9299 = vperm.xlu0 %9298, %v8953
  %v9300 = vpop.permute.xlu0 %9299
  %9303 = vset.pattern.permute.xlu0 0
  %9304 = vperm.xlu0 %9303, %v8954
  %v9305 = vpop.permute.xlu0 %9304
  %9308 = vset.pattern.permute.xlu0 0
  %9309 = vperm.xlu0 %9308, %v8955
  %v9310 = vpop.permute.xlu0 %9309
  %9313 = vset.pattern.permute.xlu0 0
  %9314 = vperm.xlu0 %9313, %v8956
  %v9315 = vpop.permute.xlu0 %9314
  %9318 = vset.pattern.permute.xlu0 0
  %9319 = vperm.xlu0 %9318, %v8957
  %v9320 = vpop.permute.xlu0 %9319
  %9323 = vset.pattern.permute.xlu0 0
  %9324 = vperm.xlu0 %9323, %v8958
  %v9325 = vpop.permute.xlu0 %9324
  %9328 = vset.pattern.permute.xlu0 0
  %9329 = vperm.xlu0 %9328, %v8959
  %v9330 = vpop.permute.xlu0 %9329
  %9333 = vset.pattern.permute.xlu0 0
  %9334 = vperm.xlu0 %9333, %v8960
  %v9335 = vpop.permute.xlu0 %9334
  %9338 = vset.pattern.permute.xlu0 0
  %9339 = vperm.xlu0 %9338, %v8961
  %v9340 = vpop.permute.xlu0 %9339
  %9343 = vset.pattern.permute.xlu0 0
  %9344 = vperm.xlu0 %9343, %v8962
  %v9345 = vpop.permute.xlu0 %9344
  %9348 = vset.pattern.permute.xlu0 0
  %9349 = vperm.xlu0 %9348, %v8963
  %v9350 = vpop.permute.xlu0 %9349
  %9353 = vset.pattern.permute.xlu0 0
  %9354 = vperm.xlu0 %9353, %v8964
  %v9355 = vpop.permute.xlu0 %9354
  %9358 = vset.pattern.permute.xlu0 0
  %9359 = vperm.xlu0 %9358, %v8965
  %v9360 = vpop.permute.xlu0 %9359
  %9363 = vset.pattern.permute.xlu0 0
  %9364 = vperm.xlu0 %9363, %v8966
  %v9365 = vpop.permute.xlu0 %9364
  %9368 = vset.pattern.permute.xlu0 0
  %9369 = vperm.xlu0 %9368, %v8967
  %v9370 = vpop.permute.xlu0 %9369
  %9373 = vset.pattern.permute.xlu0 0
  %9374 = vperm.xlu0 %9373, %v8968
  %v9375 = vpop.permute.xlu0 %9374
  %9378 = vset.pattern.permute.xlu0 0
  %9379 = vperm.xlu0 %9378, %v8969
  %v9380 = vpop.permute.xlu0 %9379
  %9383 = vset.pattern.permute.xlu0 0
  %9384 = vperm.xlu0 %9383, %v8970
  %v9385 = vpop.permute.xlu0 %9384
  %9388 = vset.pattern.permute.xlu0 0
  %9389 = vperm.xlu0 %9388, %v8971
  %v9390 = vpop.permute.xlu0 %9389
  %9393 = vset.pattern.permute.xlu0 0
  %9394 = vperm.xlu0 %9393, %v8972
  %v9395 = vpop.permute.xlu0 %9394
  %9398 = vset.pattern.permute.xlu0 0
  %9399 = vperm.xlu0 %9398, %v8973
  %v9400 = vpop.permute.xlu0 %9399
  %9403 = vset.pattern.permute.xlu0 0
  %9404 = vperm.xlu0 %9403, %v8974
  %v9405 = vpop.permute.xlu0 %9404
  %9408 = vset.pattern.permute.xlu0 0
  %9409 = vperm.xlu0 %9408, %v8975
  %v9410 = vpop.permute.xlu0 %9409
  %9413 = vset.pattern.permute.xlu0 0
  %9414 = vperm.xlu0 %9413, %v8976
  %v9415 = vpop.permute.xlu0 %9414
  %9418 = vset.pattern.permute.xlu0 0
  %9419 = vperm.xlu0 %9418, %v8977
  %v9420 = vpop.permute.xlu0 %9419
  %9423 = vset.pattern.permute.xlu0 0
  %9424 = vperm.xlu0 %9423, %v8978
  %v9425 = vpop.permute.xlu0 %9424
  %9428 = vset.pattern.permute.xlu0 0
  %9429 = vperm.xlu0 %9428, %v8979
  %v9430 = vpop.permute.xlu0 %9429
  %9433 = vset.pattern.permute.xlu0 0
  %9434 = vperm.xlu0 %9433, %v8980
  %v9435 = vpop.permute.xlu0 %9434
  %9438 = vset.pattern.permute.xlu0 0
  %9439 = vperm.xlu0 %9438, %v8981
  %v9440 = vpop.permute.xlu0 %9439
  %9443 = vset.pattern.permute.xlu0 0
  %9444 = vperm.xlu0 %9443, %v8982
  %v9445 = vpop.permute.xlu0 %9444
  %9448 = vset.pattern.permute.xlu0 0
  %9449 = vperm.xlu0 %9448, %v8983
  %v9450 = vpop.permute.xlu0 %9449
  %9453 = vset.pattern.permute.xlu0 0
  %9454 = vperm.xlu0 %9453, %v8984
  %v9455 = vpop.permute.xlu0 %9454
  %9458 = vset.pattern.permute.xlu0 0
  %9459 = vperm.xlu0 %9458, %v8985
  %v9460 = vpop.permute.xlu0 %9459
  %9463 = vset.pattern.permute.xlu0 0
  %9464 = vperm.xlu0 %9463, %v8986
  %v9465 = vpop.permute.xlu0 %9464
  %9468 = vset.pattern.permute.xlu0 0
  %9469 = vperm.xlu0 %9468, %v8987
  %v9470 = vpop.permute.xlu0 %9469
  %9473 = vset.pattern.permute.xlu0 0
  %9474 = vperm.xlu0 %9473, %v8988
  %v9475 = vpop.permute.xlu0 %9474
  %9478 = vset.pattern.permute.xlu0 0
  %9479 = vperm.xlu0 %9478, %v8989
  %v9480 = vpop.permute.xlu0 %9479
  %9483 = vset.pattern.permute.xlu0 0
  %9484 = vperm.xlu0 %9483, %v8990
  %v9485 = vpop.permute.xlu0 %9484
  %9488 = vset.pattern.permute.xlu0 0
  %9489 = vperm.xlu0 %9488, %v8991
  %v9490 = vpop.permute.xlu0 %9489
  %9493 = vset.pattern.permute.xlu0 0
  %9494 = vperm.xlu0 %9493, %v8992
  %v9495 = vpop.permute.xlu0 %9494
  %9498 = vset.pattern.permute.xlu0 0
  %9499 = vperm.xlu0 %9498, %v8993
  %v9500 = vpop.permute.xlu0 %9499
  %9503 = vset.pattern.permute.xlu0 0
  %9504 = vperm.xlu0 %9503, %v8994
  %v9505 = vpop.permute.xlu0 %9504
  %9508 = vset.pattern.permute.xlu0 0
  %9509 = vperm.xlu0 %9508, %v8995
  %v9510 = vpop.permute.xlu0 %9509
  %9513 = vset.pattern.permute.xlu0 0
  %9514 = vperm.xlu0 %9513, %v8996
  %v9515 = vpop.permute.xlu0 %9514
  %9518 = vset.pattern.permute.xlu0 0
  %9519 = vperm.xlu0 %9518, %v8997
  %v9520 = vpop.permute.xlu0 %9519
  %9523 = vset.pattern.permute.xlu0 0
  %9524 = vperm.xlu0 %9523, %v8998
  %v9525 = vpop.permute.xlu0 %9524
  %9528 = vset.pattern.permute.xlu0 0
  %9529 = vperm.xlu0 %9528, %v8999
  %v9530 = vpop.permute.xlu0 %9529
  %9533 = vset.pattern.permute.xlu0 0
  %9534 = vperm.xlu0 %9533, %v9000
  %v9535 = vpop.permute.xlu0 %9534
  %9538 = vset.pattern.permute.xlu0 0
  %9539 = vperm.xlu0 %9538, %v9001
  %v9540 = vpop.permute.xlu0 %9539
  %9543 = vset.pattern.permute.xlu0 0
  %9544 = vperm.xlu0 %9543, %v9002
  %v9545 = vpop.permute.xlu0 %9544
  %9548 = vset.pattern.permute.xlu0 0
  %9549 = vperm.xlu0 %9548, %v9003
  %v9550 = vpop.permute.xlu0 %9549
  %9553 = vset.pattern.permute.xlu0 0
  %9554 = vperm.xlu0 %9553, %v9004
  %v9555 = vpop.permute.xlu0 %9554
  %9558 = vset.pattern.permute.xlu0 0
  %9559 = vperm.xlu0 %9558, %v9005
  %v9560 = vpop.permute.xlu0 %9559
  %9563 = vset.pattern.permute.xlu0 0
  %9564 = vperm.xlu0 %9563, %v9006
  %v9565 = vpop.permute.xlu0 %9564
  %9568 = vset.pattern.permute.xlu0 0
  %9569 = vperm.xlu0 %9568, %v9007
  %v9570 = vpop.permute.xlu0 %9569
  %9573 = vset.pattern.permute.xlu0 0
  %9574 = vperm.xlu0 %9573, %v9008
  %v9575 = vpop.permute.xlu0 %9574
  %9578 = vset.pattern.permute.xlu0 0
  %9579 = vperm.xlu0 %9578, %v9009
  %v9580 = vpop.permute.xlu0 %9579
  %9583 = vset.pattern.permute.xlu0 0
  %9584 = vperm.xlu0 %9583, %v9010
  %v9585 = vpop.permute.xlu0 %9584
  %9588 = vset.pattern.permute.xlu0 0
  %9589 = vperm.xlu0 %9588, %v9011
  %v9590 = vpop.permute.xlu0 %9589
  %9593 = vset.pattern.permute.xlu0 0
  %9594 = vperm.xlu0 %9593, %v9012
  %v9595 = vpop.permute.xlu0 %9594
  %9598 = vset.pattern.permute.xlu0 0
  %9599 = vperm.xlu0 %9598, %v9013
  %v9600 = vpop.permute.xlu0 %9599
  %9603 = vset.pattern.permute.xlu0 0
  %9604 = vperm.xlu0 %9603, %v9014
  %v9605 = vpop.permute.xlu0 %9604
  %9608 = vset.pattern.permute.xlu0 0
  %9609 = vperm.xlu0 %9608, %v9015
  %v9610 = vpop.permute.xlu0 %9609
  %9613 = vset.pattern.permute.xlu0 0
  %9614 = vperm.xlu0 %9613, %v9016
  %v9615 = vpop.permute.xlu0 %9614
  %9618 = vset.pattern.permute.xlu0 0
  %9619 = vperm.xlu0 %9618, %v9017
  %v9620 = vpop.permute.xlu0 %9619
  %9623 = vset.pattern.permute.xlu0 0
  %9624 = vperm.xlu0 %9623, %v9018
  %v9625 = vpop.permute.xlu0 %9624
  %9628 = vset.pattern.permute.xlu0 0
  %9629 = vperm.xlu0 %9628, %v9019
  %v9630 = vpop.permute.xlu0 %9629
  %9633 = vset.pattern.permute.xlu0 0
  %9634 = vperm.xlu0 %9633, %v9020
  %v9635 = vpop.permute.xlu0 %9634
  %9638 = vset.pattern.permute.xlu0 0
  %9639 = vperm.xlu0 %9638, %v9021
  %v9640 = vpop.permute.xlu0 %9639
  %9643 = vset.pattern.permute.xlu0 0
  %9644 = vperm.xlu0 %9643, %v9022
  %v9645 = vpop.permute.xlu0 %9644
  %9648 = vset.pattern.permute.xlu0 0
  %9649 = vperm.xlu0 %9648, %v9023
  %v9650 = vpop.permute.xlu0 %9649
  %9653 = vset.pattern.permute.xlu0 0
  %9654 = vperm.xlu0 %9653, %v9024
  %v9655 = vpop.permute.xlu0 %9654
  %9658 = vset.pattern.permute.xlu0 0
  %9659 = vperm.xlu0 %9658, %v9025
  %v9660 = vpop.permute.xlu0 %9659
  %9663 = vset.pattern.permute.xlu0 0
  %9664 = vperm.xlu0 %9663, %v9026
  %v9665 = vpop.permute.xlu0 %9664
  %v9667 = vmul.f32 %v8387, %v9030
  %v9668 = vmul.f32 %v8388, %v9030
  %v9669 = vmul.f32 %v8389, %v9030
  %v9670 = vmul.f32 %v8390, %v9030
  %v9671 = vmul.f32 %v8391, %v9035
  %v9672 = vmul.f32 %v8392, %v9035
  %v9673 = vmul.f32 %v8393, %v9035
  %v9674 = vmul.f32 %v8394, %v9035
  %v9675 = vmul.f32 %v8395, %v9040
  %v9676 = vmul.f32 %v8396, %v9040
  %v9677 = vmul.f32 %v8397, %v9040
  %v9678 = vmul.f32 %v8398, %v9040
  %v9679 = vmul.f32 %v8399, %v9045
  %v9680 = vmul.f32 %v8400, %v9045
  %v9681 = vmul.f32 %v8401, %v9045
  %v9682 = vmul.f32 %v8402, %v9045
  %v9683 = vmul.f32 %v8403, %v9050
  %v9684 = vmul.f32 %v8404, %v9050
  %v9685 = vmul.f32 %v8405, %v9050
  %v9686 = vmul.f32 %v8406, %v9050
  %v9687 = vmul.f32 %v8407, %v9055
  %v9688 = vmul.f32 %v8408, %v9055
  %v9689 = vmul.f32 %v8409, %v9055
  %v9690 = vmul.f32 %v8410, %v9055
  %v9691 = vmul.f32 %v8411, %v9060
  %v9692 = vmul.f32 %v8412, %v9060
  %v9693 = vmul.f32 %v8413, %v9060
  %v9694 = vmul.f32 %v8414, %v9060
  %v9695 = vmul.f32 %v8415, %v9065
  %v9696 = vmul.f32 %v8416, %v9065
  %v9697 = vmul.f32 %v8417, %v9065
  %v9698 = vmul.f32 %v8418, %v9065
  %v9699 = vmul.f32 %v8419, %v9070
  %v9700 = vmul.f32 %v8420, %v9070
  %v9701 = vmul.f32 %v8421, %v9070
  %v9702 = vmul.f32 %v8422, %v9070
  %v9703 = vmul.f32 %v8423, %v9075
  %v9704 = vmul.f32 %v8424, %v9075
  %v9705 = vmul.f32 %v8425, %v9075
  %v9706 = vmul.f32 %v8426, %v9075
  %v9707 = vmul.f32 %v8427, %v9080
  %v9708 = vmul.f32 %v8428, %v9080
  %v9709 = vmul.f32 %v8429, %v9080
  %v9710 = vmul.f32 %v8430, %v9080
  %v9711 = vmul.f32 %v8431, %v9085
  %v9712 = vmul.f32 %v8432, %v9085
  %v9713 = vmul.f32 %v8433, %v9085
  %v9714 = vmul.f32 %v8434, %v9085
  %v9715 = vmul.f32 %v8435, %v9090
  %v9716 = vmul.f32 %v8436, %v9090
  %v9717 = vmul.f32 %v8437, %v9090
  %v9718 = vmul.f32 %v8438, %v9090
  %v9719 = vmul.f32 %v8439, %v9095
  %v9720 = vmul.f32 %v8440, %v9095
  %v9721 = vmul.f32 %v8441, %v9095
  %v9722 = vmul.f32 %v8442, %v9095
  %v9723 = vmul.f32 %v8443, %v9100
  %v9724 = vmul.f32 %v8444, %v9100
  %v9725 = vmul.f32 %v8445, %v9100
  %v9726 = vmul.f32 %v8446, %v9100
  %v9727 = vmul.f32 %v8447, %v9105
  %v9728 = vmul.f32 %v8448, %v9105
  %v9729 = vmul.f32 %v8449, %v9105
  %v9730 = vmul.f32 %v8450, %v9105
  %v9731 = vmul.f32 %v8451, %v9110
  %v9732 = vmul.f32 %v8452, %v9110
  %v9733 = vmul.f32 %v8453, %v9110
  %v9734 = vmul.f32 %v8454, %v9110
  %v9735 = vmul.f32 %v8455, %v9115
  %v9736 = vmul.f32 %v8456, %v9115
  %v9737 = vmul.f32 %v8457, %v9115
  %v9738 = vmul.f32 %v8458, %v9115
  %v9739 = vmul.f32 %v8459, %v9120
  %v9740 = vmul.f32 %v8460, %v9120
  %v9741 = vmul.f32 %v8461, %v9120
  %v9742 = vmul.f32 %v8462, %v9120
  %v9743 = vmul.f32 %v8463, %v9125
  %v9744 = vmul.f32 %v8464, %v9125
  %v9745 = vmul.f32 %v8465, %v9125
  %v9746 = vmul.f32 %v8466, %v9125
  %v9747 = vmul.f32 %v8467, %v9130
  %v9748 = vmul.f32 %v8468, %v9130
  %v9749 = vmul.f32 %v8469, %v9130
  %v9750 = vmul.f32 %v8470, %v9130
  %v9751 = vmul.f32 %v8471, %v9135
  %v9752 = vmul.f32 %v8472, %v9135
  %v9753 = vmul.f32 %v8473, %v9135
  %v9754 = vmul.f32 %v8474, %v9135
  %v9755 = vmul.f32 %v8475, %v9140
  %v9756 = vmul.f32 %v8476, %v9140
  %v9757 = vmul.f32 %v8477, %v9140
  %v9758 = vmul.f32 %v8478, %v9140
  %v9759 = vmul.f32 %v8479, %v9145
  %v9760 = vmul.f32 %v8480, %v9145
  %v9761 = vmul.f32 %v8481, %v9145
  %v9762 = vmul.f32 %v8482, %v9145
  %v9763 = vmul.f32 %v8483, %v9150
  %v9764 = vmul.f32 %v8484, %v9150
  %v9765 = vmul.f32 %v8485, %v9150
  %v9766 = vmul.f32 %v8486, %v9150
  %v9767 = vmul.f32 %v8487, %v9155
  %v9768 = vmul.f32 %v8488, %v9155
  %v9769 = vmul.f32 %v8489, %v9155
  %v9770 = vmul.f32 %v8490, %v9155
  %v9771 = vmul.f32 %v8491, %v9160
  %v9772 = vmul.f32 %v8492, %v9160
  %v9773 = vmul.f32 %v8493, %v9160
  %v9774 = vmul.f32 %v8494, %v9160
  %v9775 = vmul.f32 %v8495, %v9165
  %v9776 = vmul.f32 %v8496, %v9165
  %v9777 = vmul.f32 %v8497, %v9165
  %v9778 = vmul.f32 %v8498, %v9165
  %v9779 = vmul.f32 %v8499, %v9170
  %v9780 = vmul.f32 %v8500, %v9170
  %v9781 = vmul.f32 %v8501, %v9170
  %v9782 = vmul.f32 %v8502, %v9170
  %v9783 = vmul.f32 %v8503, %v9175
  %v9784 = vmul.f32 %v8504, %v9175
  %v9785 = vmul.f32 %v8505, %v9175
  %v9786 = vmul.f32 %v8506, %v9175
  %v9787 = vmul.f32 %v8507, %v9180
  %v9788 = vmul.f32 %v8508, %v9180
  %v9789 = vmul.f32 %v8509, %v9180
  %v9790 = vmul.f32 %v8510, %v9180
  %v9791 = vmul.f32 %v8511, %v9185
  %v9792 = vmul.f32 %v8512, %v9185
  %v9793 = vmul.f32 %v8513, %v9185
  %v9794 = vmul.f32 %v8514, %v9185
  %v9795 = vmul.f32 %v8515, %v9190
  %v9796 = vmul.f32 %v8516, %v9190
  %v9797 = vmul.f32 %v8517, %v9190
  %v9798 = vmul.f32 %v8518, %v9190
  %v9799 = vmul.f32 %v8519, %v9195
  %v9800 = vmul.f32 %v8520, %v9195
  %v9801 = vmul.f32 %v8521, %v9195
  %v9802 = vmul.f32 %v8522, %v9195
  %v9803 = vmul.f32 %v8523, %v9200
  %v9804 = vmul.f32 %v8524, %v9200
  %v9805 = vmul.f32 %v8525, %v9200
  %v9806 = vmul.f32 %v8526, %v9200
  %v9807 = vmul.f32 %v8527, %v9205
  %v9808 = vmul.f32 %v8528, %v9205
  %v9809 = vmul.f32 %v8529, %v9205
  %v9810 = vmul.f32 %v8530, %v9205
  %v9811 = vmul.f32 %v8531, %v9210
  %v9812 = vmul.f32 %v8532, %v9210
  %v9813 = vmul.f32 %v8533, %v9210
  %v9814 = vmul.f32 %v8534, %v9210
  %v9815 = vmul.f32 %v8535, %v9215
  %v9816 = vmul.f32 %v8536, %v9215
  %v9817 = vmul.f32 %v8537, %v9215
  %v9818 = vmul.f32 %v8538, %v9215
  %v9819 = vmul.f32 %v8539, %v9220
  %v9820 = vmul.f32 %v8540, %v9220
  %v9821 = vmul.f32 %v8541, %v9220
  %v9822 = vmul.f32 %v8542, %v9220
  %v9823 = vmul.f32 %v8543, %v9225
  %v9824 = vmul.f32 %v8544, %v9225
  %v9825 = vmul.f32 %v8545, %v9225
  %v9826 = vmul.f32 %v8546, %v9225
  %v9827 = vmul.f32 %v8547, %v9230
  %v9828 = vmul.f32 %v8548, %v9230
  %v9829 = vmul.f32 %v8549, %v9230
  %v9830 = vmul.f32 %v8550, %v9230
  %v9831 = vmul.f32 %v8551, %v9235
  %v9832 = vmul.f32 %v8552, %v9235
  %v9833 = vmul.f32 %v8553, %v9235
  %v9834 = vmul.f32 %v8554, %v9235
  %v9835 = vmul.f32 %v8555, %v9240
  %v9836 = vmul.f32 %v8556, %v9240
  %v9837 = vmul.f32 %v8557, %v9240
  %v9838 = vmul.f32 %v8558, %v9240
  %v9839 = vmul.f32 %v8559, %v9245
  %v9840 = vmul.f32 %v8560, %v9245
  %v9841 = vmul.f32 %v8561, %v9245
  %v9842 = vmul.f32 %v8562, %v9245
  %v9843 = vmul.f32 %v8563, %v9250
  %v9844 = vmul.f32 %v8564, %v9250
  %v9845 = vmul.f32 %v8565, %v9250
  %v9846 = vmul.f32 %v8566, %v9250
  %v9847 = vmul.f32 %v8567, %v9255
  %v9848 = vmul.f32 %v8568, %v9255
  %v9849 = vmul.f32 %v8569, %v9255
  %v9850 = vmul.f32 %v8570, %v9255
  %v9851 = vmul.f32 %v8571, %v9260
  %v9852 = vmul.f32 %v8572, %v9260
  %v9853 = vmul.f32 %v8573, %v9260
  %v9854 = vmul.f32 %v8574, %v9260
  %v9855 = vmul.f32 %v8575, %v9265
  %v9856 = vmul.f32 %v8576, %v9265
  %v9857 = vmul.f32 %v8577, %v9265
  %v9858 = vmul.f32 %v8578, %v9265
  %v9859 = vmul.f32 %v8579, %v9270
  %v9860 = vmul.f32 %v8580, %v9270
  %v9861 = vmul.f32 %v8581, %v9270
  %v9862 = vmul.f32 %v8582, %v9270
  %v9863 = vmul.f32 %v8583, %v9275
  %v9864 = vmul.f32 %v8584, %v9275
  %v9865 = vmul.f32 %v8585, %v9275
  %v9866 = vmul.f32 %v8586, %v9275
  %v9867 = vmul.f32 %v8587, %v9280
  %v9868 = vmul.f32 %v8588, %v9280
  %v9869 = vmul.f32 %v8589, %v9280
  %v9870 = vmul.f32 %v8590, %v9280
  %v9871 = vmul.f32 %v8591, %v9285
  %v9872 = vmul.f32 %v8592, %v9285
  %v9873 = vmul.f32 %v8593, %v9285
  %v9874 = vmul.f32 %v8594, %v9285
  %v9875 = vmul.f32 %v8595, %v9290
  %v9876 = vmul.f32 %v8596, %v9290
  %v9877 = vmul.f32 %v8597, %v9290
  %v9878 = vmul.f32 %v8598, %v9290
  %v9879 = vmul.f32 %v8599, %v9295
  %v9880 = vmul.f32 %v8600, %v9295
  %v9881 = vmul.f32 %v8601, %v9295
  %v9882 = vmul.f32 %v8602, %v9295
  %v9883 = vmul.f32 %v8603, %v9300
  %v9884 = vmul.f32 %v8604, %v9300
  %v9885 = vmul.f32 %v8605, %v9300
  %v9886 = vmul.f32 %v8606, %v9300
  %v9887 = vmul.f32 %v8607, %v9305
  %v9888 = vmul.f32 %v8608, %v9305
  %v9889 = vmul.f32 %v8609, %v9305
  %v9890 = vmul.f32 %v8610, %v9305
  %v9891 = vmul.f32 %v8611, %v9310
  %v9892 = vmul.f32 %v8612, %v9310
  %v9893 = vmul.f32 %v8613, %v9310
  %v9894 = vmul.f32 %v8614, %v9310
  %v9895 = vmul.f32 %v8615, %v9315
  %v9896 = vmul.f32 %v8616, %v9315
  %v9897 = vmul.f32 %v8617, %v9315
  %v9898 = vmul.f32 %v8618, %v9315
  %v9899 = vmul.f32 %v8619, %v9320
  %v9900 = vmul.f32 %v8620, %v9320
  %v9901 = vmul.f32 %v8621, %v9320
  %v9902 = vmul.f32 %v8622, %v9320
  %v9903 = vmul.f32 %v8623, %v9325
  %v9904 = vmul.f32 %v8624, %v9325
  %v9905 = vmul.f32 %v8625, %v9325
  %v9906 = vmul.f32 %v8626, %v9325
  %v9907 = vmul.f32 %v8627, %v9330
  %v9908 = vmul.f32 %v8628, %v9330
  %v9909 = vmul.f32 %v8629, %v9330
  %v9910 = vmul.f32 %v8630, %v9330
  %v9911 = vmul.f32 %v8631, %v9335
  %v9912 = vmul.f32 %v8632, %v9335
  %v9913 = vmul.f32 %v8633, %v9335
  %v9914 = vmul.f32 %v8634, %v9335
  %v9915 = vmul.f32 %v8635, %v9340
  %v9916 = vmul.f32 %v8636, %v9340
  %v9917 = vmul.f32 %v8637, %v9340
  %v9918 = vmul.f32 %v8638, %v9340
  %v9919 = vmul.f32 %v8639, %v9345
  %v9920 = vmul.f32 %v8640, %v9345
  %v9921 = vmul.f32 %v8641, %v9345
  %v9922 = vmul.f32 %v8642, %v9345
  %v9923 = vmul.f32 %v8643, %v9350
  %v9924 = vmul.f32 %v8644, %v9350
  %v9925 = vmul.f32 %v8645, %v9350
  %v9926 = vmul.f32 %v8646, %v9350
  %v9927 = vmul.f32 %v8647, %v9355
  %v9928 = vmul.f32 %v8648, %v9355
  %v9929 = vmul.f32 %v8649, %v9355
  %v9930 = vmul.f32 %v8650, %v9355
  %v9931 = vmul.f32 %v8651, %v9360
  %v9932 = vmul.f32 %v8652, %v9360
  %v9933 = vmul.f32 %v8653, %v9360
  %v9934 = vmul.f32 %v8654, %v9360
  %v9935 = vmul.f32 %v8655, %v9365
  %v9936 = vmul.f32 %v8656, %v9365
  %v9937 = vmul.f32 %v8657, %v9365
  %v9938 = vmul.f32 %v8658, %v9365
  %v9939 = vmul.f32 %v8659, %v9370
  %v9940 = vmul.f32 %v8660, %v9370
  %v9941 = vmul.f32 %v8661, %v9370
  %v9942 = vmul.f32 %v8662, %v9370
  %v9943 = vmul.f32 %v8663, %v9375
  %v9944 = vmul.f32 %v8664, %v9375
  %v9945 = vmul.f32 %v8665, %v9375
  %v9946 = vmul.f32 %v8666, %v9375
  %v9947 = vmul.f32 %v8667, %v9380
  %v9948 = vmul.f32 %v8668, %v9380
  %v9949 = vmul.f32 %v8669, %v9380
  %v9950 = vmul.f32 %v8670, %v9380
  %v9951 = vmul.f32 %v8671, %v9385
  %v9952 = vmul.f32 %v8672, %v9385
  %v9953 = vmul.f32 %v8673, %v9385
  %v9954 = vmul.f32 %v8674, %v9385
  %v9955 = vmul.f32 %v8675, %v9390
  %v9956 = vmul.f32 %v8676, %v9390
  %v9957 = vmul.f32 %v8677, %v9390
  %v9958 = vmul.f32 %v8678, %v9390
  %v9959 = vmul.f32 %v8679, %v9395
  %v9960 = vmul.f32 %v8680, %v9395
  %v9961 = vmul.f32 %v8681, %v9395
  %v9962 = vmul.f32 %v8682, %v9395
  %v9963 = vmul.f32 %v8683, %v9400
  %v9964 = vmul.f32 %v8684, %v9400
  %v9965 = vmul.f32 %v8685, %v9400
  %v9966 = vmul.f32 %v8686, %v9400
  %v9967 = vmul.f32 %v8687, %v9405
  %v9968 = vmul.f32 %v8688, %v9405
  %v9969 = vmul.f32 %v8689, %v9405
  %v9970 = vmul.f32 %v8690, %v9405
  %v9971 = vmul.f32 %v8691, %v9410
  %v9972 = vmul.f32 %v8692, %v9410
  %v9973 = vmul.f32 %v8693, %v9410
  %v9974 = vmul.f32 %v8694, %v9410
  %v9975 = vmul.f32 %v8695, %v9415
  %v9976 = vmul.f32 %v8696, %v9415
  %v9977 = vmul.f32 %v8697, %v9415
  %v9978 = vmul.f32 %v8698, %v9415
  %v9979 = vmul.f32 %v8699, %v9420
  %v9980 = vmul.f32 %v8700, %v9420
  %v9981 = vmul.f32 %v8701, %v9420
  %v9982 = vmul.f32 %v8702, %v9420
  %v9983 = vmul.f32 %v8703, %v9425
  %v9984 = vmul.f32 %v8704, %v9425
  %v9985 = vmul.f32 %v8705, %v9425
  %v9986 = vmul.f32 %v8706, %v9425
  %v9987 = vmul.f32 %v8707, %v9430
  %v9988 = vmul.f32 %v8708, %v9430
  %v9989 = vmul.f32 %v8709, %v9430
  %v9990 = vmul.f32 %v8710, %v9430
  %v9991 = vmul.f32 %v8711, %v9435
  %v9992 = vmul.f32 %v8712, %v9435
  %v9993 = vmul.f32 %v8713, %v9435
  %v9994 = vmul.f32 %v8714, %v9435
  %v9995 = vmul.f32 %v8715, %v9440
  %v9996 = vmul.f32 %v8716, %v9440
  %v9997 = vmul.f32 %v8717, %v9440
  %v9998 = vmul.f32 %v8718, %v9440
  %v9999 = vmul.f32 %v8719, %v9445
  %v10000 = vmul.f32 %v8720, %v9445
  %v10001 = vmul.f32 %v8721, %v9445
  %v10002 = vmul.f32 %v8722, %v9445
  %v10003 = vmul.f32 %v8723, %v9450
  %v10004 = vmul.f32 %v8724, %v9450
  %v10005 = vmul.f32 %v8725, %v9450
  %v10006 = vmul.f32 %v8726, %v9450
  %v10007 = vmul.f32 %v8727, %v9455
  %v10008 = vmul.f32 %v8728, %v9455
  %v10009 = vmul.f32 %v8729, %v9455
  %v10010 = vmul.f32 %v8730, %v9455
  %v10011 = vmul.f32 %v8731, %v9460
  %v10012 = vmul.f32 %v8732, %v9460
  %v10013 = vmul.f32 %v8733, %v9460
  %v10014 = vmul.f32 %v8734, %v9460
  %v10015 = vmul.f32 %v8735, %v9465
  %v10016 = vmul.f32 %v8736, %v9465
  %v10017 = vmul.f32 %v8737, %v9465
  %v10018 = vmul.f32 %v8738, %v9465
  %v10019 = vmul.f32 %v8739, %v9470
  %v10020 = vmul.f32 %v8740, %v9470
  %v10021 = vmul.f32 %v8741, %v9470
  %v10022 = vmul.f32 %v8742, %v9470
  %v10023 = vmul.f32 %v8743, %v9475
  %v10024 = vmul.f32 %v8744, %v9475
  %v10025 = vmul.f32 %v8745, %v9475
  %v10026 = vmul.f32 %v8746, %v9475
  %v10027 = vmul.f32 %v8747, %v9480
  %v10028 = vmul.f32 %v8748, %v9480
  %v10029 = vmul.f32 %v8749, %v9480
  %v10030 = vmul.f32 %v8750, %v9480
  %v10031 = vmul.f32 %v8751, %v9485
  %v10032 = vmul.f32 %v8752, %v9485
  %v10033 = vmul.f32 %v8753, %v9485
  %v10034 = vmul.f32 %v8754, %v9485
  %v10035 = vmul.f32 %v8755, %v9490
  %v10036 = vmul.f32 %v8756, %v9490
  %v10037 = vmul.f32 %v8757, %v9490
  %v10038 = vmul.f32 %v8758, %v9490
  %v10039 = vmul.f32 %v8759, %v9495
  %v10040 = vmul.f32 %v8760, %v9495
  %v10041 = vmul.f32 %v8761, %v9495
  %v10042 = vmul.f32 %v8762, %v9495
  %v10043 = vmul.f32 %v8763, %v9500
  %v10044 = vmul.f32 %v8764, %v9500
  %v10045 = vmul.f32 %v8765, %v9500
  %v10046 = vmul.f32 %v8766, %v9500
  %v10047 = vmul.f32 %v8767, %v9505
  %v10048 = vmul.f32 %v8768, %v9505
  %v10049 = vmul.f32 %v8769, %v9505
  %v10050 = vmul.f32 %v8770, %v9505
  %v10051 = vmul.f32 %v8771, %v9510
  %v10052 = vmul.f32 %v8772, %v9510
  %v10053 = vmul.f32 %v8773, %v9510
  %v10054 = vmul.f32 %v8774, %v9510
  %v10055 = vmul.f32 %v8775, %v9515
  %v10056 = vmul.f32 %v8776, %v9515
  %v10057 = vmul.f32 %v8777, %v9515
  %v10058 = vmul.f32 %v8778, %v9515
  %v10059 = vmul.f32 %v8779, %v9520
  %v10060 = vmul.f32 %v8780, %v9520
  %v10061 = vmul.f32 %v8781, %v9520
  %v10062 = vmul.f32 %v8782, %v9520
  %v10063 = vmul.f32 %v8783, %v9525
  %v10064 = vmul.f32 %v8784, %v9525
  %v10065 = vmul.f32 %v8785, %v9525
  %v10066 = vmul.f32 %v8786, %v9525
  %v10067 = vmul.f32 %v8787, %v9530
  %v10068 = vmul.f32 %v8788, %v9530
  %v10069 = vmul.f32 %v8789, %v9530
  %v10070 = vmul.f32 %v8790, %v9530
  %v10071 = vmul.f32 %v8791, %v9535
  %v10072 = vmul.f32 %v8792, %v9535
  %v10073 = vmul.f32 %v8793, %v9535
  %v10074 = vmul.f32 %v8794, %v9535
  %v10075 = vmul.f32 %v8795, %v9540
  %v10076 = vmul.f32 %v8796, %v9540
  %v10077 = vmul.f32 %v8797, %v9540
  %v10078 = vmul.f32 %v8798, %v9540
  %v10079 = vmul.f32 %v8799, %v9545
  %v10080 = vmul.f32 %v8800, %v9545
  %v10081 = vmul.f32 %v8801, %v9545
  %v10082 = vmul.f32 %v8802, %v9545
  %v10083 = vmul.f32 %v8803, %v9550
  %v10084 = vmul.f32 %v8804, %v9550
  %v10085 = vmul.f32 %v8805, %v9550
  %v10086 = vmul.f32 %v8806, %v9550
  %v10087 = vmul.f32 %v8807, %v9555
  %v10088 = vmul.f32 %v8808, %v9555
  %v10089 = vmul.f32 %v8809, %v9555
  %v10090 = vmul.f32 %v8810, %v9555
  %v10091 = vmul.f32 %v8811, %v9560
  %v10092 = vmul.f32 %v8812, %v9560
  %v10093 = vmul.f32 %v8813, %v9560
  %v10094 = vmul.f32 %v8814, %v9560
  %v10095 = vmul.f32 %v8815, %v9565
  %v10096 = vmul.f32 %v8816, %v9565
  %v10097 = vmul.f32 %v8817, %v9565
  %v10098 = vmul.f32 %v8818, %v9565
  %v10099 = vmul.f32 %v8819, %v9570
  %v10100 = vmul.f32 %v8820, %v9570
  %v10101 = vmul.f32 %v8821, %v9570
  %v10102 = vmul.f32 %v8822, %v9570
  %v10103 = vmul.f32 %v8823, %v9575
  %v10104 = vmul.f32 %v8824, %v9575
  %v10105 = vmul.f32 %v8825, %v9575
  %v10106 = vmul.f32 %v8826, %v9575
  %v10107 = vmul.f32 %v8827, %v9580
  %v10108 = vmul.f32 %v8828, %v9580
  %v10109 = vmul.f32 %v8829, %v9580
  %v10110 = vmul.f32 %v8830, %v9580
  %v10111 = vmul.f32 %v8831, %v9585
  %v10112 = vmul.f32 %v8832, %v9585
  %v10113 = vmul.f32 %v8833, %v9585
  %v10114 = vmul.f32 %v8834, %v9585
  %v10115 = vmul.f32 %v8835, %v9590
  %v10116 = vmul.f32 %v8836, %v9590
  %v10117 = vmul.f32 %v8837, %v9590
  %v10118 = vmul.f32 %v8838, %v9590
  %v10119 = vmul.f32 %v8839, %v9595
  %v10120 = vmul.f32 %v8840, %v9595
  %v10121 = vmul.f32 %v8841, %v9595
  %v10122 = vmul.f32 %v8842, %v9595
  %v10123 = vmul.f32 %v8843, %v9600
  %v10124 = vmul.f32 %v8844, %v9600
  %v10125 = vmul.f32 %v8845, %v9600
  %v10126 = vmul.f32 %v8846, %v9600
  %v10127 = vmul.f32 %v8847, %v9605
  %v10128 = vmul.f32 %v8848, %v9605
  %v10129 = vmul.f32 %v8849, %v9605
  %v10130 = vmul.f32 %v8850, %v9605
  %v10131 = vmul.f32 %v8851, %v9610
  %v10132 = vmul.f32 %v8852, %v9610
  %v10133 = vmul.f32 %v8853, %v9610
  %v10134 = vmul.f32 %v8854, %v9610
  %v10135 = vmul.f32 %v8855, %v9615
  %v10136 = vmul.f32 %v8856, %v9615
  %v10137 = vmul.f32 %v8857, %v9615
  %v10138 = vmul.f32 %v8858, %v9615
  %v10139 = vmul.f32 %v8859, %v9620
  %v10140 = vmul.f32 %v8860, %v9620
  %v10141 = vmul.f32 %v8861, %v9620
  %v10142 = vmul.f32 %v8862, %v9620
  %v10143 = vmul.f32 %v8863, %v9625
  %v10144 = vmul.f32 %v8864, %v9625
  %v10145 = vmul.f32 %v8865, %v9625
  %v10146 = vmul.f32 %v8866, %v9625
  %v10147 = vmul.f32 %v8867, %v9630
  %v10148 = vmul.f32 %v8868, %v9630
  %v10149 = vmul.f32 %v8869, %v9630
  %v10150 = vmul.f32 %v8870, %v9630
  %v10151 = vmul.f32 %v8871, %v9635
  %v10152 = vmul.f32 %v8872, %v9635
  %v10153 = vmul.f32 %v8873, %v9635
  %v10154 = vmul.f32 %v8874, %v9635
  %v10155 = vmul.f32 %v8875, %v9640
  %v10156 = vmul.f32 %v8876, %v9640
  %v10157 = vmul.f32 %v8877, %v9640
  %v10158 = vmul.f32 %v8878, %v9640
  %v10159 = vmul.f32 %v8879, %v9645
  %v10160 = vmul.f32 %v8880, %v9645
  %v10161 = vmul.f32 %v8881, %v9645
  %v10162 = vmul.f32 %v8882, %v9645
  %v10163 = vmul.f32 %v8883, %v9650
  %v10164 = vmul.f32 %v8884, %v9650
  %v10165 = vmul.f32 %v8885, %v9650
  %v10166 = vmul.f32 %v8886, %v9650
  %v10167 = vmul.f32 %v8887, %v9655
  %v10168 = vmul.f32 %v8888, %v9655
  %v10169 = vmul.f32 %v8889, %v9655
  %v10170 = vmul.f32 %v8890, %v9655
  %v10171 = vmul.f32 %v8891, %v9660
  %v10172 = vmul.f32 %v8892, %v9660
  %v10173 = vmul.f32 %v8893, %v9660
  %v10174 = vmul.f32 %v8894, %v9660
  %v10175 = vmul.f32 %v8895, %v9665
  %v10176 = vmul.f32 %v8896, %v9665
  %v10177 = vmul.f32 %v8897, %v9665
  %v10178 = vmul.f32 %v8898, %v9665
  %v10179 = vadd.f32 %v9667, %v9671
  %v10180 = vadd.f32 %v10179, %v9675
  %v10181 = vadd.f32 %v10180, %v9679
  %v10182 = vadd.f32 %v10181, %v9683
  %v10183 = vadd.f32 %v10182, %v9687
  %v10184 = vadd.f32 %v10183, %v9691
  %v10185 = vadd.f32 %v10184, %v9695
  %v10186 = vadd.f32 %v10185, %v9699
  %v10187 = vadd.f32 %v10186, %v9703
  %v10188 = vadd.f32 %v10187, %v9707
  %v10189 = vadd.f32 %v10188, %v9711
  %v10190 = vadd.f32 %v10189, %v9715
  %v10191 = vadd.f32 %v10190, %v9719
  %v10192 = vadd.f32 %v10191, %v9723
  %v10193 = vadd.f32 %v10192, %v9727
  %v10194 = vadd.f32 %v10193, %v9731
  %v10195 = vadd.f32 %v10194, %v9735
  %v10196 = vadd.f32 %v10195, %v9739
  %v10197 = vadd.f32 %v10196, %v9743
  %v10198 = vadd.f32 %v10197, %v9747
  %v10199 = vadd.f32 %v10198, %v9751
  %v10200 = vadd.f32 %v10199, %v9755
  %v10201 = vadd.f32 %v10200, %v9759
  %v10202 = vadd.f32 %v10201, %v9763
  %v10203 = vadd.f32 %v10202, %v9767
  %v10204 = vadd.f32 %v10203, %v9771
  %v10205 = vadd.f32 %v10204, %v9775
  %v10206 = vadd.f32 %v10205, %v9779
  %v10207 = vadd.f32 %v10206, %v9783
  %v10208 = vadd.f32 %v10207, %v9787
  %v10209 = vadd.f32 %v10208, %v9791
  %v10210 = vadd.f32 %v10209, %v9795
  %v10211 = vadd.f32 %v10210, %v9799
  %v10212 = vadd.f32 %v10211, %v9803
  %v10213 = vadd.f32 %v10212, %v9807
  %v10214 = vadd.f32 %v10213, %v9811
  %v10215 = vadd.f32 %v10214, %v9815
  %v10216 = vadd.f32 %v10215, %v9819
  %v10217 = vadd.f32 %v10216, %v9823
  %v10218 = vadd.f32 %v10217, %v9827
  %v10219 = vadd.f32 %v10218, %v9831
  %v10220 = vadd.f32 %v10219, %v9835
  %v10221 = vadd.f32 %v10220, %v9839
  %v10222 = vadd.f32 %v10221, %v9843
  %v10223 = vadd.f32 %v10222, %v9847
  %v10224 = vadd.f32 %v10223, %v9851
  %v10225 = vadd.f32 %v10224, %v9855
  %v10226 = vadd.f32 %v10225, %v9859
  %v10227 = vadd.f32 %v10226, %v9863
  %v10228 = vadd.f32 %v10227, %v9867
  %v10229 = vadd.f32 %v10228, %v9871
  %v10230 = vadd.f32 %v10229, %v9875
  %v10231 = vadd.f32 %v10230, %v9879
  %v10232 = vadd.f32 %v10231, %v9883
  %v10233 = vadd.f32 %v10232, %v9887
  %v10234 = vadd.f32 %v10233, %v9891
  %v10235 = vadd.f32 %v10234, %v9895
  %v10236 = vadd.f32 %v10235, %v9899
  %v10237 = vadd.f32 %v10236, %v9903
  %v10238 = vadd.f32 %v10237, %v9907
  %v10239 = vadd.f32 %v10238, %v9911
  %v10240 = vadd.f32 %v10239, %v9915
  %v10241 = vadd.f32 %v10240, %v9919
  %v10242 = vadd.f32 %v10241, %v9923
  %v10243 = vadd.f32 %v10242, %v9927
  %v10244 = vadd.f32 %v10243, %v9931
  %v10245 = vadd.f32 %v10244, %v9935
  %v10246 = vadd.f32 %v10245, %v9939
  %v10247 = vadd.f32 %v10246, %v9943
  %v10248 = vadd.f32 %v10247, %v9947
  %v10249 = vadd.f32 %v10248, %v9951
  %v10250 = vadd.f32 %v10249, %v9955
  %v10251 = vadd.f32 %v10250, %v9959
  %v10252 = vadd.f32 %v10251, %v9963
  %v10253 = vadd.f32 %v10252, %v9967
  %v10254 = vadd.f32 %v10253, %v9971
  %v10255 = vadd.f32 %v10254, %v9975
  %v10256 = vadd.f32 %v10255, %v9979
  %v10257 = vadd.f32 %v10256, %v9983
  %v10258 = vadd.f32 %v10257, %v9987
  %v10259 = vadd.f32 %v10258, %v9991
  %v10260 = vadd.f32 %v10259, %v9995
  %v10261 = vadd.f32 %v10260, %v9999
  %v10262 = vadd.f32 %v10261, %v10003
  %v10263 = vadd.f32 %v10262, %v10007
  %v10264 = vadd.f32 %v10263, %v10011
  %v10265 = vadd.f32 %v10264, %v10015
  %v10266 = vadd.f32 %v10265, %v10019
  %v10267 = vadd.f32 %v10266, %v10023
  %v10268 = vadd.f32 %v10267, %v10027
  %v10269 = vadd.f32 %v10268, %v10031
  %v10270 = vadd.f32 %v10269, %v10035
  %v10271 = vadd.f32 %v10270, %v10039
  %v10272 = vadd.f32 %v10271, %v10043
  %v10273 = vadd.f32 %v10272, %v10047
  %v10274 = vadd.f32 %v10273, %v10051
  %v10275 = vadd.f32 %v10274, %v10055
  %v10276 = vadd.f32 %v10275, %v10059
  %v10277 = vadd.f32 %v10276, %v10063
  %v10278 = vadd.f32 %v10277, %v10067
  %v10279 = vadd.f32 %v10278, %v10071
  %v10280 = vadd.f32 %v10279, %v10075
  %v10281 = vadd.f32 %v10280, %v10079
  %v10282 = vadd.f32 %v10281, %v10083
  %v10283 = vadd.f32 %v10282, %v10087
  %v10284 = vadd.f32 %v10283, %v10091
  %v10285 = vadd.f32 %v10284, %v10095
  %v10286 = vadd.f32 %v10285, %v10099
  %v10287 = vadd.f32 %v10286, %v10103
  %v10288 = vadd.f32 %v10287, %v10107
  %v10289 = vadd.f32 %v10288, %v10111
  %v10290 = vadd.f32 %v10289, %v10115
  %v10291 = vadd.f32 %v10290, %v10119
  %v10292 = vadd.f32 %v10291, %v10123
  %v10293 = vadd.f32 %v10292, %v10127
  %v10294 = vadd.f32 %v10293, %v10131
  %v10295 = vadd.f32 %v10294, %v10135
  %v10296 = vadd.f32 %v10295, %v10139
  %v10297 = vadd.f32 %v10296, %v10143
  %v10298 = vadd.f32 %v10297, %v10147
  %v10299 = vadd.f32 %v10298, %v10151
  %v10300 = vadd.f32 %v10299, %v10155
  %v10301 = vadd.f32 %v10300, %v10159
  %v10302 = vadd.f32 %v10301, %v10163
  %v10303 = vadd.f32 %v10302, %v10167
  %v10304 = vadd.f32 %v10303, %v10171
  %v10305 = vadd.f32 %v10304, %v10175
  %v10306 = vrot.slane %v10305, 4
  %v10307 = vadd.f32 %v10305, %v10306
  %v10308 = vrot.slane %v10307, 2
  %v10309 = vadd.f32 %v10307, %v10308
  %v10310 = vrot.slane %v10309, 1
  %v10311 = vadd.f32 %v10309, %v10310
  %v10312 = vadd.f32 %v9668, %v9672
  %v10313 = vadd.f32 %v10312, %v9676
  %v10314 = vadd.f32 %v10313, %v9680
  %v10315 = vadd.f32 %v10314, %v9684
  %v10316 = vadd.f32 %v10315, %v9688
  %v10317 = vadd.f32 %v10316, %v9692
  %v10318 = vadd.f32 %v10317, %v9696
  %v10319 = vadd.f32 %v10318, %v9700
  %v10320 = vadd.f32 %v10319, %v9704
  %v10321 = vadd.f32 %v10320, %v9708
  %v10322 = vadd.f32 %v10321, %v9712
  %v10323 = vadd.f32 %v10322, %v9716
  %v10324 = vadd.f32 %v10323, %v9720
  %v10325 = vadd.f32 %v10324, %v9724
  %v10326 = vadd.f32 %v10325, %v9728
  %v10327 = vadd.f32 %v10326, %v9732
  %v10328 = vadd.f32 %v10327, %v9736
  %v10329 = vadd.f32 %v10328, %v9740
  %v10330 = vadd.f32 %v10329, %v9744
  %v10331 = vadd.f32 %v10330, %v9748
  %v10332 = vadd.f32 %v10331, %v9752
  %v10333 = vadd.f32 %v10332, %v9756
  %v10334 = vadd.f32 %v10333, %v9760
  %v10335 = vadd.f32 %v10334, %v9764
  %v10336 = vadd.f32 %v10335, %v9768
  %v10337 = vadd.f32 %v10336, %v9772
  %v10338 = vadd.f32 %v10337, %v9776
  %v10339 = vadd.f32 %v10338, %v9780
  %v10340 = vadd.f32 %v10339, %v9784
  %v10341 = vadd.f32 %v10340, %v9788
  %v10342 = vadd.f32 %v10341, %v9792
  %v10343 = vadd.f32 %v10342, %v9796
  %v10344 = vadd.f32 %v10343, %v9800
  %v10345 = vadd.f32 %v10344, %v9804
  %v10346 = vadd.f32 %v10345, %v9808
  %v10347 = vadd.f32 %v10346, %v9812
  %v10348 = vadd.f32 %v10347, %v9816
  %v10349 = vadd.f32 %v10348, %v9820
  %v10350 = vadd.f32 %v10349, %v9824
  %v10351 = vadd.f32 %v10350, %v9828
  %v10352 = vadd.f32 %v10351, %v9832
  %v10353 = vadd.f32 %v10352, %v9836
  %v10354 = vadd.f32 %v10353, %v9840
  %v10355 = vadd.f32 %v10354, %v9844
  %v10356 = vadd.f32 %v10355, %v9848
  %v10357 = vadd.f32 %v10356, %v9852
  %v10358 = vadd.f32 %v10357, %v9856
  %v10359 = vadd.f32 %v10358, %v9860
  %v10360 = vadd.f32 %v10359, %v9864
  %v10361 = vadd.f32 %v10360, %v9868
  %v10362 = vadd.f32 %v10361, %v9872
  %v10363 = vadd.f32 %v10362, %v9876
  %v10364 = vadd.f32 %v10363, %v9880
  %v10365 = vadd.f32 %v10364, %v9884
  %v10366 = vadd.f32 %v10365, %v9888
  %v10367 = vadd.f32 %v10366, %v9892
  %v10368 = vadd.f32 %v10367, %v9896
  %v10369 = vadd.f32 %v10368, %v9900
  %v10370 = vadd.f32 %v10369, %v9904
  %v10371 = vadd.f32 %v10370, %v9908
  %v10372 = vadd.f32 %v10371, %v9912
  %v10373 = vadd.f32 %v10372, %v9916
  %v10374 = vadd.f32 %v10373, %v9920
  %v10375 = vadd.f32 %v10374, %v9924
  %v10376 = vadd.f32 %v10375, %v9928
  %v10377 = vadd.f32 %v10376, %v9932
  %v10378 = vadd.f32 %v10377, %v9936
  %v10379 = vadd.f32 %v10378, %v9940
  %v10380 = vadd.f32 %v10379, %v9944
  %v10381 = vadd.f32 %v10380, %v9948
  %v10382 = vadd.f32 %v10381, %v9952
  %v10383 = vadd.f32 %v10382, %v9956
  %v10384 = vadd.f32 %v10383, %v9960
  %v10385 = vadd.f32 %v10384, %v9964
  %v10386 = vadd.f32 %v10385, %v9968
  %v10387 = vadd.f32 %v10386, %v9972
  %v10388 = vadd.f32 %v10387, %v9976
  %v10389 = vadd.f32 %v10388, %v9980
  %v10390 = vadd.f32 %v10389, %v9984
  %v10391 = vadd.f32 %v10390, %v9988
  %v10392 = vadd.f32 %v10391, %v9992
  %v10393 = vadd.f32 %v10392, %v9996
  %v10394 = vadd.f32 %v10393, %v10000
  %v10395 = vadd.f32 %v10394, %v10004
  %v10396 = vadd.f32 %v10395, %v10008
  %v10397 = vadd.f32 %v10396, %v10012
  %v10398 = vadd.f32 %v10397, %v10016
  %v10399 = vadd.f32 %v10398, %v10020
  %v10400 = vadd.f32 %v10399, %v10024
  %v10401 = vadd.f32 %v10400, %v10028
  %v10402 = vadd.f32 %v10401, %v10032
  %v10403 = vadd.f32 %v10402, %v10036
  %v10404 = vadd.f32 %v10403, %v10040
  %v10405 = vadd.f32 %v10404, %v10044
  %v10406 = vadd.f32 %v10405, %v10048
  %v10407 = vadd.f32 %v10406, %v10052
  %v10408 = vadd.f32 %v10407, %v10056
  %v10409 = vadd.f32 %v10408, %v10060
  %v10410 = vadd.f32 %v10409, %v10064
  %v10411 = vadd.f32 %v10410, %v10068
  %v10412 = vadd.f32 %v10411, %v10072
  %v10413 = vadd.f32 %v10412, %v10076
  %v10414 = vadd.f32 %v10413, %v10080
  %v10415 = vadd.f32 %v10414, %v10084
  %v10416 = vadd.f32 %v10415, %v10088
  %v10417 = vadd.f32 %v10416, %v10092
  %v10418 = vadd.f32 %v10417, %v10096
  %v10419 = vadd.f32 %v10418, %v10100
  %v10420 = vadd.f32 %v10419, %v10104
  %v10421 = vadd.f32 %v10420, %v10108
  %v10422 = vadd.f32 %v10421, %v10112
  %v10423 = vadd.f32 %v10422, %v10116
  %v10424 = vadd.f32 %v10423, %v10120
  %v10425 = vadd.f32 %v10424, %v10124
  %v10426 = vadd.f32 %v10425, %v10128
  %v10427 = vadd.f32 %v10426, %v10132
  %v10428 = vadd.f32 %v10427, %v10136
  %v10429 = vadd.f32 %v10428, %v10140
  %v10430 = vadd.f32 %v10429, %v10144
  %v10431 = vadd.f32 %v10430, %v10148
  %v10432 = vadd.f32 %v10431, %v10152
  %v10433 = vadd.f32 %v10432, %v10156
  %v10434 = vadd.f32 %v10433, %v10160
  %v10435 = vadd.f32 %v10434, %v10164
  %v10436 = vadd.f32 %v10435, %v10168
  %v10437 = vadd.f32 %v10436, %v10172
  %v10438 = vadd.f32 %v10437, %v10176
  %v10439 = vrot.slane %v10438, 4
  %v10440 = vadd.f32 %v10438, %v10439
  %v10441 = vrot.slane %v10440, 2
  %v10442 = vadd.f32 %v10440, %v10441
  %v10443 = vrot.slane %v10442, 1
  %v10444 = vadd.f32 %v10442, %v10443
  %v10445 = vadd.f32 %v9669, %v9673
  %v10446 = vadd.f32 %v10445, %v9677
  %v10447 = vadd.f32 %v10446, %v9681
  %v10448 = vadd.f32 %v10447, %v9685
  %v10449 = vadd.f32 %v10448, %v9689
  %v10450 = vadd.f32 %v10449, %v9693
  %v10451 = vadd.f32 %v10450, %v9697
  %v10452 = vadd.f32 %v10451, %v9701
  %v10453 = vadd.f32 %v10452, %v9705
  %v10454 = vadd.f32 %v10453, %v9709
  %v10455 = vadd.f32 %v10454, %v9713
  %v10456 = vadd.f32 %v10455, %v9717
  %v10457 = vadd.f32 %v10456, %v9721
  %v10458 = vadd.f32 %v10457, %v9725
  %v10459 = vadd.f32 %v10458, %v9729
  %v10460 = vadd.f32 %v10459, %v9733
  %v10461 = vadd.f32 %v10460, %v9737
  %v10462 = vadd.f32 %v10461, %v9741
  %v10463 = vadd.f32 %v10462, %v9745
  %v10464 = vadd.f32 %v10463, %v9749
  %v10465 = vadd.f32 %v10464, %v9753
  %v10466 = vadd.f32 %v10465, %v9757
  %v10467 = vadd.f32 %v10466, %v9761
  %v10468 = vadd.f32 %v10467, %v9765
  %v10469 = vadd.f32 %v10468, %v9769
  %v10470 = vadd.f32 %v10469, %v9773
  %v10471 = vadd.f32 %v10470, %v9777
  %v10472 = vadd.f32 %v10471, %v9781
  %v10473 = vadd.f32 %v10472, %v9785
  %v10474 = vadd.f32 %v10473, %v9789
  %v10475 = vadd.f32 %v10474, %v9793
  %v10476 = vadd.f32 %v10475, %v9797
  %v10477 = vadd.f32 %v10476, %v9801
  %v10478 = vadd.f32 %v10477, %v9805
  %v10479 = vadd.f32 %v10478, %v9809
  %v10480 = vadd.f32 %v10479, %v9813
  %v10481 = vadd.f32 %v10480, %v9817
  %v10482 = vadd.f32 %v10481, %v9821
  %v10483 = vadd.f32 %v10482, %v9825
  %v10484 = vadd.f32 %v10483, %v9829
  %v10485 = vadd.f32 %v10484, %v9833
  %v10486 = vadd.f32 %v10485, %v9837
  %v10487 = vadd.f32 %v10486, %v9841
  %v10488 = vadd.f32 %v10487, %v9845
  %v10489 = vadd.f32 %v10488, %v9849
  %v10490 = vadd.f32 %v10489, %v9853
  %v10491 = vadd.f32 %v10490, %v9857
  %v10492 = vadd.f32 %v10491, %v9861
  %v10493 = vadd.f32 %v10492, %v9865
  %v10494 = vadd.f32 %v10493, %v9869
  %v10495 = vadd.f32 %v10494, %v9873
  %v10496 = vadd.f32 %v10495, %v9877
  %v10497 = vadd.f32 %v10496, %v9881
  %v10498 = vadd.f32 %v10497, %v9885
  %v10499 = vadd.f32 %v10498, %v9889
  %v10500 = vadd.f32 %v10499, %v9893
  %v10501 = vadd.f32 %v10500, %v9897
  %v10502 = vadd.f32 %v10501, %v9901
  %v10503 = vadd.f32 %v10502, %v9905
  %v10504 = vadd.f32 %v10503, %v9909
  %v10505 = vadd.f32 %v10504, %v9913
  %v10506 = vadd.f32 %v10505, %v9917
  %v10507 = vadd.f32 %v10506, %v9921
  %v10508 = vadd.f32 %v10507, %v9925
  %v10509 = vadd.f32 %v10508, %v9929
  %v10510 = vadd.f32 %v10509, %v9933
  %v10511 = vadd.f32 %v10510, %v9937
  %v10512 = vadd.f32 %v10511, %v9941
  %v10513 = vadd.f32 %v10512, %v9945
  %v10514 = vadd.f32 %v10513, %v9949
  %v10515 = vadd.f32 %v10514, %v9953
  %v10516 = vadd.f32 %v10515, %v9957
  %v10517 = vadd.f32 %v10516, %v9961
  %v10518 = vadd.f32 %v10517, %v9965
  %v10519 = vadd.f32 %v10518, %v9969
  %v10520 = vadd.f32 %v10519, %v9973
  %v10521 = vadd.f32 %v10520, %v9977
  %v10522 = vadd.f32 %v10521, %v9981
  %v10523 = vadd.f32 %v10522, %v9985
  %v10524 = vadd.f32 %v10523, %v9989
  %v10525 = vadd.f32 %v10524, %v9993
  %v10526 = vadd.f32 %v10525, %v9997
  %v10527 = vadd.f32 %v10526, %v10001
  %v10528 = vadd.f32 %v10527, %v10005
  %v10529 = vadd.f32 %v10528, %v10009
  %v10530 = vadd.f32 %v10529, %v10013
  %v10531 = vadd.f32 %v10530, %v10017
  %v10532 = vadd.f32 %v10531, %v10021
  %v10533 = vadd.f32 %v10532, %v10025
  %v10534 = vadd.f32 %v10533, %v10029
  %v10535 = vadd.f32 %v10534, %v10033
  %v10536 = vadd.f32 %v10535, %v10037
  %v10537 = vadd.f32 %v10536, %v10041
  %v10538 = vadd.f32 %v10537, %v10045
  %v10539 = vadd.f32 %v10538, %v10049
  %v10540 = vadd.f32 %v10539, %v10053
  %v10541 = vadd.f32 %v10540, %v10057
  %v10542 = vadd.f32 %v10541, %v10061
  %v10543 = vadd.f32 %v10542, %v10065
  %v10544 = vadd.f32 %v10543, %v10069
  %v10545 = vadd.f32 %v10544, %v10073
  %v10546 = vadd.f32 %v10545, %v10077
  %v10547 = vadd.f32 %v10546, %v10081
  %v10548 = vadd.f32 %v10547, %v10085
  %v10549 = vadd.f32 %v10548, %v10089
  %v10550 = vadd.f32 %v10549, %v10093
  %v10551 = vadd.f32 %v10550, %v10097
  %v10552 = vadd.f32 %v10551, %v10101
  %v10553 = vadd.f32 %v10552, %v10105
  %v10554 = vadd.f32 %v10553, %v10109
  %v10555 = vadd.f32 %v10554, %v10113
  %v10556 = vadd.f32 %v10555, %v10117
  %v10557 = vadd.f32 %v10556, %v10121
  %v10558 = vadd.f32 %v10557, %v10125
  %v10559 = vadd.f32 %v10558, %v10129
  %v10560 = vadd.f32 %v10559, %v10133
  %v10561 = vadd.f32 %v10560, %v10137
  %v10562 = vadd.f32 %v10561, %v10141
  %v10563 = vadd.f32 %v10562, %v10145
  %v10564 = vadd.f32 %v10563, %v10149
  %v10565 = vadd.f32 %v10564, %v10153
  %v10566 = vadd.f32 %v10565, %v10157
  %v10567 = vadd.f32 %v10566, %v10161
  %v10568 = vadd.f32 %v10567, %v10165
  %v10569 = vadd.f32 %v10568, %v10169
  %v10570 = vadd.f32 %v10569, %v10173
  %v10571 = vadd.f32 %v10570, %v10177
  %v10572 = vrot.slane %v10571, 4
  %v10573 = vadd.f32 %v10571, %v10572
  %v10574 = vrot.slane %v10573, 2
  %v10575 = vadd.f32 %v10573, %v10574
  %v10576 = vrot.slane %v10575, 1
  %v10577 = vadd.f32 %v10575, %v10576
  %v10578 = vadd.f32 %v9670, %v9674
  %v10579 = vadd.f32 %v10578, %v9678
  %v10580 = vadd.f32 %v10579, %v9682
  %v10581 = vadd.f32 %v10580, %v9686
  %v10582 = vadd.f32 %v10581, %v9690
  %v10583 = vadd.f32 %v10582, %v9694
  %v10584 = vadd.f32 %v10583, %v9698
  %v10585 = vadd.f32 %v10584, %v9702
  %v10586 = vadd.f32 %v10585, %v9706
  %v10587 = vadd.f32 %v10586, %v9710
  %v10588 = vadd.f32 %v10587, %v9714
  %v10589 = vadd.f32 %v10588, %v9718
  %v10590 = vadd.f32 %v10589, %v9722
  %v10591 = vadd.f32 %v10590, %v9726
  %v10592 = vadd.f32 %v10591, %v9730
  %v10593 = vadd.f32 %v10592, %v9734
  %v10594 = vadd.f32 %v10593, %v9738
  %v10595 = vadd.f32 %v10594, %v9742
  %v10596 = vadd.f32 %v10595, %v9746
  %v10597 = vadd.f32 %v10596, %v9750
  %v10598 = vadd.f32 %v10597, %v9754
  %v10599 = vadd.f32 %v10598, %v9758
  %v10600 = vadd.f32 %v10599, %v9762
  %v10601 = vadd.f32 %v10600, %v9766
  %v10602 = vadd.f32 %v10601, %v9770
  %v10603 = vadd.f32 %v10602, %v9774
  %v10604 = vadd.f32 %v10603, %v9778
  %v10605 = vadd.f32 %v10604, %v9782
  %v10606 = vadd.f32 %v10605, %v9786
  %v10607 = vadd.f32 %v10606, %v9790
  %v10608 = vadd.f32 %v10607, %v9794
  %v10609 = vadd.f32 %v10608, %v9798
  %v10610 = vadd.f32 %v10609, %v9802
  %v10611 = vadd.f32 %v10610, %v9806
  %v10612 = vadd.f32 %v10611, %v9810
  %v10613 = vadd.f32 %v10612, %v9814
  %v10614 = vadd.f32 %v10613, %v9818
  %v10615 = vadd.f32 %v10614, %v9822
  %v10616 = vadd.f32 %v10615, %v9826
  %v10617 = vadd.f32 %v10616, %v9830
  %v10618 = vadd.f32 %v10617, %v9834
  %v10619 = vadd.f32 %v10618, %v9838
  %v10620 = vadd.f32 %v10619, %v9842
  %v10621 = vadd.f32 %v10620, %v9846
  %v10622 = vadd.f32 %v10621, %v9850
  %v10623 = vadd.f32 %v10622, %v9854
  %v10624 = vadd.f32 %v10623, %v9858
  %v10625 = vadd.f32 %v10624, %v9862
  %v10626 = vadd.f32 %v10625, %v9866
  %v10627 = vadd.f32 %v10626, %v9870
  %v10628 = vadd.f32 %v10627, %v9874
  %v10629 = vadd.f32 %v10628, %v9878
  %v10630 = vadd.f32 %v10629, %v9882
  %v10631 = vadd.f32 %v10630, %v9886
  %v10632 = vadd.f32 %v10631, %v9890
  %v10633 = vadd.f32 %v10632, %v9894
  %v10634 = vadd.f32 %v10633, %v9898
  %v10635 = vadd.f32 %v10634, %v9902
  %v10636 = vadd.f32 %v10635, %v9906
  %v10637 = vadd.f32 %v10636, %v9910
  %v10638 = vadd.f32 %v10637, %v9914
  %v10639 = vadd.f32 %v10638, %v9918
  %v10640 = vadd.f32 %v10639, %v9922
  %v10641 = vadd.f32 %v10640, %v9926
  %v10642 = vadd.f32 %v10641, %v9930
  %v10643 = vadd.f32 %v10642, %v9934
  %v10644 = vadd.f32 %v10643, %v9938
  %v10645 = vadd.f32 %v10644, %v9942
  %v10646 = vadd.f32 %v10645, %v9946
  %v10647 = vadd.f32 %v10646, %v9950
  %v10648 = vadd.f32 %v10647, %v9954
  %v10649 = vadd.f32 %v10648, %v9958
  %v10650 = vadd.f32 %v10649, %v9962
  %v10651 = vadd.f32 %v10650, %v9966
  %v10652 = vadd.f32 %v10651, %v9970
  %v10653 = vadd.f32 %v10652, %v9974
  %v10654 = vadd.f32 %v10653, %v9978
  %v10655 = vadd.f32 %v10654, %v9982
  %v10656 = vadd.f32 %v10655, %v9986
  %v10657 = vadd.f32 %v10656, %v9990
  %v10658 = vadd.f32 %v10657, %v9994
  %v10659 = vadd.f32 %v10658, %v9998
  %v10660 = vadd.f32 %v10659, %v10002
  %v10661 = vadd.f32 %v10660, %v10006
  %v10662 = vadd.f32 %v10661, %v10010
  %v10663 = vadd.f32 %v10662, %v10014
  %v10664 = vadd.f32 %v10663, %v10018
  %v10665 = vadd.f32 %v10664, %v10022
  %v10666 = vadd.f32 %v10665, %v10026
  %v10667 = vadd.f32 %v10666, %v10030
  %v10668 = vadd.f32 %v10667, %v10034
  %v10669 = vadd.f32 %v10668, %v10038
  %v10670 = vadd.f32 %v10669, %v10042
  %v10671 = vadd.f32 %v10670, %v10046
  %v10672 = vadd.f32 %v10671, %v10050
  %v10673 = vadd.f32 %v10672, %v10054
  %v10674 = vadd.f32 %v10673, %v10058
  %v10675 = vadd.f32 %v10674, %v10062
  %v10676 = vadd.f32 %v10675, %v10066
  %v10677 = vadd.f32 %v10676, %v10070
  %v10678 = vadd.f32 %v10677, %v10074
  %v10679 = vadd.f32 %v10678, %v10078
  %v10680 = vadd.f32 %v10679, %v10082
  %v10681 = vadd.f32 %v10680, %v10086
  %v10682 = vadd.f32 %v10681, %v10090
  %v10683 = vadd.f32 %v10682, %v10094
  %v10684 = vadd.f32 %v10683, %v10098
  %v10685 = vadd.f32 %v10684, %v10102
  %v10686 = vadd.f32 %v10685, %v10106
  %v10687 = vadd.f32 %v10686, %v10110
  %v10688 = vadd.f32 %v10687, %v10114
  %v10689 = vadd.f32 %v10688, %v10118
  %v10690 = vadd.f32 %v10689, %v10122
  %v10691 = vadd.f32 %v10690, %v10126
  %v10692 = vadd.f32 %v10691, %v10130
  %v10693 = vadd.f32 %v10692, %v10134
  %v10694 = vadd.f32 %v10693, %v10138
  %v10695 = vadd.f32 %v10694, %v10142
  %v10696 = vadd.f32 %v10695, %v10146
  %v10697 = vadd.f32 %v10696, %v10150
  %v10698 = vadd.f32 %v10697, %v10154
  %v10699 = vadd.f32 %v10698, %v10158
  %v10700 = vadd.f32 %v10699, %v10162
  %v10701 = vadd.f32 %v10700, %v10166
  %v10702 = vadd.f32 %v10701, %v10170
  %v10703 = vadd.f32 %v10702, %v10174
  %v10704 = vadd.f32 %v10703, %v10178
  %v10705 = vrot.slane %v10704, 4
  %v10706 = vadd.f32 %v10704, %v10705
  %v10707 = vrot.slane %v10706, 2
  %v10708 = vadd.f32 %v10706, %v10707
  %v10709 = vrot.slane %v10708, 1
  %v10710 = vadd.f32 %v10708, %v10709
  %v10715 = vrot.slane %v10444, 7
  %v10716 = vrot.slane %v10577, 6
  %v10717 = vrot.slane %v10710, 5
  %vm10718 = vcmask 1040384
  %v10719 = vsel %vm10718, %v10311, %v10715
  %vm10720 = vcmask 1042434
  %v10721 = vsel %vm10720, %v10716, %v10717
  %vm10722 = vcmask 1041408
  %v10723 = vsel %vm10722, %v10719, %v10721
  %v10725 = vlaneseq
  %vm10726 = vcmp.ge.s32.totalorder %v10725, 0
  %vm10727 = vcmp.lt.s32.totalorder %v10725, 512
  %vm10728 = vmand %vm10726, %vm10727
  %10729 = vst.msk [vmem:[%s4] sm:$0xf] %vm10728, %v10723
  // Predicated region
  $region18: #{net1_v3_forward.1} parent=0 // pred_check
    _
  $region19: #{net1_v3_forward.1} parent=0 // pred_check_branch
    %10731 = sbr.rel (0) target = $region21
  $region20: #{net1_v3_forward.1} parent=0 // pred_region
    _
  $region21: #{net1_v3_forward.1} parent=0 // pred_fallthru
    _
  // Predicated region
  $region22: #{net1_v3_forward.1} parent=0 // pred_check
    _
  $region23: #{net1_v3_forward.1} parent=0 // pred_check_branch
    %10733 = sbr.rel (0) target = $region25
  $region24: #{net1_v3_forward.1} parent=0 // pred_region
    _
  $region25: #{net1_v3_forward.1} parent=0 // pred_fallthru
    _

</llo_original>
